<compile_context>
chip_gen: v7x
topology: tpu7x:2x2x1
jax: 0.10.0
libtpu: 0.0.40
codegen_flags: <defaults>
</compile_context>

<pallas_src>
import jax
import jax.numpy as jnp
from jax.experimental import pallas as pl
from jax.experimental.pallas import tpu as pltpu


_PARALLEL = pltpu.CompilerParams(dimension_semantics=("parallel",))


# ----------------------------- Pallas kernels ------------------------------ #

def _conv1_kernel(x_ref, w_ref, b_ref, o_ref):
    """Direct 5x5 conv, C_in=1 -> C_out=10, one image per grid step.

    x_ref: (1, 28, 28, 1)  w_ref: (25, 10)  b_ref: (1, 10)  o_ref: (1, 24, 24, 10)
    """
    x = x_ref[0].astype(jnp.float32)           # (28, 28, 1)
    w = w_ref[...].astype(jnp.float32)         # (25, 10)
    acc = jnp.zeros((24, 24, 10), jnp.float32)
    for kh in range(5):
        for kw in range(5):
            k = kh * 5 + kw
            tap = x[kh:kh + 24, kw:kw + 24, :]          # (24, 24, 1)
            acc = acc + tap * w[k:k + 1, :]             # broadcast -> (24, 24, 10)
    acc = acc + b_ref[...].astype(jnp.float32)
    o_ref[0] = acc.astype(o_ref.dtype)


def _conv2_kernel(h_ref, w_ref, b_ref, o_ref):
    """In-kernel im2col + MXU matmul, C_in=10 -> C_out=20, one image per grid step.

    h_ref: (1, 12, 12, 10)  w_ref: (250, 20)  b_ref: (1, 20)  o_ref: (1, 64, 20)
    """
    h = h_ref[0].astype(jnp.float32)           # (12, 12, 10)
    cols = []
    for kh in range(5):
        for kw in range(5):
            cols.append(h[kh:kh + 8, kw:kw + 8, :])     # (8, 8, 10)
    patches = jnp.concatenate(cols, axis=-1)            # (8, 8, 250), lane concat
    patches = patches.reshape(64, 250)                  # lane dim unchanged
    out = jnp.dot(patches, w_ref[...].astype(jnp.float32),
                  preferred_element_type=jnp.float32)
    out = out + b_ref[...].astype(jnp.float32)          # (64, 20)
    o_ref[0] = out.astype(o_ref.dtype)


def _maxpool_relu_kernel(x_ref, o_ref):
    """relu(2x2 max pool). x_ref: (1, H2, 2, W2, 2*C), o_ref: (1, H2, W2, C)."""
    c = o_ref.shape[-1]
    a = x_ref[0, :, 0, :, :].astype(jnp.float32)        # even rows  (H2, W2, 2C)
    b = x_ref[0, :, 1, :, :].astype(jnp.float32)        # odd rows
    m = jnp.maximum(a, b)
    m = jnp.maximum(m[..., :c], m[..., c:])             # even vs odd columns
    o_ref[0] = jnp.maximum(m, 0.0).astype(o_ref.dtype)


def _fc_softmax_kernel(x_ref, w1_ref, b1_ref, w2_ref, b2_ref, o_ref):
    """softmax(relu(x @ W1 + b1) @ W2 + b2), one batch-row tile per grid step."""
    x = x_ref[...].astype(jnp.float32)
    h = jnp.dot(x, w1_ref[...], preferred_element_type=jnp.float32) + b1_ref[...]
    h = jnp.maximum(h, 0.0)
    logits = jnp.dot(h, w2_ref[...], preferred_element_type=jnp.float32) + b2_ref[...]
    m = jnp.max(logits, axis=-1, keepdims=True)
    e = jnp.exp(logits - m)
    denom = jnp.sum(e, axis=-1, keepdims=True)
    o_ref[...] = e * pl.reciprocal(denom, approx=True)


# ----------------------------- Pallas wrappers ----------------------------- #

def conv1(x_nhwc, w_col, b_row):
    n = x_nhwc.shape[0]
    return pl.pallas_call(
        _conv1_kernel,
        grid=(n,),
        in_specs=[
            pl.BlockSpec((1, 28, 28, 1), lambda i: (i, 0, 0, 0)),
            pl.BlockSpec((25, 10), lambda i: (0, 0)),    # weights resident across grid
            pl.BlockSpec((1, 10), lambda i: (0, 0)),
        ],
        out_specs=pl.BlockSpec((1, 24, 24, 10), lambda i: (i, 0, 0, 0)),
        out_shape=jax.ShapeDtypeStruct((n, 24, 24, 10), jnp.bfloat16),
        compiler_params=_PARALLEL,
    )(x_nhwc, w_col, b_row)


def conv2(h_nhwc, w_col, b_row):
    n = h_nhwc.shape[0]
    return pl.pallas_call(
        _conv2_kernel,
        grid=(n,),
        in_specs=[
            pl.BlockSpec((1, 12, 12, 10), lambda i: (i, 0, 0, 0)),
            pl.BlockSpec((250, 20), lambda i: (0, 0)),   # weights resident across grid
            pl.BlockSpec((1, 20), lambda i: (0, 0)),
        ],
        out_specs=pl.BlockSpec((1, 64, 20), lambda i: (i, 0, 0)),
        out_shape=jax.ShapeDtypeStruct((n, 64, 20), jnp.bfloat16),
        compiler_params=_PARALLEL,
    )(h_nhwc, w_col, b_row)


def maxpool2_relu(x_nhwc, out_dtype=jnp.float32):
    """x: (N, H, W, C), H and W even -> relu(maxpool2x2(x)): (N, H//2, W//2, C)."""
    n, h, w, c = x_nhwc.shape
    h2, w2 = h // 2, w // 2
    # Metadata-only reshape (no HBM copy): exposes the 2x2 window structure so the
    # kernel reads the conv output exactly once (no 4x strided tap copies).
    xv = x_nhwc.reshape(n, h2, 2, w2, 2 * c)
    return pl.pallas_call(
        _maxpool_relu_kernel,
        grid=(n,),
        in_specs=[pl.BlockSpec((1, h2, 2, w2, 2 * c), lambda i: (i, 0, 0, 0, 0))],
        out_specs=pl.BlockSpec((1, h2, w2, c), lambda i: (i, 0, 0, 0)),
        out_shape=jax.ShapeDtypeStruct((n, h2, w2, c), out_dtype),
        compiler_params=_PARALLEL,
    )(xv)


def fc_softmax(x, w1, b1, w2, b2, block_m=256):
    """x: (N, 320); w1: (320, 50); w2: (50, 10) -> softmax probs (N, 10)."""
    n, d_in = x.shape
    d_hid = w1.shape[1]
    d_out = w2.shape[1]
    bm = min(block_m, n)          # batch-tiled; bounds VMEM & pipelines at large N
    return pl.pallas_call(
        _fc_softmax_kernel,
        grid=(pl.cdiv(n, bm),),
        in_specs=[
            pl.BlockSpec((bm, d_in), lambda i: (i, 0)),
            pl.BlockSpec((d_in, d_hid), lambda i: (0, 0)),   # weights resident
            pl.BlockSpec((1, d_hid), lambda i: (0, 0)),
            pl.BlockSpec((d_hid, d_out), lambda i: (0, 0)),
            pl.BlockSpec((1, d_out), lambda i: (0, 0)),
        ],
        out_specs=pl.BlockSpec((bm, d_out), lambda i: (i, 0)),
        out_shape=jax.ShapeDtypeStruct((n, d_out), jnp.float32),
        compiler_params=_PARALLEL,
    )(x.astype(jnp.float32), w1, b1, w2, b2)


# ------------------------------ parameters --------------------------------- #

def init_params(key):
    """PyTorch-layout parameters (as the nn.Module would hold them)."""
    ks = jax.random.split(key, 8)
    s = 0.1
    return {
        "conv1_w": s * jax.random.normal(ks[0], (10, 1, 5, 5), jnp.float32),
        "conv1_b": s * jax.random.normal(ks[1], (10,), jnp.float32),
        "conv2_w": s * jax.random.normal(ks[2], (20, 10, 5, 5), jnp.float32),
        "conv2_b": s * jax.random.normal(ks[3], (20,), jnp.float32),
        "fc1_w": s * jax.random.normal(ks[4], (50, 320), jnp.float32),
        "fc1_b": s * jax.random.normal(ks[5], (50,), jnp.float32),
        "fc2_w": s * jax.random.normal(ks[6], (10, 50), jnp.float32),
        "fc2_b": s * jax.random.normal(ks[7], (10,), jnp.float32),
    }


def prepare_params(p):
    """One-time layout conversion (outside the forward hot path)."""
    def conv_to_col(w):  # PyTorch (C_out, C_in, KH, KW) -> (KH*KW*C_in, C_out)
        c_out, c_in, kh, kw = w.shape
        return jnp.transpose(w, (2, 3, 1, 0)).reshape(kh * kw * c_in, c_out)
    return {
        "conv1_w": conv_to_col(p["conv1_w"]),             # (25, 10)
        "conv1_b": p["conv1_b"].reshape(1, 10),
        "conv2_w": conv_to_col(p["conv2_w"]),             # (250, 20)
        "conv2_b": p["conv2_b"].reshape(1, 20),
        "fc1_w": p["fc1_w"].T,                            # (320, 50), transposed once
        "fc1_b": p["fc1_b"].reshape(1, 50),
        "fc2_w": p["fc2_w"].T,                            # (50, 10), transposed once
        "fc2_b": p["fc2_b"].reshape(1, 10),
    }


# ------------------------------- forward ----------------------------------- #

def neural_network_explainer_forward(x_nchw, kp):
    """x_nchw: (N, 1, 28, 28) float32 -> class probabilities (N, 10)."""
    n = x_nchw.shape[0]
    x = jnp.transpose(x_nchw, (0, 2, 3, 1))                # NCHW -> NHWC, (N, 28, 28, 1)

    c1 = conv1(x, kp["conv1_w"], kp["conv1_b"])            # (N, 24, 24, 10) bf16
    h1 = maxpool2_relu(c1)                                 # (N, 12, 12, 10) f32

    c2 = conv2(h1, kp["conv2_w"], kp["conv2_b"])           # (N, 64, 20) bf16
    # TODO(synk): nn.Dropout here is identity (eval-mode semantics); no RNG masking.
    h2 = maxpool2_relu(c2.reshape(n, 8, 8, 20))            # (N, 4, 4, 20) f32

    # Flatten with PyTorch NCHW ordering: (N, C, H, W) -> (N, 320).
    flat = jnp.transpose(h2, (0, 3, 1, 2)).reshape(n, 320)

    # Linear(320,50)+ReLU+Dropout(id)+Linear(50,10)+Softmax(dim=1), fused kernel.
    return fc_softmax(flat, kp["fc1_w"], kp["fc1_b"], kp["fc2_w"], kp["fc2_b"])


# --------------------------------- driver ---------------------------------- #

if __name__ == "__main__":
    key = jax.random.PRNGKey(0)
    k_x, k_p = jax.random.split(key)

    # The fc stack requires 320 = 20*4*4 features => input spatial must be 28x28.
    x = jax.random.normal(k_x, (2, 1, 28, 28), jnp.float32)
    params = prepare_params(init_params(k_p))

    fwd = jax.jit(neural_network_explainer_forward)
    out = jax.block_until_ready(fwd(x, params))

    assert out.shape == (2, 10)
    assert bool(jnp.all(jnp.isfinite(out)))
    print("KERNEL_OK")
</pallas_src>

<mosaic_0001>
module attributes {stable_mosaic.version = 11 : i64} {
  func.func @_conv1_kernel(%arg0: i32, %arg1: memref<1x28x28x1xf32, #tpu.memory_space<vmem>>, %arg2: memref<25x10xf32, #tpu.memory_space<vmem>>, %arg3: memref<1x10xf32, #tpu.memory_space<vmem>>, %arg4: memref<1x24x24x10xbf16, #tpu.memory_space<vmem>>) attributes {dimension_semantics = [#tpu.dimension_semantics<parallel>], iteration_bounds = array<i64: 2>, scalar_prefetch = 0 : i64, scratch_operands = 0 : i64, tpu.core_type = #tpu.core_type<tc>, window_params = [{transform_indices = @transform_0, window_bounds = array<i64: 1, 28, 28, 1>}, {pipeline_mode = #tpu.pipeline_mode<synchronous>, transform_indices = @transform_1, window_bounds = array<i64: 25, 10>}, {pipeline_mode = #tpu.pipeline_mode<synchronous>, transform_indices = @transform_2, window_bounds = array<i64: 1, 10>}, {transform_indices = @transform_3, window_bounds = array<i64: 1, 24, 24, 10>}]} {
    %c0 = arith.constant 0 : index
    %c0_0 = arith.constant 0 : index
    %c0_1 = arith.constant 0 : index
    %c0_2 = arith.constant 0 : index
    %0 = vector.load %arg1[%c0, %c0_0, %c0_1, %c0_2] : memref<1x28x28x1xf32, #tpu.memory_space<vmem>>, vector<1x28x28x1xf32>
    %1 = vector.shape_cast %0 : vector<1x28x28x1xf32> to vector<28x28x1xf32>
    %c0_3 = arith.constant 0 : index
    %c0_4 = arith.constant 0 : index
    %2 = vector.load %arg2[%c0_3, %c0_4] : memref<25x10xf32, #tpu.memory_space<vmem>>, vector<25x10xf32>
    %cst = arith.constant 0.000000e+00 : f32
    %3 = vector.broadcast %cst : f32 to vector<24x24x10xf32>
    %4 = vector.extract_strided_slice %1 {offsets = [0, 0, 0], sizes = [24, 24, 1], strides = [1, 1, 1]} : vector<28x28x1xf32> to vector<24x24x1xf32>
    %5 = vector.extract_strided_slice %2 {offsets = [0, 0], sizes = [1, 10], strides = [1, 1]} : vector<25x10xf32> to vector<1x10xf32>
    %6 = vector.shape_cast %5 : vector<1x10xf32> to vector<1x1x10xf32>
    %7 = vector.broadcast %4 : vector<24x24x1xf32> to vector<24x24x10xf32>
    %8 = vector.broadcast %6 : vector<1x1x10xf32> to vector<24x24x10xf32>
    %9 = arith.mulf %7, %8 : vector<24x24x10xf32>
    %10 = arith.addf %3, %9 : vector<24x24x10xf32>
    %11 = vector.extract_strided_slice %1 {offsets = [0, 1, 0], sizes = [24, 24, 1], strides = [1, 1, 1]} : vector<28x28x1xf32> to vector<24x24x1xf32>
    %12 = vector.extract_strided_slice %2 {offsets = [1, 0], sizes = [1, 10], strides = [1, 1]} : vector<25x10xf32> to vector<1x10xf32>
    %13 = vector.shape_cast %12 : vector<1x10xf32> to vector<1x1x10xf32>
    %14 = vector.broadcast %11 : vector<24x24x1xf32> to vector<24x24x10xf32>
    %15 = vector.broadcast %13 : vector<1x1x10xf32> to vector<24x24x10xf32>
    %16 = arith.mulf %14, %15 : vector<24x24x10xf32>
    %17 = arith.addf %10, %16 : vector<24x24x10xf32>
    %18 = vector.extract_strided_slice %1 {offsets = [0, 2, 0], sizes = [24, 24, 1], strides = [1, 1, 1]} : vector<28x28x1xf32> to vector<24x24x1xf32>
    %19 = vector.extract_strided_slice %2 {offsets = [2, 0], sizes = [1, 10], strides = [1, 1]} : vector<25x10xf32> to vector<1x10xf32>
    %20 = vector.shape_cast %19 : vector<1x10xf32> to vector<1x1x10xf32>
    %21 = vector.broadcast %18 : vector<24x24x1xf32> to vector<24x24x10xf32>
    %22 = vector.broadcast %20 : vector<1x1x10xf32> to vector<24x24x10xf32>
    %23 = arith.mulf %21, %22 : vector<24x24x10xf32>
    %24 = arith.addf %17, %23 : vector<24x24x10xf32>
    %25 = vector.extract_strided_slice %1 {offsets = [0, 3, 0], sizes = [24, 24, 1], strides = [1, 1, 1]} : vector<28x28x1xf32> to vector<24x24x1xf32>
    %26 = vector.extract_strided_slice %2 {offsets = [3, 0], sizes = [1, 10], strides = [1, 1]} : vector<25x10xf32> to vector<1x10xf32>
    %27 = vector.shape_cast %26 : vector<1x10xf32> to vector<1x1x10xf32>
    %28 = vector.broadcast %25 : vector<24x24x1xf32> to vector<24x24x10xf32>
    %29 = vector.broadcast %27 : vector<1x1x10xf32> to vector<24x24x10xf32>
    %30 = arith.mulf %28, %29 : vector<24x24x10xf32>
    %31 = arith.addf %24, %30 : vector<24x24x10xf32>
    %32 = vector.extract_strided_slice %1 {offsets = [0, 4, 0], sizes = [24, 24, 1], strides = [1, 1, 1]} : vector<28x28x1xf32> to vector<24x24x1xf32>
    %33 = vector.extract_strided_slice %2 {offsets = [4, 0], sizes = [1, 10], strides = [1, 1]} : vector<25x10xf32> to vector<1x10xf32>
    %34 = vector.shape_cast %33 : vector<1x10xf32> to vector<1x1x10xf32>
    %35 = vector.broadcast %32 : vector<24x24x1xf32> to vector<24x24x10xf32>
    %36 = vector.broadcast %34 : vector<1x1x10xf32> to vector<24x24x10xf32>
    %37 = arith.mulf %35, %36 : vector<24x24x10xf32>
    %38 = arith.addf %31, %37 : vector<24x24x10xf32>
    %39 = vector.extract_strided_slice %1 {offsets = [1, 0, 0], sizes = [24, 24, 1], strides = [1, 1, 1]} : vector<28x28x1xf32> to vector<24x24x1xf32>
    %40 = vector.extract_strided_slice %2 {offsets = [5, 0], sizes = [1, 10], strides = [1, 1]} : vector<25x10xf32> to vector<1x10xf32>
    %41 = vector.shape_cast %40 : vector<1x10xf32> to vector<1x1x10xf32>
    %42 = vector.broadcast %39 : vector<24x24x1xf32> to vector<24x24x10xf32>
    %43 = vector.broadcast %41 : vector<1x1x10xf32> to vector<24x24x10xf32>
    %44 = arith.mulf %42, %43 : vector<24x24x10xf32>
    %45 = arith.addf %38, %44 : vector<24x24x10xf32>
    %46 = vector.extract_strided_slice %1 {offsets = [1, 1, 0], sizes = [24, 24, 1], strides = [1, 1, 1]} : vector<28x28x1xf32> to vector<24x24x1xf32>
    %47 = vector.extract_strided_slice %2 {offsets = [6, 0], sizes = [1, 10], strides = [1, 1]} : vector<25x10xf32> to vector<1x10xf32>
    %48 = vector.shape_cast %47 : vector<1x10xf32> to vector<1x1x10xf32>
    %49 = vector.broadcast %46 : vector<24x24x1xf32> to vector<24x24x10xf32>
    %50 = vector.broadcast %48 : vector<1x1x10xf32> to vector<24x24x10xf32>
    %51 = arith.mulf %49, %50 : vector<24x24x10xf32>
    %52 = arith.addf %45, %51 : vector<24x24x10xf32>
    %53 = vector.extract_strided_slice %1 {offsets = [1, 2, 0], sizes = [24, 24, 1], strides = [1, 1, 1]} : vector<28x28x1xf32> to vector<24x24x1xf32>
    %54 = vector.extract_strided_slice %2 {offsets = [7, 0], sizes = [1, 10], strides = [1, 1]} : vector<25x10xf32> to vector<1x10xf32>
    %55 = vector.shape_cast %54 : vector<1x10xf32> to vector<1x1x10xf32>
    %56 = vector.broadcast %53 : vector<24x24x1xf32> to vector<24x24x10xf32>
    %57 = vector.broadcast %55 : vector<1x1x10xf32> to vector<24x24x10xf32>
    %58 = arith.mulf %56, %57 : vector<24x24x10xf32>
    %59 = arith.addf %52, %58 : vector<24x24x10xf32>
    %60 = vector.extract_strided_slice %1 {offsets = [1, 3, 0], sizes = [24, 24, 1], strides = [1, 1, 1]} : vector<28x28x1xf32> to vector<24x24x1xf32>
    %61 = vector.extract_strided_slice %2 {offsets = [8, 0], sizes = [1, 10], strides = [1, 1]} : vector<25x10xf32> to vector<1x10xf32>
    %62 = vector.shape_cast %61 : vector<1x10xf32> to vector<1x1x10xf32>
    %63 = vector.broadcast %60 : vector<24x24x1xf32> to vector<24x24x10xf32>
    %64 = vector.broadcast %62 : vector<1x1x10xf32> to vector<24x24x10xf32>
    %65 = arith.mulf %63, %64 : vector<24x24x10xf32>
    %66 = arith.addf %59, %65 : vector<24x24x10xf32>
    %67 = vector.extract_strided_slice %1 {offsets = [1, 4, 0], sizes = [24, 24, 1], strides = [1, 1, 1]} : vector<28x28x1xf32> to vector<24x24x1xf32>
    %68 = vector.extract_strided_slice %2 {offsets = [9, 0], sizes = [1, 10], strides = [1, 1]} : vector<25x10xf32> to vector<1x10xf32>
    %69 = vector.shape_cast %68 : vector<1x10xf32> to vector<1x1x10xf32>
    %70 = vector.broadcast %67 : vector<24x24x1xf32> to vector<24x24x10xf32>
    %71 = vector.broadcast %69 : vector<1x1x10xf32> to vector<24x24x10xf32>
    %72 = arith.mulf %70, %71 : vector<24x24x10xf32>
    %73 = arith.addf %66, %72 : vector<24x24x10xf32>
    %74 = vector.extract_strided_slice %1 {offsets = [2, 0, 0], sizes = [24, 24, 1], strides = [1, 1, 1]} : vector<28x28x1xf32> to vector<24x24x1xf32>
    %75 = vector.extract_strided_slice %2 {offsets = [10, 0], sizes = [1, 10], strides = [1, 1]} : vector<25x10xf32> to vector<1x10xf32>
    %76 = vector.shape_cast %75 : vector<1x10xf32> to vector<1x1x10xf32>
    %77 = vector.broadcast %74 : vector<24x24x1xf32> to vector<24x24x10xf32>
    %78 = vector.broadcast %76 : vector<1x1x10xf32> to vector<24x24x10xf32>
    %79 = arith.mulf %77, %78 : vector<24x24x10xf32>
    %80 = arith.addf %73, %79 : vector<24x24x10xf32>
    %81 = vector.extract_strided_slice %1 {offsets = [2, 1, 0], sizes = [24, 24, 1], strides = [1, 1, 1]} : vector<28x28x1xf32> to vector<24x24x1xf32>
    %82 = vector.extract_strided_slice %2 {offsets = [11, 0], sizes = [1, 10], strides = [1, 1]} : vector<25x10xf32> to vector<1x10xf32>
    %83 = vector.shape_cast %82 : vector<1x10xf32> to vector<1x1x10xf32>
    %84 = vector.broadcast %81 : vector<24x24x1xf32> to vector<24x24x10xf32>
    %85 = vector.broadcast %83 : vector<1x1x10xf32> to vector<24x24x10xf32>
    %86 = arith.mulf %84, %85 : vector<24x24x10xf32>
    %87 = arith.addf %80, %86 : vector<24x24x10xf32>
    %88 = vector.extract_strided_slice %1 {offsets = [2, 2, 0], sizes = [24, 24, 1], strides = [1, 1, 1]} : vector<28x28x1xf32> to vector<24x24x1xf32>
    %89 = vector.extract_strided_slice %2 {offsets = [12, 0], sizes = [1, 10], strides = [1, 1]} : vector<25x10xf32> to vector<1x10xf32>
    %90 = vector.shape_cast %89 : vector<1x10xf32> to vector<1x1x10xf32>
    %91 = vector.broadcast %88 : vector<24x24x1xf32> to vector<24x24x10xf32>
    %92 = vector.broadcast %90 : vector<1x1x10xf32> to vector<24x24x10xf32>
    %93 = arith.mulf %91, %92 : vector<24x24x10xf32>
    %94 = arith.addf %87, %93 : vector<24x24x10xf32>
    %95 = vector.extract_strided_slice %1 {offsets = [2, 3, 0], sizes = [24, 24, 1], strides = [1, 1, 1]} : vector<28x28x1xf32> to vector<24x24x1xf32>
    %96 = vector.extract_strided_slice %2 {offsets = [13, 0], sizes = [1, 10], strides = [1, 1]} : vector<25x10xf32> to vector<1x10xf32>
    %97 = vector.shape_cast %96 : vector<1x10xf32> to vector<1x1x10xf32>
    %98 = vector.broadcast %95 : vector<24x24x1xf32> to vector<24x24x10xf32>
    %99 = vector.broadcast %97 : vector<1x1x10xf32> to vector<24x24x10xf32>
    %100 = arith.mulf %98, %99 : vector<24x24x10xf32>
    %101 = arith.addf %94, %100 : vector<24x24x10xf32>
    %102 = vector.extract_strided_slice %1 {offsets = [2, 4, 0], sizes = [24, 24, 1], strides = [1, 1, 1]} : vector<28x28x1xf32> to vector<24x24x1xf32>
    %103 = vector.extract_strided_slice %2 {offsets = [14, 0], sizes = [1, 10], strides = [1, 1]} : vector<25x10xf32> to vector<1x10xf32>
    %104 = vector.shape_cast %103 : vector<1x10xf32> to vector<1x1x10xf32>
    %105 = vector.broadcast %102 : vector<24x24x1xf32> to vector<24x24x10xf32>
    %106 = vector.broadcast %104 : vector<1x1x10xf32> to vector<24x24x10xf32>
    %107 = arith.mulf %105, %106 : vector<24x24x10xf32>
    %108 = arith.addf %101, %107 : vector<24x24x10xf32>
    %109 = vector.extract_strided_slice %1 {offsets = [3, 0, 0], sizes = [24, 24, 1], strides = [1, 1, 1]} : vector<28x28x1xf32> to vector<24x24x1xf32>
    %110 = vector.extract_strided_slice %2 {offsets = [15, 0], sizes = [1, 10], strides = [1, 1]} : vector<25x10xf32> to vector<1x10xf32>
    %111 = vector.shape_cast %110 : vector<1x10xf32> to vector<1x1x10xf32>
    %112 = vector.broadcast %109 : vector<24x24x1xf32> to vector<24x24x10xf32>
    %113 = vector.broadcast %111 : vector<1x1x10xf32> to vector<24x24x10xf32>
    %114 = arith.mulf %112, %113 : vector<24x24x10xf32>
    %115 = arith.addf %108, %114 : vector<24x24x10xf32>
    %116 = vector.extract_strided_slice %1 {offsets = [3, 1, 0], sizes = [24, 24, 1], strides = [1, 1, 1]} : vector<28x28x1xf32> to vector<24x24x1xf32>
    %117 = vector.extract_strided_slice %2 {offsets = [16, 0], sizes = [1, 10], strides = [1, 1]} : vector<25x10xf32> to vector<1x10xf32>
    %118 = vector.shape_cast %117 : vector<1x10xf32> to vector<1x1x10xf32>
    %119 = vector.broadcast %116 : vector<24x24x1xf32> to vector<24x24x10xf32>
    %120 = vector.broadcast %118 : vector<1x1x10xf32> to vector<24x24x10xf32>
    %121 = arith.mulf %119, %120 : vector<24x24x10xf32>
    %122 = arith.addf %115, %121 : vector<24x24x10xf32>
    %123 = vector.extract_strided_slice %1 {offsets = [3, 2, 0], sizes = [24, 24, 1], strides = [1, 1, 1]} : vector<28x28x1xf32> to vector<24x24x1xf32>
    %124 = vector.extract_strided_slice %2 {offsets = [17, 0], sizes = [1, 10], strides = [1, 1]} : vector<25x10xf32> to vector<1x10xf32>
    %125 = vector.shape_cast %124 : vector<1x10xf32> to vector<1x1x10xf32>
    %126 = vector.broadcast %123 : vector<24x24x1xf32> to vector<24x24x10xf32>
    %127 = vector.broadcast %125 : vector<1x1x10xf32> to vector<24x24x10xf32>
    %128 = arith.mulf %126, %127 : vector<24x24x10xf32>
    %129 = arith.addf %122, %128 : vector<24x24x10xf32>
    %130 = vector.extract_strided_slice %1 {offsets = [3, 3, 0], sizes = [24, 24, 1], strides = [1, 1, 1]} : vector<28x28x1xf32> to vector<24x24x1xf32>
    %131 = vector.extract_strided_slice %2 {offsets = [18, 0], sizes = [1, 10], strides = [1, 1]} : vector<25x10xf32> to vector<1x10xf32>
    %132 = vector.shape_cast %131 : vector<1x10xf32> to vector<1x1x10xf32>
    %133 = vector.broadcast %130 : vector<24x24x1xf32> to vector<24x24x10xf32>
    %134 = vector.broadcast %132 : vector<1x1x10xf32> to vector<24x24x10xf32>
    %135 = arith.mulf %133, %134 : vector<24x24x10xf32>
    %136 = arith.addf %129, %135 : vector<24x24x10xf32>
    %137 = vector.extract_strided_slice %1 {offsets = [3, 4, 0], sizes = [24, 24, 1], strides = [1, 1, 1]} : vector<28x28x1xf32> to vector<24x24x1xf32>
    %138 = vector.extract_strided_slice %2 {offsets = [19, 0], sizes = [1, 10], strides = [1, 1]} : vector<25x10xf32> to vector<1x10xf32>
    %139 = vector.shape_cast %138 : vector<1x10xf32> to vector<1x1x10xf32>
    %140 = vector.broadcast %137 : vector<24x24x1xf32> to vector<24x24x10xf32>
    %141 = vector.broadcast %139 : vector<1x1x10xf32> to vector<24x24x10xf32>
    %142 = arith.mulf %140, %141 : vector<24x24x10xf32>
    %143 = arith.addf %136, %142 : vector<24x24x10xf32>
    %144 = vector.extract_strided_slice %1 {offsets = [4, 0, 0], sizes = [24, 24, 1], strides = [1, 1, 1]} : vector<28x28x1xf32> to vector<24x24x1xf32>
    %145 = vector.extract_strided_slice %2 {offsets = [20, 0], sizes = [1, 10], strides = [1, 1]} : vector<25x10xf32> to vector<1x10xf32>
    %146 = vector.shape_cast %145 : vector<1x10xf32> to vector<1x1x10xf32>
    %147 = vector.broadcast %144 : vector<24x24x1xf32> to vector<24x24x10xf32>
    %148 = vector.broadcast %146 : vector<1x1x10xf32> to vector<24x24x10xf32>
    %149 = arith.mulf %147, %148 : vector<24x24x10xf32>
    %150 = arith.addf %143, %149 : vector<24x24x10xf32>
    %151 = vector.extract_strided_slice %1 {offsets = [4, 1, 0], sizes = [24, 24, 1], strides = [1, 1, 1]} : vector<28x28x1xf32> to vector<24x24x1xf32>
    %152 = vector.extract_strided_slice %2 {offsets = [21, 0], sizes = [1, 10], strides = [1, 1]} : vector<25x10xf32> to vector<1x10xf32>
    %153 = vector.shape_cast %152 : vector<1x10xf32> to vector<1x1x10xf32>
    %154 = vector.broadcast %151 : vector<24x24x1xf32> to vector<24x24x10xf32>
    %155 = vector.broadcast %153 : vector<1x1x10xf32> to vector<24x24x10xf32>
    %156 = arith.mulf %154, %155 : vector<24x24x10xf32>
    %157 = arith.addf %150, %156 : vector<24x24x10xf32>
    %158 = vector.extract_strided_slice %1 {offsets = [4, 2, 0], sizes = [24, 24, 1], strides = [1, 1, 1]} : vector<28x28x1xf32> to vector<24x24x1xf32>
    %159 = vector.extract_strided_slice %2 {offsets = [22, 0], sizes = [1, 10], strides = [1, 1]} : vector<25x10xf32> to vector<1x10xf32>
    %160 = vector.shape_cast %159 : vector<1x10xf32> to vector<1x1x10xf32>
    %161 = vector.broadcast %158 : vector<24x24x1xf32> to vector<24x24x10xf32>
    %162 = vector.broadcast %160 : vector<1x1x10xf32> to vector<24x24x10xf32>
    %163 = arith.mulf %161, %162 : vector<24x24x10xf32>
    %164 = arith.addf %157, %163 : vector<24x24x10xf32>
    %165 = vector.extract_strided_slice %1 {offsets = [4, 3, 0], sizes = [24, 24, 1], strides = [1, 1, 1]} : vector<28x28x1xf32> to vector<24x24x1xf32>
    %166 = vector.extract_strided_slice %2 {offsets = [23, 0], sizes = [1, 10], strides = [1, 1]} : vector<25x10xf32> to vector<1x10xf32>
    %167 = vector.shape_cast %166 : vector<1x10xf32> to vector<1x1x10xf32>
    %168 = vector.broadcast %165 : vector<24x24x1xf32> to vector<24x24x10xf32>
    %169 = vector.broadcast %167 : vector<1x1x10xf32> to vector<24x24x10xf32>
    %170 = arith.mulf %168, %169 : vector<24x24x10xf32>
    %171 = arith.addf %164, %170 : vector<24x24x10xf32>
    %172 = vector.extract_strided_slice %1 {offsets = [4, 4, 0], sizes = [24, 24, 1], strides = [1, 1, 1]} : vector<28x28x1xf32> to vector<24x24x1xf32>
    %173 = vector.extract_strided_slice %2 {offsets = [24, 0], sizes = [1, 10], strides = [1, 1]} : vector<25x10xf32> to vector<1x10xf32>
    %174 = vector.shape_cast %173 : vector<1x10xf32> to vector<1x1x10xf32>
    %175 = vector.broadcast %172 : vector<24x24x1xf32> to vector<24x24x10xf32>
    %176 = vector.broadcast %174 : vector<1x1x10xf32> to vector<24x24x10xf32>
    %177 = arith.mulf %175, %176 : vector<24x24x10xf32>
    %178 = arith.addf %171, %177 : vector<24x24x10xf32>
    %c0_5 = arith.constant 0 : index
    %c0_6 = arith.constant 0 : index
    %179 = vector.load %arg3[%c0_5, %c0_6] : memref<1x10xf32, #tpu.memory_space<vmem>>, vector<1x10xf32>
    %180 = vector.shape_cast %179 : vector<1x10xf32> to vector<1x1x10xf32>
    %181 = vector.broadcast %180 : vector<1x1x10xf32> to vector<24x24x10xf32>
    %182 = arith.addf %178, %181 : vector<24x24x10xf32>
    %183 = arith.truncf %182 : vector<24x24x10xf32> to vector<24x24x10xbf16>
    %c0_7 = arith.constant 0 : index
    %c0_8 = arith.constant 0 : index
    %c0_9 = arith.constant 0 : index
    %c0_10 = arith.constant 0 : index
    %184 = vector.load %arg4[%c0_7, %c0_8, %c0_9, %c0_10] : memref<1x24x24x10xbf16, #tpu.memory_space<vmem>>, vector<1x24x24x10xbf16>
    %185 = vector.shape_cast %184 : vector<1x24x24x10xbf16> to vector<24x24x10xbf16>
    %186 = vector.shape_cast %183 : vector<24x24x10xbf16> to vector<1x24x24x10xbf16>
    tpu.vector_store %arg4[%c0_7, %c0_8, %c0_9, %c0_10], %186 {strides = array<i32>} : memref<1x24x24x10xbf16, #tpu.memory_space<vmem>>, vector<1x24x24x10xbf16>,
    return
  }
  func.func @transform_0(%arg0: i32) -> (i32, i32, i32, i32) {
    %c0_i32 = arith.constant 0 : i32
    %c0_i32_0 = arith.constant 0 : i32
    %c0_i32_1 = arith.constant 0 : i32
    %c0_i32_2 = arith.constant 0 : i32
    return %arg0, %c0_i32, %c0_i32_0, %c0_i32_1 : i32, i32, i32, i32
  }
  func.func @transform_1(%arg0: i32) -> (i32, i32) {
    %c0_i32 = arith.constant 0 : i32
    %c0_i32_0 = arith.constant 0 : i32
    %c0_i32_1 = arith.constant 0 : i32
    return %c0_i32, %c0_i32_0 : i32, i32
  }
  func.func @transform_2(%arg0: i32) -> (i32, i32) {
    %c0_i32 = arith.constant 0 : i32
    %c0_i32_0 = arith.constant 0 : i32
    %c0_i32_1 = arith.constant 0 : i32
    return %c0_i32, %c0_i32_0 : i32, i32
  }
  func.func @transform_3(%arg0: i32) -> (i32, i32, i32, i32) {
    %c0_i32 = arith.constant 0 : i32
    %c0_i32_0 = arith.constant 0 : i32
    %c0_i32_1 = arith.constant 0 : i32
    %c0_i32_2 = arith.constant 0 : i32
    return %arg0, %c0_i32, %c0_i32_0, %c0_i32_1 : i32, i32, i32, i32
  }
}

module attributes {stable_mosaic.version = 11 : i64} {
  func.func @_maxpool_relu_kernel(%arg0: i32, %arg1: memref<1x12x2x12x20xbf16, #tpu.memory_space<vmem>>, %arg2: memref<1x12x12x10xf32, #tpu.memory_space<vmem>>) attributes {dimension_semantics = [#tpu.dimension_semantics<parallel>], iteration_bounds = array<i64: 2>, scalar_prefetch = 0 : i64, scratch_operands = 0 : i64, tpu.core_type = #tpu.core_type<tc>, window_params = [{transform_indices = @transform_0, window_bounds = array<i64: 1, 12, 2, 12, 20>}, {transform_indices = @transform_1, window_bounds = array<i64: 1, 12, 12, 10>}]} {
    %c0 = arith.constant 0 : index
    %c0_0 = arith.constant 0 : index
    %c0_1 = arith.constant 0 : index
    %c0_2 = arith.constant 0 : index
    %c0_3 = arith.constant 0 : index
    %0 = vector.load %arg1[%c0, %c0_0, %c0_1, %c0_2, %c0_3] : memref<1x12x2x12x20xbf16, #tpu.memory_space<vmem>>, vector<1x12x1x12x20xbf16>
    %1 = vector.shape_cast %0 : vector<1x12x1x12x20xbf16> to vector<12x12x20xbf16>
    %2 = arith.extf %1 : vector<12x12x20xbf16> to vector<12x12x20xf32>
    %c0_4 = arith.constant 0 : index
    %c0_5 = arith.constant 0 : index
    %c1 = arith.constant 1 : index
    %c0_6 = arith.constant 0 : index
    %c0_7 = arith.constant 0 : index
    %3 = vector.load %arg1[%c0_4, %c0_5, %c1, %c0_6, %c0_7] : memref<1x12x2x12x20xbf16, #tpu.memory_space<vmem>>, vector<1x12x1x12x20xbf16>
    %4 = vector.shape_cast %3 : vector<1x12x1x12x20xbf16> to vector<12x12x20xbf16>
    %5 = arith.extf %4 : vector<12x12x20xbf16> to vector<12x12x20xf32>
    %6 = arith.maximumf %2, %5 : vector<12x12x20xf32>
    %7 = vector.extract_strided_slice %6 {offsets = [0, 0, 0], sizes = [12, 12, 10], strides = [1, 1, 1]} : vector<12x12x20xf32> to vector<12x12x10xf32>
    %8 = vector.extract_strided_slice %6 {offsets = [0, 0, 10], sizes = [12, 12, 10], strides = [1, 1, 1]} : vector<12x12x20xf32> to vector<12x12x10xf32>
    %9 = arith.maximumf %7, %8 : vector<12x12x10xf32>
    %cst = arith.constant 0.000000e+00 : f32
    %10 = vector.broadcast %cst : f32 to vector<12x12x10xf32>
    %11 = arith.maximumf %9, %10 : vector<12x12x10xf32>
    %c0_8 = arith.constant 0 : index
    %c0_9 = arith.constant 0 : index
    %c0_10 = arith.constant 0 : index
    %c0_11 = arith.constant 0 : index
    %12 = vector.load %arg2[%c0_8, %c0_9, %c0_10, %c0_11] : memref<1x12x12x10xf32, #tpu.memory_space<vmem>>, vector<1x12x12x10xf32>
    %13 = vector.shape_cast %12 : vector<1x12x12x10xf32> to vector<12x12x10xf32>
    %14 = vector.shape_cast %11 : vector<12x12x10xf32> to vector<1x12x12x10xf32>
    tpu.vector_store %arg2[%c0_8, %c0_9, %c0_10, %c0_11], %14 {strides = array<i32>} : memref<1x12x12x10xf32, #tpu.memory_space<vmem>>, vector<1x12x12x10xf32>,
    return
  }
  func.func @transform_0(%arg0: i32) -> (i32, i32, i32, i32, i32) {
    %c0_i32 = arith.constant 0 : i32
    %c0_i32_0 = arith.constant 0 : i32
    %c0_i32_1 = arith.constant 0 : i32
    %c0_i32_2 = arith.constant 0 : i32
    %c0_i32_3 = arith.constant 0 : i32
    return %arg0, %c0_i32, %c0_i32_0, %c0_i32_1, %c0_i32_2 : i32, i32, i32, i32, i32
  }
  func.func @transform_1(%arg0: i32) -> (i32, i32, i32, i32) {
    %c0_i32 = arith.constant 0 : i32
    %c0_i32_0 = arith.constant 0 : i32
    %c0_i32_1 = arith.constant 0 : i32
    %c0_i32_2 = arith.constant 0 : i32
    return %arg0, %c0_i32, %c0_i32_0, %c0_i32_1 : i32, i32, i32, i32
  }
}

module attributes {stable_mosaic.version = 11 : i64} {
  func.func @_conv2_kernel(%arg0: i32, %arg1: memref<1x12x12x10xf32, #tpu.memory_space<vmem>>, %arg2: memref<250x20xf32, #tpu.memory_space<vmem>>, %arg3: memref<1x20xf32, #tpu.memory_space<vmem>>, %arg4: memref<1x64x20xbf16, #tpu.memory_space<vmem>>) attributes {dimension_semantics = [#tpu.dimension_semantics<parallel>], iteration_bounds = array<i64: 2>, scalar_prefetch = 0 : i64, scratch_operands = 0 : i64, tpu.core_type = #tpu.core_type<tc>, window_params = [{transform_indices = @transform_0, window_bounds = array<i64: 1, 12, 12, 10>}, {pipeline_mode = #tpu.pipeline_mode<synchronous>, transform_indices = @transform_1, window_bounds = array<i64: 250, 20>}, {pipeline_mode = #tpu.pipeline_mode<synchronous>, transform_indices = @transform_2, window_bounds = array<i64: 1, 20>}, {transform_indices = @transform_3, window_bounds = array<i64: 1, 64, 20>}]} {
    %c0 = arith.constant 0 : index
    %c0_0 = arith.constant 0 : index
    %c0_1 = arith.constant 0 : index
    %c0_2 = arith.constant 0 : index
    %0 = vector.load %arg1[%c0, %c0_0, %c0_1, %c0_2] : memref<1x12x12x10xf32, #tpu.memory_space<vmem>>, vector<1x12x12x10xf32>
    %1 = vector.shape_cast %0 : vector<1x12x12x10xf32> to vector<12x12x10xf32>
    %2 = vector.extract_strided_slice %1 {offsets = [0, 0, 0], sizes = [8, 8, 10], strides = [1, 1, 1]} : vector<12x12x10xf32> to vector<8x8x10xf32>
    %3 = vector.extract_strided_slice %1 {offsets = [0, 1, 0], sizes = [8, 8, 10], strides = [1, 1, 1]} : vector<12x12x10xf32> to vector<8x8x10xf32>
    %4 = vector.extract_strided_slice %1 {offsets = [0, 2, 0], sizes = [8, 8, 10], strides = [1, 1, 1]} : vector<12x12x10xf32> to vector<8x8x10xf32>
    %5 = vector.extract_strided_slice %1 {offsets = [0, 3, 0], sizes = [8, 8, 10], strides = [1, 1, 1]} : vector<12x12x10xf32> to vector<8x8x10xf32>
    %6 = vector.extract_strided_slice %1 {offsets = [0, 4, 0], sizes = [8, 8, 10], strides = [1, 1, 1]} : vector<12x12x10xf32> to vector<8x8x10xf32>
    %7 = vector.extract_strided_slice %1 {offsets = [1, 0, 0], sizes = [8, 8, 10], strides = [1, 1, 1]} : vector<12x12x10xf32> to vector<8x8x10xf32>
    %8 = vector.extract_strided_slice %1 {offsets = [1, 1, 0], sizes = [8, 8, 10], strides = [1, 1, 1]} : vector<12x12x10xf32> to vector<8x8x10xf32>
    %9 = vector.extract_strided_slice %1 {offsets = [1, 2, 0], sizes = [8, 8, 10], strides = [1, 1, 1]} : vector<12x12x10xf32> to vector<8x8x10xf32>
    %10 = vector.extract_strided_slice %1 {offsets = [1, 3, 0], sizes = [8, 8, 10], strides = [1, 1, 1]} : vector<12x12x10xf32> to vector<8x8x10xf32>
    %11 = vector.extract_strided_slice %1 {offsets = [1, 4, 0], sizes = [8, 8, 10], strides = [1, 1, 1]} : vector<12x12x10xf32> to vector<8x8x10xf32>
    %12 = vector.extract_strided_slice %1 {offsets = [2, 0, 0], sizes = [8, 8, 10], strides = [1, 1, 1]} : vector<12x12x10xf32> to vector<8x8x10xf32>
    %13 = vector.extract_strided_slice %1 {offsets = [2, 1, 0], sizes = [8, 8, 10], strides = [1, 1, 1]} : vector<12x12x10xf32> to vector<8x8x10xf32>
    %14 = vector.extract_strided_slice %1 {offsets = [2, 2, 0], sizes = [8, 8, 10], strides = [1, 1, 1]} : vector<12x12x10xf32> to vector<8x8x10xf32>
    %15 = vector.extract_strided_slice %1 {offsets = [2, 3, 0], sizes = [8, 8, 10], strides = [1, 1, 1]} : vector<12x12x10xf32> to vector<8x8x10xf32>
    %16 = vector.extract_strided_slice %1 {offsets = [2, 4, 0], sizes = [8, 8, 10], strides = [1, 1, 1]} : vector<12x12x10xf32> to vector<8x8x10xf32>
    %17 = vector.extract_strided_slice %1 {offsets = [3, 0, 0], sizes = [8, 8, 10], strides = [1, 1, 1]} : vector<12x12x10xf32> to vector<8x8x10xf32>
    %18 = vector.extract_strided_slice %1 {offsets = [3, 1, 0], sizes = [8, 8, 10], strides = [1, 1, 1]} : vector<12x12x10xf32> to vector<8x8x10xf32>
    %19 = vector.extract_strided_slice %1 {offsets = [3, 2, 0], sizes = [8, 8, 10], strides = [1, 1, 1]} : vector<12x12x10xf32> to vector<8x8x10xf32>
    %20 = vector.extract_strided_slice %1 {offsets = [3, 3, 0], sizes = [8, 8, 10], strides = [1, 1, 1]} : vector<12x12x10xf32> to vector<8x8x10xf32>
    %21 = vector.extract_strided_slice %1 {offsets = [3, 4, 0], sizes = [8, 8, 10], strides = [1, 1, 1]} : vector<12x12x10xf32> to vector<8x8x10xf32>
    %22 = vector.extract_strided_slice %1 {offsets = [4, 0, 0], sizes = [8, 8, 10], strides = [1, 1, 1]} : vector<12x12x10xf32> to vector<8x8x10xf32>
    %23 = vector.extract_strided_slice %1 {offsets = [4, 1, 0], sizes = [8, 8, 10], strides = [1, 1, 1]} : vector<12x12x10xf32> to vector<8x8x10xf32>
    %24 = vector.extract_strided_slice %1 {offsets = [4, 2, 0], sizes = [8, 8, 10], strides = [1, 1, 1]} : vector<12x12x10xf32> to vector<8x8x10xf32>
    %25 = vector.extract_strided_slice %1 {offsets = [4, 3, 0], sizes = [8, 8, 10], strides = [1, 1, 1]} : vector<12x12x10xf32> to vector<8x8x10xf32>
    %26 = vector.extract_strided_slice %1 {offsets = [4, 4, 0], sizes = [8, 8, 10], strides = [1, 1, 1]} : vector<12x12x10xf32> to vector<8x8x10xf32>
    %27 = tpu.concatenate %2, %3, %4, %5, %6, %7, %8, %9, %10, %11, %12, %13, %14, %15, %16, %17 in 2 : vector<8x8x10xf32>, vector<8x8x10xf32>, vector<8x8x10xf32>, vector<8x8x10xf32>, vector<8x8x10xf32>, vector<8x8x10xf32>, vector<8x8x10xf32>, vector<8x8x10xf32>, vector<8x8x10xf32>, vector<8x8x10xf32>, vector<8x8x10xf32>, vector<8x8x10xf32>, vector<8x8x10xf32>, vector<8x8x10xf32>, vector<8x8x10xf32>, vector<8x8x10xf32> -> vector<8x8x160xf32>
    %28 = tpu.concatenate %18, %19, %20, %21, %22, %23, %24, %25, %26 in 2 : vector<8x8x10xf32>, vector<8x8x10xf32>, vector<8x8x10xf32>, vector<8x8x10xf32>, vector<8x8x10xf32>, vector<8x8x10xf32>, vector<8x8x10xf32>, vector<8x8x10xf32>, vector<8x8x10xf32> -> vector<8x8x90xf32>
    %29 = tpu.concatenate %27, %28 in 2 : vector<8x8x160xf32>, vector<8x8x90xf32> -> vector<8x8x250xf32>
    %30 = vector.shape_cast %29 : vector<8x8x250xf32> to vector<64x250xf32>
    %c0_3 = arith.constant 0 : index
    %c0_4 = arith.constant 0 : index
    %31 = vector.load %arg2[%c0_3, %c0_4] : memref<250x20xf32, #tpu.memory_space<vmem>>, vector<250x20xf32>
    %cst = arith.constant dense<0.000000e+00> : vector<64x20xf32>
    %32 = tpu.matmul %30, %31, %cst {dimension_numbers = #tpu.dot_dimension_numbers<[1], [0], [0], [1], [0, 0, 1, 1], [], []>} : vector<64x250xf32>, vector<250x20xf32>, vector<64x20xf32> -> vector<64x20xf32>
    %c0_5 = arith.constant 0 : index
    %c0_6 = arith.constant 0 : index
    %33 = vector.load %arg3[%c0_5, %c0_6] : memref<1x20xf32, #tpu.memory_space<vmem>>, vector<1x20xf32>
    %34 = vector.broadcast %33 : vector<1x20xf32> to vector<64x20xf32>
    %35 = arith.addf %32, %34 : vector<64x20xf32>
    %36 = arith.truncf %35 : vector<64x20xf32> to vector<64x20xbf16>
    %c0_7 = arith.constant 0 : index
    %c0_8 = arith.constant 0 : index
    %c0_9 = arith.constant 0 : index
    %37 = vector.load %arg4[%c0_7, %c0_8, %c0_9] : memref<1x64x20xbf16, #tpu.memory_space<vmem>>, vector<1x64x20xbf16>
    %38 = vector.shape_cast %37 : vector<1x64x20xbf16> to vector<64x20xbf16>
    %39 = vector.shape_cast %36 : vector<64x20xbf16> to vector<1x64x20xbf16>
    tpu.vector_store %arg4[%c0_7, %c0_8, %c0_9], %39 {strides = array<i32>} : memref<1x64x20xbf16, #tpu.memory_space<vmem>>, vector<1x64x20xbf16>,
    return
  }
  func.func @transform_0(%arg0: i32) -> (i32, i32, i32, i32) {
    %c0_i32 = arith.constant 0 : i32
    %c0_i32_0 = arith.constant 0 : i32
    %c0_i32_1 = arith.constant 0 : i32
    %c0_i32_2 = arith.constant 0 : i32
    return %arg0, %c0_i32, %c0_i32_0, %c0_i32_1 : i32, i32, i32, i32
  }
  func.func @transform_1(%arg0: i32) -> (i32, i32) {
    %c0_i32 = arith.constant 0 : i32
    %c0_i32_0 = arith.constant 0 : i32
    %c0_i32_1 = arith.constant 0 : i32
    return %c0_i32, %c0_i32_0 : i32, i32
  }
  func.func @transform_2(%arg0: i32) -> (i32, i32) {
    %c0_i32 = arith.constant 0 : i32
    %c0_i32_0 = arith.constant 0 : i32
    %c0_i32_1 = arith.constant 0 : i32
    return %c0_i32, %c0_i32_0 : i32, i32
  }
  func.func @transform_3(%arg0: i32) -> (i32, i32, i32) {
    %c0_i32 = arith.constant 0 : i32
    %c0_i32_0 = arith.constant 0 : i32
    %c0_i32_1 = arith.constant 0 : i32
    return %arg0, %c0_i32, %c0_i32_0 : i32, i32, i32
  }
}

module attributes {stable_mosaic.version = 11 : i64} {
  func.func @_maxpool_relu_kernel(%arg0: i32, %arg1: memref<1x4x2x4x40xbf16, #tpu.memory_space<vmem>>, %arg2: memref<1x4x4x20xf32, #tpu.memory_space<vmem>>) attributes {dimension_semantics = [#tpu.dimension_semantics<parallel>], iteration_bounds = array<i64: 2>, scalar_prefetch = 0 : i64, scratch_operands = 0 : i64, tpu.core_type = #tpu.core_type<tc>, window_params = [{transform_indices = @transform_0, window_bounds = array<i64: 1, 4, 2, 4, 40>}, {transform_indices = @transform_1, window_bounds = array<i64: 1, 4, 4, 20>}]} {
    %c0 = arith.constant 0 : index
    %c0_0 = arith.constant 0 : index
    %c0_1 = arith.constant 0 : index
    %c0_2 = arith.constant 0 : index
    %c0_3 = arith.constant 0 : index
    %0 = vector.load %arg1[%c0, %c0_0, %c0_1, %c0_2, %c0_3] : memref<1x4x2x4x40xbf16, #tpu.memory_space<vmem>>, vector<1x4x1x4x40xbf16>
    %1 = vector.shape_cast %0 : vector<1x4x1x4x40xbf16> to vector<4x4x40xbf16>
    %2 = arith.extf %1 : vector<4x4x40xbf16> to vector<4x4x40xf32>
    %c0_4 = arith.constant 0 : index
    %c0_5 = arith.constant 0 : index
    %c1 = arith.constant 1 : index
    %c0_6 = arith.constant 0 : index
    %c0_7 = arith.constant 0 : index
    %3 = vector.load %arg1[%c0_4, %c0_5, %c1, %c0_6, %c0_7] : memref<1x4x2x4x40xbf16, #tpu.memory_space<vmem>>, vector<1x4x1x4x40xbf16>
    %4 = vector.shape_cast %3 : vector<1x4x1x4x40xbf16> to vector<4x4x40xbf16>
    %5 = arith.extf %4 : vector<4x4x40xbf16> to vector<4x4x40xf32>
    %6 = arith.maximumf %2, %5 : vector<4x4x40xf32>
    %7 = vector.extract_strided_slice %6 {offsets = [0, 0, 0], sizes = [4, 4, 20], strides = [1, 1, 1]} : vector<4x4x40xf32> to vector<4x4x20xf32>
    %8 = vector.extract_strided_slice %6 {offsets = [0, 0, 20], sizes = [4, 4, 20], strides = [1, 1, 1]} : vector<4x4x40xf32> to vector<4x4x20xf32>
    %9 = arith.maximumf %7, %8 : vector<4x4x20xf32>
    %cst = arith.constant 0.000000e+00 : f32
    %10 = vector.broadcast %cst : f32 to vector<4x4x20xf32>
    %11 = arith.maximumf %9, %10 : vector<4x4x20xf32>
    %c0_8 = arith.constant 0 : index
    %c0_9 = arith.constant 0 : index
    %c0_10 = arith.constant 0 : index
    %c0_11 = arith.constant 0 : index
    %12 = vector.load %arg2[%c0_8, %c0_9, %c0_10, %c0_11] : memref<1x4x4x20xf32, #tpu.memory_space<vmem>>, vector<1x4x4x20xf32>
    %13 = vector.shape_cast %12 : vector<1x4x4x20xf32> to vector<4x4x20xf32>
    %14 = vector.shape_cast %11 : vector<4x4x20xf32> to vector<1x4x4x20xf32>
    tpu.vector_store %arg2[%c0_8, %c0_9, %c0_10, %c0_11], %14 {strides = array<i32>} : memref<1x4x4x20xf32, #tpu.memory_space<vmem>>, vector<1x4x4x20xf32>,
    return
  }
  func.func @transform_0(%arg0: i32) -> (i32, i32, i32, i32, i32) {
    %c0_i32 = arith.constant 0 : i32
    %c0_i32_0 = arith.constant 0 : i32
    %c0_i32_1 = arith.constant 0 : i32
    %c0_i32_2 = arith.constant 0 : i32
    %c0_i32_3 = arith.constant 0 : i32
    return %arg0, %c0_i32, %c0_i32_0, %c0_i32_1, %c0_i32_2 : i32, i32, i32, i32, i32
  }
  func.func @transform_1(%arg0: i32) -> (i32, i32, i32, i32) {
    %c0_i32 = arith.constant 0 : i32
    %c0_i32_0 = arith.constant 0 : i32
    %c0_i32_1 = arith.constant 0 : i32
    %c0_i32_2 = arith.constant 0 : i32
    return %arg0, %c0_i32, %c0_i32_0, %c0_i32_1 : i32, i32, i32, i32
  }
}

module attributes {stable_mosaic.version = 11 : i64} {
  func.func @_fc_softmax_kernel(%arg0: i32, %arg1: memref<2x320xf32, #tpu.memory_space<vmem>>, %arg2: memref<320x50xf32, #tpu.memory_space<vmem>>, %arg3: memref<1x50xf32, #tpu.memory_space<vmem>>, %arg4: memref<50x10xf32, #tpu.memory_space<vmem>>, %arg5: memref<1x10xf32, #tpu.memory_space<vmem>>, %arg6: memref<2x10xf32, #tpu.memory_space<vmem>>) attributes {dimension_semantics = [#tpu.dimension_semantics<parallel>], iteration_bounds = array<i64: 1>, scalar_prefetch = 0 : i64, scratch_operands = 0 : i64, tpu.core_type = #tpu.core_type<tc>, window_params = [{transform_indices = @transform_0, window_bounds = array<i64: 2, 320>}, {pipeline_mode = #tpu.pipeline_mode<synchronous>, transform_indices = @transform_1, window_bounds = array<i64: 320, 50>}, {pipeline_mode = #tpu.pipeline_mode<synchronous>, transform_indices = @transform_2, window_bounds = array<i64: 1, 50>}, {pipeline_mode = #tpu.pipeline_mode<synchronous>, transform_indices = @transform_3, window_bounds = array<i64: 50, 10>}, {pipeline_mode = #tpu.pipeline_mode<synchronous>, transform_indices = @transform_4, window_bounds = array<i64: 1, 10>}, {transform_indices = @transform_5, window_bounds = array<i64: 2, 10>}]} {
    %c0 = arith.constant 0 : index
    %c0_0 = arith.constant 0 : index
    %0 = vector.load %arg1[%c0, %c0_0] : memref<2x320xf32, #tpu.memory_space<vmem>>, vector<2x320xf32>
    %c0_1 = arith.constant 0 : index
    %c0_2 = arith.constant 0 : index
    %1 = vector.load %arg2[%c0_1, %c0_2] : memref<320x50xf32, #tpu.memory_space<vmem>>, vector<320x50xf32>
    %cst = arith.constant dense<0.000000e+00> : vector<2x50xf32>
    %2 = tpu.matmul %0, %1, %cst {dimension_numbers = #tpu.dot_dimension_numbers<[1], [0], [0], [1], [0, 0, 1, 1], [], []>} : vector<2x320xf32>, vector<320x50xf32>, vector<2x50xf32> -> vector<2x50xf32>
    %c0_3 = arith.constant 0 : index
    %c0_4 = arith.constant 0 : index
    %3 = vector.load %arg3[%c0_3, %c0_4] : memref<1x50xf32, #tpu.memory_space<vmem>>, vector<1x50xf32>
    %4 = vector.broadcast %3 : vector<1x50xf32> to vector<2x50xf32>
    %5 = arith.addf %2, %4 : vector<2x50xf32>
    %cst_5 = arith.constant 0.000000e+00 : f32
    %6 = vector.broadcast %cst_5 : f32 to vector<2x50xf32>
    %7 = arith.maximumf %5, %6 : vector<2x50xf32>
    %c0_6 = arith.constant 0 : index
    %c0_7 = arith.constant 0 : index
    %8 = vector.load %arg4[%c0_6, %c0_7] : memref<50x10xf32, #tpu.memory_space<vmem>>, vector<50x10xf32>
    %cst_8 = arith.constant dense<0.000000e+00> : vector<2x10xf32>
    %9 = tpu.matmul %7, %8, %cst_8 {dimension_numbers = #tpu.dot_dimension_numbers<[1], [0], [0], [1], [0, 0, 1, 1], [], []>} : vector<2x50xf32>, vector<50x10xf32>, vector<2x10xf32> -> vector<2x10xf32>
    %c0_9 = arith.constant 0 : index
    %c0_10 = arith.constant 0 : index
    %10 = vector.load %arg5[%c0_9, %c0_10] : memref<1x10xf32, #tpu.memory_space<vmem>>, vector<1x10xf32>
    %11 = vector.broadcast %10 : vector<1x10xf32> to vector<2x10xf32>
    %12 = arith.addf %9, %11 : vector<2x10xf32>
    %cst_11 = arith.constant dense<0xFF800000> : vector<2xf32>
    %13 = vector.multi_reduction <maximumf>, %12, %cst_11 [1] : vector<2x10xf32> to vector<2xf32>
    %14 = vector.shape_cast %13 : vector<2xf32> to vector<2x1xf32>
    %15 = vector.broadcast %14 : vector<2x1xf32> to vector<2x10xf32>
    %16 = arith.subf %12, %15 : vector<2x10xf32>
    %17 = math.exp %16 : vector<2x10xf32>
    %cst_12 = arith.constant dense<0.000000e+00> : vector<2xf32>
    %18 = vector.multi_reduction <add>, %17, %cst_12 [1] : vector<2x10xf32> to vector<2xf32>
    %19 = vector.shape_cast %18 : vector<2xf32> to vector<2x1xf32>
    %20 = tpu.reciprocal %19 {approx = true} : vector<2x1xf32> -> vector<2x1xf32>
    %21 = vector.broadcast %20 : vector<2x1xf32> to vector<2x10xf32>
    %22 = arith.mulf %17, %21 : vector<2x10xf32>
    %c0_13 = arith.constant 0 : index
    %c0_14 = arith.constant 0 : index
    %23 = vector.load %arg6[%c0_13, %c0_14] : memref<2x10xf32, #tpu.memory_space<vmem>>, vector<2x10xf32>
    tpu.vector_store %arg6[%c0_13, %c0_14], %22 {strides = array<i32>} : memref<2x10xf32, #tpu.memory_space<vmem>>, vector<2x10xf32>,
    return
  }
  func.func @transform_0(%arg0: i32) -> (i32, i32) {
    %c0_i32 = arith.constant 0 : i32
    %c0_i32_0 = arith.constant 0 : i32
    return %arg0, %c0_i32 : i32, i32
  }
  func.func @transform_1(%arg0: i32) -> (i32, i32) {
    %c0_i32 = arith.constant 0 : i32
    %c0_i32_0 = arith.constant 0 : i32
    %c0_i32_1 = arith.constant 0 : i32
    return %c0_i32, %c0_i32_0 : i32, i32
  }
  func.func @transform_2(%arg0: i32) -> (i32, i32) {
    %c0_i32 = arith.constant 0 : i32
    %c0_i32_0 = arith.constant 0 : i32
    %c0_i32_1 = arith.constant 0 : i32
    return %c0_i32, %c0_i32_0 : i32, i32
  }
  func.func @transform_3(%arg0: i32) -> (i32, i32) {
    %c0_i32 = arith.constant 0 : i32
    %c0_i32_0 = arith.constant 0 : i32
    %c0_i32_1 = arith.constant 0 : i32
    return %c0_i32, %c0_i32_0 : i32, i32
  }
  func.func @transform_4(%arg0: i32) -> (i32, i32) {
    %c0_i32 = arith.constant 0 : i32
    %c0_i32_0 = arith.constant 0 : i32
    %c0_i32_1 = arith.constant 0 : i32
    return %c0_i32, %c0_i32_0 : i32, i32
  }
  func.func @transform_5(%arg0: i32) -> (i32, i32) {
    %c0_i32 = arith.constant 0 : i32
    %c0_i32_0 = arith.constant 0 : i32
    return %arg0, %c0_i32 : i32, i32
  }
}

</mosaic_0001>

<llo_original>
// kernel: neural_network_explainer_forward.6
$region0: #{neural_network_explainer_forward.6}
  #allocation0 [shape = 'u32[]', space=smem, size = 0x4, offset = 0x4, fixed_abs, tag = 'smem constant byte address 0x4 - core index']
  #allocation1 [shape = 'u32[144,128]{1,0:T(1,128)}', space=vmem, size = 0x12000, scoped, tag = 'internal scratch']
  %s0 = inlined_call_operand.vmem [shape: bf16[2,12,2,12,20], index: 0, kind: input, shape index: {}]
  %s1 = inlined_call_operand.vmem [shape: f32[2,12,12,10], index: 1, kind: output, shape index: {}]
  %s2 = sld [smem:[#allocation0]]
  $region37: #{neural_network_explainer_forward.6} parent=0
    _
  %s4 = ssub.s32 1, %s2
  %s5 = scalar_select 0, %s4, %s2
  loop: start=0, step=1, limit=4
  $region2: #{neural_network_explainer_forward.6} parent=0 // loop_pre_header
    _
  $region3: #{neural_network_explainer_forward.6} parent=0 // loop_header
    %s7 = sphi 0, %s11
    %p8 = scmp.ge.s32.totalorder %s7, 4
    %s17 = sphi 0, %s19
    %s20 = sphi 0, %s17
    %s21 = sphi 0, %s20
    %s37 = sphi 0, %s21
    %s43 = sphi 0, %s45
    %s46 = sphi 0, %s43
    %s47 = sphi 0, %s46
    %s63 = sphi 0, %s47
  $region4: #{neural_network_explainer_forward.6} parent=0 // loop_header_branch
    %10 = sbr.rel (%p8) target = $region8
  $region5: #{neural_network_explainer_forward.6} parent=0 // loop_body
    %s12 = ssub.s32 %s7, 1
    %s13 = ssub.s32 %s7, 2
    %s14 = sadd.s32 %s7, 1
    %s15 = ssub.s32 %s7, %s14
    %p16 = scmp.eq.s32.totalorder %s15, 0
    %s18 = sadd.s32 %s17, 1
    %s19 = scalar_select %p16, %s17, %s18
    %p22 = pneg %p16
    %p23 = scmp.eq.s32.totalorder %s7, 1
    %p24 = por %p22, %p23
    %p25 = scmp.ne.s32.totalorder %s17, %s20
    %p26 = scmp.eq.s32.totalorder %s7, 0
    %p27 = por %p25, %p26
    %p28 = scmp.ne.s32.totalorder %s17, %s20
    %p29 = scmp.eq.s32.totalorder %s12, 1
    %p30 = por %p28, %p29
    %p31 = scmp.ne.s32.totalorder %s20, %s21
    %p32 = scmp.eq.s32.totalorder %s12, 0
    %p33 = por %p31, %p32
    %p34 = scmp.ne.s32.totalorder %s20, %s21
    %p35 = scmp.eq.s32.totalorder %s13, 1
    %p36 = por %p34, %p35
    %p38 = scmp.ne.s32.totalorder %s21, %s37
    %p39 = scmp.eq.s32.totalorder %s13, 0
    %p40 = por %p38, %p39
    %s41 = ssub.s32 %s7, %s14
    %p42 = scmp.eq.s32.totalorder %s41, 0
    %s44 = sadd.s32 %s43, 1
    %s45 = scalar_select %p42, %s43, %s44
    %p48 = pneg %p42
    %p49 = scmp.eq.s32.totalorder %s7, 1
    %p50 = por %p48, %p49
    %p51 = scmp.ne.s32.totalorder %s43, %s46
    %p52 = scmp.eq.s32.totalorder %s7, 0
    %p53 = por %p51, %p52
    %p54 = scmp.ne.s32.totalorder %s43, %s46
    %p55 = scmp.eq.s32.totalorder %s12, 1
    %p56 = por %p54, %p55
    %p57 = scmp.ne.s32.totalorder %s46, %s47
    %p58 = scmp.eq.s32.totalorder %s12, 0
    %p59 = por %p57, %p58
    %p60 = scmp.ne.s32.totalorder %s46, %s47
    %p61 = scmp.eq.s32.totalorder %s13, 1
    %p62 = por %p60, %p61
    %p64 = scmp.ne.s32.totalorder %s47, %s63
    %p65 = scmp.eq.s32.totalorder %s13, 0
    %p66 = por %p64, %p65
    %p67 = scmp.le.s32.totalorder 1, %s7
    %p68 = scmp.lt.s32.totalorder %s7, 3
    %p69 = pnand %p67, %p68
    %p70 = pneg %p69
    // Predicated region
    $region9: #{neural_network_explainer_forward.6} parent=5 // pred_check
      _
    $region10: #{neural_network_explainer_forward.6} parent=5 // pred_check_branch
      %72 = sbr.rel (%p69) target = $region12
    $region11: #{neural_network_explainer_forward.6} parent=5 // pred_region
      %s73 = ssub.s32 %s7, 1
    $region12: #{neural_network_explainer_forward.6} parent=5 // pred_fallthru
      _
    %p74 = scmp.lt.s32.totalorder %s7, 2
    // Predicated region
    $region13: #{neural_network_explainer_forward.6} parent=5 // pred_check
      %p75 = pneg %p74
    $region14: #{neural_network_explainer_forward.6} parent=5 // pred_check_branch
      %77 = sbr.rel (%p75) target = $region16
    $region15: #{neural_network_explainer_forward.6} parent=5 // pred_region
      // Predicated region
      $region17: #{neural_network_explainer_forward.6} parent=15 // pred_check
        %p78 = pneg %p27
      $region18: #{neural_network_explainer_forward.6} parent=15 // pred_check_branch
        %80 = sbr.rel (%p78) target = $region20
      $region19: #{neural_network_explainer_forward.6} parent=15 // pred_region
        %p81 = scmp.lt.s32.totalorder %s7, 1
        %s82 = scalar_select %p81, %s7, 1
        %s83 = smul.addr %s82, 48
        %s84 = smul.addr %s83, 4
        %s85 = scalar_lea.vmem %s0, %s84
      $region20: #{neural_network_explainer_forward.6} parent=15 // pred_fallthru
        _
    $region16: #{neural_network_explainer_forward.6} parent=5 // pred_fallthru
      _
    %p86 = scmp.le.s32.totalorder 1, %s7
    %p87 = scmp.lt.s32.totalorder %s7, 3
    %p88 = pnand %p86, %p87
    %p89 = pneg %p88
    // Predicated region
    $region21: #{neural_network_explainer_forward.6} parent=5 // pred_check
      _
    $region22: #{neural_network_explainer_forward.6} parent=5 // pred_check_branch
      %91 = sbr.rel (%p88) target = $region24
    $region23: #{neural_network_explainer_forward.6} parent=5 // pred_region
      %s92 = ssub.s32 %s7, 1
      %p93 = scmp.lt.s32.totalorder %s12, 1
      %s94 = scalar_select %p93, %s12, 1
      %s95 = smul.addr %s94, 48
      %s96 = smul.addr %s95, 4
      %s97 = scalar_lea.vmem %s0, %s96
      %p98 = pneg %p33
      %p99 = pneg %p30
      %p100 = pneg %p59
      %p101 = pneg %p56
      %p102 = scmp.lt.s32.totalorder %s12, 1
      %s103 = scalar_select %p102, %s12, 1
      %s104 = smul.addr %s103, 24
      %s105 = smul.addr %s104, 8
      %s106 = scalar_lea.vmem %s1, %s105
      %p107 = scmp.lt.s32.totalorder %s12, 1
      %s108 = scalar_select %p107, %s12, 1
      %s109 = smul.addr %s108, 48
      %s110 = smul.addr %s109, 4
      %s111 = scalar_lea.vmem %s0, %s110
      %p112 = scmp.lt.s32.totalorder %s12, 1
      %s113 = scalar_select %p112, %s12, 1
      %s114 = smul.addr %s113, 24
      %s115 = smul.addr %s114, 8
      %s116 = scalar_lea.vmem %s1, %s115
      %v117 = vld [vmem:[%s111] sm:$0xf]
      %v118 = vld [vmem:[%s111 + $0x4] sm:$0x3]
      %v119 = vld [vmem:[%s111 + $0x10] sm:$0xf]
      %v120 = vld [vmem:[%s111 + $0x14] sm:$0x3]
      %v121 = vld [vmem:[%s111 + $0x20] sm:$0xf]
      %v122 = vld [vmem:[%s111 + $0x24] sm:$0x3]
      %v123 = vld [vmem:[%s111 + $0x30] sm:$0xf]
      %v124 = vld [vmem:[%s111 + $0x34] sm:$0x3]
      %v125 = vld [vmem:[%s111 + $0x40] sm:$0xf]
      %v126 = vld [vmem:[%s111 + $0x44] sm:$0x3]
      %v127 = vld [vmem:[%s111 + $0x50] sm:$0xf]
      %v128 = vld [vmem:[%s111 + $0x54] sm:$0x3]
      %v129 = vld [vmem:[%s111 + $0x60] sm:$0xf]
      %v130 = vld [vmem:[%s111 + $0x64] sm:$0x3]
      %v131 = vld [vmem:[%s111 + $0x70] sm:$0xf]
      %v132 = vld [vmem:[%s111 + $0x74] sm:$0x3]
      %v133 = vld [vmem:[%s111 + $0x80] sm:$0xf]
      %v134 = vld [vmem:[%s111 + $0x84] sm:$0x3]
      %v135 = vld [vmem:[%s111 + $0x90] sm:$0xf]
      %v136 = vld [vmem:[%s111 + $0x94] sm:$0x3]
      %v137 = vld [vmem:[%s111 + $0xa0] sm:$0xf]
      %v138 = vld [vmem:[%s111 + $0xa4] sm:$0x3]
      %v139 = vld [vmem:[%s111 + $0xb0] sm:$0xf]
      %v140 = vld [vmem:[%s111 + $0xb4] sm:$0x3]
      %v141 = vunpack.c.l.bf16 %v117
      %v142 = vunpack.c.l.bf16 %v118
      %v143 = vunpack.c.l.bf16 %v119
      %v144 = vunpack.c.l.bf16 %v120
      %v145 = vunpack.c.l.bf16 %v121
      %v146 = vunpack.c.l.bf16 %v122
      %v147 = vunpack.c.l.bf16 %v123
      %v148 = vunpack.c.l.bf16 %v124
      %v149 = vunpack.c.l.bf16 %v125
      %v150 = vunpack.c.l.bf16 %v126
      %v151 = vunpack.c.l.bf16 %v127
      %v152 = vunpack.c.l.bf16 %v128
      %v153 = vunpack.c.l.bf16 %v129
      %v154 = vunpack.c.l.bf16 %v130
      %v155 = vunpack.c.l.bf16 %v131
      %v156 = vunpack.c.l.bf16 %v132
      %v157 = vunpack.c.l.bf16 %v133
      %v158 = vunpack.c.l.bf16 %v134
      %v159 = vunpack.c.l.bf16 %v135
      %v160 = vunpack.c.l.bf16 %v136
      %v161 = vunpack.c.l.bf16 %v137
      %v162 = vunpack.c.l.bf16 %v138
      %v163 = vunpack.c.l.bf16 %v139
      %v164 = vunpack.c.l.bf16 %v140
      %s165 = scalar_lea.vmem %s111, 8
      %v166 = vld [vmem:[%s165] sm:$0xf]
      %v167 = vld [vmem:[%s165 + $0x4] sm:$0x3]
      %v168 = vld [vmem:[%s165 + $0x10] sm:$0xf]
      %v169 = vld [vmem:[%s165 + $0x14] sm:$0x3]
      %v170 = vld [vmem:[%s165 + $0x20] sm:$0xf]
      %v171 = vld [vmem:[%s165 + $0x24] sm:$0x3]
      %v172 = vld [vmem:[%s165 + $0x30] sm:$0xf]
      %v173 = vld [vmem:[%s165 + $0x34] sm:$0x3]
      %v174 = vld [vmem:[%s165 + $0x40] sm:$0xf]
      %v175 = vld [vmem:[%s165 + $0x44] sm:$0x3]
      %v176 = vld [vmem:[%s165 + $0x50] sm:$0xf]
      %v177 = vld [vmem:[%s165 + $0x54] sm:$0x3]
      %v178 = vld [vmem:[%s165 + $0x60] sm:$0xf]
      %v179 = vld [vmem:[%s165 + $0x64] sm:$0x3]
      %v180 = vld [vmem:[%s165 + $0x70] sm:$0xf]
      %v181 = vld [vmem:[%s165 + $0x74] sm:$0x3]
      %v182 = vld [vmem:[%s165 + $0x80] sm:$0xf]
      %v183 = vld [vmem:[%s165 + $0x84] sm:$0x3]
      %v184 = vld [vmem:[%s165 + $0x90] sm:$0xf]
      %v185 = vld [vmem:[%s165 + $0x94] sm:$0x3]
      %v186 = vld [vmem:[%s165 + $0xa0] sm:$0xf]
      %v187 = vld [vmem:[%s165 + $0xa4] sm:$0x3]
      %v188 = vld [vmem:[%s165 + $0xb0] sm:$0xf]
      %v189 = vld [vmem:[%s165 + $0xb4] sm:$0x3]
      %v190 = vunpack.c.l.bf16 %v166
      %v191 = vunpack.c.l.bf16 %v167
      %v192 = vunpack.c.l.bf16 %v168
      %v193 = vunpack.c.l.bf16 %v169
      %v194 = vunpack.c.l.bf16 %v170
      %v195 = vunpack.c.l.bf16 %v171
      %v196 = vunpack.c.l.bf16 %v172
      %v197 = vunpack.c.l.bf16 %v173
      %v198 = vunpack.c.l.bf16 %v174
      %v199 = vunpack.c.l.bf16 %v175
      %v200 = vunpack.c.l.bf16 %v176
      %v201 = vunpack.c.l.bf16 %v177
      %v202 = vunpack.c.l.bf16 %v178
      %v203 = vunpack.c.l.bf16 %v179
      %v204 = vunpack.c.l.bf16 %v180
      %v205 = vunpack.c.l.bf16 %v181
      %v206 = vunpack.c.l.bf16 %v182
      %v207 = vunpack.c.l.bf16 %v183
      %v208 = vunpack.c.l.bf16 %v184
      %v209 = vunpack.c.l.bf16 %v185
      %v210 = vunpack.c.l.bf16 %v186
      %v211 = vunpack.c.l.bf16 %v187
      %v212 = vunpack.c.l.bf16 %v188
      %v213 = vunpack.c.l.bf16 %v189
      %v214 = vmax.f32 %v141, %v190
      %v215 = vmax.f32 %v142, %v191
      %v216 = vmax.f32 %v143, %v192
      %v217 = vmax.f32 %v144, %v193
      %v218 = vmax.f32 %v145, %v194
      %v219 = vmax.f32 %v146, %v195
      %v220 = vmax.f32 %v147, %v196
      %v221 = vmax.f32 %v148, %v197
      %v222 = vmax.f32 %v149, %v198
      %v223 = vmax.f32 %v150, %v199
      %v224 = vmax.f32 %v151, %v200
      %v225 = vmax.f32 %v152, %v201
      %v226 = vmax.f32 %v153, %v202
      %v227 = vmax.f32 %v154, %v203
      %v228 = vmax.f32 %v155, %v204
      %v229 = vmax.f32 %v156, %v205
      %v230 = vmax.f32 %v157, %v206
      %v231 = vmax.f32 %v158, %v207
      %v232 = vmax.f32 %v159, %v208
      %v233 = vmax.f32 %v160, %v209
      %v234 = vmax.f32 %v161, %v210
      %v235 = vmax.f32 %v162, %v211
      %v236 = vmax.f32 %v163, %v212
      %v237 = vmax.f32 %v164, %v213
      %262 = vrot.lane.b32.xlu0 %v214, 118
      %v263 = vpop.permute.xlu0 %262
      %264 = vrot.lane.b32.xlu0 %v215, 118
      %v265 = vpop.permute.xlu0 %264
      %266 = vrot.lane.b32.xlu0 %v216, 118
      %v267 = vpop.permute.xlu0 %266
      %268 = vrot.lane.b32.xlu0 %v217, 118
      %v269 = vpop.permute.xlu0 %268
      %270 = vrot.lane.b32.xlu0 %v218, 118
      %v271 = vpop.permute.xlu0 %270
      %272 = vrot.lane.b32.xlu0 %v219, 118
      %v273 = vpop.permute.xlu0 %272
      %274 = vrot.lane.b32.xlu0 %v220, 118
      %v275 = vpop.permute.xlu0 %274
      %276 = vrot.lane.b32.xlu0 %v221, 118
      %v277 = vpop.permute.xlu0 %276
      %278 = vrot.lane.b32.xlu0 %v222, 118
      %v279 = vpop.permute.xlu0 %278
      %280 = vrot.lane.b32.xlu0 %v223, 118
      %v281 = vpop.permute.xlu0 %280
      %282 = vrot.lane.b32.xlu0 %v224, 118
      %v283 = vpop.permute.xlu0 %282
      %284 = vrot.lane.b32.xlu0 %v225, 118
      %v285 = vpop.permute.xlu0 %284
      %286 = vrot.lane.b32.xlu0 %v226, 118
      %v287 = vpop.permute.xlu0 %286
      %288 = vrot.lane.b32.xlu0 %v227, 118
      %v289 = vpop.permute.xlu0 %288
      %290 = vrot.lane.b32.xlu0 %v228, 118
      %v291 = vpop.permute.xlu0 %290
      %292 = vrot.lane.b32.xlu0 %v229, 118
      %v293 = vpop.permute.xlu0 %292
      %294 = vrot.lane.b32.xlu0 %v230, 118
      %v295 = vpop.permute.xlu0 %294
      %296 = vrot.lane.b32.xlu0 %v231, 118
      %v297 = vpop.permute.xlu0 %296
      %298 = vrot.lane.b32.xlu0 %v232, 118
      %v299 = vpop.permute.xlu0 %298
      %300 = vrot.lane.b32.xlu0 %v233, 118
      %v301 = vpop.permute.xlu0 %300
      %302 = vrot.lane.b32.xlu0 %v234, 118
      %v303 = vpop.permute.xlu0 %302
      %304 = vrot.lane.b32.xlu0 %v235, 118
      %v305 = vpop.permute.xlu0 %304
      %306 = vrot.lane.b32.xlu0 %v236, 118
      %v307 = vpop.permute.xlu0 %306
      %308 = vrot.lane.b32.xlu0 %v237, 118
      %v309 = vpop.permute.xlu0 %308
      %v334 = vmax.f32 %v214, %v263
      %v335 = vmax.f32 %v215, %v265
      %v336 = vmax.f32 %v216, %v267
      %v337 = vmax.f32 %v217, %v269
      %v338 = vmax.f32 %v218, %v271
      %v339 = vmax.f32 %v219, %v273
      %v340 = vmax.f32 %v220, %v275
      %v341 = vmax.f32 %v221, %v277
      %v342 = vmax.f32 %v222, %v279
      %v343 = vmax.f32 %v223, %v281
      %v344 = vmax.f32 %v224, %v283
      %v345 = vmax.f32 %v225, %v285
      %v346 = vmax.f32 %v226, %v287
      %v347 = vmax.f32 %v227, %v289
      %v348 = vmax.f32 %v228, %v291
      %v349 = vmax.f32 %v229, %v293
      %v350 = vmax.f32 %v230, %v295
      %v351 = vmax.f32 %v231, %v297
      %v352 = vmax.f32 %v232, %v299
      %v353 = vmax.f32 %v233, %v301
      %v354 = vmax.f32 %v234, %v303
      %v355 = vmax.f32 %v235, %v305
      %v356 = vmax.f32 %v236, %v307
      %v357 = vmax.f32 %v237, %v309
      %v358 = vmax.f32 %v334, 0.0
      %v359 = vmax.f32 %v335, 0.0
      %v360 = vmax.f32 %v336, 0.0
      %v361 = vmax.f32 %v337, 0.0
      %v362 = vmax.f32 %v338, 0.0
      %v363 = vmax.f32 %v339, 0.0
      %v364 = vmax.f32 %v340, 0.0
      %v365 = vmax.f32 %v341, 0.0
      %v366 = vmax.f32 %v342, 0.0
      %v367 = vmax.f32 %v343, 0.0
      %v368 = vmax.f32 %v344, 0.0
      %v369 = vmax.f32 %v345, 0.0
      %v370 = vmax.f32 %v346, 0.0
      %v371 = vmax.f32 %v347, 0.0
      %v372 = vmax.f32 %v348, 0.0
      %v373 = vmax.f32 %v349, 0.0
      %v374 = vmax.f32 %v350, 0.0
      %v375 = vmax.f32 %v351, 0.0
      %v376 = vmax.f32 %v352, 0.0
      %v377 = vmax.f32 %v353, 0.0
      %v378 = vmax.f32 %v354, 0.0
      %v379 = vmax.f32 %v355, 0.0
      %v380 = vmax.f32 %v356, 0.0
      %v381 = vmax.f32 %v357, 0.0
      %vm382 = vcmask 80896
      %383 = vst.msk [vmem:[%s116] sm:$0xff] %vm382, %v358
      %vm384 = vcmask 76800
      %385 = vst.msk [vmem:[%s116 + $0x8] sm:$0xf] %vm384, %v359
      %386 = vst.msk [vmem:[%s116 + $0x10] sm:$0xff] %vm382, %v360
      %387 = vst.msk [vmem:[%s116 + $0x18] sm:$0xf] %vm384, %v361
      %388 = vst.msk [vmem:[%s116 + $0x20] sm:$0xff] %vm382, %v362
      %389 = vst.msk [vmem:[%s116 + $0x28] sm:$0xf] %vm384, %v363
      %390 = vst.msk [vmem:[%s116 + $0x30] sm:$0xff] %vm382, %v364
      %391 = vst.msk [vmem:[%s116 + $0x38] sm:$0xf] %vm384, %v365
      %392 = vst.msk [vmem:[%s116 + $0x40] sm:$0xff] %vm382, %v366
      %393 = vst.msk [vmem:[%s116 + $0x48] sm:$0xf] %vm384, %v367
      %394 = vst.msk [vmem:[%s116 + $0x50] sm:$0xff] %vm382, %v368
      %395 = vst.msk [vmem:[%s116 + $0x58] sm:$0xf] %vm384, %v369
      %396 = vst.msk [vmem:[%s116 + $0x60] sm:$0xff] %vm382, %v370
      %397 = vst.msk [vmem:[%s116 + $0x68] sm:$0xf] %vm384, %v371
      %398 = vst.msk [vmem:[%s116 + $0x70] sm:$0xff] %vm382, %v372
      %399 = vst.msk [vmem:[%s116 + $0x78] sm:$0xf] %vm384, %v373
      %400 = vst.msk [vmem:[%s116 + $0x80] sm:$0xff] %vm382, %v374
      %401 = vst.msk [vmem:[%s116 + $0x88] sm:$0xf] %vm384, %v375
      %402 = vst.msk [vmem:[%s116 + $0x90] sm:$0xff] %vm382, %v376
      %403 = vst.msk [vmem:[%s116 + $0x98] sm:$0xf] %vm384, %v377
      %404 = vst.msk [vmem:[%s116 + $0xa0] sm:$0xff] %vm382, %v378
      %405 = vst.msk [vmem:[%s116 + $0xa8] sm:$0xf] %vm384, %v379
      %406 = vst.msk [vmem:[%s116 + $0xb0] sm:$0xff] %vm382, %v380
      %407 = vst.msk [vmem:[%s116 + $0xb8] sm:$0xf] %vm384, %v381
      %p408 = scmp.lt.s32.totalorder %s12, 1
      %s409 = scalar_select %p408, %s12, 1
      %s410 = smul.addr %s409, 24
      %s411 = smul.addr %s410, 8
      %s412 = scalar_lea.vmem %s1, %s411
      // Predicated region
      $region25: #{neural_network_explainer_forward.6} parent=23 // pred_check
        %p413 = pneg %p56
      $region26: #{neural_network_explainer_forward.6} parent=23 // pred_check_branch
        %415 = sbr.rel (%p413) target = $region28
      $region27: #{neural_network_explainer_forward.6} parent=23 // pred_region
        _
      $region28: #{neural_network_explainer_forward.6} parent=23 // pred_fallthru
        _
    $region24: #{neural_network_explainer_forward.6} parent=5 // pred_fallthru
      _
    %p416 = scmp.le.s32.totalorder 2, %s7
    // Predicated region
    $region29: #{neural_network_explainer_forward.6} parent=5 // pred_check
      %p417 = pneg %p416
    $region30: #{neural_network_explainer_forward.6} parent=5 // pred_check_branch
      %419 = sbr.rel (%p417) target = $region32
    $region31: #{neural_network_explainer_forward.6} parent=5 // pred_region
      %s420 = ssub.s32 %s7, 2
      // Predicated region
      $region33: #{neural_network_explainer_forward.6} parent=31 // pred_check
        %p421 = pneg %p62
      $region34: #{neural_network_explainer_forward.6} parent=31 // pred_check_branch
        %423 = sbr.rel (%p421) target = $region36
      $region35: #{neural_network_explainer_forward.6} parent=31 // pred_region
        %p424 = scmp.lt.s32.totalorder %s13, 1
        %s425 = scalar_select %p424, %s13, 1
        %s426 = smul.addr %s425, 24
        %s427 = smul.addr %s426, 8
        %s428 = scalar_lea.vmem %s1, %s427
      $region36: #{neural_network_explainer_forward.6} parent=31 // pred_fallthru
        _
    $region32: #{neural_network_explainer_forward.6} parent=5 // pred_fallthru
      _
  $region6: #{neural_network_explainer_forward.6} parent=0 // loop_footer
    %s11 = sadd.s32 1, %s7
  $region7: #{neural_network_explainer_forward.6} parent=0 // loop_footer_branch
    %6 = sbr.rel target = $region3
  $region8: #{neural_network_explainer_forward.6} parent=0 // loop_exit
    _

// kernel: neural_network_explainer_forward.8
$region0: #{neural_network_explainer_forward.8}
  #allocation0 [shape = 'u32[]', space=smem, size = 0x4, offset = 0x4, fixed_abs, tag = 'smem constant byte address 0x4 - core index']
  #allocation1 [shape = 'u32[144,128]{1,0:T(1,128)}', space=vmem, size = 0x12000, scoped, tag = 'internal scratch']
  %s0 = inlined_call_operand.vmem [shape: bf16[2,4,2,4,40], index: 0, kind: input, shape index: {}]
  %s1 = inlined_call_operand.vmem [shape: f32[2,4,4,20], index: 1, kind: output, shape index: {}]
  %s2 = sld [smem:[#allocation0]]
  $region37: #{neural_network_explainer_forward.8} parent=0
    _
  %s4 = ssub.s32 1, %s2
  %s5 = scalar_select 0, %s4, %s2
  loop: start=0, step=1, limit=4
  $region2: #{neural_network_explainer_forward.8} parent=0 // loop_pre_header
    _
  $region3: #{neural_network_explainer_forward.8} parent=0 // loop_header
    %s7 = sphi 0, %s11
    %p8 = scmp.ge.s32.totalorder %s7, 4
    %s17 = sphi 0, %s19
    %s20 = sphi 0, %s17
    %s21 = sphi 0, %s20
    %s37 = sphi 0, %s21
    %s43 = sphi 0, %s45
    %s46 = sphi 0, %s43
    %s47 = sphi 0, %s46
    %s63 = sphi 0, %s47
  $region4: #{neural_network_explainer_forward.8} parent=0 // loop_header_branch
    %10 = sbr.rel (%p8) target = $region8
  $region5: #{neural_network_explainer_forward.8} parent=0 // loop_body
    %s12 = ssub.s32 %s7, 1
    %s13 = ssub.s32 %s7, 2
    %s14 = sadd.s32 %s7, 1
    %s15 = ssub.s32 %s7, %s14
    %p16 = scmp.eq.s32.totalorder %s15, 0
    %s18 = sadd.s32 %s17, 1
    %s19 = scalar_select %p16, %s17, %s18
    %p22 = pneg %p16
    %p23 = scmp.eq.s32.totalorder %s7, 1
    %p24 = por %p22, %p23
    %p25 = scmp.ne.s32.totalorder %s17, %s20
    %p26 = scmp.eq.s32.totalorder %s7, 0
    %p27 = por %p25, %p26
    %p28 = scmp.ne.s32.totalorder %s17, %s20
    %p29 = scmp.eq.s32.totalorder %s12, 1
    %p30 = por %p28, %p29
    %p31 = scmp.ne.s32.totalorder %s20, %s21
    %p32 = scmp.eq.s32.totalorder %s12, 0
    %p33 = por %p31, %p32
    %p34 = scmp.ne.s32.totalorder %s20, %s21
    %p35 = scmp.eq.s32.totalorder %s13, 1
    %p36 = por %p34, %p35
    %p38 = scmp.ne.s32.totalorder %s21, %s37
    %p39 = scmp.eq.s32.totalorder %s13, 0
    %p40 = por %p38, %p39
    %s41 = ssub.s32 %s7, %s14
    %p42 = scmp.eq.s32.totalorder %s41, 0
    %s44 = sadd.s32 %s43, 1
    %s45 = scalar_select %p42, %s43, %s44
    %p48 = pneg %p42
    %p49 = scmp.eq.s32.totalorder %s7, 1
    %p50 = por %p48, %p49
    %p51 = scmp.ne.s32.totalorder %s43, %s46
    %p52 = scmp.eq.s32.totalorder %s7, 0
    %p53 = por %p51, %p52
    %p54 = scmp.ne.s32.totalorder %s43, %s46
    %p55 = scmp.eq.s32.totalorder %s12, 1
    %p56 = por %p54, %p55
    %p57 = scmp.ne.s32.totalorder %s46, %s47
    %p58 = scmp.eq.s32.totalorder %s12, 0
    %p59 = por %p57, %p58
    %p60 = scmp.ne.s32.totalorder %s46, %s47
    %p61 = scmp.eq.s32.totalorder %s13, 1
    %p62 = por %p60, %p61
    %p64 = scmp.ne.s32.totalorder %s47, %s63
    %p65 = scmp.eq.s32.totalorder %s13, 0
    %p66 = por %p64, %p65
    %p67 = scmp.le.s32.totalorder 1, %s7
    %p68 = scmp.lt.s32.totalorder %s7, 3
    %p69 = pnand %p67, %p68
    %p70 = pneg %p69
    // Predicated region
    $region9: #{neural_network_explainer_forward.8} parent=5 // pred_check
      _
    $region10: #{neural_network_explainer_forward.8} parent=5 // pred_check_branch
      %72 = sbr.rel (%p69) target = $region12
    $region11: #{neural_network_explainer_forward.8} parent=5 // pred_region
      %s73 = ssub.s32 %s7, 1
    $region12: #{neural_network_explainer_forward.8} parent=5 // pred_fallthru
      _
    %p74 = scmp.lt.s32.totalorder %s7, 2
    // Predicated region
    $region13: #{neural_network_explainer_forward.8} parent=5 // pred_check
      %p75 = pneg %p74
    $region14: #{neural_network_explainer_forward.8} parent=5 // pred_check_branch
      %77 = sbr.rel (%p75) target = $region16
    $region15: #{neural_network_explainer_forward.8} parent=5 // pred_region
      // Predicated region
      $region17: #{neural_network_explainer_forward.8} parent=15 // pred_check
        %p78 = pneg %p27
      $region18: #{neural_network_explainer_forward.8} parent=15 // pred_check_branch
        %80 = sbr.rel (%p78) target = $region20
      $region19: #{neural_network_explainer_forward.8} parent=15 // pred_region
        %p81 = scmp.lt.s32.totalorder %s7, 1
        %s82 = scalar_select %p81, %s7, 1
        %s83 = smul.addr %s82, 8
        %s84 = smul.addr %s83, 2
        %s85 = scalar_lea.vmem %s0, %s84
      $region20: #{neural_network_explainer_forward.8} parent=15 // pred_fallthru
        _
    $region16: #{neural_network_explainer_forward.8} parent=5 // pred_fallthru
      _
    %p86 = scmp.le.s32.totalorder 1, %s7
    %p87 = scmp.lt.s32.totalorder %s7, 3
    %p88 = pnand %p86, %p87
    %p89 = pneg %p88
    // Predicated region
    $region21: #{neural_network_explainer_forward.8} parent=5 // pred_check
      _
    $region22: #{neural_network_explainer_forward.8} parent=5 // pred_check_branch
      %91 = sbr.rel (%p88) target = $region24
    $region23: #{neural_network_explainer_forward.8} parent=5 // pred_region
      %s92 = ssub.s32 %s7, 1
      %p93 = scmp.lt.s32.totalorder %s12, 1
      %s94 = scalar_select %p93, %s12, 1
      %s95 = smul.addr %s94, 8
      %s96 = smul.addr %s95, 2
      %s97 = scalar_lea.vmem %s0, %s96
      %p98 = pneg %p33
      %p99 = pneg %p30
      %p100 = pneg %p59
      %p101 = pneg %p56
      %p102 = scmp.lt.s32.totalorder %s12, 1
      %s103 = scalar_select %p102, %s12, 1
      %s104 = smul.addr %s103, 4
      %s105 = smul.addr %s104, 4
      %s106 = scalar_lea.vmem %s1, %s105
      %p107 = scmp.lt.s32.totalorder %s12, 1
      %s108 = scalar_select %p107, %s12, 1
      %s109 = smul.addr %s108, 8
      %s110 = smul.addr %s109, 2
      %s111 = scalar_lea.vmem %s0, %s110
      %p112 = scmp.lt.s32.totalorder %s12, 1
      %s113 = scalar_select %p112, %s12, 1
      %s114 = smul.addr %s113, 4
      %s115 = smul.addr %s114, 4
      %s116 = scalar_lea.vmem %s1, %s115
      %v117 = vld [vmem:[%s111] sm:$0x3]
      %v118 = vld [vmem:[%s111 + $0x4] sm:$0x3]
      %v119 = vld [vmem:[%s111 + $0x8] sm:$0x3]
      %v120 = vld [vmem:[%s111 + $0xc] sm:$0x3]
      %v121 = vunpack.c.l.bf16 %v117
      %v122 = vunpack.c.l.bf16 %v118
      %v123 = vunpack.c.l.bf16 %v119
      %v124 = vunpack.c.l.bf16 %v120
      %s125 = scalar_lea.vmem %s111, 2
      %v126 = vld [vmem:[%s125] sm:$0x3]
      %v127 = vld [vmem:[%s125 + $0x4] sm:$0x3]
      %v128 = vld [vmem:[%s125 + $0x8] sm:$0x3]
      %v129 = vld [vmem:[%s125 + $0xc] sm:$0x3]
      %v130 = vunpack.c.l.bf16 %v126
      %v131 = vunpack.c.l.bf16 %v127
      %v132 = vunpack.c.l.bf16 %v128
      %v133 = vunpack.c.l.bf16 %v129
      %v134 = vmax.f32 %v121, %v130
      %v135 = vmax.f32 %v122, %v131
      %v136 = vmax.f32 %v123, %v132
      %v137 = vmax.f32 %v124, %v133
      %142 = vrot.lane.b32.xlu0 %v134, 108
      %v143 = vpop.permute.xlu0 %142
      %144 = vrot.lane.b32.xlu0 %v135, 108
      %v145 = vpop.permute.xlu0 %144
      %146 = vrot.lane.b32.xlu0 %v136, 108
      %v147 = vpop.permute.xlu0 %146
      %148 = vrot.lane.b32.xlu0 %v137, 108
      %v149 = vpop.permute.xlu0 %148
      %v154 = vmax.f32 %v134, %v143
      %v155 = vmax.f32 %v135, %v145
      %v156 = vmax.f32 %v136, %v147
      %v157 = vmax.f32 %v137, %v149
      %v158 = vmax.f32 %v154, 0.0
      %v159 = vmax.f32 %v155, 0.0
      %v160 = vmax.f32 %v156, 0.0
      %v161 = vmax.f32 %v157, 0.0
      %vm162 = vcmask 158720
      %163 = vst.msk [vmem:[%s116] sm:$0xf] %vm162, %v158
      %164 = vst.msk [vmem:[%s116 + $0x4] sm:$0xf] %vm162, %v159
      %165 = vst.msk [vmem:[%s116 + $0x8] sm:$0xf] %vm162, %v160
      %166 = vst.msk [vmem:[%s116 + $0xc] sm:$0xf] %vm162, %v161
      %p167 = scmp.lt.s32.totalorder %s12, 1
      %s168 = scalar_select %p167, %s12, 1
      %s169 = smul.addr %s168, 4
      %s170 = smul.addr %s169, 4
      %s171 = scalar_lea.vmem %s1, %s170
      // Predicated region
      $region25: #{neural_network_explainer_forward.8} parent=23 // pred_check
        %p172 = pneg %p56
      $region26: #{neural_network_explainer_forward.8} parent=23 // pred_check_branch
        %174 = sbr.rel (%p172) target = $region28
      $region27: #{neural_network_explainer_forward.8} parent=23 // pred_region
        _
      $region28: #{neural_network_explainer_forward.8} parent=23 // pred_fallthru
        _
    $region24: #{neural_network_explainer_forward.8} parent=5 // pred_fallthru
      _
    %p175 = scmp.le.s32.totalorder 2, %s7
    // Predicated region
    $region29: #{neural_network_explainer_forward.8} parent=5 // pred_check
      %p176 = pneg %p175
    $region30: #{neural_network_explainer_forward.8} parent=5 // pred_check_branch
      %178 = sbr.rel (%p176) target = $region32
    $region31: #{neural_network_explainer_forward.8} parent=5 // pred_region
      %s179 = ssub.s32 %s7, 2
      // Predicated region
      $region33: #{neural_network_explainer_forward.8} parent=31 // pred_check
        %p180 = pneg %p62
      $region34: #{neural_network_explainer_forward.8} parent=31 // pred_check_branch
        %182 = sbr.rel (%p180) target = $region36
      $region35: #{neural_network_explainer_forward.8} parent=31 // pred_region
        %p183 = scmp.lt.s32.totalorder %s13, 1
        %s184 = scalar_select %p183, %s13, 1
        %s185 = smul.addr %s184, 4
        %s186 = smul.addr %s185, 4
        %s187 = scalar_lea.vmem %s1, %s186
      $region36: #{neural_network_explainer_forward.8} parent=31 // pred_fallthru
        _
    $region32: #{neural_network_explainer_forward.8} parent=5 // pred_fallthru
      _
  $region6: #{neural_network_explainer_forward.8} parent=0 // loop_footer
    %s11 = sadd.s32 1, %s7
  $region7: #{neural_network_explainer_forward.8} parent=0 // loop_footer_branch
    %6 = sbr.rel target = $region3
  $region8: #{neural_network_explainer_forward.8} parent=0 // loop_exit
    _

// kernel: neural_network_explainer_forward.7
$region0: #{neural_network_explainer_forward.7}
  #allocation0 [shape = 'u32[]', space=smem, size = 0x4, offset = 0x4, fixed_abs, tag = 'smem constant byte address 0x4 - core index']
  #allocation1 [shape = 'u32[144,128]{1,0:T(1,128)}', space=vmem, size = 0x12000, scoped, tag = 'internal scratch']
  %s0 = inlined_call_operand.vmem [shape: f32[2,12,12,10], index: 0, kind: input, shape index: {}]
  %s1 = inlined_call_operand.vmem [shape: f32[250,20], index: 1, kind: input, shape index: {}]
  %s2 = inlined_call_operand.vmem [shape: f32[1,20], index: 2, kind: input, shape index: {}]
  %s3 = inlined_call_operand.vmem [shape: bf16[2,64,20], index: 3, kind: output, shape index: {}]
  %s4 = sld [smem:[#allocation0]]
  $region45: #{neural_network_explainer_forward.7} parent=0
    _
  %s6 = ssub.s32 1, %s4
  %s7 = scalar_select 0, %s6, %s4
  loop: start=0, step=1, limit=4
  $region2: #{neural_network_explainer_forward.7} parent=0 // loop_pre_header
    _
  $region3: #{neural_network_explainer_forward.7} parent=0 // loop_header
    %s9 = sphi 0, %s13
    %p10 = scmp.ge.s32.totalorder %s9, 4
    %s19 = sphi 0, %s21
    %s22 = sphi 0, %s19
    %s23 = sphi 0, %s22
    %s39 = sphi 0, %s23
    %s43 = sphi 0, %s43
    %s45 = sphi 0, %s43
    %s46 = sphi 0, %s45
    %s60 = sphi 0, %s46
    %s64 = sphi 0, %s64
    %s66 = sphi 0, %s64
    %s67 = sphi 0, %s66
    %s81 = sphi 0, %s67
    %s87 = sphi 0, %s89
    %s90 = sphi 0, %s87
    %s91 = sphi 0, %s90
    %s107 = sphi 0, %s91
  $region4: #{neural_network_explainer_forward.7} parent=0 // loop_header_branch
    %12 = sbr.rel (%p10) target = $region8
  $region5: #{neural_network_explainer_forward.7} parent=0 // loop_body
    %s14 = ssub.s32 %s9, 1
    %s15 = ssub.s32 %s9, 2
    %s16 = sadd.s32 %s9, 1
    %s17 = ssub.s32 %s9, %s16
    %p18 = scmp.eq.s32.totalorder %s17, 0
    %s20 = sadd.s32 %s19, 1
    %s21 = scalar_select %p18, %s19, %s20
    %p24 = pneg %p18
    %p25 = scmp.eq.s32.totalorder %s9, 1
    %p26 = por %p24, %p25
    %p27 = scmp.ne.s32.totalorder %s19, %s22
    %p28 = scmp.eq.s32.totalorder %s9, 0
    %p29 = por %p27, %p28
    %p30 = scmp.ne.s32.totalorder %s19, %s22
    %p31 = scmp.eq.s32.totalorder %s14, 1
    %p32 = por %p30, %p31
    %p33 = scmp.ne.s32.totalorder %s22, %s23
    %p34 = scmp.eq.s32.totalorder %s14, 0
    %p35 = por %p33, %p34
    %p36 = scmp.ne.s32.totalorder %s22, %s23
    %p37 = scmp.eq.s32.totalorder %s15, 1
    %p38 = por %p36, %p37
    %p40 = scmp.ne.s32.totalorder %s23, %s39
    %p41 = scmp.eq.s32.totalorder %s15, 0
    %p42 = por %p40, %p41
    %s44 = sadd.s32 %s43, 1
    %p47 = scmp.eq.s32.totalorder %s9, 1
    %p48 = scmp.ne.s32.totalorder %s43, %s45
    %p49 = scmp.eq.s32.totalorder %s9, 0
    %p50 = por %p48, %p49
    %p51 = scmp.ne.s32.totalorder %s43, %s45
    %p52 = scmp.eq.s32.totalorder %s14, 1
    %p53 = por %p51, %p52
    %p54 = scmp.ne.s32.totalorder %s45, %s46
    %p55 = scmp.eq.s32.totalorder %s14, 0
    %p56 = por %p54, %p55
    %p57 = scmp.ne.s32.totalorder %s45, %s46
    %p58 = scmp.eq.s32.totalorder %s15, 1
    %p59 = por %p57, %p58
    %p61 = scmp.ne.s32.totalorder %s46, %s60
    %p62 = scmp.eq.s32.totalorder %s15, 0
    %p63 = por %p61, %p62
    %s65 = sadd.s32 %s64, 1
    %p68 = scmp.eq.s32.totalorder %s9, 1
    %p69 = scmp.ne.s32.totalorder %s64, %s66
    %p70 = scmp.eq.s32.totalorder %s9, 0
    %p71 = por %p69, %p70
    %p72 = scmp.ne.s32.totalorder %s64, %s66
    %p73 = scmp.eq.s32.totalorder %s14, 1
    %p74 = por %p72, %p73
    %p75 = scmp.ne.s32.totalorder %s66, %s67
    %p76 = scmp.eq.s32.totalorder %s14, 0
    %p77 = por %p75, %p76
    %p78 = scmp.ne.s32.totalorder %s66, %s67
    %p79 = scmp.eq.s32.totalorder %s15, 1
    %p80 = por %p78, %p79
    %p82 = scmp.ne.s32.totalorder %s67, %s81
    %p83 = scmp.eq.s32.totalorder %s15, 0
    %p84 = por %p82, %p83
    %s85 = ssub.s32 %s9, %s16
    %p86 = scmp.eq.s32.totalorder %s85, 0
    %s88 = sadd.s32 %s87, 1
    %s89 = scalar_select %p86, %s87, %s88
    %p92 = pneg %p86
    %p93 = scmp.eq.s32.totalorder %s9, 1
    %p94 = por %p92, %p93
    %p95 = scmp.ne.s32.totalorder %s87, %s90
    %p96 = scmp.eq.s32.totalorder %s9, 0
    %p97 = por %p95, %p96
    %p98 = scmp.ne.s32.totalorder %s87, %s90
    %p99 = scmp.eq.s32.totalorder %s14, 1
    %p100 = por %p98, %p99
    %p101 = scmp.ne.s32.totalorder %s90, %s91
    %p102 = scmp.eq.s32.totalorder %s14, 0
    %p103 = por %p101, %p102
    %p104 = scmp.ne.s32.totalorder %s90, %s91
    %p105 = scmp.eq.s32.totalorder %s15, 1
    %p106 = por %p104, %p105
    %p108 = scmp.ne.s32.totalorder %s91, %s107
    %p109 = scmp.eq.s32.totalorder %s15, 0
    %p110 = por %p108, %p109
    %p111 = scmp.le.s32.totalorder 1, %s9
    %p112 = scmp.lt.s32.totalorder %s9, 3
    %p113 = pnand %p111, %p112
    %p114 = pneg %p113
    // Predicated region
    $region9: #{neural_network_explainer_forward.7} parent=5 // pred_check
      _
    $region10: #{neural_network_explainer_forward.7} parent=5 // pred_check_branch
      %116 = sbr.rel (%p113) target = $region12
    $region11: #{neural_network_explainer_forward.7} parent=5 // pred_region
      %s117 = ssub.s32 %s9, 1
      // Predicated region
      $region13: #{neural_network_explainer_forward.7} parent=11 // pred_check
        %p118 = pneg %p56
      $region14: #{neural_network_explainer_forward.7} parent=11 // pred_check_branch
        %120 = sbr.rel (%p118) target = $region16
      $region15: #{neural_network_explainer_forward.7} parent=11 // pred_region
        _
      $region16: #{neural_network_explainer_forward.7} parent=11 // pred_fallthru
        _
      // Predicated region
      $region17: #{neural_network_explainer_forward.7} parent=11 // pred_check
        %p121 = pneg %p77
      $region18: #{neural_network_explainer_forward.7} parent=11 // pred_check_branch
        %123 = sbr.rel (%p121) target = $region20
      $region19: #{neural_network_explainer_forward.7} parent=11 // pred_region
        _
      $region20: #{neural_network_explainer_forward.7} parent=11 // pred_fallthru
        _
    $region12: #{neural_network_explainer_forward.7} parent=5 // pred_fallthru
      _
    %p124 = scmp.lt.s32.totalorder %s9, 2
    // Predicated region
    $region21: #{neural_network_explainer_forward.7} parent=5 // pred_check
      %p125 = pneg %p124
    $region22: #{neural_network_explainer_forward.7} parent=5 // pred_check_branch
      %127 = sbr.rel (%p125) target = $region24
    $region23: #{neural_network_explainer_forward.7} parent=5 // pred_region
      // Predicated region
      $region25: #{neural_network_explainer_forward.7} parent=23 // pred_check
        %p128 = pneg %p29
      $region26: #{neural_network_explainer_forward.7} parent=23 // pred_check_branch
        %130 = sbr.rel (%p128) target = $region28
      $region27: #{neural_network_explainer_forward.7} parent=23 // pred_region
        %p131 = scmp.lt.s32.totalorder %s9, 1
        %s132 = scalar_select %p131, %s9, 1
        %s133 = smul.addr %s132, 24
        %s134 = smul.addr %s133, 8
        %s135 = scalar_lea.vmem %s0, %s134
      $region28: #{neural_network_explainer_forward.7} parent=23 // pred_fallthru
        _
    $region24: #{neural_network_explainer_forward.7} parent=5 // pred_fallthru
      _
    %p136 = scmp.le.s32.totalorder 1, %s9
    %p137 = scmp.lt.s32.totalorder %s9, 3
    %p138 = pnand %p136, %p137
    %p139 = pneg %p138
    // Predicated region
    $region29: #{neural_network_explainer_forward.7} parent=5 // pred_check
      _
    $region30: #{neural_network_explainer_forward.7} parent=5 // pred_check_branch
      %141 = sbr.rel (%p138) target = $region32
    $region31: #{neural_network_explainer_forward.7} parent=5 // pred_region
      %s142 = ssub.s32 %s9, 1
      %p143 = scmp.lt.s32.totalorder %s14, 1
      %s144 = scalar_select %p143, %s14, 1
      %s145 = smul.addr %s144, 24
      %s146 = smul.addr %s145, 8
      %s147 = scalar_lea.vmem %s0, %s146
      %p148 = pneg %p35
      %p149 = pneg %p32
      %p150 = pneg %p56
      %p151 = pneg %p53
      %p152 = pneg %p77
      %p153 = pneg %p74
      %p154 = pneg %p103
      %p155 = pneg %p100
      %p156 = scmp.lt.s32.totalorder %s14, 1
      %s157 = scalar_select %p156, %s14, 1
      %s158 = smul.addr %s157, 8
      %s159 = smul.addr %s158, 4
      %s160 = scalar_lea.vmem %s3, %s159
      %p161 = scmp.lt.s32.totalorder %s14, 1
      %s162 = scalar_select %p161, %s14, 1
      %s163 = smul.addr %s162, 24
      %s164 = smul.addr %s163, 8
      %s165 = scalar_lea.vmem %s0, %s164
      %p166 = scmp.lt.s32.totalorder %s14, 1
      %s167 = scalar_select %p166, %s14, 1
      %s168 = smul.addr %s167, 8
      %s169 = smul.addr %s168, 4
      %s170 = scalar_lea.vmem %s3, %s169
      %v171 = vld [vmem:[%s165] sm:$0xff]
      %v172 = vld [vmem:[%s165 + $0x8] sm:$0xf]
      %v173 = vld [vmem:[%s165 + $0x10] sm:$0xff]
      %v174 = vld [vmem:[%s165 + $0x18] sm:$0xf]
      %v175 = vld [vmem:[%s165 + $0x20] sm:$0xff]
      %v176 = vld [vmem:[%s165 + $0x28] sm:$0xf]
      %v177 = vld [vmem:[%s165 + $0x30] sm:$0xff]
      %v178 = vld [vmem:[%s165 + $0x38] sm:$0xf]
      %v179 = vld [vmem:[%s165 + $0x40] sm:$0xff]
      %v180 = vld [vmem:[%s165 + $0x48] sm:$0xf]
      %v181 = vld [vmem:[%s165 + $0x50] sm:$0xff]
      %v182 = vld [vmem:[%s165 + $0x58] sm:$0xf]
      %v183 = vld [vmem:[%s165 + $0x60] sm:$0xff]
      %v184 = vld [vmem:[%s165 + $0x68] sm:$0xf]
      %v185 = vld [vmem:[%s165 + $0x70] sm:$0xff]
      %v186 = vld [vmem:[%s165 + $0x78] sm:$0xf]
      %v187 = vld [vmem:[%s165 + $0x80] sm:$0xff]
      %v188 = vld [vmem:[%s165 + $0x88] sm:$0xf]
      %v189 = vld [vmem:[%s165 + $0x90] sm:$0xff]
      %v190 = vld [vmem:[%s165 + $0x98] sm:$0xf]
      %v191 = vld [vmem:[%s165 + $0xa0] sm:$0xff]
      %v192 = vld [vmem:[%s165 + $0xa8] sm:$0xf]
      %v193 = vld [vmem:[%s165 + $0xb0] sm:$0xff]
      %v194 = vld [vmem:[%s165 + $0xb8] sm:$0xf]
      %vm211 = vcmask 1046528
      %v212 = vrot.slane %v171, 1
      %v213 = vrot.slane %v172, 1
      %v214 = vsel %vm211, %v212, %v213
      %v215 = vrot.slane %v173, 1
      %v216 = vrot.slane %v174, 1
      %v217 = vsel %vm211, %v215, %v216
      %v218 = vrot.slane %v175, 1
      %v219 = vrot.slane %v176, 1
      %v220 = vsel %vm211, %v218, %v219
      %v221 = vrot.slane %v177, 1
      %v222 = vrot.slane %v178, 1
      %v223 = vsel %vm211, %v221, %v222
      %v224 = vrot.slane %v179, 1
      %v225 = vrot.slane %v180, 1
      %v226 = vsel %vm211, %v224, %v225
      %v227 = vrot.slane %v181, 1
      %v228 = vrot.slane %v182, 1
      %v229 = vsel %vm211, %v227, %v228
      %v230 = vrot.slane %v183, 1
      %v231 = vrot.slane %v184, 1
      %v232 = vsel %vm211, %v230, %v231
      %v233 = vrot.slane %v185, 1
      %v234 = vrot.slane %v186, 1
      %v235 = vsel %vm211, %v233, %v234
      %236 = vrot.lane.b32.xlu0 %v214, 10
      %v237 = vpop.permute.xlu0 %236
      %238 = vrot.lane.b32.xlu0 %v217, 10
      %v239 = vpop.permute.xlu0 %238
      %240 = vrot.lane.b32.xlu0 %v220, 10
      %v241 = vpop.permute.xlu0 %240
      %242 = vrot.lane.b32.xlu0 %v223, 10
      %v243 = vpop.permute.xlu0 %242
      %244 = vrot.lane.b32.xlu0 %v226, 10
      %v245 = vpop.permute.xlu0 %244
      %246 = vrot.lane.b32.xlu0 %v229, 10
      %v247 = vpop.permute.xlu0 %246
      %248 = vrot.lane.b32.xlu0 %v232, 10
      %v249 = vpop.permute.xlu0 %248
      %250 = vrot.lane.b32.xlu0 %v235, 10
      %v251 = vpop.permute.xlu0 %250
      %vm260 = vcmask 1045504
      %v261 = vrot.slane %v171, 2
      %v262 = vrot.slane %v172, 2
      %v263 = vsel %vm260, %v261, %v262
      %v264 = vrot.slane %v173, 2
      %v265 = vrot.slane %v174, 2
      %v266 = vsel %vm260, %v264, %v265
      %v267 = vrot.slane %v175, 2
      %v268 = vrot.slane %v176, 2
      %v269 = vsel %vm260, %v267, %v268
      %v270 = vrot.slane %v177, 2
      %v271 = vrot.slane %v178, 2
      %v272 = vsel %vm260, %v270, %v271
      %v273 = vrot.slane %v179, 2
      %v274 = vrot.slane %v180, 2
      %v275 = vsel %vm260, %v273, %v274
      %v276 = vrot.slane %v181, 2
      %v277 = vrot.slane %v182, 2
      %v278 = vsel %vm260, %v276, %v277
      %v279 = vrot.slane %v183, 2
      %v280 = vrot.slane %v184, 2
      %v281 = vsel %vm260, %v279, %v280
      %v282 = vrot.slane %v185, 2
      %v283 = vrot.slane %v186, 2
      %v284 = vsel %vm260, %v282, %v283
      %285 = vrot.lane.b32.xlu0 %v263, 20
      %v286 = vpop.permute.xlu0 %285
      %287 = vrot.lane.b32.xlu0 %v266, 20
      %v288 = vpop.permute.xlu0 %287
      %289 = vrot.lane.b32.xlu0 %v269, 20
      %v290 = vpop.permute.xlu0 %289
      %291 = vrot.lane.b32.xlu0 %v272, 20
      %v292 = vpop.permute.xlu0 %291
      %293 = vrot.lane.b32.xlu0 %v275, 20
      %v294 = vpop.permute.xlu0 %293
      %295 = vrot.lane.b32.xlu0 %v278, 20
      %v296 = vpop.permute.xlu0 %295
      %297 = vrot.lane.b32.xlu0 %v281, 20
      %v298 = vpop.permute.xlu0 %297
      %299 = vrot.lane.b32.xlu0 %v284, 20
      %v300 = vpop.permute.xlu0 %299
      %vm309 = vcmask 1044480
      %v310 = vrot.slane %v171, 3
      %v311 = vrot.slane %v172, 3
      %v312 = vsel %vm309, %v310, %v311
      %v313 = vrot.slane %v173, 3
      %v314 = vrot.slane %v174, 3
      %v315 = vsel %vm309, %v313, %v314
      %v316 = vrot.slane %v175, 3
      %v317 = vrot.slane %v176, 3
      %v318 = vsel %vm309, %v316, %v317
      %v319 = vrot.slane %v177, 3
      %v320 = vrot.slane %v178, 3
      %v321 = vsel %vm309, %v319, %v320
      %v322 = vrot.slane %v179, 3
      %v323 = vrot.slane %v180, 3
      %v324 = vsel %vm309, %v322, %v323
      %v325 = vrot.slane %v181, 3
      %v326 = vrot.slane %v182, 3
      %v327 = vsel %vm309, %v325, %v326
      %v328 = vrot.slane %v183, 3
      %v329 = vrot.slane %v184, 3
      %v330 = vsel %vm309, %v328, %v329
      %v331 = vrot.slane %v185, 3
      %v332 = vrot.slane %v186, 3
      %v333 = vsel %vm309, %v331, %v332
      %334 = vrot.lane.b32.xlu0 %v312, 30
      %v335 = vpop.permute.xlu0 %334
      %336 = vrot.lane.b32.xlu0 %v315, 30
      %v337 = vpop.permute.xlu0 %336
      %338 = vrot.lane.b32.xlu0 %v318, 30
      %v339 = vpop.permute.xlu0 %338
      %340 = vrot.lane.b32.xlu0 %v321, 30
      %v341 = vpop.permute.xlu0 %340
      %342 = vrot.lane.b32.xlu0 %v324, 30
      %v343 = vpop.permute.xlu0 %342
      %344 = vrot.lane.b32.xlu0 %v327, 30
      %v345 = vpop.permute.xlu0 %344
      %346 = vrot.lane.b32.xlu0 %v330, 30
      %v347 = vpop.permute.xlu0 %346
      %348 = vrot.lane.b32.xlu0 %v333, 30
      %v349 = vpop.permute.xlu0 %348
      %vm358 = vcmask 1043456
      %v359 = vrot.slane %v171, 4
      %v360 = vrot.slane %v172, 4
      %v361 = vsel %vm358, %v359, %v360
      %v362 = vrot.slane %v173, 4
      %v363 = vrot.slane %v174, 4
      %v364 = vsel %vm358, %v362, %v363
      %v365 = vrot.slane %v175, 4
      %v366 = vrot.slane %v176, 4
      %v367 = vsel %vm358, %v365, %v366
      %v368 = vrot.slane %v177, 4
      %v369 = vrot.slane %v178, 4
      %v370 = vsel %vm358, %v368, %v369
      %v371 = vrot.slane %v179, 4
      %v372 = vrot.slane %v180, 4
      %v373 = vsel %vm358, %v371, %v372
      %v374 = vrot.slane %v181, 4
      %v375 = vrot.slane %v182, 4
      %v376 = vsel %vm358, %v374, %v375
      %v377 = vrot.slane %v183, 4
      %v378 = vrot.slane %v184, 4
      %v379 = vsel %vm358, %v377, %v378
      %v380 = vrot.slane %v185, 4
      %v381 = vrot.slane %v186, 4
      %v382 = vsel %vm358, %v380, %v381
      %383 = vrot.lane.b32.xlu0 %v361, 40
      %v384 = vpop.permute.xlu0 %383
      %385 = vrot.lane.b32.xlu0 %v364, 40
      %v386 = vpop.permute.xlu0 %385
      %387 = vrot.lane.b32.xlu0 %v367, 40
      %v388 = vpop.permute.xlu0 %387
      %389 = vrot.lane.b32.xlu0 %v370, 40
      %v390 = vpop.permute.xlu0 %389
      %391 = vrot.lane.b32.xlu0 %v373, 40
      %v392 = vpop.permute.xlu0 %391
      %393 = vrot.lane.b32.xlu0 %v376, 40
      %v394 = vpop.permute.xlu0 %393
      %395 = vrot.lane.b32.xlu0 %v379, 40
      %v396 = vpop.permute.xlu0 %395
      %397 = vrot.lane.b32.xlu0 %v382, 40
      %v398 = vpop.permute.xlu0 %397
      %408 = vrot.lane.b32.xlu0 %v173, 50
      %v409 = vpop.permute.xlu0 %408
      %410 = vrot.lane.b32.xlu0 %v175, 50
      %v411 = vpop.permute.xlu0 %410
      %412 = vrot.lane.b32.xlu0 %v177, 50
      %v413 = vpop.permute.xlu0 %412
      %414 = vrot.lane.b32.xlu0 %v179, 50
      %v415 = vpop.permute.xlu0 %414
      %416 = vrot.lane.b32.xlu0 %v181, 50
      %v417 = vpop.permute.xlu0 %416
      %418 = vrot.lane.b32.xlu0 %v183, 50
      %v419 = vpop.permute.xlu0 %418
      %420 = vrot.lane.b32.xlu0 %v185, 50
      %v421 = vpop.permute.xlu0 %420
      %422 = vrot.lane.b32.xlu0 %v187, 50
      %v423 = vpop.permute.xlu0 %422
      %v433 = vrot.slane %v187, 1
      %v434 = vrot.slane %v188, 1
      %v435 = vsel %vm211, %v433, %v434
      %436 = vrot.lane.b32.xlu0 %v217, 60
      %v437 = vpop.permute.xlu0 %436
      %438 = vrot.lane.b32.xlu0 %v220, 60
      %v439 = vpop.permute.xlu0 %438
      %440 = vrot.lane.b32.xlu0 %v223, 60
      %v441 = vpop.permute.xlu0 %440
      %442 = vrot.lane.b32.xlu0 %v226, 60
      %v443 = vpop.permute.xlu0 %442
      %444 = vrot.lane.b32.xlu0 %v229, 60
      %v445 = vpop.permute.xlu0 %444
      %446 = vrot.lane.b32.xlu0 %v232, 60
      %v447 = vpop.permute.xlu0 %446
      %448 = vrot.lane.b32.xlu0 %v235, 60
      %v449 = vpop.permute.xlu0 %448
      %450 = vrot.lane.b32.xlu0 %v435, 60
      %v451 = vpop.permute.xlu0 %450
      %v460 = vrot.slane %v187, 2
      %v461 = vrot.slane %v188, 2
      %v462 = vsel %vm260, %v460, %v461
      %463 = vrot.lane.b32.xlu0 %v266, 70
      %v464 = vpop.permute.xlu0 %463
      %465 = vrot.lane.b32.xlu0 %v269, 70
      %v466 = vpop.permute.xlu0 %465
      %467 = vrot.lane.b32.xlu0 %v272, 70
      %v468 = vpop.permute.xlu0 %467
      %469 = vrot.lane.b32.xlu0 %v275, 70
      %v470 = vpop.permute.xlu0 %469
      %471 = vrot.lane.b32.xlu0 %v278, 70
      %v472 = vpop.permute.xlu0 %471
      %473 = vrot.lane.b32.xlu0 %v281, 70
      %v474 = vpop.permute.xlu0 %473
      %475 = vrot.lane.b32.xlu0 %v284, 70
      %v476 = vpop.permute.xlu0 %475
      %477 = vrot.lane.b32.xlu0 %v462, 70
      %v478 = vpop.permute.xlu0 %477
      %v487 = vrot.slane %v187, 3
      %v488 = vrot.slane %v188, 3
      %v489 = vsel %vm309, %v487, %v488
      %490 = vrot.lane.b32.xlu0 %v315, 80
      %v491 = vpop.permute.xlu0 %490
      %492 = vrot.lane.b32.xlu0 %v318, 80
      %v493 = vpop.permute.xlu0 %492
      %494 = vrot.lane.b32.xlu0 %v321, 80
      %v495 = vpop.permute.xlu0 %494
      %496 = vrot.lane.b32.xlu0 %v324, 80
      %v497 = vpop.permute.xlu0 %496
      %498 = vrot.lane.b32.xlu0 %v327, 80
      %v499 = vpop.permute.xlu0 %498
      %500 = vrot.lane.b32.xlu0 %v330, 80
      %v501 = vpop.permute.xlu0 %500
      %502 = vrot.lane.b32.xlu0 %v333, 80
      %v503 = vpop.permute.xlu0 %502
      %504 = vrot.lane.b32.xlu0 %v489, 80
      %v505 = vpop.permute.xlu0 %504
      %v514 = vrot.slane %v187, 4
      %v515 = vrot.slane %v188, 4
      %v516 = vsel %vm358, %v514, %v515
      %517 = vrot.lane.b32.xlu0 %v364, 90
      %v518 = vpop.permute.xlu0 %517
      %519 = vrot.lane.b32.xlu0 %v367, 90
      %v520 = vpop.permute.xlu0 %519
      %521 = vrot.lane.b32.xlu0 %v370, 90
      %v522 = vpop.permute.xlu0 %521
      %523 = vrot.lane.b32.xlu0 %v373, 90
      %v524 = vpop.permute.xlu0 %523
      %525 = vrot.lane.b32.xlu0 %v376, 90
      %v526 = vpop.permute.xlu0 %525
      %527 = vrot.lane.b32.xlu0 %v379, 90
      %v528 = vpop.permute.xlu0 %527
      %529 = vrot.lane.b32.xlu0 %v382, 90
      %v530 = vpop.permute.xlu0 %529
      %531 = vrot.lane.b32.xlu0 %v516, 90
      %v532 = vpop.permute.xlu0 %531
      %542 = vrot.lane.b32.xlu0 %v175, 100
      %v543 = vpop.permute.xlu0 %542
      %544 = vrot.lane.b32.xlu0 %v177, 100
      %v545 = vpop.permute.xlu0 %544
      %546 = vrot.lane.b32.xlu0 %v179, 100
      %v547 = vpop.permute.xlu0 %546
      %548 = vrot.lane.b32.xlu0 %v181, 100
      %v549 = vpop.permute.xlu0 %548
      %550 = vrot.lane.b32.xlu0 %v183, 100
      %v551 = vpop.permute.xlu0 %550
      %552 = vrot.lane.b32.xlu0 %v185, 100
      %v553 = vpop.permute.xlu0 %552
      %554 = vrot.lane.b32.xlu0 %v187, 100
      %v555 = vpop.permute.xlu0 %554
      %556 = vrot.lane.b32.xlu0 %v189, 100
      %v557 = vpop.permute.xlu0 %556
      %v567 = vrot.slane %v189, 1
      %v568 = vrot.slane %v190, 1
      %v569 = vsel %vm211, %v567, %v568
      %570 = vrot.lane.b32.xlu0 %v220, 110
      %v571 = vpop.permute.xlu0 %570
      %572 = vrot.lane.b32.xlu0 %v223, 110
      %v573 = vpop.permute.xlu0 %572
      %574 = vrot.lane.b32.xlu0 %v226, 110
      %v575 = vpop.permute.xlu0 %574
      %576 = vrot.lane.b32.xlu0 %v229, 110
      %v577 = vpop.permute.xlu0 %576
      %578 = vrot.lane.b32.xlu0 %v232, 110
      %v579 = vpop.permute.xlu0 %578
      %580 = vrot.lane.b32.xlu0 %v235, 110
      %v581 = vpop.permute.xlu0 %580
      %582 = vrot.lane.b32.xlu0 %v435, 110
      %v583 = vpop.permute.xlu0 %582
      %584 = vrot.lane.b32.xlu0 %v569, 110
      %v585 = vpop.permute.xlu0 %584
      %v594 = vrot.slane %v189, 2
      %v595 = vrot.slane %v190, 2
      %v596 = vsel %vm260, %v594, %v595
      %597 = vrot.lane.b32.xlu0 %v269, 120
      %v598 = vpop.permute.xlu0 %597
      %599 = vrot.lane.b32.xlu0 %v272, 120
      %v600 = vpop.permute.xlu0 %599
      %601 = vrot.lane.b32.xlu0 %v275, 120
      %v602 = vpop.permute.xlu0 %601
      %603 = vrot.lane.b32.xlu0 %v278, 120
      %v604 = vpop.permute.xlu0 %603
      %605 = vrot.lane.b32.xlu0 %v281, 120
      %v606 = vpop.permute.xlu0 %605
      %607 = vrot.lane.b32.xlu0 %v284, 120
      %v608 = vpop.permute.xlu0 %607
      %609 = vrot.lane.b32.xlu0 %v462, 120
      %v610 = vpop.permute.xlu0 %609
      %611 = vrot.lane.b32.xlu0 %v596, 120
      %v612 = vpop.permute.xlu0 %611
      %v621 = vrot.slane %v189, 3
      %v622 = vrot.slane %v190, 3
      %v623 = vsel %vm309, %v621, %v622
      %624 = vrot.lane.b32.xlu0 %v318, 2
      %v625 = vpop.permute.xlu0 %624
      %626 = vrot.lane.b32.xlu0 %v321, 2
      %v627 = vpop.permute.xlu0 %626
      %628 = vrot.lane.b32.xlu0 %v324, 2
      %v629 = vpop.permute.xlu0 %628
      %630 = vrot.lane.b32.xlu0 %v327, 2
      %v631 = vpop.permute.xlu0 %630
      %632 = vrot.lane.b32.xlu0 %v330, 2
      %v633 = vpop.permute.xlu0 %632
      %634 = vrot.lane.b32.xlu0 %v333, 2
      %v635 = vpop.permute.xlu0 %634
      %636 = vrot.lane.b32.xlu0 %v489, 2
      %v637 = vpop.permute.xlu0 %636
      %638 = vrot.lane.b32.xlu0 %v623, 2
      %v639 = vpop.permute.xlu0 %638
      %v648 = vrot.slane %v189, 4
      %v649 = vrot.slane %v190, 4
      %v650 = vsel %vm358, %v648, %v649
      %651 = vrot.lane.b32.xlu0 %v367, 12
      %v652 = vpop.permute.xlu0 %651
      %653 = vrot.lane.b32.xlu0 %v370, 12
      %v654 = vpop.permute.xlu0 %653
      %655 = vrot.lane.b32.xlu0 %v373, 12
      %v656 = vpop.permute.xlu0 %655
      %657 = vrot.lane.b32.xlu0 %v376, 12
      %v658 = vpop.permute.xlu0 %657
      %659 = vrot.lane.b32.xlu0 %v379, 12
      %v660 = vpop.permute.xlu0 %659
      %661 = vrot.lane.b32.xlu0 %v382, 12
      %v662 = vpop.permute.xlu0 %661
      %663 = vrot.lane.b32.xlu0 %v516, 12
      %v664 = vpop.permute.xlu0 %663
      %665 = vrot.lane.b32.xlu0 %v650, 12
      %v666 = vpop.permute.xlu0 %665
      %676 = vrot.lane.b32.xlu0 %v177, 22
      %v677 = vpop.permute.xlu0 %676
      %678 = vrot.lane.b32.xlu0 %v179, 22
      %v679 = vpop.permute.xlu0 %678
      %680 = vrot.lane.b32.xlu0 %v181, 22
      %v681 = vpop.permute.xlu0 %680
      %682 = vrot.lane.b32.xlu0 %v183, 22
      %v683 = vpop.permute.xlu0 %682
      %684 = vrot.lane.b32.xlu0 %v185, 22
      %v685 = vpop.permute.xlu0 %684
      %686 = vrot.lane.b32.xlu0 %v187, 22
      %v687 = vpop.permute.xlu0 %686
      %688 = vrot.lane.b32.xlu0 %v189, 22
      %v689 = vpop.permute.xlu0 %688
      %690 = vrot.lane.b32.xlu0 %v191, 22
      %v691 = vpop.permute.xlu0 %690
      %vm700 = vcmask 80896
      %v701 = vsel %vm700, %v171, %v237
      %v702 = vsel %vm700, %v173, %v239
      %v703 = vsel %vm700, %v175, %v241
      %v704 = vsel %vm700, %v177, %v243
      %v705 = vsel %vm700, %v179, %v245
      %v706 = vsel %vm700, %v181, %v247
      %v707 = vsel %vm700, %v183, %v249
      %v708 = vsel %vm700, %v185, %v251
      %vm709 = vcmask 162816
      %v710 = vsel %vm709, %v701, %v286
      %v711 = vsel %vm709, %v702, %v288
      %v712 = vsel %vm709, %v703, %v290
      %v713 = vsel %vm709, %v704, %v292
      %v714 = vsel %vm709, %v705, %v294
      %v715 = vsel %vm709, %v706, %v296
      %v716 = vsel %vm709, %v707, %v298
      %v717 = vsel %vm709, %v708, %v300
      %vm718 = vcmask 244736
      %v719 = vsel %vm718, %v710, %v335
      %v720 = vsel %vm718, %v711, %v337
      %v721 = vsel %vm718, %v712, %v339
      %v722 = vsel %vm718, %v713, %v341
      %v723 = vsel %vm718, %v714, %v343
      %v724 = vsel %vm718, %v715, %v345
      %v725 = vsel %vm718, %v716, %v347
      %v726 = vsel %vm718, %v717, %v349
      %vm727 = vcmask 326656
      %v728 = vsel %vm727, %v719, %v384
      %v729 = vsel %vm727, %v720, %v386
      %v730 = vsel %vm727, %v721, %v388
      %v731 = vsel %vm727, %v722, %v390
      %v732 = vsel %vm727, %v723, %v392
      %v733 = vsel %vm727, %v724, %v394
      %v734 = vsel %vm727, %v725, %v396
      %v735 = vsel %vm727, %v726, %v398
      %vm736 = vcmask 408576
      %v737 = vsel %vm736, %v728, %v409
      %v738 = vsel %vm736, %v729, %v411
      %v739 = vsel %vm736, %v730, %v413
      %v740 = vsel %vm736, %v731, %v415
      %v741 = vsel %vm736, %v732, %v417
      %v742 = vsel %vm736, %v733, %v419
      %v743 = vsel %vm736, %v734, %v421
      %v744 = vsel %vm736, %v735, %v423
      %vm745 = vcmask 490496
      %v746 = vsel %vm745, %v737, %v437
      %v747 = vsel %vm745, %v738, %v439
      %v748 = vsel %vm745, %v739, %v441
      %v749 = vsel %vm745, %v740, %v443
      %v750 = vsel %vm745, %v741, %v445
      %v751 = vsel %vm745, %v742, %v447
      %v752 = vsel %vm745, %v743, %v449
      %v753 = vsel %vm745, %v744, %v451
      %vm754 = vcmask 572416
      %v755 = vsel %vm754, %v746, %v464
      %v756 = vsel %vm754, %v747, %v466
      %v757 = vsel %vm754, %v748, %v468
      %v758 = vsel %vm754, %v749, %v470
      %v759 = vsel %vm754, %v750, %v472
      %v760 = vsel %vm754, %v751, %v474
      %v761 = vsel %vm754, %v752, %v476
      %v762 = vsel %vm754, %v753, %v478
      %vm763 = vcmask 654336
      %v764 = vsel %vm763, %v755, %v491
      %v765 = vsel %vm763, %v756, %v493
      %v766 = vsel %vm763, %v757, %v495
      %v767 = vsel %vm763, %v758, %v497
      %v768 = vsel %vm763, %v759, %v499
      %v769 = vsel %vm763, %v760, %v501
      %v770 = vsel %vm763, %v761, %v503
      %v771 = vsel %vm763, %v762, %v505
      %vm772 = vcmask 736256
      %v773 = vsel %vm772, %v764, %v518
      %v774 = vsel %vm772, %v765, %v520
      %v775 = vsel %vm772, %v766, %v522
      %v776 = vsel %vm772, %v767, %v524
      %v777 = vsel %vm772, %v768, %v526
      %v778 = vsel %vm772, %v769, %v528
      %v779 = vsel %vm772, %v770, %v530
      %v780 = vsel %vm772, %v771, %v532
      %vm781 = vcmask 818176
      %v782 = vsel %vm781, %v773, %v543
      %v783 = vsel %vm781, %v774, %v545
      %v784 = vsel %vm781, %v775, %v547
      %v785 = vsel %vm781, %v776, %v549
      %v786 = vsel %vm781, %v777, %v551
      %v787 = vsel %vm781, %v778, %v553
      %v788 = vsel %vm781, %v779, %v555
      %v789 = vsel %vm781, %v780, %v557
      %vm790 = vcmask 900096
      %v791 = vsel %vm790, %v782, %v571
      %v792 = vsel %vm790, %v783, %v573
      %v793 = vsel %vm790, %v784, %v575
      %v794 = vsel %vm790, %v785, %v577
      %v795 = vsel %vm790, %v786, %v579
      %v796 = vsel %vm790, %v787, %v581
      %v797 = vsel %vm790, %v788, %v583
      %v798 = vsel %vm790, %v789, %v585
      %vm799 = vcmask 982016
      %v800 = vsel %vm799, %v791, %v598
      %v801 = vsel %vm799, %v792, %v600
      %v802 = vsel %vm799, %v793, %v602
      %v803 = vsel %vm799, %v794, %v604
      %v804 = vsel %vm799, %v795, %v606
      %v805 = vsel %vm799, %v796, %v608
      %v806 = vsel %vm799, %v797, %v610
      %v807 = vsel %vm799, %v798, %v612
      %vm808 = vcmask 15360
      %v809 = vsel %vm808, %v598, %v625
      %v810 = vsel %vm808, %v600, %v627
      %v811 = vsel %vm808, %v602, %v629
      %v812 = vsel %vm808, %v604, %v631
      %v813 = vsel %vm808, %v606, %v633
      %v814 = vsel %vm808, %v608, %v635
      %v815 = vsel %vm808, %v610, %v637
      %v816 = vsel %vm808, %v612, %v639
      %vm817 = vcmask 97280
      %v818 = vsel %vm817, %v809, %v652
      %v819 = vsel %vm817, %v810, %v654
      %v820 = vsel %vm817, %v811, %v656
      %v821 = vsel %vm817, %v812, %v658
      %v822 = vsel %vm817, %v813, %v660
      %v823 = vsel %vm817, %v814, %v662
      %v824 = vsel %vm817, %v815, %v664
      %v825 = vsel %vm817, %v816, %v666
      %vm826 = vcmask 179200
      %v827 = vsel %vm826, %v818, %v677
      %v828 = vsel %vm826, %v819, %v679
      %v829 = vsel %vm826, %v820, %v681
      %v830 = vsel %vm826, %v821, %v683
      %v831 = vsel %vm826, %v822, %v685
      %v832 = vsel %vm826, %v823, %v687
      %v833 = vsel %vm826, %v824, %v689
      %v834 = vsel %vm826, %v825, %v691
      %v836 = vrot.slane %v191, 1
      %v837 = vrot.slane %v192, 1
      %v838 = vsel %vm211, %v836, %v837
      %839 = vrot.lane.b32.xlu0 %v222, 10
      %v840 = vpop.permute.xlu0 %839
      %841 = vrot.lane.b32.xlu0 %v225, 10
      %v842 = vpop.permute.xlu0 %841
      %843 = vrot.lane.b32.xlu0 %v228, 10
      %v844 = vpop.permute.xlu0 %843
      %845 = vrot.lane.b32.xlu0 %v231, 10
      %v846 = vpop.permute.xlu0 %845
      %847 = vrot.lane.b32.xlu0 %v234, 10
      %v848 = vpop.permute.xlu0 %847
      %849 = vrot.lane.b32.xlu0 %v435, 10
      %v850 = vpop.permute.xlu0 %849
      %851 = vrot.lane.b32.xlu0 %v434, 10
      %v852 = vpop.permute.xlu0 %851
      %853 = vrot.lane.b32.xlu0 %v569, 10
      %v854 = vpop.permute.xlu0 %853
      %855 = vrot.lane.b32.xlu0 %v568, 10
      %v856 = vpop.permute.xlu0 %855
      %857 = vrot.lane.b32.xlu0 %v838, 10
      %v858 = vpop.permute.xlu0 %857
      %859 = vrot.lane.b32.xlu0 %v837, 10
      %v860 = vpop.permute.xlu0 %859
      %v872 = vrot.slane %v191, 2
      %v873 = vrot.slane %v192, 2
      %v874 = vsel %vm260, %v872, %v873
      %875 = vrot.lane.b32.xlu0 %v271, 20
      %v876 = vpop.permute.xlu0 %875
      %877 = vrot.lane.b32.xlu0 %v274, 20
      %v878 = vpop.permute.xlu0 %877
      %879 = vrot.lane.b32.xlu0 %v277, 20
      %v880 = vpop.permute.xlu0 %879
      %881 = vrot.lane.b32.xlu0 %v280, 20
      %v882 = vpop.permute.xlu0 %881
      %883 = vrot.lane.b32.xlu0 %v283, 20
      %v884 = vpop.permute.xlu0 %883
      %885 = vrot.lane.b32.xlu0 %v462, 20
      %v886 = vpop.permute.xlu0 %885
      %887 = vrot.lane.b32.xlu0 %v461, 20
      %v888 = vpop.permute.xlu0 %887
      %889 = vrot.lane.b32.xlu0 %v596, 20
      %v890 = vpop.permute.xlu0 %889
      %891 = vrot.lane.b32.xlu0 %v595, 20
      %v892 = vpop.permute.xlu0 %891
      %893 = vrot.lane.b32.xlu0 %v874, 20
      %v894 = vpop.permute.xlu0 %893
      %895 = vrot.lane.b32.xlu0 %v873, 20
      %v896 = vpop.permute.xlu0 %895
      %v908 = vrot.slane %v191, 3
      %v909 = vrot.slane %v192, 3
      %v910 = vsel %vm309, %v908, %v909
      %911 = vrot.lane.b32.xlu0 %v320, 30
      %v912 = vpop.permute.xlu0 %911
      %913 = vrot.lane.b32.xlu0 %v323, 30
      %v914 = vpop.permute.xlu0 %913
      %915 = vrot.lane.b32.xlu0 %v326, 30
      %v916 = vpop.permute.xlu0 %915
      %917 = vrot.lane.b32.xlu0 %v329, 30
      %v918 = vpop.permute.xlu0 %917
      %919 = vrot.lane.b32.xlu0 %v332, 30
      %v920 = vpop.permute.xlu0 %919
      %921 = vrot.lane.b32.xlu0 %v489, 30
      %v922 = vpop.permute.xlu0 %921
      %923 = vrot.lane.b32.xlu0 %v488, 30
      %v924 = vpop.permute.xlu0 %923
      %925 = vrot.lane.b32.xlu0 %v623, 30
      %v926 = vpop.permute.xlu0 %925
      %927 = vrot.lane.b32.xlu0 %v622, 30
      %v928 = vpop.permute.xlu0 %927
      %929 = vrot.lane.b32.xlu0 %v910, 30
      %v930 = vpop.permute.xlu0 %929
      %931 = vrot.lane.b32.xlu0 %v909, 30
      %v932 = vpop.permute.xlu0 %931
      %v945 = vrot.slane %v179, 7
      %v946 = vrot.slane %v181, 7
      %v947 = vrot.slane %v183, 7
      %v948 = vrot.slane %v185, 7
      %v949 = vrot.slane %v187, 7
      %v950 = vrot.slane %v189, 7
      %v951 = vrot.slane %v191, 7
      %v952 = vrot.slane %v193, 7
      %953 = vrot.lane.b32.xlu0 %v945, 40
      %v954 = vpop.permute.xlu0 %953
      %955 = vrot.lane.b32.xlu0 %v946, 40
      %v956 = vpop.permute.xlu0 %955
      %957 = vrot.lane.b32.xlu0 %v947, 40
      %v958 = vpop.permute.xlu0 %957
      %959 = vrot.lane.b32.xlu0 %v948, 40
      %v960 = vpop.permute.xlu0 %959
      %961 = vrot.lane.b32.xlu0 %v949, 40
      %v962 = vpop.permute.xlu0 %961
      %963 = vrot.lane.b32.xlu0 %v950, 40
      %v964 = vpop.permute.xlu0 %963
      %965 = vrot.lane.b32.xlu0 %v951, 40
      %v966 = vpop.permute.xlu0 %965
      %967 = vrot.lane.b32.xlu0 %v952, 40
      %v968 = vpop.permute.xlu0 %967
      %978 = vrot.lane.b32.xlu0 %v180, 50
      %v979 = vpop.permute.xlu0 %978
      %980 = vrot.lane.b32.xlu0 %v182, 50
      %v981 = vpop.permute.xlu0 %980
      %982 = vrot.lane.b32.xlu0 %v184, 50
      %v983 = vpop.permute.xlu0 %982
      %984 = vrot.lane.b32.xlu0 %v186, 50
      %v985 = vpop.permute.xlu0 %984
      %986 = vrot.lane.b32.xlu0 %v188, 50
      %v987 = vpop.permute.xlu0 %986
      %988 = vrot.lane.b32.xlu0 %v189, 50
      %v989 = vpop.permute.xlu0 %988
      %990 = vrot.lane.b32.xlu0 %v190, 50
      %v991 = vpop.permute.xlu0 %990
      %992 = vrot.lane.b32.xlu0 %v191, 50
      %v993 = vpop.permute.xlu0 %992
      %994 = vrot.lane.b32.xlu0 %v192, 50
      %v995 = vpop.permute.xlu0 %994
      %996 = vrot.lane.b32.xlu0 %v193, 50
      %v997 = vpop.permute.xlu0 %996
      %998 = vrot.lane.b32.xlu0 %v194, 50
      %v999 = vpop.permute.xlu0 %998
      %v1011 = vrot.slane %v193, 1
      %v1012 = vrot.slane %v194, 1
      %v1013 = vsel %vm211, %v1011, %v1012
      %1014 = vrot.lane.b32.xlu0 %v225, 60
      %v1015 = vpop.permute.xlu0 %1014
      %1016 = vrot.lane.b32.xlu0 %v228, 60
      %v1017 = vpop.permute.xlu0 %1016
      %1018 = vrot.lane.b32.xlu0 %v231, 60
      %v1019 = vpop.permute.xlu0 %1018
      %1020 = vrot.lane.b32.xlu0 %v234, 60
      %v1021 = vpop.permute.xlu0 %1020
      %1022 = vrot.lane.b32.xlu0 %v434, 60
      %v1023 = vpop.permute.xlu0 %1022
      %1024 = vrot.lane.b32.xlu0 %v569, 60
      %v1025 = vpop.permute.xlu0 %1024
      %1026 = vrot.lane.b32.xlu0 %v568, 60
      %v1027 = vpop.permute.xlu0 %1026
      %1028 = vrot.lane.b32.xlu0 %v838, 60
      %v1029 = vpop.permute.xlu0 %1028
      %1030 = vrot.lane.b32.xlu0 %v837, 60
      %v1031 = vpop.permute.xlu0 %1030
      %1032 = vrot.lane.b32.xlu0 %v1013, 60
      %v1033 = vpop.permute.xlu0 %1032
      %1034 = vrot.lane.b32.xlu0 %v1012, 60
      %v1035 = vpop.permute.xlu0 %1034
      %v1047 = vrot.slane %v193, 2
      %v1048 = vrot.slane %v194, 2
      %v1049 = vsel %vm260, %v1047, %v1048
      %1050 = vrot.lane.b32.xlu0 %v274, 70
      %v1051 = vpop.permute.xlu0 %1050
      %1052 = vrot.lane.b32.xlu0 %v277, 70
      %v1053 = vpop.permute.xlu0 %1052
      %1054 = vrot.lane.b32.xlu0 %v280, 70
      %v1055 = vpop.permute.xlu0 %1054
      %1056 = vrot.lane.b32.xlu0 %v283, 70
      %v1057 = vpop.permute.xlu0 %1056
      %1058 = vrot.lane.b32.xlu0 %v461, 70
      %v1059 = vpop.permute.xlu0 %1058
      %1060 = vrot.lane.b32.xlu0 %v596, 70
      %v1061 = vpop.permute.xlu0 %1060
      %1062 = vrot.lane.b32.xlu0 %v595, 70
      %v1063 = vpop.permute.xlu0 %1062
      %1064 = vrot.lane.b32.xlu0 %v874, 70
      %v1065 = vpop.permute.xlu0 %1064
      %1066 = vrot.lane.b32.xlu0 %v873, 70
      %v1067 = vpop.permute.xlu0 %1066
      %1068 = vrot.lane.b32.xlu0 %v1049, 70
      %v1069 = vpop.permute.xlu0 %1068
      %1070 = vrot.lane.b32.xlu0 %v1048, 70
      %v1071 = vpop.permute.xlu0 %1070
      %v1083 = vrot.slane %v193, 3
      %v1084 = vrot.slane %v194, 3
      %v1085 = vsel %vm309, %v1083, %v1084
      %1086 = vrot.lane.b32.xlu0 %v323, 80
      %v1087 = vpop.permute.xlu0 %1086
      %1088 = vrot.lane.b32.xlu0 %v326, 80
      %v1089 = vpop.permute.xlu0 %1088
      %1090 = vrot.lane.b32.xlu0 %v329, 80
      %v1091 = vpop.permute.xlu0 %1090
      %1092 = vrot.lane.b32.xlu0 %v332, 80
      %v1093 = vpop.permute.xlu0 %1092
      %1094 = vrot.lane.b32.xlu0 %v488, 80
      %v1095 = vpop.permute.xlu0 %1094
      %1096 = vrot.lane.b32.xlu0 %v623, 80
      %v1097 = vpop.permute.xlu0 %1096
      %1098 = vrot.lane.b32.xlu0 %v622, 80
      %v1099 = vpop.permute.xlu0 %1098
      %1100 = vrot.lane.b32.xlu0 %v910, 80
      %v1101 = vpop.permute.xlu0 %1100
      %1102 = vrot.lane.b32.xlu0 %v909, 80
      %v1103 = vpop.permute.xlu0 %1102
      %1104 = vrot.lane.b32.xlu0 %v1085, 80
      %v1105 = vpop.permute.xlu0 %1104
      %1106 = vrot.lane.b32.xlu0 %v1084, 80
      %v1107 = vpop.permute.xlu0 %1106
      %v1119 = vsel %vm700, %v178, %v840
      %v1120 = vsel %vm700, %v180, %v842
      %v1121 = vsel %vm700, %v182, %v844
      %v1122 = vsel %vm700, %v184, %v846
      %v1123 = vsel %vm700, %v186, %v848
      %v1124 = vsel %vm700, %v187, %v850
      %v1125 = vsel %vm700, %v188, %v852
      %v1126 = vsel %vm700, %v189, %v854
      %v1127 = vsel %vm700, %v190, %v856
      %v1128 = vsel %vm700, %v191, %v858
      %v1129 = vsel %vm700, %v192, %v860
      %v1130 = vsel %vm709, %v1119, %v876
      %v1131 = vsel %vm709, %v1120, %v878
      %v1132 = vsel %vm709, %v1121, %v880
      %v1133 = vsel %vm709, %v1122, %v882
      %v1134 = vsel %vm709, %v1123, %v884
      %v1135 = vsel %vm709, %v1124, %v886
      %v1136 = vsel %vm709, %v1125, %v888
      %v1137 = vsel %vm709, %v1126, %v890
      %v1138 = vsel %vm709, %v1127, %v892
      %v1139 = vsel %vm709, %v1128, %v894
      %v1140 = vsel %vm709, %v1129, %v896
      %v1141 = vsel %vm718, %v1130, %v912
      %v1142 = vsel %vm718, %v1131, %v914
      %v1143 = vsel %vm718, %v1132, %v916
      %v1144 = vsel %vm718, %v1133, %v918
      %v1145 = vsel %vm718, %v1134, %v920
      %v1146 = vsel %vm718, %v1135, %v922
      %v1147 = vsel %vm718, %v1136, %v924
      %v1148 = vsel %vm718, %v1137, %v926
      %v1149 = vsel %vm718, %v1138, %v928
      %v1150 = vsel %vm718, %v1139, %v930
      %v1151 = vsel %vm718, %v1140, %v932
      %v1152 = vsel %vm727, %v722, %v954
      %v1153 = vsel %vm727, %v1141, %v954
      %v1154 = vsel %vm727, %v723, %v956
      %v1155 = vsel %vm727, %v1142, %v956
      %v1156 = vsel %vm727, %v724, %v958
      %v1157 = vsel %vm727, %v1143, %v958
      %v1158 = vsel %vm727, %v725, %v960
      %v1159 = vsel %vm727, %v1144, %v960
      %v1160 = vsel %vm727, %v726, %v962
      %v1161 = vsel %vm727, %v1145, %v962
      %v1162 = vsel %vm727, %v1146, %v964
      %v1163 = vsel %vm727, %v1147, %v964
      %v1164 = vsel %vm727, %v1148, %v966
      %v1165 = vsel %vm727, %v1149, %v966
      %v1166 = vsel %vm727, %v1150, %v968
      %v1167 = vsel %vm727, %v1151, %v968
      %v1168 = vsel %vm736, %v1152, %v415
      %v1169 = vsel %vm736, %v1153, %v979
      %v1170 = vsel %vm736, %v1154, %v417
      %v1171 = vsel %vm736, %v1155, %v981
      %v1172 = vsel %vm736, %v1156, %v419
      %v1173 = vsel %vm736, %v1157, %v983
      %v1174 = vsel %vm736, %v1158, %v421
      %v1175 = vsel %vm736, %v1159, %v985
      %v1176 = vsel %vm736, %v1160, %v423
      %v1177 = vsel %vm736, %v1161, %v987
      %v1178 = vsel %vm736, %v1162, %v989
      %v1179 = vsel %vm736, %v1163, %v991
      %v1180 = vsel %vm736, %v1164, %v993
      %v1181 = vsel %vm736, %v1165, %v995
      %v1182 = vsel %vm736, %v1166, %v997
      %v1183 = vsel %vm736, %v1167, %v999
      %v1184 = vsel %vm745, %v1168, %v443
      %v1185 = vsel %vm745, %v1169, %v1015
      %v1186 = vsel %vm745, %v1170, %v445
      %v1187 = vsel %vm745, %v1171, %v1017
      %v1188 = vsel %vm745, %v1172, %v447
      %v1189 = vsel %vm745, %v1173, %v1019
      %v1190 = vsel %vm745, %v1174, %v449
      %v1191 = vsel %vm745, %v1175, %v1021
      %v1192 = vsel %vm745, %v1176, %v451
      %v1193 = vsel %vm745, %v1177, %v1023
      %v1194 = vsel %vm745, %v1178, %v1025
      %v1195 = vsel %vm745, %v1179, %v1027
      %v1196 = vsel %vm745, %v1180, %v1029
      %v1197 = vsel %vm745, %v1181, %v1031
      %v1198 = vsel %vm745, %v1182, %v1033
      %v1199 = vsel %vm745, %v1183, %v1035
      %v1200 = vsel %vm754, %v1184, %v470
      %v1201 = vsel %vm754, %v1185, %v1051
      %v1202 = vsel %vm754, %v1186, %v472
      %v1203 = vsel %vm754, %v1187, %v1053
      %v1204 = vsel %vm754, %v1188, %v474
      %v1205 = vsel %vm754, %v1189, %v1055
      %v1206 = vsel %vm754, %v1190, %v476
      %v1207 = vsel %vm754, %v1191, %v1057
      %v1208 = vsel %vm754, %v1192, %v478
      %v1209 = vsel %vm754, %v1193, %v1059
      %v1210 = vsel %vm754, %v1194, %v1061
      %v1211 = vsel %vm754, %v1195, %v1063
      %v1212 = vsel %vm754, %v1196, %v1065
      %v1213 = vsel %vm754, %v1197, %v1067
      %v1214 = vsel %vm754, %v1198, %v1069
      %v1215 = vsel %vm754, %v1199, %v1071
      %v1216 = vsel %vm763, %v1200, %v497
      %v1217 = vsel %vm763, %v1201, %v1087
      %v1218 = vsel %vm763, %v1202, %v499
      %v1219 = vsel %vm763, %v1203, %v1089
      %v1220 = vsel %vm763, %v1204, %v501
      %v1221 = vsel %vm763, %v1205, %v1091
      %v1222 = vsel %vm763, %v1206, %v503
      %v1223 = vsel %vm763, %v1207, %v1093
      %v1224 = vsel %vm763, %v1208, %v505
      %v1225 = vsel %vm763, %v1209, %v1095
      %v1226 = vsel %vm763, %v1210, %v1097
      %v1227 = vsel %vm763, %v1211, %v1099
      %v1228 = vsel %vm763, %v1212, %v1101
      %v1229 = vsel %vm763, %v1213, %v1103
      %v1230 = vsel %vm763, %v1214, %v1105
      %v1231 = vsel %vm763, %v1215, %v1107
      %v1248 = vrot.slane %v1216, 1
      %v1249 = vrot.slane %v1217, 1
      %v1250 = vsel %vm211, %v1248, %v1249
      %v1251 = vrot.slane %v1218, 1
      %v1252 = vrot.slane %v1219, 1
      %v1253 = vsel %vm211, %v1251, %v1252
      %v1254 = vrot.slane %v1220, 1
      %v1255 = vrot.slane %v1221, 1
      %v1256 = vsel %vm211, %v1254, %v1255
      %v1257 = vrot.slane %v1222, 1
      %v1258 = vrot.slane %v1223, 1
      %v1259 = vsel %vm211, %v1257, %v1258
      %v1260 = vrot.slane %v1224, 1
      %v1261 = vrot.slane %v1225, 1
      %v1262 = vsel %vm211, %v1260, %v1261
      %v1263 = vrot.slane %v1226, 1
      %v1264 = vrot.slane %v1227, 1
      %v1265 = vsel %vm211, %v1263, %v1264
      %v1266 = vrot.slane %v1228, 1
      %v1267 = vrot.slane %v1229, 1
      %v1268 = vsel %vm211, %v1266, %v1267
      %v1269 = vrot.slane %v1230, 1
      %v1270 = vrot.slane %v1231, 1
      %v1271 = vsel %vm211, %v1269, %v1270
      %1272 = vrot.lane.b32.xlu0 %v1250, 32
      %v1273 = vpop.permute.xlu0 %1272
      %1274 = vrot.lane.b32.xlu0 %v1253, 32
      %v1275 = vpop.permute.xlu0 %1274
      %1276 = vrot.lane.b32.xlu0 %v1256, 32
      %v1277 = vpop.permute.xlu0 %1276
      %1278 = vrot.lane.b32.xlu0 %v1259, 32
      %v1279 = vpop.permute.xlu0 %1278
      %1280 = vrot.lane.b32.xlu0 %v1262, 32
      %v1281 = vpop.permute.xlu0 %1280
      %1282 = vrot.lane.b32.xlu0 %v1265, 32
      %v1283 = vpop.permute.xlu0 %1282
      %1284 = vrot.lane.b32.xlu0 %v1268, 32
      %v1285 = vpop.permute.xlu0 %1284
      %1286 = vrot.lane.b32.xlu0 %v1271, 32
      %v1287 = vpop.permute.xlu0 %1286
      %vm1296 = vcmask 261120
      %v1297 = vsel %vm1296, %v827, %v1273
      %v1298 = vsel %vm1296, %v828, %v1275
      %v1299 = vsel %vm1296, %v829, %v1277
      %v1300 = vsel %vm1296, %v830, %v1279
      %v1301 = vsel %vm1296, %v831, %v1281
      %v1302 = vsel %vm1296, %v832, %v1283
      %v1303 = vsel %vm1296, %v833, %v1285
      %v1304 = vsel %vm1296, %v834, %v1287
      %v1305 = vld [vmem:[%s1] sm:$0xff]
      %v1306 = vld [vmem:[%s1 + $0x8] sm:$0xff]
      %v1307 = vld [vmem:[%s1 + $0x10] sm:$0xff]
      %v1308 = vld [vmem:[%s1 + $0x18] sm:$0xff]
      %v1309 = vld [vmem:[%s1 + $0x20] sm:$0xff]
      %v1310 = vld [vmem:[%s1 + $0x28] sm:$0xff]
      %v1311 = vld [vmem:[%s1 + $0x30] sm:$0xff]
      %v1312 = vld [vmem:[%s1 + $0x38] sm:$0xff]
      %v1313 = vld [vmem:[%s1 + $0x40] sm:$0xff]
      %v1314 = vld [vmem:[%s1 + $0x48] sm:$0xff]
      %v1315 = vld [vmem:[%s1 + $0x50] sm:$0xff]
      %v1316 = vld [vmem:[%s1 + $0x58] sm:$0xff]
      %v1317 = vld [vmem:[%s1 + $0x60] sm:$0xff]
      %v1318 = vld [vmem:[%s1 + $0x68] sm:$0xff]
      %v1319 = vld [vmem:[%s1 + $0x70] sm:$0xff]
      %v1320 = vld [vmem:[%s1 + $0x78] sm:$0xff]
      %v1321 = vld [vmem:[%s1 + $0x80] sm:$0xff]
      %v1322 = vld [vmem:[%s1 + $0x88] sm:$0xff]
      %v1323 = vld [vmem:[%s1 + $0x90] sm:$0xff]
      %v1324 = vld [vmem:[%s1 + $0x98] sm:$0xff]
      %v1325 = vld [vmem:[%s1 + $0xa0] sm:$0xff]
      %v1326 = vld [vmem:[%s1 + $0xa8] sm:$0xff]
      %v1327 = vld [vmem:[%s1 + $0xb0] sm:$0xff]
      %v1328 = vld [vmem:[%s1 + $0xb8] sm:$0xff]
      %v1329 = vld [vmem:[%s1 + $0xc0] sm:$0xff]
      %v1330 = vld [vmem:[%s1 + $0xc8] sm:$0xff]
      %v1331 = vld [vmem:[%s1 + $0xd0] sm:$0xff]
      %v1332 = vld [vmem:[%s1 + $0xd8] sm:$0xff]
      %v1333 = vld [vmem:[%s1 + $0xe0] sm:$0xff]
      %v1334 = vld [vmem:[%s1 + $0xe8] sm:$0xff]
      %v1335 = vld [vmem:[%s1 + $0xf0] sm:$0xff]
      %v1336 = vld [vmem:[%s1 + $0xf8] sm:$0x3]
      %v1337 = vld [vmem:[%s2] sm:$0x1]
      %v1339 = vlaneseq
      %v1340 = vshrl.u32 %v1339, 7
      %v1341 = vsub.s32 0, %v1340
      %v1342 = vrot.slane %v1337, %v1341
      %vm1344 = vcmask 998400
      %v1346 = vsel %vm1344, %v1297, 0
      %v1349 = vsel %vm1344, %v1298, 0
      %v1352 = vsel %vm1344, %v1299, 0
      %v1355 = vsel %vm1344, %v1300, 0
      %v1358 = vsel %vm1344, %v1301, 0
      %v1361 = vsel %vm1344, %v1302, 0
      %v1364 = vsel %vm1344, %v1303, 0
      %v1367 = vsel %vm1344, %v1304, 0
      %vm1369 = vcmask 1041408
      %v1371 = vsel %vm1369, %v1336, 0
      %1373 = vmatprep.subr.mxu0 0.0
      %1374 = vmatpush1.msra.mxu0 %v1305
      %1375 = vmatprep.subr.mxu0 0.0
      %1376 = vmatpush1.msra.mxu0 %v1306
      %1377 = vmatprep.subr.mxu0 0.0
      %1378 = vmatpush1.msra.mxu0 %v1307
      %1379 = vmatprep.subr.mxu0 0.0
      %1380 = vmatpush1.msra.mxu0 %v1308
      %1381 = vmatprep.subr.mxu0 0.0
      %1382 = vmatpush1.msra.mxu0 %v1309
      %1383 = vmatprep.subr.mxu0 0.0
      %1384 = vmatpush1.msra.mxu0 %v1310
      %1385 = vmatprep.subr.mxu0 0.0
      %1386 = vmatpush1.msra.mxu0 %v1311
      %1387 = vmatprep.subr.mxu0 0.0
      %1388 = vmatpush1.msra.mxu0 %v1312
      %1389 = vmatprep.subr.mxu0 0.0
      %1390 = vmatpush1.msra.mxu0 %v1313
      %1391 = vmatprep.subr.mxu0 0.0
      %1392 = vmatpush1.msra.mxu0 %v1314
      %1393 = vmatprep.subr.mxu0 0.0
      %1394 = vmatpush1.msra.mxu0 %v1315
      %1395 = vmatprep.subr.mxu0 0.0
      %1396 = vmatpush1.msra.mxu0 %v1316
      %1397 = vmatprep.subr.mxu0 0.0
      %1398 = vmatpush1.msra.mxu0 %v1317
      %1399 = vmatprep.subr.mxu0 0.0
      %1400 = vmatpush1.msra.mxu0 %v1318
      %1401 = vmatprep.subr.mxu0 0.0
      %1402 = vmatpush1.msra.mxu0 %v1319
      %1403 = vmatprep.subr.mxu0 0.0
      %1404 = vmatpush1.msra.mxu0 %v1320
      %1405 = vmatprep.subr.mxu0 0.0
      %1406 = vmatpush1.msra.mxu0 %v1321
      %1407 = vmatprep.subr.mxu0 0.0
      %1408 = vmatpush1.msra.mxu0 %v1322
      %1409 = vmatprep.subr.mxu0 0.0
      %1410 = vmatpush1.msra.mxu0 %v1323
      %1411 = vmatprep.subr.mxu0 0.0
      %1412 = vmatpush1.msra.mxu0 %v1324
      %1413 = vmatprep.subr.mxu0 0.0
      %1414 = vmatpush1.msra.mxu0 %v1325
      %1415 = vmatprep.subr.mxu0 0.0
      %1416 = vmatpush1.msra.mxu0 %v1326
      %1417 = vmatprep.subr.mxu0 0.0
      %1418 = vmatpush1.msra.mxu0 %v1327
      %1419 = vmatprep.subr.mxu0 0.0
      %1420 = vmatpush1.msra.mxu0 %v1328
      %1421 = vmatprep.subr.mxu0 0.0
      %1422 = vmatpush1.msra.mxu0 %v1329
      %1423 = vmatprep.subr.mxu0 0.0
      %1424 = vmatpush1.msra.mxu0 %v1330
      %1425 = vmatprep.subr.mxu0 0.0
      %1426 = vmatpush1.msra.mxu0 %v1331
      %1427 = vmatprep.subr.mxu0 0.0
      %1428 = vmatpush1.msra.mxu0 %v1332
      %1429 = vmatprep.subr.mxu0 0.0
      %1430 = vmatpush1.msra.mxu0 %v1333
      %1431 = vmatprep.subr.mxu0 0.0
      %1432 = vmatpush1.msra.mxu0 %v1334
      %1433 = vmatprep.subr.mxu0 0.0
      %1434 = vmatpush1.msra.mxu0 %v1335
      %1435 = vmatprep.subr.mxu0 0.0
      %1436 = vmatpush1.msra.mxu0 %v1371
      %1437 = vmatprep.mubr.f32.mxu0 %v1346
      %1438 = vmatmul.mubr.f32.gmra.mrb[0].mxu0 %v800
      %v1439 = vpop.f32.mrb[0].mxu0
      %v1440 = vadd.f32 %v1342, %v1439
      %v1441 = vpop.f32.mrb[0].mxu0
      %1442 = vmatprep.mubr.f32.mxu0 %v1349
      %1443 = vmatmul.mubr.f32.gmra.mrb[0].mxu0 %v801
      %v1444 = vpop.f32.mrb[0].mxu0
      %v1445 = vadd.f32 %v1342, %v1444
      %v1446 = vpop.f32.mrb[0].mxu0
      %1447 = vmatprep.mubr.f32.mxu0 %v1352
      %1448 = vmatmul.mubr.f32.gmra.mrb[0].mxu0 %v802
      %v1449 = vpop.f32.mrb[0].mxu0
      %v1450 = vadd.f32 %v1342, %v1449
      %v1451 = vpop.f32.mrb[0].mxu0
      %1452 = vmatprep.mubr.f32.mxu0 %v1355
      %1453 = vmatmul.mubr.f32.gmra.mrb[0].mxu0 %v803
      %v1454 = vpop.f32.mrb[0].mxu0
      %v1455 = vadd.f32 %v1342, %v1454
      %v1456 = vpop.f32.mrb[0].mxu0
      %1457 = vmatprep.mubr.f32.mxu0 %v1358
      %1458 = vmatmul.mubr.f32.gmra.mrb[0].mxu0 %v804
      %v1459 = vpop.f32.mrb[0].mxu0
      %v1460 = vadd.f32 %v1342, %v1459
      %v1461 = vpop.f32.mrb[0].mxu0
      %1462 = vmatprep.mubr.f32.mxu0 %v1361
      %1463 = vmatmul.mubr.f32.gmra.mrb[0].mxu0 %v805
      %v1464 = vpop.f32.mrb[0].mxu0
      %v1465 = vadd.f32 %v1342, %v1464
      %v1466 = vpop.f32.mrb[0].mxu0
      %1467 = vmatprep.mubr.f32.mxu0 %v1364
      %1468 = vmatmul.mubr.f32.gmra.mrb[0].mxu0 %v806
      %v1469 = vpop.f32.mrb[0].mxu0
      %v1470 = vadd.f32 %v1342, %v1469
      %v1471 = vpop.f32.mrb[0].mxu0
      %1472 = vmatprep.mubr.f32.mxu0 %v1367
      %1473 = vmatmul.mubr.f32.gmra.mrb[0].mxu0 %v807
      %v1474 = vpop.f32.mrb[0].mxu0
      %v1475 = vadd.f32 %v1342, %v1474
      %v1476 = vpop.f32.mrb[0].mxu0
      %1477 = vdwg.mxu0
      %v1478 = vpack.c.bf16 %v1445, %v1440
      %v1479 = vpack.c.bf16 %v1455, %v1450
      %v1480 = vpack.c.bf16 %v1465, %v1460
      %v1481 = vpack.c.bf16 %v1475, %v1470
      %v1486 = vunpack.c.l.b16 %v1478
      %v1487 = vunpack.c.h.b16 %v1478
      %v1488 = vunpack.c.l.b16 %v1479
      %v1489 = vunpack.c.h.b16 %v1479
      %v1490 = vunpack.c.l.b16 %v1480
      %v1491 = vunpack.c.h.b16 %v1480
      %v1492 = vunpack.c.l.b16 %v1481
      %v1493 = vunpack.c.h.b16 %v1481
      %v1494 = vpack.c.b16 %v1486, %v1486
      %v1495 = vpack.c.b16 %v1487, %v1487
      %v1496 = vpack.c.b16 %v1488, %v1488
      %v1497 = vpack.c.b16 %v1489, %v1489
      %v1498 = vpack.c.b16 %v1490, %v1490
      %v1499 = vpack.c.b16 %v1491, %v1491
      %v1500 = vpack.c.b16 %v1492, %v1492
      %v1501 = vpack.c.b16 %v1493, %v1493
      %vm1510 = vcmask 158720
      %1511 = vst.msk [vmem:[%s170] sm:$0xf] %vm1510, %v1494
      %1512 = vst.msk [vmem:[%s170 + $0x4] sm:$0xf] %vm1510, %v1495
      %1513 = vst.msk [vmem:[%s170 + $0x8] sm:$0xf] %vm1510, %v1496
      %1514 = vst.msk [vmem:[%s170 + $0xc] sm:$0xf] %vm1510, %v1497
      %1515 = vst.msk [vmem:[%s170 + $0x10] sm:$0xf] %vm1510, %v1498
      %1516 = vst.msk [vmem:[%s170 + $0x14] sm:$0xf] %vm1510, %v1499
      %1517 = vst.msk [vmem:[%s170 + $0x18] sm:$0xf] %vm1510, %v1500
      %1518 = vst.msk [vmem:[%s170 + $0x1c] sm:$0xf] %vm1510, %v1501
      %p1519 = scmp.lt.s32.totalorder %s14, 1
      %s1520 = scalar_select %p1519, %s14, 1
      %s1521 = smul.addr %s1520, 8
      %s1522 = smul.addr %s1521, 4
      %s1523 = scalar_lea.vmem %s3, %s1522
      // Predicated region
      $region33: #{neural_network_explainer_forward.7} parent=31 // pred_check
        %p1524 = pneg %p100
      $region34: #{neural_network_explainer_forward.7} parent=31 // pred_check_branch
        %1526 = sbr.rel (%p1524) target = $region36
      $region35: #{neural_network_explainer_forward.7} parent=31 // pred_region
        _
      $region36: #{neural_network_explainer_forward.7} parent=31 // pred_fallthru
        _
    $region32: #{neural_network_explainer_forward.7} parent=5 // pred_fallthru
      _
    %p1527 = scmp.le.s32.totalorder 2, %s9
    // Predicated region
    $region37: #{neural_network_explainer_forward.7} parent=5 // pred_check
      %p1528 = pneg %p1527
    $region38: #{neural_network_explainer_forward.7} parent=5 // pred_check_branch
      %1530 = sbr.rel (%p1528) target = $region40
    $region39: #{neural_network_explainer_forward.7} parent=5 // pred_region
      %s1531 = ssub.s32 %s9, 2
      // Predicated region
      $region41: #{neural_network_explainer_forward.7} parent=39 // pred_check
        %p1532 = pneg %p106
      $region42: #{neural_network_explainer_forward.7} parent=39 // pred_check_branch
        %1534 = sbr.rel (%p1532) target = $region44
      $region43: #{neural_network_explainer_forward.7} parent=39 // pred_region
        %p1535 = scmp.lt.s32.totalorder %s15, 1
        %s1536 = scalar_select %p1535, %s15, 1
        %s1537 = smul.addr %s1536, 8
        %s1538 = smul.addr %s1537, 4
        %s1539 = scalar_lea.vmem %s3, %s1538
      $region44: #{neural_network_explainer_forward.7} parent=39 // pred_fallthru
        _
    $region40: #{neural_network_explainer_forward.7} parent=5 // pred_fallthru
      _
  $region6: #{neural_network_explainer_forward.7} parent=0 // loop_footer
    %s13 = sadd.s32 1, %s9
  $region7: #{neural_network_explainer_forward.7} parent=0 // loop_footer_branch
    %8 = sbr.rel target = $region3
  $region8: #{neural_network_explainer_forward.7} parent=0 // loop_exit
    _

// kernel: neural_network_explainer_forward.9
$region0: #{neural_network_explainer_forward.9}
  #allocation0 [shape = 'u32[]', space=smem, size = 0x4, offset = 0x4, fixed_abs, tag = 'smem constant byte address 0x4 - core index']
  #allocation1 [shape = 'u32[144,128]{1,0:T(1,128)}', space=vmem, size = 0x12000, scoped, tag = 'internal scratch']
  %s0 = inlined_call_operand.vmem [shape: f32[2,320], index: 0, kind: input, shape index: {}]
  %s1 = inlined_call_operand.vmem [shape: f32[320,50], index: 1, kind: input, shape index: {}]
  %s2 = inlined_call_operand.vmem [shape: f32[1,50], index: 2, kind: input, shape index: {}]
  %s3 = inlined_call_operand.vmem [shape: f32[50,10], index: 3, kind: input, shape index: {}]
  %s4 = inlined_call_operand.vmem [shape: f32[1,10], index: 4, kind: input, shape index: {}]
  %s5 = inlined_call_operand.hbm [shape: f32[2,10], index: 5, kind: output, shape index: {}]
  %s6 = sld [smem:[#allocation0]]
  $region30: #{neural_network_explainer_forward.9} parent=0
    _
  %s8 = ssub.s32 1, %s6
  %s9 = scalar_select 0, %s8, %s6
  $region1: #{neural_network_explainer_forward.9} parent=0
    #allocation2 [shape = 'u8[1024]{0}', space=vmem, size = 0x400, scoped, tag = 'output window, operand 0, single buffered']
    #allocation3 [shape = 's32[1]{0}', space=sflag, size = 0x4, scoped, tag = 'scoped memory for neural_network_explainer_forward.9']
    %10 = vsyncpa [#allocation3], 0
    // Predicated region
    $region2: #{neural_network_explainer_forward.9} parent=1 // pred_check
      _
    $region3: #{neural_network_explainer_forward.9} parent=1 // pred_check_branch
      %12 = sbr.rel (0) target = $region5
    $region4: #{neural_network_explainer_forward.9} parent=1 // pred_region
      _
    $region5: #{neural_network_explainer_forward.9} parent=1 // pred_fallthru
      _
    // Predicated region
    $region6: #{neural_network_explainer_forward.9} parent=1 // pred_check
      _
    $region7: #{neural_network_explainer_forward.9} parent=1 // pred_check_branch
      %14 = sbr.rel (0) target = $region9
    $region8: #{neural_network_explainer_forward.9} parent=1 // pred_region
      _
    $region9: #{neural_network_explainer_forward.9} parent=1 // pred_fallthru
      _
    // Predicated region
    $region10: #{neural_network_explainer_forward.9} parent=1 // pred_check
      _
    $region11: #{neural_network_explainer_forward.9} parent=1 // pred_check_branch
      %16 = sbr.rel (0) target = $region13
    $region12: #{neural_network_explainer_forward.9} parent=1 // pred_region
      _
    $region13: #{neural_network_explainer_forward.9} parent=1 // pred_fallthru
      _
    // Predicated region
    $region14: #{neural_network_explainer_forward.9} parent=1 // pred_check
      _
    $region15: #{neural_network_explainer_forward.9} parent=1 // pred_check_branch
      %18 = sbr.rel (0) target = $region17
    $region16: #{neural_network_explainer_forward.9} parent=1 // pred_region
      _
    $region17: #{neural_network_explainer_forward.9} parent=1 // pred_fallthru
      _
    // Predicated region
    $region18: #{neural_network_explainer_forward.9} parent=1 // pred_check
      _
    $region19: #{neural_network_explainer_forward.9} parent=1 // pred_check_branch
      %20 = sbr.rel (0) target = $region21
    $region20: #{neural_network_explainer_forward.9} parent=1 // pred_region
      _
    $region21: #{neural_network_explainer_forward.9} parent=1 // pred_fallthru
      _
    %v21 = vld [vmem:[%s0] sm:$0x3f]
    %v22 = vld [vmem:[%s1] sm:$0xff]
    %v23 = vld [vmem:[%s1 + $0x8] sm:$0xff]
    %v24 = vld [vmem:[%s1 + $0x10] sm:$0xff]
    %v25 = vld [vmem:[%s1 + $0x18] sm:$0xff]
    %v26 = vld [vmem:[%s1 + $0x20] sm:$0xff]
    %v27 = vld [vmem:[%s1 + $0x28] sm:$0xff]
    %v28 = vld [vmem:[%s1 + $0x30] sm:$0xff]
    %v29 = vld [vmem:[%s1 + $0x38] sm:$0xff]
    %v30 = vld [vmem:[%s1 + $0x40] sm:$0xff]
    %v31 = vld [vmem:[%s1 + $0x48] sm:$0xff]
    %v32 = vld [vmem:[%s1 + $0x50] sm:$0xff]
    %v33 = vld [vmem:[%s1 + $0x58] sm:$0xff]
    %v34 = vld [vmem:[%s1 + $0x60] sm:$0xff]
    %v35 = vld [vmem:[%s1 + $0x68] sm:$0xff]
    %v36 = vld [vmem:[%s1 + $0x70] sm:$0xff]
    %v37 = vld [vmem:[%s1 + $0x78] sm:$0xff]
    %v38 = vld [vmem:[%s1 + $0x80] sm:$0xff]
    %v39 = vld [vmem:[%s1 + $0x88] sm:$0xff]
    %v40 = vld [vmem:[%s1 + $0x90] sm:$0xff]
    %v41 = vld [vmem:[%s1 + $0x98] sm:$0xff]
    %v42 = vld [vmem:[%s1 + $0xa0] sm:$0xff]
    %v43 = vld [vmem:[%s1 + $0xa8] sm:$0xff]
    %v44 = vld [vmem:[%s1 + $0xb0] sm:$0xff]
    %v45 = vld [vmem:[%s1 + $0xb8] sm:$0xff]
    %v46 = vld [vmem:[%s1 + $0xc0] sm:$0xff]
    %v47 = vld [vmem:[%s1 + $0xc8] sm:$0xff]
    %v48 = vld [vmem:[%s1 + $0xd0] sm:$0xff]
    %v49 = vld [vmem:[%s1 + $0xd8] sm:$0xff]
    %v50 = vld [vmem:[%s1 + $0xe0] sm:$0xff]
    %v51 = vld [vmem:[%s1 + $0xe8] sm:$0xff]
    %v52 = vld [vmem:[%s1 + $0xf0] sm:$0xff]
    %v53 = vld [vmem:[%s1 + $0xf8] sm:$0xff]
    %v54 = vld [vmem:[%s1 + $0x100] sm:$0xff]
    %v55 = vld [vmem:[%s1 + $0x108] sm:$0xff]
    %v56 = vld [vmem:[%s1 + $0x110] sm:$0xff]
    %v57 = vld [vmem:[%s1 + $0x118] sm:$0xff]
    %v58 = vld [vmem:[%s1 + $0x120] sm:$0xff]
    %v59 = vld [vmem:[%s1 + $0x128] sm:$0xff]
    %v60 = vld [vmem:[%s1 + $0x130] sm:$0xff]
    %v61 = vld [vmem:[%s1 + $0x138] sm:$0xff]
    %v62 = vld [vmem:[%s2] sm:$0x1]
    %v64 = vlaneseq
    %v65 = vshrl.u32 %v64, 7
    %v66 = vsub.s32 0, %v65
    %v67 = vrot.slane %v62, %v66
    %v70 = vcombine.high %v21, %v21
    %v72 = vunpack.c.l.s4 1983009808
    %v73 = vunpack.c.0.s8 %v72
    %v74 = vlaneseq
    %v75 = vshrl.u32 %v74, 7
    %v76 = vsub.s32 %v73, %v75
    %v77 = vrot.slane %v21, %v76
    %v79 = vunpack.c.l.s4 1983009808
    %v80 = vunpack.c.0.s8 %v79
    %v81 = vlaneseq
    %v82 = vshrl.u32 %v81, 7
    %v83 = vsub.s32 %v80, %v82
    %v84 = vrot.slane %v70, %v83
    %v85 = vcombine.high %v77, %v77
    %vm88 = vcmask 523264
    %v89 = vsel %vm88, %v84, 0
    %91 = vmatprep.subr.mxu0 0.0
    %92 = vmatpush1.msra.mxu0 %v22
    %93 = vmatprep.subr.mxu0 0.0
    %94 = vmatpush1.msra.mxu0 %v23
    %95 = vmatprep.subr.mxu0 0.0
    %96 = vmatpush1.msra.mxu0 %v24
    %97 = vmatprep.subr.mxu0 0.0
    %98 = vmatpush1.msra.mxu0 %v25
    %99 = vmatprep.subr.mxu0 0.0
    %100 = vmatpush1.msra.mxu0 %v26
    %101 = vmatprep.subr.mxu0 0.0
    %102 = vmatpush1.msra.mxu0 %v27
    %103 = vmatprep.subr.mxu0 0.0
    %104 = vmatpush1.msra.mxu0 %v28
    %105 = vmatprep.subr.mxu0 0.0
    %106 = vmatpush1.msra.mxu0 %v29
    %107 = vmatprep.subr.mxu0 0.0
    %108 = vmatpush1.msra.mxu0 %v30
    %109 = vmatprep.subr.mxu0 0.0
    %110 = vmatpush1.msra.mxu0 %v31
    %111 = vmatprep.subr.mxu0 0.0
    %112 = vmatpush1.msra.mxu0 %v32
    %113 = vmatprep.subr.mxu0 0.0
    %114 = vmatpush1.msra.mxu0 %v33
    %115 = vmatprep.subr.mxu0 0.0
    %116 = vmatpush1.msra.mxu0 %v34
    %117 = vmatprep.subr.mxu0 0.0
    %118 = vmatpush1.msra.mxu0 %v35
    %119 = vmatprep.subr.mxu0 0.0
    %120 = vmatpush1.msra.mxu0 %v36
    %121 = vmatprep.subr.mxu0 0.0
    %122 = vmatpush1.msra.mxu0 %v37
    %123 = vmatprep.subr.mxu0 0.0
    %124 = vmatpush1.msra.mxu0 %v38
    %125 = vmatprep.subr.mxu0 0.0
    %126 = vmatpush1.msra.mxu0 %v39
    %127 = vmatprep.subr.mxu0 0.0
    %128 = vmatpush1.msra.mxu0 %v40
    %129 = vmatprep.subr.mxu0 0.0
    %130 = vmatpush1.msra.mxu0 %v41
    %131 = vmatprep.subr.mxu0 0.0
    %132 = vmatpush1.msra.mxu0 %v42
    %133 = vmatprep.subr.mxu0 0.0
    %134 = vmatpush1.msra.mxu0 %v43
    %135 = vmatprep.subr.mxu0 0.0
    %136 = vmatpush1.msra.mxu0 %v44
    %137 = vmatprep.subr.mxu0 0.0
    %138 = vmatpush1.msra.mxu0 %v45
    %139 = vmatprep.subr.mxu0 0.0
    %140 = vmatpush1.msra.mxu0 %v46
    %141 = vmatprep.subr.mxu0 0.0
    %142 = vmatpush1.msra.mxu0 %v47
    %143 = vmatprep.subr.mxu0 0.0
    %144 = vmatpush1.msra.mxu0 %v48
    %145 = vmatprep.subr.mxu0 0.0
    %146 = vmatpush1.msra.mxu0 %v49
    %147 = vmatprep.subr.mxu0 0.0
    %148 = vmatpush1.msra.mxu0 %v50
    %149 = vmatprep.subr.mxu0 0.0
    %150 = vmatpush1.msra.mxu0 %v51
    %151 = vmatprep.subr.mxu0 0.0
    %152 = vmatpush1.msra.mxu0 %v52
    %153 = vmatprep.subr.mxu0 0.0
    %154 = vmatpush1.msra.mxu0 %v53
    %155 = vmatprep.mubr.f32.mxu0 %v85
    %156 = vmatmul.mubr.f32.gmra.mrb[0].mxu0 %v77
    %v157 = vpop.f32.mrb[0].mxu0
    %v158 = vadd.f32 %v67, %v157
    %v159 = vpop.f32.mrb[0].mxu0
    %160 = vdwg.mxu0
    %161 = vmatprep.subr.mxu0 0.0
    %162 = vmatpush1.msra.mxu0 %v54
    %163 = vmatprep.subr.mxu0 0.0
    %164 = vmatpush1.msra.mxu0 %v55
    %165 = vmatprep.subr.mxu0 0.0
    %166 = vmatpush1.msra.mxu0 %v56
    %167 = vmatprep.subr.mxu0 0.0
    %168 = vmatpush1.msra.mxu0 %v57
    %169 = vmatprep.subr.mxu0 0.0
    %170 = vmatpush1.msra.mxu0 %v58
    %171 = vmatprep.subr.mxu0 0.0
    %172 = vmatpush1.msra.mxu0 %v59
    %173 = vmatprep.subr.mxu0 0.0
    %174 = vmatpush1.msra.mxu0 %v60
    %175 = vmatprep.subr.mxu0 0.0
    %176 = vmatpush1.msra.mxu0 %v61
    %177 = vmatprep.subr.mxu0 0.0
    %178 = vmatpush1.msra.mxu0 0.0
    %179 = vmatprep.subr.mxu0 0.0
    %180 = vmatpush1.msra.mxu0 0.0
    %181 = vmatprep.subr.mxu0 0.0
    %182 = vmatpush1.msra.mxu0 0.0
    %183 = vmatprep.subr.mxu0 0.0
    %184 = vmatpush1.msra.mxu0 0.0
    %185 = vmatprep.subr.mxu0 0.0
    %186 = vmatpush1.msra.mxu0 0.0
    %187 = vmatprep.subr.mxu0 0.0
    %188 = vmatpush1.msra.mxu0 0.0
    %189 = vmatprep.subr.mxu0 0.0
    %190 = vmatpush1.msra.mxu0 0.0
    %191 = vmatprep.subr.mxu0 0.0
    %192 = vmatpush1.msra.mxu0 0.0
    %193 = vmatprep.subr.mxu0 0.0
    %194 = vmatpush1.msra.mxu0 0.0
    %195 = vmatprep.subr.mxu0 0.0
    %196 = vmatpush1.msra.mxu0 0.0
    %197 = vmatprep.subr.mxu0 0.0
    %198 = vmatpush1.msra.mxu0 0.0
    %199 = vmatprep.subr.mxu0 0.0
    %200 = vmatpush1.msra.mxu0 0.0
    %201 = vmatprep.subr.mxu0 0.0
    %202 = vmatpush1.msra.mxu0 0.0
    %203 = vmatprep.subr.mxu0 0.0
    %204 = vmatpush1.msra.mxu0 0.0
    %205 = vmatprep.subr.mxu0 0.0
    %206 = vmatpush1.msra.mxu0 0.0
    %207 = vmatprep.subr.mxu0 0.0
    %208 = vmatpush1.msra.mxu0 0.0
    %209 = vmatprep.subr.mxu0 0.0
    %210 = vmatpush1.msra.mxu0 0.0
    %211 = vmatprep.subr.mxu0 0.0
    %212 = vmatpush1.msra.mxu0 0.0
    %213 = vmatprep.subr.mxu0 0.0
    %214 = vmatpush1.msra.mxu0 0.0
    %215 = vmatprep.subr.mxu0 0.0
    %216 = vmatpush1.msra.mxu0 0.0
    %217 = vmatprep.subr.mxu0 0.0
    %218 = vmatpush1.msra.mxu0 0.0
    %219 = vmatprep.subr.mxu0 0.0
    %220 = vmatpush1.msra.mxu0 0.0
    %221 = vmatprep.subr.mxu0 0.0
    %222 = vmatpush1.msra.mxu0 0.0
    %223 = vmatprep.subr.mxu0 0.0
    %224 = vmatpush1.msra.mxu0 0.0
    %225 = vmatprep.mubr.f32.mxu0 0.0
    %226 = vmatmul.mubr.f32.gmra.mrb[0].mxu0 %v89
    %v227 = vpop.f32.mrb[0].mxu0
    %v228 = vadd.f32 %v158, %v227
    %v229 = vpop.f32.mrb[0].mxu0
    %230 = vdwg.mxu0
    %v231 = vmax.f32 %v228, 0.0
    %v232 = vld [vmem:[%s3] sm:$0xff]
    %v233 = vld [vmem:[%s3 + $0x8] sm:$0xff]
    %v234 = vld [vmem:[%s3 + $0x10] sm:$0xff]
    %v235 = vld [vmem:[%s3 + $0x18] sm:$0xff]
    %v236 = vld [vmem:[%s3 + $0x20] sm:$0xff]
    %v237 = vld [vmem:[%s3 + $0x28] sm:$0xff]
    %v238 = vld [vmem:[%s3 + $0x30] sm:$0x3]
    %v239 = vld [vmem:[%s4] sm:$0x1]
    %v241 = vlaneseq
    %v242 = vshrl.u32 %v241, 7
    %v243 = vsub.s32 0, %v242
    %v244 = vrot.slane %v239, %v243
    %vm246 = vcmask 408576
    %v248 = vsel %vm246, %v231, 0
    %vm250 = vcmask 1041408
    %v252 = vsel %vm250, %v238, 0
    %254 = vmatprep.subr.mxu0 0.0
    %255 = vmatpush1.msra.mxu0 %v232
    %256 = vmatprep.subr.mxu0 0.0
    %257 = vmatpush1.msra.mxu0 %v233
    %258 = vmatprep.subr.mxu0 0.0
    %259 = vmatpush1.msra.mxu0 %v234
    %260 = vmatprep.subr.mxu0 0.0
    %261 = vmatpush1.msra.mxu0 %v235
    %262 = vmatprep.subr.mxu0 0.0
    %263 = vmatpush1.msra.mxu0 %v236
    %264 = vmatprep.subr.mxu0 0.0
    %265 = vmatpush1.msra.mxu0 %v237
    %266 = vmatprep.subr.mxu0 0.0
    %267 = vmatpush1.msra.mxu0 %v252
    %268 = vmatprep.subr.mxu0 0.0
    %269 = vmatpush1.msra.mxu0 0.0
    %270 = vmatprep.subr.mxu0 0.0
    %271 = vmatpush1.msra.mxu0 0.0
    %272 = vmatprep.subr.mxu0 0.0
    %273 = vmatpush1.msra.mxu0 0.0
    %274 = vmatprep.subr.mxu0 0.0
    %275 = vmatpush1.msra.mxu0 0.0
    %276 = vmatprep.subr.mxu0 0.0
    %277 = vmatpush1.msra.mxu0 0.0
    %278 = vmatprep.subr.mxu0 0.0
    %279 = vmatpush1.msra.mxu0 0.0
    %280 = vmatprep.subr.mxu0 0.0
    %281 = vmatpush1.msra.mxu0 0.0
    %282 = vmatprep.subr.mxu0 0.0
    %283 = vmatpush1.msra.mxu0 0.0
    %284 = vmatprep.subr.mxu0 0.0
    %285 = vmatpush1.msra.mxu0 0.0
    %286 = vmatprep.subr.mxu0 0.0
    %287 = vmatpush1.msra.mxu0 0.0
    %288 = vmatprep.subr.mxu0 0.0
    %289 = vmatpush1.msra.mxu0 0.0
    %290 = vmatprep.subr.mxu0 0.0
    %291 = vmatpush1.msra.mxu0 0.0
    %292 = vmatprep.subr.mxu0 0.0
    %293 = vmatpush1.msra.mxu0 0.0
    %294 = vmatprep.subr.mxu0 0.0
    %295 = vmatpush1.msra.mxu0 0.0
    %296 = vmatprep.subr.mxu0 0.0
    %297 = vmatpush1.msra.mxu0 0.0
    %298 = vmatprep.subr.mxu0 0.0
    %299 = vmatpush1.msra.mxu0 0.0
    %300 = vmatprep.subr.mxu0 0.0
    %301 = vmatpush1.msra.mxu0 0.0
    %302 = vmatprep.subr.mxu0 0.0
    %303 = vmatpush1.msra.mxu0 0.0
    %304 = vmatprep.subr.mxu0 0.0
    %305 = vmatpush1.msra.mxu0 0.0
    %306 = vmatprep.subr.mxu0 0.0
    %307 = vmatpush1.msra.mxu0 0.0
    %308 = vmatprep.subr.mxu0 0.0
    %309 = vmatpush1.msra.mxu0 0.0
    %310 = vmatprep.subr.mxu0 0.0
    %311 = vmatpush1.msra.mxu0 0.0
    %312 = vmatprep.subr.mxu0 0.0
    %313 = vmatpush1.msra.mxu0 0.0
    %314 = vmatprep.subr.mxu0 0.0
    %315 = vmatpush1.msra.mxu0 0.0
    %316 = vmatprep.subr.mxu0 0.0
    %317 = vmatpush1.msra.mxu0 0.0
    %318 = vmatprep.mubr.f32.mxu0 0.0
    %319 = vmatmul.mubr.f32.gmra.mrb[0].mxu0 %v248
    %v320 = vpop.f32.mrb[0].mxu0
    %v321 = vadd.f32 %v244, %v320
    %v322 = vpop.f32.mrb[0].mxu0
    %323 = vdwg.mxu0
    %vm324 = vcmask 74752
    %v325 = vsel %vm324, %v321, -inf
    %326 = vmax.xlane.f32.xlu0 %v325
    %v327 = vpop.xlane.xlu0 %326
    %v328 = vsub.f32 %v321, %v327
    %v329 = vmul.f32 %v328, 1.442695
    %v330 = vpow.pop %v329
    %v331 = vsel %vm324, %v330, 0.0
    %332 = vadd.xlane.f32.xlu0 %v331
    %v333 = vpop.xlane.xlu0 %332
    %v334 = vrcp.pop %v333
    %v335 = vmul.f32 %v330, %v334
    %336 = vst.msk [vmem:[#allocation2] sm:$0x3] %vm324, %v335
    // Predicated region
    $region22: #{neural_network_explainer_forward.9} parent=1 // pred_check
      _
    $region23: #{neural_network_explainer_forward.9} parent=1 // pred_check_branch
      %338 = sbr.rel (0) target = $region25
    $region24: #{neural_network_explainer_forward.9} parent=1 // pred_region
      %s340 = ssub.s32 32, 32
      %341 = vsyncadd [#allocation3], %s340
      %s343 = sshll.u32 [#allocation2], 4
      %s344 = int_to_ptr.vmem [resolvable:$true] %s343
      %346 = dma.vmem_to_hbm [thread:$0]  %s344, 32, %s5, [#allocation3]
    $region25: #{neural_network_explainer_forward.9} parent=1 // pred_fallthru
      _
    // Predicated region
    $region26: #{neural_network_explainer_forward.9} parent=1 // pred_check
      _
    $region27: #{neural_network_explainer_forward.9} parent=1 // pred_check_branch
      %348 = sbr.rel (0) target = $region29
    $region28: #{neural_network_explainer_forward.9} parent=1 // pred_region
      %349 = dma.done [#allocation3], 32
    $region29: #{neural_network_explainer_forward.9} parent=1 // pred_fallthru
      _
    %350 = vsyncpa [#allocation3], 1

// kernel: neural_network_explainer_forward.5
$region0: #{neural_network_explainer_forward.5}
  #allocation0 [shape = 'u32[]', space=smem, size = 0x4, offset = 0x4, fixed_abs, tag = 'smem constant byte address 0x4 - core index']
  #allocation1 [shape = 'u32[144,128]{1,0:T(1,128)}', space=vmem, size = 0x12000, scoped, tag = 'internal scratch']
  %s0 = inlined_call_operand.vmem [shape: f32[2,28,28,1], index: 0, kind: input, shape index: {}]
  %s1 = inlined_call_operand.vmem [shape: f32[25,10], index: 1, kind: input, shape index: {}]
  %s2 = inlined_call_operand.vmem [shape: f32[1,10], index: 2, kind: input, shape index: {}]
  %s3 = inlined_call_operand.vmem [shape: bf16[2,24,24,10], index: 3, kind: output, shape index: {}]
  %s4 = sld [smem:[#allocation0]]
  $region45: #{neural_network_explainer_forward.5} parent=0
    _
  %s6 = ssub.s32 1, %s4
  %s7 = scalar_select 0, %s6, %s4
  loop: start=0, step=1, limit=4
  $region2: #{neural_network_explainer_forward.5} parent=0 // loop_pre_header
    _
  $region3: #{neural_network_explainer_forward.5} parent=0 // loop_header
    %s9 = sphi 0, %s13
    %p10 = scmp.ge.s32.totalorder %s9, 4
    %s19 = sphi 0, %s21
    %s22 = sphi 0, %s19
    %s23 = sphi 0, %s22
    %s39 = sphi 0, %s23
    %s43 = sphi 0, %s43
    %s45 = sphi 0, %s43
    %s46 = sphi 0, %s45
    %s60 = sphi 0, %s46
    %s64 = sphi 0, %s64
    %s66 = sphi 0, %s64
    %s67 = sphi 0, %s66
    %s81 = sphi 0, %s67
    %s87 = sphi 0, %s89
    %s90 = sphi 0, %s87
    %s91 = sphi 0, %s90
    %s107 = sphi 0, %s91
  $region4: #{neural_network_explainer_forward.5} parent=0 // loop_header_branch
    %12 = sbr.rel (%p10) target = $region8
  $region5: #{neural_network_explainer_forward.5} parent=0 // loop_body
    %s14 = ssub.s32 %s9, 1
    %s15 = ssub.s32 %s9, 2
    %s16 = sadd.s32 %s9, 1
    %s17 = ssub.s32 %s9, %s16
    %p18 = scmp.eq.s32.totalorder %s17, 0
    %s20 = sadd.s32 %s19, 1
    %s21 = scalar_select %p18, %s19, %s20
    %p24 = pneg %p18
    %p25 = scmp.eq.s32.totalorder %s9, 1
    %p26 = por %p24, %p25
    %p27 = scmp.ne.s32.totalorder %s19, %s22
    %p28 = scmp.eq.s32.totalorder %s9, 0
    %p29 = por %p27, %p28
    %p30 = scmp.ne.s32.totalorder %s19, %s22
    %p31 = scmp.eq.s32.totalorder %s14, 1
    %p32 = por %p30, %p31
    %p33 = scmp.ne.s32.totalorder %s22, %s23
    %p34 = scmp.eq.s32.totalorder %s14, 0
    %p35 = por %p33, %p34
    %p36 = scmp.ne.s32.totalorder %s22, %s23
    %p37 = scmp.eq.s32.totalorder %s15, 1
    %p38 = por %p36, %p37
    %p40 = scmp.ne.s32.totalorder %s23, %s39
    %p41 = scmp.eq.s32.totalorder %s15, 0
    %p42 = por %p40, %p41
    %s44 = sadd.s32 %s43, 1
    %p47 = scmp.eq.s32.totalorder %s9, 1
    %p48 = scmp.ne.s32.totalorder %s43, %s45
    %p49 = scmp.eq.s32.totalorder %s9, 0
    %p50 = por %p48, %p49
    %p51 = scmp.ne.s32.totalorder %s43, %s45
    %p52 = scmp.eq.s32.totalorder %s14, 1
    %p53 = por %p51, %p52
    %p54 = scmp.ne.s32.totalorder %s45, %s46
    %p55 = scmp.eq.s32.totalorder %s14, 0
    %p56 = por %p54, %p55
    %p57 = scmp.ne.s32.totalorder %s45, %s46
    %p58 = scmp.eq.s32.totalorder %s15, 1
    %p59 = por %p57, %p58
    %p61 = scmp.ne.s32.totalorder %s46, %s60
    %p62 = scmp.eq.s32.totalorder %s15, 0
    %p63 = por %p61, %p62
    %s65 = sadd.s32 %s64, 1
    %p68 = scmp.eq.s32.totalorder %s9, 1
    %p69 = scmp.ne.s32.totalorder %s64, %s66
    %p70 = scmp.eq.s32.totalorder %s9, 0
    %p71 = por %p69, %p70
    %p72 = scmp.ne.s32.totalorder %s64, %s66
    %p73 = scmp.eq.s32.totalorder %s14, 1
    %p74 = por %p72, %p73
    %p75 = scmp.ne.s32.totalorder %s66, %s67
    %p76 = scmp.eq.s32.totalorder %s14, 0
    %p77 = por %p75, %p76
    %p78 = scmp.ne.s32.totalorder %s66, %s67
    %p79 = scmp.eq.s32.totalorder %s15, 1
    %p80 = por %p78, %p79
    %p82 = scmp.ne.s32.totalorder %s67, %s81
    %p83 = scmp.eq.s32.totalorder %s15, 0
    %p84 = por %p82, %p83
    %s85 = ssub.s32 %s9, %s16
    %p86 = scmp.eq.s32.totalorder %s85, 0
    %s88 = sadd.s32 %s87, 1
    %s89 = scalar_select %p86, %s87, %s88
    %p92 = pneg %p86
    %p93 = scmp.eq.s32.totalorder %s9, 1
    %p94 = por %p92, %p93
    %p95 = scmp.ne.s32.totalorder %s87, %s90
    %p96 = scmp.eq.s32.totalorder %s9, 0
    %p97 = por %p95, %p96
    %p98 = scmp.ne.s32.totalorder %s87, %s90
    %p99 = scmp.eq.s32.totalorder %s14, 1
    %p100 = por %p98, %p99
    %p101 = scmp.ne.s32.totalorder %s90, %s91
    %p102 = scmp.eq.s32.totalorder %s14, 0
    %p103 = por %p101, %p102
    %p104 = scmp.ne.s32.totalorder %s90, %s91
    %p105 = scmp.eq.s32.totalorder %s15, 1
    %p106 = por %p104, %p105
    %p108 = scmp.ne.s32.totalorder %s91, %s107
    %p109 = scmp.eq.s32.totalorder %s15, 0
    %p110 = por %p108, %p109
    %p111 = scmp.le.s32.totalorder 1, %s9
    %p112 = scmp.lt.s32.totalorder %s9, 3
    %p113 = pnand %p111, %p112
    %p114 = pneg %p113
    // Predicated region
    $region9: #{neural_network_explainer_forward.5} parent=5 // pred_check
      _
    $region10: #{neural_network_explainer_forward.5} parent=5 // pred_check_branch
      %116 = sbr.rel (%p113) target = $region12
    $region11: #{neural_network_explainer_forward.5} parent=5 // pred_region
      %s117 = ssub.s32 %s9, 1
      // Predicated region
      $region13: #{neural_network_explainer_forward.5} parent=11 // pred_check
        %p118 = pneg %p56
      $region14: #{neural_network_explainer_forward.5} parent=11 // pred_check_branch
        %120 = sbr.rel (%p118) target = $region16
      $region15: #{neural_network_explainer_forward.5} parent=11 // pred_region
        _
      $region16: #{neural_network_explainer_forward.5} parent=11 // pred_fallthru
        _
      // Predicated region
      $region17: #{neural_network_explainer_forward.5} parent=11 // pred_check
        %p121 = pneg %p77
      $region18: #{neural_network_explainer_forward.5} parent=11 // pred_check_branch
        %123 = sbr.rel (%p121) target = $region20
      $region19: #{neural_network_explainer_forward.5} parent=11 // pred_region
        _
      $region20: #{neural_network_explainer_forward.5} parent=11 // pred_fallthru
        _
    $region12: #{neural_network_explainer_forward.5} parent=5 // pred_fallthru
      _
    %p124 = scmp.lt.s32.totalorder %s9, 2
    // Predicated region
    $region21: #{neural_network_explainer_forward.5} parent=5 // pred_check
      %p125 = pneg %p124
    $region22: #{neural_network_explainer_forward.5} parent=5 // pred_check_branch
      %127 = sbr.rel (%p125) target = $region24
    $region23: #{neural_network_explainer_forward.5} parent=5 // pred_region
      // Predicated region
      $region25: #{neural_network_explainer_forward.5} parent=23 // pred_check
        %p128 = pneg %p29
      $region26: #{neural_network_explainer_forward.5} parent=23 // pred_check_branch
        %130 = sbr.rel (%p128) target = $region28
      $region27: #{neural_network_explainer_forward.5} parent=23 // pred_region
        %p131 = scmp.lt.s32.totalorder %s9, 1
        %s132 = scalar_select %p131, %s9, 1
        %s133 = smul.addr %s132, 112
        %s134 = smul.addr %s133, 8
        %s135 = scalar_lea.vmem %s0, %s134
      $region28: #{neural_network_explainer_forward.5} parent=23 // pred_fallthru
        _
    $region24: #{neural_network_explainer_forward.5} parent=5 // pred_fallthru
      _
    %p136 = scmp.le.s32.totalorder 1, %s9
    %p137 = scmp.lt.s32.totalorder %s9, 3
    %p138 = pnand %p136, %p137
    %p139 = pneg %p138
    // Predicated region
    $region29: #{neural_network_explainer_forward.5} parent=5 // pred_check
      _
    $region30: #{neural_network_explainer_forward.5} parent=5 // pred_check_branch
      %141 = sbr.rel (%p138) target = $region32
    $region31: #{neural_network_explainer_forward.5} parent=5 // pred_region
      %s142 = ssub.s32 %s9, 1
      %p143 = scmp.lt.s32.totalorder %s14, 1
      %s144 = scalar_select %p143, %s14, 1
      %s145 = smul.addr %s144, 112
      %s146 = smul.addr %s145, 8
      %s147 = scalar_lea.vmem %s0, %s146
      %p148 = pneg %p35
      %p149 = pneg %p32
      %p150 = pneg %p56
      %p151 = pneg %p53
      %p152 = pneg %p77
      %p153 = pneg %p74
      %p154 = pneg %p103
      %p155 = pneg %p100
      %p156 = scmp.lt.s32.totalorder %s14, 1
      %s157 = scalar_select %p156, %s14, 1
      %s158 = smul.addr %s157, 72
      %s159 = smul.addr %s158, 4
      %s160 = scalar_lea.vmem %s3, %s159
      %p161 = scmp.lt.s32.totalorder %s14, 1
      %s162 = scalar_select %p161, %s14, 1
      %s163 = smul.addr %s162, 112
      %s164 = smul.addr %s163, 8
      %s165 = scalar_lea.vmem %s0, %s164
      %p166 = scmp.lt.s32.totalorder %s14, 1
      %s167 = scalar_select %p166, %s14, 1
      %s168 = smul.addr %s167, 72
      %s169 = smul.addr %s168, 4
      %s170 = scalar_lea.vmem %s3, %s169
      %v171 = vld [vmem:[%s165] sm:$0xff]
      %v172 = vld [vmem:[%s165 + $0x8] sm:$0xff]
      %v173 = vld [vmem:[%s165 + $0x10] sm:$0xff]
      %v174 = vld [vmem:[%s165 + $0x18] sm:$0xf]
      %v175 = vld [vmem:[%s165 + $0x20] sm:$0xff]
      %v176 = vld [vmem:[%s165 + $0x28] sm:$0xff]
      %v177 = vld [vmem:[%s165 + $0x30] sm:$0xff]
      %v178 = vld [vmem:[%s165 + $0x38] sm:$0xf]
      %v179 = vld [vmem:[%s165 + $0x40] sm:$0xff]
      %v180 = vld [vmem:[%s165 + $0x48] sm:$0xff]
      %v181 = vld [vmem:[%s165 + $0x50] sm:$0xff]
      %v182 = vld [vmem:[%s165 + $0x58] sm:$0xf]
      %v183 = vld [vmem:[%s165 + $0x60] sm:$0xff]
      %v184 = vld [vmem:[%s165 + $0x68] sm:$0xff]
      %v185 = vld [vmem:[%s165 + $0x70] sm:$0xff]
      %v186 = vld [vmem:[%s165 + $0x78] sm:$0xf]
      %v187 = vld [vmem:[%s165 + $0x80] sm:$0xff]
      %v188 = vld [vmem:[%s165 + $0x88] sm:$0xff]
      %v189 = vld [vmem:[%s165 + $0x90] sm:$0xff]
      %v190 = vld [vmem:[%s165 + $0x98] sm:$0xf]
      %v191 = vld [vmem:[%s165 + $0xa0] sm:$0xff]
      %v192 = vld [vmem:[%s165 + $0xa8] sm:$0xff]
      %v193 = vld [vmem:[%s165 + $0xb0] sm:$0xff]
      %v194 = vld [vmem:[%s165 + $0xb8] sm:$0xf]
      %v195 = vld [vmem:[%s165 + $0xc0] sm:$0xff]
      %v196 = vld [vmem:[%s165 + $0xc8] sm:$0xff]
      %v197 = vld [vmem:[%s165 + $0xd0] sm:$0xff]
      %v198 = vld [vmem:[%s165 + $0xd8] sm:$0xf]
      %v199 = vld [vmem:[%s165 + $0xe0] sm:$0xff]
      %v200 = vld [vmem:[%s165 + $0xe8] sm:$0xff]
      %v201 = vld [vmem:[%s165 + $0xf0] sm:$0xff]
      %v202 = vld [vmem:[%s165 + $0xf8] sm:$0xf]
      %v203 = vld [vmem:[%s165 + $0x100] sm:$0xff]
      %v204 = vld [vmem:[%s165 + $0x108] sm:$0xff]
      %v205 = vld [vmem:[%s165 + $0x110] sm:$0xff]
      %v206 = vld [vmem:[%s165 + $0x118] sm:$0xf]
      %v207 = vld [vmem:[%s165 + $0x120] sm:$0xff]
      %v208 = vld [vmem:[%s165 + $0x128] sm:$0xff]
      %v209 = vld [vmem:[%s165 + $0x130] sm:$0xff]
      %v210 = vld [vmem:[%s165 + $0x138] sm:$0xf]
      %v211 = vld [vmem:[%s165 + $0x140] sm:$0xff]
      %v212 = vld [vmem:[%s165 + $0x148] sm:$0xff]
      %v213 = vld [vmem:[%s165 + $0x150] sm:$0xff]
      %v214 = vld [vmem:[%s165 + $0x158] sm:$0xf]
      %v215 = vld [vmem:[%s165 + $0x160] sm:$0xff]
      %v216 = vld [vmem:[%s165 + $0x168] sm:$0xff]
      %v217 = vld [vmem:[%s165 + $0x170] sm:$0xff]
      %v218 = vld [vmem:[%s165 + $0x178] sm:$0xf]
      %v219 = vld [vmem:[%s165 + $0x180] sm:$0xff]
      %v220 = vld [vmem:[%s165 + $0x188] sm:$0xff]
      %v221 = vld [vmem:[%s165 + $0x190] sm:$0xff]
      %v222 = vld [vmem:[%s165 + $0x198] sm:$0xf]
      %v223 = vld [vmem:[%s165 + $0x1a0] sm:$0xff]
      %v224 = vld [vmem:[%s165 + $0x1a8] sm:$0xff]
      %v225 = vld [vmem:[%s165 + $0x1b0] sm:$0xff]
      %v226 = vld [vmem:[%s165 + $0x1b8] sm:$0xf]
      %v227 = vld [vmem:[%s165 + $0x1c0] sm:$0xff]
      %v228 = vld [vmem:[%s165 + $0x1c8] sm:$0xff]
      %v229 = vld [vmem:[%s165 + $0x1d0] sm:$0xff]
      %v230 = vld [vmem:[%s165 + $0x1d8] sm:$0xf]
      %v231 = vld [vmem:[%s165 + $0x1e0] sm:$0xff]
      %v232 = vld [vmem:[%s165 + $0x1e8] sm:$0xff]
      %v233 = vld [vmem:[%s165 + $0x1f0] sm:$0xff]
      %v234 = vld [vmem:[%s165 + $0x1f8] sm:$0xf]
      %v235 = vld [vmem:[%s165 + $0x200] sm:$0xff]
      %v236 = vld [vmem:[%s165 + $0x208] sm:$0xff]
      %v237 = vld [vmem:[%s165 + $0x210] sm:$0xff]
      %v238 = vld [vmem:[%s165 + $0x218] sm:$0xf]
      %v239 = vld [vmem:[%s165 + $0x220] sm:$0xff]
      %v240 = vld [vmem:[%s165 + $0x228] sm:$0xff]
      %v241 = vld [vmem:[%s165 + $0x230] sm:$0xff]
      %v242 = vld [vmem:[%s165 + $0x238] sm:$0xf]
      %v243 = vld [vmem:[%s165 + $0x240] sm:$0xff]
      %v244 = vld [vmem:[%s165 + $0x248] sm:$0xff]
      %v245 = vld [vmem:[%s165 + $0x250] sm:$0xff]
      %v246 = vld [vmem:[%s165 + $0x258] sm:$0xf]
      %v247 = vld [vmem:[%s165 + $0x260] sm:$0xff]
      %v248 = vld [vmem:[%s165 + $0x268] sm:$0xff]
      %v249 = vld [vmem:[%s165 + $0x270] sm:$0xff]
      %v250 = vld [vmem:[%s165 + $0x278] sm:$0xf]
      %v251 = vld [vmem:[%s165 + $0x280] sm:$0xff]
      %v252 = vld [vmem:[%s165 + $0x288] sm:$0xff]
      %v253 = vld [vmem:[%s165 + $0x290] sm:$0xff]
      %v254 = vld [vmem:[%s165 + $0x298] sm:$0xf]
      %v255 = vld [vmem:[%s165 + $0x2a0] sm:$0xff]
      %v256 = vld [vmem:[%s165 + $0x2a8] sm:$0xff]
      %v257 = vld [vmem:[%s165 + $0x2b0] sm:$0xff]
      %v258 = vld [vmem:[%s165 + $0x2b8] sm:$0xf]
      %v259 = vld [vmem:[%s165 + $0x2c0] sm:$0xff]
      %v260 = vld [vmem:[%s165 + $0x2c8] sm:$0xff]
      %v261 = vld [vmem:[%s165 + $0x2d0] sm:$0xff]
      %v262 = vld [vmem:[%s165 + $0x2d8] sm:$0xf]
      %v263 = vld [vmem:[%s165 + $0x2e0] sm:$0xff]
      %v264 = vld [vmem:[%s165 + $0x2e8] sm:$0xff]
      %v265 = vld [vmem:[%s165 + $0x2f0] sm:$0xff]
      %v266 = vld [vmem:[%s165 + $0x2f8] sm:$0xf]
      %v267 = vld [vmem:[%s165 + $0x300] sm:$0xff]
      %v268 = vld [vmem:[%s165 + $0x308] sm:$0xff]
      %v269 = vld [vmem:[%s165 + $0x310] sm:$0xff]
      %v270 = vld [vmem:[%s165 + $0x318] sm:$0xf]
      %v271 = vld [vmem:[%s165 + $0x320] sm:$0xff]
      %v272 = vld [vmem:[%s165 + $0x328] sm:$0xff]
      %v273 = vld [vmem:[%s165 + $0x330] sm:$0xff]
      %v274 = vld [vmem:[%s165 + $0x338] sm:$0xf]
      %v275 = vld [vmem:[%s165 + $0x340] sm:$0xff]
      %v276 = vld [vmem:[%s165 + $0x348] sm:$0xff]
      %v277 = vld [vmem:[%s165 + $0x350] sm:$0xff]
      %v278 = vld [vmem:[%s165 + $0x358] sm:$0xf]
      %v279 = vld [vmem:[%s165 + $0x360] sm:$0xff]
      %v280 = vld [vmem:[%s165 + $0x368] sm:$0xff]
      %v281 = vld [vmem:[%s165 + $0x370] sm:$0xff]
      %v282 = vld [vmem:[%s165 + $0x378] sm:$0xf]
      %v283 = vld [vmem:[%s1] sm:$0xff]
      %v284 = vld [vmem:[%s1 + $0x8] sm:$0xff]
      %v285 = vld [vmem:[%s1 + $0x10] sm:$0xff]
      %v286 = vld [vmem:[%s1 + $0x18] sm:$0x1]
      %288 = vset.pattern.permute.xlu0 0
      %289 = vperm.xlu0 %288, %v171
      %v290 = vpop.permute.xlu0 %289
      %293 = vset.pattern.permute.xlu0 0
      %294 = vperm.xlu0 %293, %v172
      %v295 = vpop.permute.xlu0 %294
      %298 = vset.pattern.permute.xlu0 0
      %299 = vperm.xlu0 %298, %v173
      %v300 = vpop.permute.xlu0 %299
      %303 = vset.pattern.permute.xlu0 0
      %304 = vperm.xlu0 %303, %v175
      %v305 = vpop.permute.xlu0 %304
      %308 = vset.pattern.permute.xlu0 0
      %309 = vperm.xlu0 %308, %v176
      %v310 = vpop.permute.xlu0 %309
      %313 = vset.pattern.permute.xlu0 0
      %314 = vperm.xlu0 %313, %v177
      %v315 = vpop.permute.xlu0 %314
      %318 = vset.pattern.permute.xlu0 0
      %319 = vperm.xlu0 %318, %v179
      %v320 = vpop.permute.xlu0 %319
      %323 = vset.pattern.permute.xlu0 0
      %324 = vperm.xlu0 %323, %v180
      %v325 = vpop.permute.xlu0 %324
      %328 = vset.pattern.permute.xlu0 0
      %329 = vperm.xlu0 %328, %v181
      %v330 = vpop.permute.xlu0 %329
      %333 = vset.pattern.permute.xlu0 0
      %334 = vperm.xlu0 %333, %v183
      %v335 = vpop.permute.xlu0 %334
      %338 = vset.pattern.permute.xlu0 0
      %339 = vperm.xlu0 %338, %v184
      %v340 = vpop.permute.xlu0 %339
      %343 = vset.pattern.permute.xlu0 0
      %344 = vperm.xlu0 %343, %v185
      %v345 = vpop.permute.xlu0 %344
      %348 = vset.pattern.permute.xlu0 0
      %349 = vperm.xlu0 %348, %v187
      %v350 = vpop.permute.xlu0 %349
      %353 = vset.pattern.permute.xlu0 0
      %354 = vperm.xlu0 %353, %v188
      %v355 = vpop.permute.xlu0 %354
      %358 = vset.pattern.permute.xlu0 0
      %359 = vperm.xlu0 %358, %v189
      %v360 = vpop.permute.xlu0 %359
      %363 = vset.pattern.permute.xlu0 0
      %364 = vperm.xlu0 %363, %v191
      %v365 = vpop.permute.xlu0 %364
      %368 = vset.pattern.permute.xlu0 0
      %369 = vperm.xlu0 %368, %v192
      %v370 = vpop.permute.xlu0 %369
      %373 = vset.pattern.permute.xlu0 0
      %374 = vperm.xlu0 %373, %v193
      %v375 = vpop.permute.xlu0 %374
      %378 = vset.pattern.permute.xlu0 0
      %379 = vperm.xlu0 %378, %v195
      %v380 = vpop.permute.xlu0 %379
      %383 = vset.pattern.permute.xlu0 0
      %384 = vperm.xlu0 %383, %v196
      %v385 = vpop.permute.xlu0 %384
      %388 = vset.pattern.permute.xlu0 0
      %389 = vperm.xlu0 %388, %v197
      %v390 = vpop.permute.xlu0 %389
      %393 = vset.pattern.permute.xlu0 0
      %394 = vperm.xlu0 %393, %v199
      %v395 = vpop.permute.xlu0 %394
      %398 = vset.pattern.permute.xlu0 0
      %399 = vperm.xlu0 %398, %v200
      %v400 = vpop.permute.xlu0 %399
      %403 = vset.pattern.permute.xlu0 0
      %404 = vperm.xlu0 %403, %v201
      %v405 = vpop.permute.xlu0 %404
      %408 = vset.pattern.permute.xlu0 0
      %409 = vperm.xlu0 %408, %v203
      %v410 = vpop.permute.xlu0 %409
      %413 = vset.pattern.permute.xlu0 0
      %414 = vperm.xlu0 %413, %v204
      %v415 = vpop.permute.xlu0 %414
      %418 = vset.pattern.permute.xlu0 0
      %419 = vperm.xlu0 %418, %v205
      %v420 = vpop.permute.xlu0 %419
      %423 = vset.pattern.permute.xlu0 0
      %424 = vperm.xlu0 %423, %v207
      %v425 = vpop.permute.xlu0 %424
      %428 = vset.pattern.permute.xlu0 0
      %429 = vperm.xlu0 %428, %v208
      %v430 = vpop.permute.xlu0 %429
      %433 = vset.pattern.permute.xlu0 0
      %434 = vperm.xlu0 %433, %v209
      %v435 = vpop.permute.xlu0 %434
      %438 = vset.pattern.permute.xlu0 0
      %439 = vperm.xlu0 %438, %v211
      %v440 = vpop.permute.xlu0 %439
      %443 = vset.pattern.permute.xlu0 0
      %444 = vperm.xlu0 %443, %v212
      %v445 = vpop.permute.xlu0 %444
      %448 = vset.pattern.permute.xlu0 0
      %449 = vperm.xlu0 %448, %v213
      %v450 = vpop.permute.xlu0 %449
      %453 = vset.pattern.permute.xlu0 0
      %454 = vperm.xlu0 %453, %v215
      %v455 = vpop.permute.xlu0 %454
      %458 = vset.pattern.permute.xlu0 0
      %459 = vperm.xlu0 %458, %v216
      %v460 = vpop.permute.xlu0 %459
      %463 = vset.pattern.permute.xlu0 0
      %464 = vperm.xlu0 %463, %v217
      %v465 = vpop.permute.xlu0 %464
      %468 = vset.pattern.permute.xlu0 0
      %469 = vperm.xlu0 %468, %v219
      %v470 = vpop.permute.xlu0 %469
      %473 = vset.pattern.permute.xlu0 0
      %474 = vperm.xlu0 %473, %v220
      %v475 = vpop.permute.xlu0 %474
      %478 = vset.pattern.permute.xlu0 0
      %479 = vperm.xlu0 %478, %v221
      %v480 = vpop.permute.xlu0 %479
      %483 = vset.pattern.permute.xlu0 0
      %484 = vperm.xlu0 %483, %v223
      %v485 = vpop.permute.xlu0 %484
      %488 = vset.pattern.permute.xlu0 0
      %489 = vperm.xlu0 %488, %v224
      %v490 = vpop.permute.xlu0 %489
      %493 = vset.pattern.permute.xlu0 0
      %494 = vperm.xlu0 %493, %v225
      %v495 = vpop.permute.xlu0 %494
      %498 = vset.pattern.permute.xlu0 0
      %499 = vperm.xlu0 %498, %v227
      %v500 = vpop.permute.xlu0 %499
      %503 = vset.pattern.permute.xlu0 0
      %504 = vperm.xlu0 %503, %v228
      %v505 = vpop.permute.xlu0 %504
      %508 = vset.pattern.permute.xlu0 0
      %509 = vperm.xlu0 %508, %v229
      %v510 = vpop.permute.xlu0 %509
      %513 = vset.pattern.permute.xlu0 0
      %514 = vperm.xlu0 %513, %v231
      %v515 = vpop.permute.xlu0 %514
      %518 = vset.pattern.permute.xlu0 0
      %519 = vperm.xlu0 %518, %v232
      %v520 = vpop.permute.xlu0 %519
      %523 = vset.pattern.permute.xlu0 0
      %524 = vperm.xlu0 %523, %v233
      %v525 = vpop.permute.xlu0 %524
      %528 = vset.pattern.permute.xlu0 0
      %529 = vperm.xlu0 %528, %v235
      %v530 = vpop.permute.xlu0 %529
      %533 = vset.pattern.permute.xlu0 0
      %534 = vperm.xlu0 %533, %v236
      %v535 = vpop.permute.xlu0 %534
      %538 = vset.pattern.permute.xlu0 0
      %539 = vperm.xlu0 %538, %v237
      %v540 = vpop.permute.xlu0 %539
      %543 = vset.pattern.permute.xlu0 0
      %544 = vperm.xlu0 %543, %v239
      %v545 = vpop.permute.xlu0 %544
      %548 = vset.pattern.permute.xlu0 0
      %549 = vperm.xlu0 %548, %v240
      %v550 = vpop.permute.xlu0 %549
      %553 = vset.pattern.permute.xlu0 0
      %554 = vperm.xlu0 %553, %v241
      %v555 = vpop.permute.xlu0 %554
      %558 = vset.pattern.permute.xlu0 0
      %559 = vperm.xlu0 %558, %v243
      %v560 = vpop.permute.xlu0 %559
      %563 = vset.pattern.permute.xlu0 0
      %564 = vperm.xlu0 %563, %v244
      %v565 = vpop.permute.xlu0 %564
      %568 = vset.pattern.permute.xlu0 0
      %569 = vperm.xlu0 %568, %v245
      %v570 = vpop.permute.xlu0 %569
      %573 = vset.pattern.permute.xlu0 0
      %574 = vperm.xlu0 %573, %v247
      %v575 = vpop.permute.xlu0 %574
      %578 = vset.pattern.permute.xlu0 0
      %579 = vperm.xlu0 %578, %v248
      %v580 = vpop.permute.xlu0 %579
      %583 = vset.pattern.permute.xlu0 0
      %584 = vperm.xlu0 %583, %v249
      %v585 = vpop.permute.xlu0 %584
      %588 = vset.pattern.permute.xlu0 0
      %589 = vperm.xlu0 %588, %v251
      %v590 = vpop.permute.xlu0 %589
      %593 = vset.pattern.permute.xlu0 0
      %594 = vperm.xlu0 %593, %v252
      %v595 = vpop.permute.xlu0 %594
      %598 = vset.pattern.permute.xlu0 0
      %599 = vperm.xlu0 %598, %v253
      %v600 = vpop.permute.xlu0 %599
      %603 = vset.pattern.permute.xlu0 0
      %604 = vperm.xlu0 %603, %v255
      %v605 = vpop.permute.xlu0 %604
      %608 = vset.pattern.permute.xlu0 0
      %609 = vperm.xlu0 %608, %v256
      %v610 = vpop.permute.xlu0 %609
      %613 = vset.pattern.permute.xlu0 0
      %614 = vperm.xlu0 %613, %v257
      %v615 = vpop.permute.xlu0 %614
      %618 = vset.pattern.permute.xlu0 0
      %619 = vperm.xlu0 %618, %v259
      %v620 = vpop.permute.xlu0 %619
      %623 = vset.pattern.permute.xlu0 0
      %624 = vperm.xlu0 %623, %v260
      %v625 = vpop.permute.xlu0 %624
      %628 = vset.pattern.permute.xlu0 0
      %629 = vperm.xlu0 %628, %v261
      %v630 = vpop.permute.xlu0 %629
      %633 = vset.pattern.permute.xlu0 0
      %634 = vperm.xlu0 %633, %v263
      %v635 = vpop.permute.xlu0 %634
      %638 = vset.pattern.permute.xlu0 0
      %639 = vperm.xlu0 %638, %v264
      %v640 = vpop.permute.xlu0 %639
      %643 = vset.pattern.permute.xlu0 0
      %644 = vperm.xlu0 %643, %v265
      %v645 = vpop.permute.xlu0 %644
      %v647 = vlaneseq
      %v648 = vshrl.u32 %v647, 7
      %v649 = vsub.s32 0, %v648
      %v650 = vrot.slane %v283, %v649
      %v651 = vmul.f32 %v290, %v650
      %v652 = vmul.f32 %v295, %v650
      %v653 = vmul.f32 %v300, %v650
      %v654 = vmul.f32 %v305, %v650
      %v655 = vmul.f32 %v310, %v650
      %v656 = vmul.f32 %v315, %v650
      %v657 = vmul.f32 %v320, %v650
      %v658 = vmul.f32 %v325, %v650
      %v659 = vmul.f32 %v330, %v650
      %v660 = vmul.f32 %v335, %v650
      %v661 = vmul.f32 %v340, %v650
      %v662 = vmul.f32 %v345, %v650
      %v663 = vmul.f32 %v350, %v650
      %v664 = vmul.f32 %v355, %v650
      %v665 = vmul.f32 %v360, %v650
      %v666 = vmul.f32 %v365, %v650
      %v667 = vmul.f32 %v370, %v650
      %v668 = vmul.f32 %v375, %v650
      %v669 = vmul.f32 %v380, %v650
      %v670 = vmul.f32 %v385, %v650
      %v671 = vmul.f32 %v390, %v650
      %v672 = vmul.f32 %v395, %v650
      %v673 = vmul.f32 %v400, %v650
      %v674 = vmul.f32 %v405, %v650
      %v675 = vmul.f32 %v410, %v650
      %v676 = vmul.f32 %v415, %v650
      %v677 = vmul.f32 %v420, %v650
      %v678 = vmul.f32 %v425, %v650
      %v679 = vmul.f32 %v430, %v650
      %v680 = vmul.f32 %v435, %v650
      %v681 = vmul.f32 %v440, %v650
      %v682 = vmul.f32 %v445, %v650
      %v683 = vmul.f32 %v450, %v650
      %v684 = vmul.f32 %v455, %v650
      %v685 = vmul.f32 %v460, %v650
      %v686 = vmul.f32 %v465, %v650
      %v687 = vmul.f32 %v470, %v650
      %v688 = vmul.f32 %v475, %v650
      %v689 = vmul.f32 %v480, %v650
      %v690 = vmul.f32 %v485, %v650
      %v691 = vmul.f32 %v490, %v650
      %v692 = vmul.f32 %v495, %v650
      %v693 = vmul.f32 %v500, %v650
      %v694 = vmul.f32 %v505, %v650
      %v695 = vmul.f32 %v510, %v650
      %v696 = vmul.f32 %v515, %v650
      %v697 = vmul.f32 %v520, %v650
      %v698 = vmul.f32 %v525, %v650
      %v699 = vmul.f32 %v530, %v650
      %v700 = vmul.f32 %v535, %v650
      %v701 = vmul.f32 %v540, %v650
      %v702 = vmul.f32 %v545, %v650
      %v703 = vmul.f32 %v550, %v650
      %v704 = vmul.f32 %v555, %v650
      %v705 = vmul.f32 %v560, %v650
      %v706 = vmul.f32 %v565, %v650
      %v707 = vmul.f32 %v570, %v650
      %v708 = vmul.f32 %v575, %v650
      %v709 = vmul.f32 %v580, %v650
      %v710 = vmul.f32 %v585, %v650
      %v711 = vmul.f32 %v590, %v650
      %v712 = vmul.f32 %v595, %v650
      %v713 = vmul.f32 %v600, %v650
      %v714 = vmul.f32 %v605, %v650
      %v715 = vmul.f32 %v610, %v650
      %v716 = vmul.f32 %v615, %v650
      %v717 = vmul.f32 %v620, %v650
      %v718 = vmul.f32 %v625, %v650
      %v719 = vmul.f32 %v630, %v650
      %v720 = vmul.f32 %v635, %v650
      %v721 = vmul.f32 %v640, %v650
      %v722 = vmul.f32 %v645, %v650
      %v723 = vadd.f32 %v651, 0.0
      %v724 = vadd.f32 %v652, 0.0
      %v725 = vadd.f32 %v653, 0.0
      %v726 = vadd.f32 %v654, 0.0
      %v727 = vadd.f32 %v655, 0.0
      %v728 = vadd.f32 %v656, 0.0
      %v729 = vadd.f32 %v657, 0.0
      %v730 = vadd.f32 %v658, 0.0
      %v731 = vadd.f32 %v659, 0.0
      %v732 = vadd.f32 %v660, 0.0
      %v733 = vadd.f32 %v661, 0.0
      %v734 = vadd.f32 %v662, 0.0
      %v735 = vadd.f32 %v663, 0.0
      %v736 = vadd.f32 %v664, 0.0
      %v737 = vadd.f32 %v665, 0.0
      %v738 = vadd.f32 %v666, 0.0
      %v739 = vadd.f32 %v667, 0.0
      %v740 = vadd.f32 %v668, 0.0
      %v741 = vadd.f32 %v669, 0.0
      %v742 = vadd.f32 %v670, 0.0
      %v743 = vadd.f32 %v671, 0.0
      %v744 = vadd.f32 %v672, 0.0
      %v745 = vadd.f32 %v673, 0.0
      %v746 = vadd.f32 %v674, 0.0
      %v747 = vadd.f32 %v675, 0.0
      %v748 = vadd.f32 %v676, 0.0
      %v749 = vadd.f32 %v677, 0.0
      %v750 = vadd.f32 %v678, 0.0
      %v751 = vadd.f32 %v679, 0.0
      %v752 = vadd.f32 %v680, 0.0
      %v753 = vadd.f32 %v681, 0.0
      %v754 = vadd.f32 %v682, 0.0
      %v755 = vadd.f32 %v683, 0.0
      %v756 = vadd.f32 %v684, 0.0
      %v757 = vadd.f32 %v685, 0.0
      %v758 = vadd.f32 %v686, 0.0
      %v759 = vadd.f32 %v687, 0.0
      %v760 = vadd.f32 %v688, 0.0
      %v761 = vadd.f32 %v689, 0.0
      %v762 = vadd.f32 %v690, 0.0
      %v763 = vadd.f32 %v691, 0.0
      %v764 = vadd.f32 %v692, 0.0
      %v765 = vadd.f32 %v693, 0.0
      %v766 = vadd.f32 %v694, 0.0
      %v767 = vadd.f32 %v695, 0.0
      %v768 = vadd.f32 %v696, 0.0
      %v769 = vadd.f32 %v697, 0.0
      %v770 = vadd.f32 %v698, 0.0
      %v771 = vadd.f32 %v699, 0.0
      %v772 = vadd.f32 %v700, 0.0
      %v773 = vadd.f32 %v701, 0.0
      %v774 = vadd.f32 %v702, 0.0
      %v775 = vadd.f32 %v703, 0.0
      %v776 = vadd.f32 %v704, 0.0
      %v777 = vadd.f32 %v705, 0.0
      %v778 = vadd.f32 %v706, 0.0
      %v779 = vadd.f32 %v707, 0.0
      %v780 = vadd.f32 %v708, 0.0
      %v781 = vadd.f32 %v709, 0.0
      %v782 = vadd.f32 %v710, 0.0
      %v783 = vadd.f32 %v711, 0.0
      %v784 = vadd.f32 %v712, 0.0
      %v785 = vadd.f32 %v713, 0.0
      %v786 = vadd.f32 %v714, 0.0
      %v787 = vadd.f32 %v715, 0.0
      %v788 = vadd.f32 %v716, 0.0
      %v789 = vadd.f32 %v717, 0.0
      %v790 = vadd.f32 %v718, 0.0
      %v791 = vadd.f32 %v719, 0.0
      %v792 = vadd.f32 %v720, 0.0
      %v793 = vadd.f32 %v721, 0.0
      %v794 = vadd.f32 %v722, 0.0
      %796 = vset.pattern.permute.xlu0 0
      %797 = vperm.xlu0 %796, %v174
      %v798 = vpop.permute.xlu0 %797
      %801 = vset.pattern.permute.xlu0 0
      %802 = vperm.xlu0 %801, %v178
      %v803 = vpop.permute.xlu0 %802
      %806 = vset.pattern.permute.xlu0 0
      %807 = vperm.xlu0 %806, %v182
      %v808 = vpop.permute.xlu0 %807
      %811 = vset.pattern.permute.xlu0 0
      %812 = vperm.xlu0 %811, %v186
      %v813 = vpop.permute.xlu0 %812
      %816 = vset.pattern.permute.xlu0 0
      %817 = vperm.xlu0 %816, %v190
      %v818 = vpop.permute.xlu0 %817
      %821 = vset.pattern.permute.xlu0 0
      %822 = vperm.xlu0 %821, %v194
      %v823 = vpop.permute.xlu0 %822
      %826 = vset.pattern.permute.xlu0 0
      %827 = vperm.xlu0 %826, %v198
      %v828 = vpop.permute.xlu0 %827
      %831 = vset.pattern.permute.xlu0 0
      %832 = vperm.xlu0 %831, %v202
      %v833 = vpop.permute.xlu0 %832
      %836 = vset.pattern.permute.xlu0 0
      %837 = vperm.xlu0 %836, %v206
      %v838 = vpop.permute.xlu0 %837
      %841 = vset.pattern.permute.xlu0 0
      %842 = vperm.xlu0 %841, %v210
      %v843 = vpop.permute.xlu0 %842
      %846 = vset.pattern.permute.xlu0 0
      %847 = vperm.xlu0 %846, %v214
      %v848 = vpop.permute.xlu0 %847
      %851 = vset.pattern.permute.xlu0 0
      %852 = vperm.xlu0 %851, %v218
      %v853 = vpop.permute.xlu0 %852
      %856 = vset.pattern.permute.xlu0 0
      %857 = vperm.xlu0 %856, %v222
      %v858 = vpop.permute.xlu0 %857
      %861 = vset.pattern.permute.xlu0 0
      %862 = vperm.xlu0 %861, %v226
      %v863 = vpop.permute.xlu0 %862
      %866 = vset.pattern.permute.xlu0 0
      %867 = vperm.xlu0 %866, %v230
      %v868 = vpop.permute.xlu0 %867
      %871 = vset.pattern.permute.xlu0 0
      %872 = vperm.xlu0 %871, %v234
      %v873 = vpop.permute.xlu0 %872
      %876 = vset.pattern.permute.xlu0 0
      %877 = vperm.xlu0 %876, %v238
      %v878 = vpop.permute.xlu0 %877
      %881 = vset.pattern.permute.xlu0 0
      %882 = vperm.xlu0 %881, %v242
      %v883 = vpop.permute.xlu0 %882
      %886 = vset.pattern.permute.xlu0 0
      %887 = vperm.xlu0 %886, %v246
      %v888 = vpop.permute.xlu0 %887
      %891 = vset.pattern.permute.xlu0 0
      %892 = vperm.xlu0 %891, %v250
      %v893 = vpop.permute.xlu0 %892
      %896 = vset.pattern.permute.xlu0 0
      %897 = vperm.xlu0 %896, %v254
      %v898 = vpop.permute.xlu0 %897
      %901 = vset.pattern.permute.xlu0 0
      %902 = vperm.xlu0 %901, %v258
      %v903 = vpop.permute.xlu0 %902
      %906 = vset.pattern.permute.xlu0 0
      %907 = vperm.xlu0 %906, %v262
      %v908 = vpop.permute.xlu0 %907
      %911 = vset.pattern.permute.xlu0 0
      %912 = vperm.xlu0 %911, %v266
      %v913 = vpop.permute.xlu0 %912
      %v915 = vlaneseq
      %v916 = vshrl.u32 %v915, 7
      %v917 = vsub.s32 1, %v916
      %v918 = vrot.slane %v283, %v917
      %v919 = vmul.f32 %v290, %v918
      %v920 = vmul.f32 %v295, %v918
      %v921 = vmul.f32 %v300, %v918
      %v922 = vmul.f32 %v798, %v918
      %v923 = vmul.f32 %v305, %v918
      %v924 = vmul.f32 %v310, %v918
      %v925 = vmul.f32 %v315, %v918
      %v926 = vmul.f32 %v803, %v918
      %v927 = vmul.f32 %v320, %v918
      %v928 = vmul.f32 %v325, %v918
      %v929 = vmul.f32 %v330, %v918
      %v930 = vmul.f32 %v808, %v918
      %v931 = vmul.f32 %v335, %v918
      %v932 = vmul.f32 %v340, %v918
      %v933 = vmul.f32 %v345, %v918
      %v934 = vmul.f32 %v813, %v918
      %v935 = vmul.f32 %v350, %v918
      %v936 = vmul.f32 %v355, %v918
      %v937 = vmul.f32 %v360, %v918
      %v938 = vmul.f32 %v818, %v918
      %v939 = vmul.f32 %v365, %v918
      %v940 = vmul.f32 %v370, %v918
      %v941 = vmul.f32 %v375, %v918
      %v942 = vmul.f32 %v823, %v918
      %v943 = vmul.f32 %v380, %v918
      %v944 = vmul.f32 %v385, %v918
      %v945 = vmul.f32 %v390, %v918
      %v946 = vmul.f32 %v828, %v918
      %v947 = vmul.f32 %v395, %v918
      %v948 = vmul.f32 %v400, %v918
      %v949 = vmul.f32 %v405, %v918
      %v950 = vmul.f32 %v833, %v918
      %v951 = vmul.f32 %v410, %v918
      %v952 = vmul.f32 %v415, %v918
      %v953 = vmul.f32 %v420, %v918
      %v954 = vmul.f32 %v838, %v918
      %v955 = vmul.f32 %v425, %v918
      %v956 = vmul.f32 %v430, %v918
      %v957 = vmul.f32 %v435, %v918
      %v958 = vmul.f32 %v843, %v918
      %v959 = vmul.f32 %v440, %v918
      %v960 = vmul.f32 %v445, %v918
      %v961 = vmul.f32 %v450, %v918
      %v962 = vmul.f32 %v848, %v918
      %v963 = vmul.f32 %v455, %v918
      %v964 = vmul.f32 %v460, %v918
      %v965 = vmul.f32 %v465, %v918
      %v966 = vmul.f32 %v853, %v918
      %v967 = vmul.f32 %v470, %v918
      %v968 = vmul.f32 %v475, %v918
      %v969 = vmul.f32 %v480, %v918
      %v970 = vmul.f32 %v858, %v918
      %v971 = vmul.f32 %v485, %v918
      %v972 = vmul.f32 %v490, %v918
      %v973 = vmul.f32 %v495, %v918
      %v974 = vmul.f32 %v863, %v918
      %v975 = vmul.f32 %v500, %v918
      %v976 = vmul.f32 %v505, %v918
      %v977 = vmul.f32 %v510, %v918
      %v978 = vmul.f32 %v868, %v918
      %v979 = vmul.f32 %v515, %v918
      %v980 = vmul.f32 %v520, %v918
      %v981 = vmul.f32 %v525, %v918
      %v982 = vmul.f32 %v873, %v918
      %v983 = vmul.f32 %v530, %v918
      %v984 = vmul.f32 %v535, %v918
      %v985 = vmul.f32 %v540, %v918
      %v986 = vmul.f32 %v878, %v918
      %v987 = vmul.f32 %v545, %v918
      %v988 = vmul.f32 %v550, %v918
      %v989 = vmul.f32 %v555, %v918
      %v990 = vmul.f32 %v883, %v918
      %v991 = vmul.f32 %v560, %v918
      %v992 = vmul.f32 %v565, %v918
      %v993 = vmul.f32 %v570, %v918
      %v994 = vmul.f32 %v888, %v918
      %v995 = vmul.f32 %v575, %v918
      %v996 = vmul.f32 %v580, %v918
      %v997 = vmul.f32 %v585, %v918
      %v998 = vmul.f32 %v893, %v918
      %v999 = vmul.f32 %v590, %v918
      %v1000 = vmul.f32 %v595, %v918
      %v1001 = vmul.f32 %v600, %v918
      %v1002 = vmul.f32 %v898, %v918
      %v1003 = vmul.f32 %v605, %v918
      %v1004 = vmul.f32 %v610, %v918
      %v1005 = vmul.f32 %v615, %v918
      %v1006 = vmul.f32 %v903, %v918
      %v1007 = vmul.f32 %v620, %v918
      %v1008 = vmul.f32 %v625, %v918
      %v1009 = vmul.f32 %v630, %v918
      %v1010 = vmul.f32 %v908, %v918
      %v1011 = vmul.f32 %v635, %v918
      %v1012 = vmul.f32 %v640, %v918
      %v1013 = vmul.f32 %v645, %v918
      %v1014 = vmul.f32 %v913, %v918
      %vm1111 = vcmask 1046528
      %v1112 = vrot.slane %v919, 1
      %v1113 = vrot.slane %v920, 1
      %v1114 = vsel %vm1111, %v1112, %v1113
      %v1115 = vrot.slane %v921, 1
      %v1116 = vsel %vm1111, %v1113, %v1115
      %v1117 = vrot.slane %v922, 1
      %v1118 = vsel %vm1111, %v1115, %v1117
      %v1119 = vrot.slane %v923, 1
      %v1120 = vrot.slane %v924, 1
      %v1121 = vsel %vm1111, %v1119, %v1120
      %v1122 = vrot.slane %v925, 1
      %v1123 = vsel %vm1111, %v1120, %v1122
      %v1124 = vrot.slane %v926, 1
      %v1125 = vsel %vm1111, %v1122, %v1124
      %v1126 = vrot.slane %v927, 1
      %v1127 = vrot.slane %v928, 1
      %v1128 = vsel %vm1111, %v1126, %v1127
      %v1129 = vrot.slane %v929, 1
      %v1130 = vsel %vm1111, %v1127, %v1129
      %v1131 = vrot.slane %v930, 1
      %v1132 = vsel %vm1111, %v1129, %v1131
      %v1133 = vrot.slane %v931, 1
      %v1134 = vrot.slane %v932, 1
      %v1135 = vsel %vm1111, %v1133, %v1134
      %v1136 = vrot.slane %v933, 1
      %v1137 = vsel %vm1111, %v1134, %v1136
      %v1138 = vrot.slane %v934, 1
      %v1139 = vsel %vm1111, %v1136, %v1138
      %v1140 = vrot.slane %v935, 1
      %v1141 = vrot.slane %v936, 1
      %v1142 = vsel %vm1111, %v1140, %v1141
      %v1143 = vrot.slane %v937, 1
      %v1144 = vsel %vm1111, %v1141, %v1143
      %v1145 = vrot.slane %v938, 1
      %v1146 = vsel %vm1111, %v1143, %v1145
      %v1147 = vrot.slane %v939, 1
      %v1148 = vrot.slane %v940, 1
      %v1149 = vsel %vm1111, %v1147, %v1148
      %v1150 = vrot.slane %v941, 1
      %v1151 = vsel %vm1111, %v1148, %v1150
      %v1152 = vrot.slane %v942, 1
      %v1153 = vsel %vm1111, %v1150, %v1152
      %v1154 = vrot.slane %v943, 1
      %v1155 = vrot.slane %v944, 1
      %v1156 = vsel %vm1111, %v1154, %v1155
      %v1157 = vrot.slane %v945, 1
      %v1158 = vsel %vm1111, %v1155, %v1157
      %v1159 = vrot.slane %v946, 1
      %v1160 = vsel %vm1111, %v1157, %v1159
      %v1161 = vrot.slane %v947, 1
      %v1162 = vrot.slane %v948, 1
      %v1163 = vsel %vm1111, %v1161, %v1162
      %v1164 = vrot.slane %v949, 1
      %v1165 = vsel %vm1111, %v1162, %v1164
      %v1166 = vrot.slane %v950, 1
      %v1167 = vsel %vm1111, %v1164, %v1166
      %v1168 = vrot.slane %v951, 1
      %v1169 = vrot.slane %v952, 1
      %v1170 = vsel %vm1111, %v1168, %v1169
      %v1171 = vrot.slane %v953, 1
      %v1172 = vsel %vm1111, %v1169, %v1171
      %v1173 = vrot.slane %v954, 1
      %v1174 = vsel %vm1111, %v1171, %v1173
      %v1175 = vrot.slane %v955, 1
      %v1176 = vrot.slane %v956, 1
      %v1177 = vsel %vm1111, %v1175, %v1176
      %v1178 = vrot.slane %v957, 1
      %v1179 = vsel %vm1111, %v1176, %v1178
      %v1180 = vrot.slane %v958, 1
      %v1181 = vsel %vm1111, %v1178, %v1180
      %v1182 = vrot.slane %v959, 1
      %v1183 = vrot.slane %v960, 1
      %v1184 = vsel %vm1111, %v1182, %v1183
      %v1185 = vrot.slane %v961, 1
      %v1186 = vsel %vm1111, %v1183, %v1185
      %v1187 = vrot.slane %v962, 1
      %v1188 = vsel %vm1111, %v1185, %v1187
      %v1189 = vrot.slane %v963, 1
      %v1190 = vrot.slane %v964, 1
      %v1191 = vsel %vm1111, %v1189, %v1190
      %v1192 = vrot.slane %v965, 1
      %v1193 = vsel %vm1111, %v1190, %v1192
      %v1194 = vrot.slane %v966, 1
      %v1195 = vsel %vm1111, %v1192, %v1194
      %v1196 = vrot.slane %v967, 1
      %v1197 = vrot.slane %v968, 1
      %v1198 = vsel %vm1111, %v1196, %v1197
      %v1199 = vrot.slane %v969, 1
      %v1200 = vsel %vm1111, %v1197, %v1199
      %v1201 = vrot.slane %v970, 1
      %v1202 = vsel %vm1111, %v1199, %v1201
      %v1203 = vrot.slane %v971, 1
      %v1204 = vrot.slane %v972, 1
      %v1205 = vsel %vm1111, %v1203, %v1204
      %v1206 = vrot.slane %v973, 1
      %v1207 = vsel %vm1111, %v1204, %v1206
      %v1208 = vrot.slane %v974, 1
      %v1209 = vsel %vm1111, %v1206, %v1208
      %v1210 = vrot.slane %v975, 1
      %v1211 = vrot.slane %v976, 1
      %v1212 = vsel %vm1111, %v1210, %v1211
      %v1213 = vrot.slane %v977, 1
      %v1214 = vsel %vm1111, %v1211, %v1213
      %v1215 = vrot.slane %v978, 1
      %v1216 = vsel %vm1111, %v1213, %v1215
      %v1217 = vrot.slane %v979, 1
      %v1218 = vrot.slane %v980, 1
      %v1219 = vsel %vm1111, %v1217, %v1218
      %v1220 = vrot.slane %v981, 1
      %v1221 = vsel %vm1111, %v1218, %v1220
      %v1222 = vrot.slane %v982, 1
      %v1223 = vsel %vm1111, %v1220, %v1222
      %v1224 = vrot.slane %v983, 1
      %v1225 = vrot.slane %v984, 1
      %v1226 = vsel %vm1111, %v1224, %v1225
      %v1227 = vrot.slane %v985, 1
      %v1228 = vsel %vm1111, %v1225, %v1227
      %v1229 = vrot.slane %v986, 1
      %v1230 = vsel %vm1111, %v1227, %v1229
      %v1231 = vrot.slane %v987, 1
      %v1232 = vrot.slane %v988, 1
      %v1233 = vsel %vm1111, %v1231, %v1232
      %v1234 = vrot.slane %v989, 1
      %v1235 = vsel %vm1111, %v1232, %v1234
      %v1236 = vrot.slane %v990, 1
      %v1237 = vsel %vm1111, %v1234, %v1236
      %v1238 = vrot.slane %v991, 1
      %v1239 = vrot.slane %v992, 1
      %v1240 = vsel %vm1111, %v1238, %v1239
      %v1241 = vrot.slane %v993, 1
      %v1242 = vsel %vm1111, %v1239, %v1241
      %v1243 = vrot.slane %v994, 1
      %v1244 = vsel %vm1111, %v1241, %v1243
      %v1245 = vrot.slane %v995, 1
      %v1246 = vrot.slane %v996, 1
      %v1247 = vsel %vm1111, %v1245, %v1246
      %v1248 = vrot.slane %v997, 1
      %v1249 = vsel %vm1111, %v1246, %v1248
      %v1250 = vrot.slane %v998, 1
      %v1251 = vsel %vm1111, %v1248, %v1250
      %v1252 = vrot.slane %v999, 1
      %v1253 = vrot.slane %v1000, 1
      %v1254 = vsel %vm1111, %v1252, %v1253
      %v1255 = vrot.slane %v1001, 1
      %v1256 = vsel %vm1111, %v1253, %v1255
      %v1257 = vrot.slane %v1002, 1
      %v1258 = vsel %vm1111, %v1255, %v1257
      %v1259 = vrot.slane %v1003, 1
      %v1260 = vrot.slane %v1004, 1
      %v1261 = vsel %vm1111, %v1259, %v1260
      %v1262 = vrot.slane %v1005, 1
      %v1263 = vsel %vm1111, %v1260, %v1262
      %v1264 = vrot.slane %v1006, 1
      %v1265 = vsel %vm1111, %v1262, %v1264
      %v1266 = vrot.slane %v1007, 1
      %v1267 = vrot.slane %v1008, 1
      %v1268 = vsel %vm1111, %v1266, %v1267
      %v1269 = vrot.slane %v1009, 1
      %v1270 = vsel %vm1111, %v1267, %v1269
      %v1271 = vrot.slane %v1010, 1
      %v1272 = vsel %vm1111, %v1269, %v1271
      %v1273 = vrot.slane %v1011, 1
      %v1274 = vrot.slane %v1012, 1
      %v1275 = vsel %vm1111, %v1273, %v1274
      %v1276 = vrot.slane %v1013, 1
      %v1277 = vsel %vm1111, %v1274, %v1276
      %v1278 = vrot.slane %v1014, 1
      %v1279 = vsel %vm1111, %v1276, %v1278
      %v1352 = vadd.f32 %v723, %v1114
      %v1353 = vadd.f32 %v724, %v1116
      %v1354 = vadd.f32 %v725, %v1118
      %v1355 = vadd.f32 %v726, %v1121
      %v1356 = vadd.f32 %v727, %v1123
      %v1357 = vadd.f32 %v728, %v1125
      %v1358 = vadd.f32 %v729, %v1128
      %v1359 = vadd.f32 %v730, %v1130
      %v1360 = vadd.f32 %v731, %v1132
      %v1361 = vadd.f32 %v732, %v1135
      %v1362 = vadd.f32 %v733, %v1137
      %v1363 = vadd.f32 %v734, %v1139
      %v1364 = vadd.f32 %v735, %v1142
      %v1365 = vadd.f32 %v736, %v1144
      %v1366 = vadd.f32 %v737, %v1146
      %v1367 = vadd.f32 %v738, %v1149
      %v1368 = vadd.f32 %v739, %v1151
      %v1369 = vadd.f32 %v740, %v1153
      %v1370 = vadd.f32 %v741, %v1156
      %v1371 = vadd.f32 %v742, %v1158
      %v1372 = vadd.f32 %v743, %v1160
      %v1373 = vadd.f32 %v744, %v1163
      %v1374 = vadd.f32 %v745, %v1165
      %v1375 = vadd.f32 %v746, %v1167
      %v1376 = vadd.f32 %v747, %v1170
      %v1377 = vadd.f32 %v748, %v1172
      %v1378 = vadd.f32 %v749, %v1174
      %v1379 = vadd.f32 %v750, %v1177
      %v1380 = vadd.f32 %v751, %v1179
      %v1381 = vadd.f32 %v752, %v1181
      %v1382 = vadd.f32 %v753, %v1184
      %v1383 = vadd.f32 %v754, %v1186
      %v1384 = vadd.f32 %v755, %v1188
      %v1385 = vadd.f32 %v756, %v1191
      %v1386 = vadd.f32 %v757, %v1193
      %v1387 = vadd.f32 %v758, %v1195
      %v1388 = vadd.f32 %v759, %v1198
      %v1389 = vadd.f32 %v760, %v1200
      %v1390 = vadd.f32 %v761, %v1202
      %v1391 = vadd.f32 %v762, %v1205
      %v1392 = vadd.f32 %v763, %v1207
      %v1393 = vadd.f32 %v764, %v1209
      %v1394 = vadd.f32 %v765, %v1212
      %v1395 = vadd.f32 %v766, %v1214
      %v1396 = vadd.f32 %v767, %v1216
      %v1397 = vadd.f32 %v768, %v1219
      %v1398 = vadd.f32 %v769, %v1221
      %v1399 = vadd.f32 %v770, %v1223
      %v1400 = vadd.f32 %v771, %v1226
      %v1401 = vadd.f32 %v772, %v1228
      %v1402 = vadd.f32 %v773, %v1230
      %v1403 = vadd.f32 %v774, %v1233
      %v1404 = vadd.f32 %v775, %v1235
      %v1405 = vadd.f32 %v776, %v1237
      %v1406 = vadd.f32 %v777, %v1240
      %v1407 = vadd.f32 %v778, %v1242
      %v1408 = vadd.f32 %v779, %v1244
      %v1409 = vadd.f32 %v780, %v1247
      %v1410 = vadd.f32 %v781, %v1249
      %v1411 = vadd.f32 %v782, %v1251
      %v1412 = vadd.f32 %v783, %v1254
      %v1413 = vadd.f32 %v784, %v1256
      %v1414 = vadd.f32 %v785, %v1258
      %v1415 = vadd.f32 %v786, %v1261
      %v1416 = vadd.f32 %v787, %v1263
      %v1417 = vadd.f32 %v788, %v1265
      %v1418 = vadd.f32 %v789, %v1268
      %v1419 = vadd.f32 %v790, %v1270
      %v1420 = vadd.f32 %v791, %v1272
      %v1421 = vadd.f32 %v792, %v1275
      %v1422 = vadd.f32 %v793, %v1277
      %v1423 = vadd.f32 %v794, %v1279
      %v1424 = vlaneseq
      %v1425 = vshrl.u32 %v1424, 7
      %v1426 = vsub.s32 2, %v1425
      %v1427 = vrot.slane %v283, %v1426
      %v1428 = vmul.f32 %v290, %v1427
      %v1429 = vmul.f32 %v295, %v1427
      %v1430 = vmul.f32 %v300, %v1427
      %v1431 = vmul.f32 %v798, %v1427
      %v1432 = vmul.f32 %v305, %v1427
      %v1433 = vmul.f32 %v310, %v1427
      %v1434 = vmul.f32 %v315, %v1427
      %v1435 = vmul.f32 %v803, %v1427
      %v1436 = vmul.f32 %v320, %v1427
      %v1437 = vmul.f32 %v325, %v1427
      %v1438 = vmul.f32 %v330, %v1427
      %v1439 = vmul.f32 %v808, %v1427
      %v1440 = vmul.f32 %v335, %v1427
      %v1441 = vmul.f32 %v340, %v1427
      %v1442 = vmul.f32 %v345, %v1427
      %v1443 = vmul.f32 %v813, %v1427
      %v1444 = vmul.f32 %v350, %v1427
      %v1445 = vmul.f32 %v355, %v1427
      %v1446 = vmul.f32 %v360, %v1427
      %v1447 = vmul.f32 %v818, %v1427
      %v1448 = vmul.f32 %v365, %v1427
      %v1449 = vmul.f32 %v370, %v1427
      %v1450 = vmul.f32 %v375, %v1427
      %v1451 = vmul.f32 %v823, %v1427
      %v1452 = vmul.f32 %v380, %v1427
      %v1453 = vmul.f32 %v385, %v1427
      %v1454 = vmul.f32 %v390, %v1427
      %v1455 = vmul.f32 %v828, %v1427
      %v1456 = vmul.f32 %v395, %v1427
      %v1457 = vmul.f32 %v400, %v1427
      %v1458 = vmul.f32 %v405, %v1427
      %v1459 = vmul.f32 %v833, %v1427
      %v1460 = vmul.f32 %v410, %v1427
      %v1461 = vmul.f32 %v415, %v1427
      %v1462 = vmul.f32 %v420, %v1427
      %v1463 = vmul.f32 %v838, %v1427
      %v1464 = vmul.f32 %v425, %v1427
      %v1465 = vmul.f32 %v430, %v1427
      %v1466 = vmul.f32 %v435, %v1427
      %v1467 = vmul.f32 %v843, %v1427
      %v1468 = vmul.f32 %v440, %v1427
      %v1469 = vmul.f32 %v445, %v1427
      %v1470 = vmul.f32 %v450, %v1427
      %v1471 = vmul.f32 %v848, %v1427
      %v1472 = vmul.f32 %v455, %v1427
      %v1473 = vmul.f32 %v460, %v1427
      %v1474 = vmul.f32 %v465, %v1427
      %v1475 = vmul.f32 %v853, %v1427
      %v1476 = vmul.f32 %v470, %v1427
      %v1477 = vmul.f32 %v475, %v1427
      %v1478 = vmul.f32 %v480, %v1427
      %v1479 = vmul.f32 %v858, %v1427
      %v1480 = vmul.f32 %v485, %v1427
      %v1481 = vmul.f32 %v490, %v1427
      %v1482 = vmul.f32 %v495, %v1427
      %v1483 = vmul.f32 %v863, %v1427
      %v1484 = vmul.f32 %v500, %v1427
      %v1485 = vmul.f32 %v505, %v1427
      %v1486 = vmul.f32 %v510, %v1427
      %v1487 = vmul.f32 %v868, %v1427
      %v1488 = vmul.f32 %v515, %v1427
      %v1489 = vmul.f32 %v520, %v1427
      %v1490 = vmul.f32 %v525, %v1427
      %v1491 = vmul.f32 %v873, %v1427
      %v1492 = vmul.f32 %v530, %v1427
      %v1493 = vmul.f32 %v535, %v1427
      %v1494 = vmul.f32 %v540, %v1427
      %v1495 = vmul.f32 %v878, %v1427
      %v1496 = vmul.f32 %v545, %v1427
      %v1497 = vmul.f32 %v550, %v1427
      %v1498 = vmul.f32 %v555, %v1427
      %v1499 = vmul.f32 %v883, %v1427
      %v1500 = vmul.f32 %v560, %v1427
      %v1501 = vmul.f32 %v565, %v1427
      %v1502 = vmul.f32 %v570, %v1427
      %v1503 = vmul.f32 %v888, %v1427
      %v1504 = vmul.f32 %v575, %v1427
      %v1505 = vmul.f32 %v580, %v1427
      %v1506 = vmul.f32 %v585, %v1427
      %v1507 = vmul.f32 %v893, %v1427
      %v1508 = vmul.f32 %v590, %v1427
      %v1509 = vmul.f32 %v595, %v1427
      %v1510 = vmul.f32 %v600, %v1427
      %v1511 = vmul.f32 %v898, %v1427
      %v1512 = vmul.f32 %v605, %v1427
      %v1513 = vmul.f32 %v610, %v1427
      %v1514 = vmul.f32 %v615, %v1427
      %v1515 = vmul.f32 %v903, %v1427
      %v1516 = vmul.f32 %v620, %v1427
      %v1517 = vmul.f32 %v625, %v1427
      %v1518 = vmul.f32 %v630, %v1427
      %v1519 = vmul.f32 %v908, %v1427
      %v1520 = vmul.f32 %v635, %v1427
      %v1521 = vmul.f32 %v640, %v1427
      %v1522 = vmul.f32 %v645, %v1427
      %v1523 = vmul.f32 %v913, %v1427
      %vm1620 = vcmask 1045504
      %v1621 = vrot.slane %v1428, 2
      %v1622 = vrot.slane %v1429, 2
      %v1623 = vsel %vm1620, %v1621, %v1622
      %v1624 = vrot.slane %v1430, 2
      %v1625 = vsel %vm1620, %v1622, %v1624
      %v1626 = vrot.slane %v1431, 2
      %v1627 = vsel %vm1620, %v1624, %v1626
      %v1628 = vrot.slane %v1432, 2
      %v1629 = vrot.slane %v1433, 2
      %v1630 = vsel %vm1620, %v1628, %v1629
      %v1631 = vrot.slane %v1434, 2
      %v1632 = vsel %vm1620, %v1629, %v1631
      %v1633 = vrot.slane %v1435, 2
      %v1634 = vsel %vm1620, %v1631, %v1633
      %v1635 = vrot.slane %v1436, 2
      %v1636 = vrot.slane %v1437, 2
      %v1637 = vsel %vm1620, %v1635, %v1636
      %v1638 = vrot.slane %v1438, 2
      %v1639 = vsel %vm1620, %v1636, %v1638
      %v1640 = vrot.slane %v1439, 2
      %v1641 = vsel %vm1620, %v1638, %v1640
      %v1642 = vrot.slane %v1440, 2
      %v1643 = vrot.slane %v1441, 2
      %v1644 = vsel %vm1620, %v1642, %v1643
      %v1645 = vrot.slane %v1442, 2
      %v1646 = vsel %vm1620, %v1643, %v1645
      %v1647 = vrot.slane %v1443, 2
      %v1648 = vsel %vm1620, %v1645, %v1647
      %v1649 = vrot.slane %v1444, 2
      %v1650 = vrot.slane %v1445, 2
      %v1651 = vsel %vm1620, %v1649, %v1650
      %v1652 = vrot.slane %v1446, 2
      %v1653 = vsel %vm1620, %v1650, %v1652
      %v1654 = vrot.slane %v1447, 2
      %v1655 = vsel %vm1620, %v1652, %v1654
      %v1656 = vrot.slane %v1448, 2
      %v1657 = vrot.slane %v1449, 2
      %v1658 = vsel %vm1620, %v1656, %v1657
      %v1659 = vrot.slane %v1450, 2
      %v1660 = vsel %vm1620, %v1657, %v1659
      %v1661 = vrot.slane %v1451, 2
      %v1662 = vsel %vm1620, %v1659, %v1661
      %v1663 = vrot.slane %v1452, 2
      %v1664 = vrot.slane %v1453, 2
      %v1665 = vsel %vm1620, %v1663, %v1664
      %v1666 = vrot.slane %v1454, 2
      %v1667 = vsel %vm1620, %v1664, %v1666
      %v1668 = vrot.slane %v1455, 2
      %v1669 = vsel %vm1620, %v1666, %v1668
      %v1670 = vrot.slane %v1456, 2
      %v1671 = vrot.slane %v1457, 2
      %v1672 = vsel %vm1620, %v1670, %v1671
      %v1673 = vrot.slane %v1458, 2
      %v1674 = vsel %vm1620, %v1671, %v1673
      %v1675 = vrot.slane %v1459, 2
      %v1676 = vsel %vm1620, %v1673, %v1675
      %v1677 = vrot.slane %v1460, 2
      %v1678 = vrot.slane %v1461, 2
      %v1679 = vsel %vm1620, %v1677, %v1678
      %v1680 = vrot.slane %v1462, 2
      %v1681 = vsel %vm1620, %v1678, %v1680
      %v1682 = vrot.slane %v1463, 2
      %v1683 = vsel %vm1620, %v1680, %v1682
      %v1684 = vrot.slane %v1464, 2
      %v1685 = vrot.slane %v1465, 2
      %v1686 = vsel %vm1620, %v1684, %v1685
      %v1687 = vrot.slane %v1466, 2
      %v1688 = vsel %vm1620, %v1685, %v1687
      %v1689 = vrot.slane %v1467, 2
      %v1690 = vsel %vm1620, %v1687, %v1689
      %v1691 = vrot.slane %v1468, 2
      %v1692 = vrot.slane %v1469, 2
      %v1693 = vsel %vm1620, %v1691, %v1692
      %v1694 = vrot.slane %v1470, 2
      %v1695 = vsel %vm1620, %v1692, %v1694
      %v1696 = vrot.slane %v1471, 2
      %v1697 = vsel %vm1620, %v1694, %v1696
      %v1698 = vrot.slane %v1472, 2
      %v1699 = vrot.slane %v1473, 2
      %v1700 = vsel %vm1620, %v1698, %v1699
      %v1701 = vrot.slane %v1474, 2
      %v1702 = vsel %vm1620, %v1699, %v1701
      %v1703 = vrot.slane %v1475, 2
      %v1704 = vsel %vm1620, %v1701, %v1703
      %v1705 = vrot.slane %v1476, 2
      %v1706 = vrot.slane %v1477, 2
      %v1707 = vsel %vm1620, %v1705, %v1706
      %v1708 = vrot.slane %v1478, 2
      %v1709 = vsel %vm1620, %v1706, %v1708
      %v1710 = vrot.slane %v1479, 2
      %v1711 = vsel %vm1620, %v1708, %v1710
      %v1712 = vrot.slane %v1480, 2
      %v1713 = vrot.slane %v1481, 2
      %v1714 = vsel %vm1620, %v1712, %v1713
      %v1715 = vrot.slane %v1482, 2
      %v1716 = vsel %vm1620, %v1713, %v1715
      %v1717 = vrot.slane %v1483, 2
      %v1718 = vsel %vm1620, %v1715, %v1717
      %v1719 = vrot.slane %v1484, 2
      %v1720 = vrot.slane %v1485, 2
      %v1721 = vsel %vm1620, %v1719, %v1720
      %v1722 = vrot.slane %v1486, 2
      %v1723 = vsel %vm1620, %v1720, %v1722
      %v1724 = vrot.slane %v1487, 2
      %v1725 = vsel %vm1620, %v1722, %v1724
      %v1726 = vrot.slane %v1488, 2
      %v1727 = vrot.slane %v1489, 2
      %v1728 = vsel %vm1620, %v1726, %v1727
      %v1729 = vrot.slane %v1490, 2
      %v1730 = vsel %vm1620, %v1727, %v1729
      %v1731 = vrot.slane %v1491, 2
      %v1732 = vsel %vm1620, %v1729, %v1731
      %v1733 = vrot.slane %v1492, 2
      %v1734 = vrot.slane %v1493, 2
      %v1735 = vsel %vm1620, %v1733, %v1734
      %v1736 = vrot.slane %v1494, 2
      %v1737 = vsel %vm1620, %v1734, %v1736
      %v1738 = vrot.slane %v1495, 2
      %v1739 = vsel %vm1620, %v1736, %v1738
      %v1740 = vrot.slane %v1496, 2
      %v1741 = vrot.slane %v1497, 2
      %v1742 = vsel %vm1620, %v1740, %v1741
      %v1743 = vrot.slane %v1498, 2
      %v1744 = vsel %vm1620, %v1741, %v1743
      %v1745 = vrot.slane %v1499, 2
      %v1746 = vsel %vm1620, %v1743, %v1745
      %v1747 = vrot.slane %v1500, 2
      %v1748 = vrot.slane %v1501, 2
      %v1749 = vsel %vm1620, %v1747, %v1748
      %v1750 = vrot.slane %v1502, 2
      %v1751 = vsel %vm1620, %v1748, %v1750
      %v1752 = vrot.slane %v1503, 2
      %v1753 = vsel %vm1620, %v1750, %v1752
      %v1754 = vrot.slane %v1504, 2
      %v1755 = vrot.slane %v1505, 2
      %v1756 = vsel %vm1620, %v1754, %v1755
      %v1757 = vrot.slane %v1506, 2
      %v1758 = vsel %vm1620, %v1755, %v1757
      %v1759 = vrot.slane %v1507, 2
      %v1760 = vsel %vm1620, %v1757, %v1759
      %v1761 = vrot.slane %v1508, 2
      %v1762 = vrot.slane %v1509, 2
      %v1763 = vsel %vm1620, %v1761, %v1762
      %v1764 = vrot.slane %v1510, 2
      %v1765 = vsel %vm1620, %v1762, %v1764
      %v1766 = vrot.slane %v1511, 2
      %v1767 = vsel %vm1620, %v1764, %v1766
      %v1768 = vrot.slane %v1512, 2
      %v1769 = vrot.slane %v1513, 2
      %v1770 = vsel %vm1620, %v1768, %v1769
      %v1771 = vrot.slane %v1514, 2
      %v1772 = vsel %vm1620, %v1769, %v1771
      %v1773 = vrot.slane %v1515, 2
      %v1774 = vsel %vm1620, %v1771, %v1773
      %v1775 = vrot.slane %v1516, 2
      %v1776 = vrot.slane %v1517, 2
      %v1777 = vsel %vm1620, %v1775, %v1776
      %v1778 = vrot.slane %v1518, 2
      %v1779 = vsel %vm1620, %v1776, %v1778
      %v1780 = vrot.slane %v1519, 2
      %v1781 = vsel %vm1620, %v1778, %v1780
      %v1782 = vrot.slane %v1520, 2
      %v1783 = vrot.slane %v1521, 2
      %v1784 = vsel %vm1620, %v1782, %v1783
      %v1785 = vrot.slane %v1522, 2
      %v1786 = vsel %vm1620, %v1783, %v1785
      %v1787 = vrot.slane %v1523, 2
      %v1788 = vsel %vm1620, %v1785, %v1787
      %v1861 = vadd.f32 %v1352, %v1623
      %v1862 = vadd.f32 %v1353, %v1625
      %v1863 = vadd.f32 %v1354, %v1627
      %v1864 = vadd.f32 %v1355, %v1630
      %v1865 = vadd.f32 %v1356, %v1632
      %v1866 = vadd.f32 %v1357, %v1634
      %v1867 = vadd.f32 %v1358, %v1637
      %v1868 = vadd.f32 %v1359, %v1639
      %v1869 = vadd.f32 %v1360, %v1641
      %v1870 = vadd.f32 %v1361, %v1644
      %v1871 = vadd.f32 %v1362, %v1646
      %v1872 = vadd.f32 %v1363, %v1648
      %v1873 = vadd.f32 %v1364, %v1651
      %v1874 = vadd.f32 %v1365, %v1653
      %v1875 = vadd.f32 %v1366, %v1655
      %v1876 = vadd.f32 %v1367, %v1658
      %v1877 = vadd.f32 %v1368, %v1660
      %v1878 = vadd.f32 %v1369, %v1662
      %v1879 = vadd.f32 %v1370, %v1665
      %v1880 = vadd.f32 %v1371, %v1667
      %v1881 = vadd.f32 %v1372, %v1669
      %v1882 = vadd.f32 %v1373, %v1672
      %v1883 = vadd.f32 %v1374, %v1674
      %v1884 = vadd.f32 %v1375, %v1676
      %v1885 = vadd.f32 %v1376, %v1679
      %v1886 = vadd.f32 %v1377, %v1681
      %v1887 = vadd.f32 %v1378, %v1683
      %v1888 = vadd.f32 %v1379, %v1686
      %v1889 = vadd.f32 %v1380, %v1688
      %v1890 = vadd.f32 %v1381, %v1690
      %v1891 = vadd.f32 %v1382, %v1693
      %v1892 = vadd.f32 %v1383, %v1695
      %v1893 = vadd.f32 %v1384, %v1697
      %v1894 = vadd.f32 %v1385, %v1700
      %v1895 = vadd.f32 %v1386, %v1702
      %v1896 = vadd.f32 %v1387, %v1704
      %v1897 = vadd.f32 %v1388, %v1707
      %v1898 = vadd.f32 %v1389, %v1709
      %v1899 = vadd.f32 %v1390, %v1711
      %v1900 = vadd.f32 %v1391, %v1714
      %v1901 = vadd.f32 %v1392, %v1716
      %v1902 = vadd.f32 %v1393, %v1718
      %v1903 = vadd.f32 %v1394, %v1721
      %v1904 = vadd.f32 %v1395, %v1723
      %v1905 = vadd.f32 %v1396, %v1725
      %v1906 = vadd.f32 %v1397, %v1728
      %v1907 = vadd.f32 %v1398, %v1730
      %v1908 = vadd.f32 %v1399, %v1732
      %v1909 = vadd.f32 %v1400, %v1735
      %v1910 = vadd.f32 %v1401, %v1737
      %v1911 = vadd.f32 %v1402, %v1739
      %v1912 = vadd.f32 %v1403, %v1742
      %v1913 = vadd.f32 %v1404, %v1744
      %v1914 = vadd.f32 %v1405, %v1746
      %v1915 = vadd.f32 %v1406, %v1749
      %v1916 = vadd.f32 %v1407, %v1751
      %v1917 = vadd.f32 %v1408, %v1753
      %v1918 = vadd.f32 %v1409, %v1756
      %v1919 = vadd.f32 %v1410, %v1758
      %v1920 = vadd.f32 %v1411, %v1760
      %v1921 = vadd.f32 %v1412, %v1763
      %v1922 = vadd.f32 %v1413, %v1765
      %v1923 = vadd.f32 %v1414, %v1767
      %v1924 = vadd.f32 %v1415, %v1770
      %v1925 = vadd.f32 %v1416, %v1772
      %v1926 = vadd.f32 %v1417, %v1774
      %v1927 = vadd.f32 %v1418, %v1777
      %v1928 = vadd.f32 %v1419, %v1779
      %v1929 = vadd.f32 %v1420, %v1781
      %v1930 = vadd.f32 %v1421, %v1784
      %v1931 = vadd.f32 %v1422, %v1786
      %v1932 = vadd.f32 %v1423, %v1788
      %v1933 = vlaneseq
      %v1934 = vshrl.u32 %v1933, 7
      %v1935 = vsub.s32 3, %v1934
      %v1936 = vrot.slane %v283, %v1935
      %v1937 = vmul.f32 %v290, %v1936
      %v1938 = vmul.f32 %v295, %v1936
      %v1939 = vmul.f32 %v300, %v1936
      %v1940 = vmul.f32 %v798, %v1936
      %v1941 = vmul.f32 %v305, %v1936
      %v1942 = vmul.f32 %v310, %v1936
      %v1943 = vmul.f32 %v315, %v1936
      %v1944 = vmul.f32 %v803, %v1936
      %v1945 = vmul.f32 %v320, %v1936
      %v1946 = vmul.f32 %v325, %v1936
      %v1947 = vmul.f32 %v330, %v1936
      %v1948 = vmul.f32 %v808, %v1936
      %v1949 = vmul.f32 %v335, %v1936
      %v1950 = vmul.f32 %v340, %v1936
      %v1951 = vmul.f32 %v345, %v1936
      %v1952 = vmul.f32 %v813, %v1936
      %v1953 = vmul.f32 %v350, %v1936
      %v1954 = vmul.f32 %v355, %v1936
      %v1955 = vmul.f32 %v360, %v1936
      %v1956 = vmul.f32 %v818, %v1936
      %v1957 = vmul.f32 %v365, %v1936
      %v1958 = vmul.f32 %v370, %v1936
      %v1959 = vmul.f32 %v375, %v1936
      %v1960 = vmul.f32 %v823, %v1936
      %v1961 = vmul.f32 %v380, %v1936
      %v1962 = vmul.f32 %v385, %v1936
      %v1963 = vmul.f32 %v390, %v1936
      %v1964 = vmul.f32 %v828, %v1936
      %v1965 = vmul.f32 %v395, %v1936
      %v1966 = vmul.f32 %v400, %v1936
      %v1967 = vmul.f32 %v405, %v1936
      %v1968 = vmul.f32 %v833, %v1936
      %v1969 = vmul.f32 %v410, %v1936
      %v1970 = vmul.f32 %v415, %v1936
      %v1971 = vmul.f32 %v420, %v1936
      %v1972 = vmul.f32 %v838, %v1936
      %v1973 = vmul.f32 %v425, %v1936
      %v1974 = vmul.f32 %v430, %v1936
      %v1975 = vmul.f32 %v435, %v1936
      %v1976 = vmul.f32 %v843, %v1936
      %v1977 = vmul.f32 %v440, %v1936
      %v1978 = vmul.f32 %v445, %v1936
      %v1979 = vmul.f32 %v450, %v1936
      %v1980 = vmul.f32 %v848, %v1936
      %v1981 = vmul.f32 %v455, %v1936
      %v1982 = vmul.f32 %v460, %v1936
      %v1983 = vmul.f32 %v465, %v1936
      %v1984 = vmul.f32 %v853, %v1936
      %v1985 = vmul.f32 %v470, %v1936
      %v1986 = vmul.f32 %v475, %v1936
      %v1987 = vmul.f32 %v480, %v1936
      %v1988 = vmul.f32 %v858, %v1936
      %v1989 = vmul.f32 %v485, %v1936
      %v1990 = vmul.f32 %v490, %v1936
      %v1991 = vmul.f32 %v495, %v1936
      %v1992 = vmul.f32 %v863, %v1936
      %v1993 = vmul.f32 %v500, %v1936
      %v1994 = vmul.f32 %v505, %v1936
      %v1995 = vmul.f32 %v510, %v1936
      %v1996 = vmul.f32 %v868, %v1936
      %v1997 = vmul.f32 %v515, %v1936
      %v1998 = vmul.f32 %v520, %v1936
      %v1999 = vmul.f32 %v525, %v1936
      %v2000 = vmul.f32 %v873, %v1936
      %v2001 = vmul.f32 %v530, %v1936
      %v2002 = vmul.f32 %v535, %v1936
      %v2003 = vmul.f32 %v540, %v1936
      %v2004 = vmul.f32 %v878, %v1936
      %v2005 = vmul.f32 %v545, %v1936
      %v2006 = vmul.f32 %v550, %v1936
      %v2007 = vmul.f32 %v555, %v1936
      %v2008 = vmul.f32 %v883, %v1936
      %v2009 = vmul.f32 %v560, %v1936
      %v2010 = vmul.f32 %v565, %v1936
      %v2011 = vmul.f32 %v570, %v1936
      %v2012 = vmul.f32 %v888, %v1936
      %v2013 = vmul.f32 %v575, %v1936
      %v2014 = vmul.f32 %v580, %v1936
      %v2015 = vmul.f32 %v585, %v1936
      %v2016 = vmul.f32 %v893, %v1936
      %v2017 = vmul.f32 %v590, %v1936
      %v2018 = vmul.f32 %v595, %v1936
      %v2019 = vmul.f32 %v600, %v1936
      %v2020 = vmul.f32 %v898, %v1936
      %v2021 = vmul.f32 %v605, %v1936
      %v2022 = vmul.f32 %v610, %v1936
      %v2023 = vmul.f32 %v615, %v1936
      %v2024 = vmul.f32 %v903, %v1936
      %v2025 = vmul.f32 %v620, %v1936
      %v2026 = vmul.f32 %v625, %v1936
      %v2027 = vmul.f32 %v630, %v1936
      %v2028 = vmul.f32 %v908, %v1936
      %v2029 = vmul.f32 %v635, %v1936
      %v2030 = vmul.f32 %v640, %v1936
      %v2031 = vmul.f32 %v645, %v1936
      %v2032 = vmul.f32 %v913, %v1936
      %vm2129 = vcmask 1044480
      %v2130 = vrot.slane %v1937, 3
      %v2131 = vrot.slane %v1938, 3
      %v2132 = vsel %vm2129, %v2130, %v2131
      %v2133 = vrot.slane %v1939, 3
      %v2134 = vsel %vm2129, %v2131, %v2133
      %v2135 = vrot.slane %v1940, 3
      %v2136 = vsel %vm2129, %v2133, %v2135
      %v2137 = vrot.slane %v1941, 3
      %v2138 = vrot.slane %v1942, 3
      %v2139 = vsel %vm2129, %v2137, %v2138
      %v2140 = vrot.slane %v1943, 3
      %v2141 = vsel %vm2129, %v2138, %v2140
      %v2142 = vrot.slane %v1944, 3
      %v2143 = vsel %vm2129, %v2140, %v2142
      %v2144 = vrot.slane %v1945, 3
      %v2145 = vrot.slane %v1946, 3
      %v2146 = vsel %vm2129, %v2144, %v2145
      %v2147 = vrot.slane %v1947, 3
      %v2148 = vsel %vm2129, %v2145, %v2147
      %v2149 = vrot.slane %v1948, 3
      %v2150 = vsel %vm2129, %v2147, %v2149
      %v2151 = vrot.slane %v1949, 3
      %v2152 = vrot.slane %v1950, 3
      %v2153 = vsel %vm2129, %v2151, %v2152
      %v2154 = vrot.slane %v1951, 3
      %v2155 = vsel %vm2129, %v2152, %v2154
      %v2156 = vrot.slane %v1952, 3
      %v2157 = vsel %vm2129, %v2154, %v2156
      %v2158 = vrot.slane %v1953, 3
      %v2159 = vrot.slane %v1954, 3
      %v2160 = vsel %vm2129, %v2158, %v2159
      %v2161 = vrot.slane %v1955, 3
      %v2162 = vsel %vm2129, %v2159, %v2161
      %v2163 = vrot.slane %v1956, 3
      %v2164 = vsel %vm2129, %v2161, %v2163
      %v2165 = vrot.slane %v1957, 3
      %v2166 = vrot.slane %v1958, 3
      %v2167 = vsel %vm2129, %v2165, %v2166
      %v2168 = vrot.slane %v1959, 3
      %v2169 = vsel %vm2129, %v2166, %v2168
      %v2170 = vrot.slane %v1960, 3
      %v2171 = vsel %vm2129, %v2168, %v2170
      %v2172 = vrot.slane %v1961, 3
      %v2173 = vrot.slane %v1962, 3
      %v2174 = vsel %vm2129, %v2172, %v2173
      %v2175 = vrot.slane %v1963, 3
      %v2176 = vsel %vm2129, %v2173, %v2175
      %v2177 = vrot.slane %v1964, 3
      %v2178 = vsel %vm2129, %v2175, %v2177
      %v2179 = vrot.slane %v1965, 3
      %v2180 = vrot.slane %v1966, 3
      %v2181 = vsel %vm2129, %v2179, %v2180
      %v2182 = vrot.slane %v1967, 3
      %v2183 = vsel %vm2129, %v2180, %v2182
      %v2184 = vrot.slane %v1968, 3
      %v2185 = vsel %vm2129, %v2182, %v2184
      %v2186 = vrot.slane %v1969, 3
      %v2187 = vrot.slane %v1970, 3
      %v2188 = vsel %vm2129, %v2186, %v2187
      %v2189 = vrot.slane %v1971, 3
      %v2190 = vsel %vm2129, %v2187, %v2189
      %v2191 = vrot.slane %v1972, 3
      %v2192 = vsel %vm2129, %v2189, %v2191
      %v2193 = vrot.slane %v1973, 3
      %v2194 = vrot.slane %v1974, 3
      %v2195 = vsel %vm2129, %v2193, %v2194
      %v2196 = vrot.slane %v1975, 3
      %v2197 = vsel %vm2129, %v2194, %v2196
      %v2198 = vrot.slane %v1976, 3
      %v2199 = vsel %vm2129, %v2196, %v2198
      %v2200 = vrot.slane %v1977, 3
      %v2201 = vrot.slane %v1978, 3
      %v2202 = vsel %vm2129, %v2200, %v2201
      %v2203 = vrot.slane %v1979, 3
      %v2204 = vsel %vm2129, %v2201, %v2203
      %v2205 = vrot.slane %v1980, 3
      %v2206 = vsel %vm2129, %v2203, %v2205
      %v2207 = vrot.slane %v1981, 3
      %v2208 = vrot.slane %v1982, 3
      %v2209 = vsel %vm2129, %v2207, %v2208
      %v2210 = vrot.slane %v1983, 3
      %v2211 = vsel %vm2129, %v2208, %v2210
      %v2212 = vrot.slane %v1984, 3
      %v2213 = vsel %vm2129, %v2210, %v2212
      %v2214 = vrot.slane %v1985, 3
      %v2215 = vrot.slane %v1986, 3
      %v2216 = vsel %vm2129, %v2214, %v2215
      %v2217 = vrot.slane %v1987, 3
      %v2218 = vsel %vm2129, %v2215, %v2217
      %v2219 = vrot.slane %v1988, 3
      %v2220 = vsel %vm2129, %v2217, %v2219
      %v2221 = vrot.slane %v1989, 3
      %v2222 = vrot.slane %v1990, 3
      %v2223 = vsel %vm2129, %v2221, %v2222
      %v2224 = vrot.slane %v1991, 3
      %v2225 = vsel %vm2129, %v2222, %v2224
      %v2226 = vrot.slane %v1992, 3
      %v2227 = vsel %vm2129, %v2224, %v2226
      %v2228 = vrot.slane %v1993, 3
      %v2229 = vrot.slane %v1994, 3
      %v2230 = vsel %vm2129, %v2228, %v2229
      %v2231 = vrot.slane %v1995, 3
      %v2232 = vsel %vm2129, %v2229, %v2231
      %v2233 = vrot.slane %v1996, 3
      %v2234 = vsel %vm2129, %v2231, %v2233
      %v2235 = vrot.slane %v1997, 3
      %v2236 = vrot.slane %v1998, 3
      %v2237 = vsel %vm2129, %v2235, %v2236
      %v2238 = vrot.slane %v1999, 3
      %v2239 = vsel %vm2129, %v2236, %v2238
      %v2240 = vrot.slane %v2000, 3
      %v2241 = vsel %vm2129, %v2238, %v2240
      %v2242 = vrot.slane %v2001, 3
      %v2243 = vrot.slane %v2002, 3
      %v2244 = vsel %vm2129, %v2242, %v2243
      %v2245 = vrot.slane %v2003, 3
      %v2246 = vsel %vm2129, %v2243, %v2245
      %v2247 = vrot.slane %v2004, 3
      %v2248 = vsel %vm2129, %v2245, %v2247
      %v2249 = vrot.slane %v2005, 3
      %v2250 = vrot.slane %v2006, 3
      %v2251 = vsel %vm2129, %v2249, %v2250
      %v2252 = vrot.slane %v2007, 3
      %v2253 = vsel %vm2129, %v2250, %v2252
      %v2254 = vrot.slane %v2008, 3
      %v2255 = vsel %vm2129, %v2252, %v2254
      %v2256 = vrot.slane %v2009, 3
      %v2257 = vrot.slane %v2010, 3
      %v2258 = vsel %vm2129, %v2256, %v2257
      %v2259 = vrot.slane %v2011, 3
      %v2260 = vsel %vm2129, %v2257, %v2259
      %v2261 = vrot.slane %v2012, 3
      %v2262 = vsel %vm2129, %v2259, %v2261
      %v2263 = vrot.slane %v2013, 3
      %v2264 = vrot.slane %v2014, 3
      %v2265 = vsel %vm2129, %v2263, %v2264
      %v2266 = vrot.slane %v2015, 3
      %v2267 = vsel %vm2129, %v2264, %v2266
      %v2268 = vrot.slane %v2016, 3
      %v2269 = vsel %vm2129, %v2266, %v2268
      %v2270 = vrot.slane %v2017, 3
      %v2271 = vrot.slane %v2018, 3
      %v2272 = vsel %vm2129, %v2270, %v2271
      %v2273 = vrot.slane %v2019, 3
      %v2274 = vsel %vm2129, %v2271, %v2273
      %v2275 = vrot.slane %v2020, 3
      %v2276 = vsel %vm2129, %v2273, %v2275
      %v2277 = vrot.slane %v2021, 3
      %v2278 = vrot.slane %v2022, 3
      %v2279 = vsel %vm2129, %v2277, %v2278
      %v2280 = vrot.slane %v2023, 3
      %v2281 = vsel %vm2129, %v2278, %v2280
      %v2282 = vrot.slane %v2024, 3
      %v2283 = vsel %vm2129, %v2280, %v2282
      %v2284 = vrot.slane %v2025, 3
      %v2285 = vrot.slane %v2026, 3
      %v2286 = vsel %vm2129, %v2284, %v2285
      %v2287 = vrot.slane %v2027, 3
      %v2288 = vsel %vm2129, %v2285, %v2287
      %v2289 = vrot.slane %v2028, 3
      %v2290 = vsel %vm2129, %v2287, %v2289
      %v2291 = vrot.slane %v2029, 3
      %v2292 = vrot.slane %v2030, 3
      %v2293 = vsel %vm2129, %v2291, %v2292
      %v2294 = vrot.slane %v2031, 3
      %v2295 = vsel %vm2129, %v2292, %v2294
      %v2296 = vrot.slane %v2032, 3
      %v2297 = vsel %vm2129, %v2294, %v2296
      %v2370 = vadd.f32 %v1861, %v2132
      %v2371 = vadd.f32 %v1862, %v2134
      %v2372 = vadd.f32 %v1863, %v2136
      %v2373 = vadd.f32 %v1864, %v2139
      %v2374 = vadd.f32 %v1865, %v2141
      %v2375 = vadd.f32 %v1866, %v2143
      %v2376 = vadd.f32 %v1867, %v2146
      %v2377 = vadd.f32 %v1868, %v2148
      %v2378 = vadd.f32 %v1869, %v2150
      %v2379 = vadd.f32 %v1870, %v2153
      %v2380 = vadd.f32 %v1871, %v2155
      %v2381 = vadd.f32 %v1872, %v2157
      %v2382 = vadd.f32 %v1873, %v2160
      %v2383 = vadd.f32 %v1874, %v2162
      %v2384 = vadd.f32 %v1875, %v2164
      %v2385 = vadd.f32 %v1876, %v2167
      %v2386 = vadd.f32 %v1877, %v2169
      %v2387 = vadd.f32 %v1878, %v2171
      %v2388 = vadd.f32 %v1879, %v2174
      %v2389 = vadd.f32 %v1880, %v2176
      %v2390 = vadd.f32 %v1881, %v2178
      %v2391 = vadd.f32 %v1882, %v2181
      %v2392 = vadd.f32 %v1883, %v2183
      %v2393 = vadd.f32 %v1884, %v2185
      %v2394 = vadd.f32 %v1885, %v2188
      %v2395 = vadd.f32 %v1886, %v2190
      %v2396 = vadd.f32 %v1887, %v2192
      %v2397 = vadd.f32 %v1888, %v2195
      %v2398 = vadd.f32 %v1889, %v2197
      %v2399 = vadd.f32 %v1890, %v2199
      %v2400 = vadd.f32 %v1891, %v2202
      %v2401 = vadd.f32 %v1892, %v2204
      %v2402 = vadd.f32 %v1893, %v2206
      %v2403 = vadd.f32 %v1894, %v2209
      %v2404 = vadd.f32 %v1895, %v2211
      %v2405 = vadd.f32 %v1896, %v2213
      %v2406 = vadd.f32 %v1897, %v2216
      %v2407 = vadd.f32 %v1898, %v2218
      %v2408 = vadd.f32 %v1899, %v2220
      %v2409 = vadd.f32 %v1900, %v2223
      %v2410 = vadd.f32 %v1901, %v2225
      %v2411 = vadd.f32 %v1902, %v2227
      %v2412 = vadd.f32 %v1903, %v2230
      %v2413 = vadd.f32 %v1904, %v2232
      %v2414 = vadd.f32 %v1905, %v2234
      %v2415 = vadd.f32 %v1906, %v2237
      %v2416 = vadd.f32 %v1907, %v2239
      %v2417 = vadd.f32 %v1908, %v2241
      %v2418 = vadd.f32 %v1909, %v2244
      %v2419 = vadd.f32 %v1910, %v2246
      %v2420 = vadd.f32 %v1911, %v2248
      %v2421 = vadd.f32 %v1912, %v2251
      %v2422 = vadd.f32 %v1913, %v2253
      %v2423 = vadd.f32 %v1914, %v2255
      %v2424 = vadd.f32 %v1915, %v2258
      %v2425 = vadd.f32 %v1916, %v2260
      %v2426 = vadd.f32 %v1917, %v2262
      %v2427 = vadd.f32 %v1918, %v2265
      %v2428 = vadd.f32 %v1919, %v2267
      %v2429 = vadd.f32 %v1920, %v2269
      %v2430 = vadd.f32 %v1921, %v2272
      %v2431 = vadd.f32 %v1922, %v2274
      %v2432 = vadd.f32 %v1923, %v2276
      %v2433 = vadd.f32 %v1924, %v2279
      %v2434 = vadd.f32 %v1925, %v2281
      %v2435 = vadd.f32 %v1926, %v2283
      %v2436 = vadd.f32 %v1927, %v2286
      %v2437 = vadd.f32 %v1928, %v2288
      %v2438 = vadd.f32 %v1929, %v2290
      %v2439 = vadd.f32 %v1930, %v2293
      %v2440 = vadd.f32 %v1931, %v2295
      %v2441 = vadd.f32 %v1932, %v2297
      %v2442 = vlaneseq
      %v2443 = vshrl.u32 %v2442, 7
      %v2444 = vsub.s32 4, %v2443
      %v2445 = vrot.slane %v283, %v2444
      %v2446 = vmul.f32 %v290, %v2445
      %v2447 = vmul.f32 %v295, %v2445
      %v2448 = vmul.f32 %v300, %v2445
      %v2449 = vmul.f32 %v798, %v2445
      %v2450 = vmul.f32 %v305, %v2445
      %v2451 = vmul.f32 %v310, %v2445
      %v2452 = vmul.f32 %v315, %v2445
      %v2453 = vmul.f32 %v803, %v2445
      %v2454 = vmul.f32 %v320, %v2445
      %v2455 = vmul.f32 %v325, %v2445
      %v2456 = vmul.f32 %v330, %v2445
      %v2457 = vmul.f32 %v808, %v2445
      %v2458 = vmul.f32 %v335, %v2445
      %v2459 = vmul.f32 %v340, %v2445
      %v2460 = vmul.f32 %v345, %v2445
      %v2461 = vmul.f32 %v813, %v2445
      %v2462 = vmul.f32 %v350, %v2445
      %v2463 = vmul.f32 %v355, %v2445
      %v2464 = vmul.f32 %v360, %v2445
      %v2465 = vmul.f32 %v818, %v2445
      %v2466 = vmul.f32 %v365, %v2445
      %v2467 = vmul.f32 %v370, %v2445
      %v2468 = vmul.f32 %v375, %v2445
      %v2469 = vmul.f32 %v823, %v2445
      %v2470 = vmul.f32 %v380, %v2445
      %v2471 = vmul.f32 %v385, %v2445
      %v2472 = vmul.f32 %v390, %v2445
      %v2473 = vmul.f32 %v828, %v2445
      %v2474 = vmul.f32 %v395, %v2445
      %v2475 = vmul.f32 %v400, %v2445
      %v2476 = vmul.f32 %v405, %v2445
      %v2477 = vmul.f32 %v833, %v2445
      %v2478 = vmul.f32 %v410, %v2445
      %v2479 = vmul.f32 %v415, %v2445
      %v2480 = vmul.f32 %v420, %v2445
      %v2481 = vmul.f32 %v838, %v2445
      %v2482 = vmul.f32 %v425, %v2445
      %v2483 = vmul.f32 %v430, %v2445
      %v2484 = vmul.f32 %v435, %v2445
      %v2485 = vmul.f32 %v843, %v2445
      %v2486 = vmul.f32 %v440, %v2445
      %v2487 = vmul.f32 %v445, %v2445
      %v2488 = vmul.f32 %v450, %v2445
      %v2489 = vmul.f32 %v848, %v2445
      %v2490 = vmul.f32 %v455, %v2445
      %v2491 = vmul.f32 %v460, %v2445
      %v2492 = vmul.f32 %v465, %v2445
      %v2493 = vmul.f32 %v853, %v2445
      %v2494 = vmul.f32 %v470, %v2445
      %v2495 = vmul.f32 %v475, %v2445
      %v2496 = vmul.f32 %v480, %v2445
      %v2497 = vmul.f32 %v858, %v2445
      %v2498 = vmul.f32 %v485, %v2445
      %v2499 = vmul.f32 %v490, %v2445
      %v2500 = vmul.f32 %v495, %v2445
      %v2501 = vmul.f32 %v863, %v2445
      %v2502 = vmul.f32 %v500, %v2445
      %v2503 = vmul.f32 %v505, %v2445
      %v2504 = vmul.f32 %v510, %v2445
      %v2505 = vmul.f32 %v868, %v2445
      %v2506 = vmul.f32 %v515, %v2445
      %v2507 = vmul.f32 %v520, %v2445
      %v2508 = vmul.f32 %v525, %v2445
      %v2509 = vmul.f32 %v873, %v2445
      %v2510 = vmul.f32 %v530, %v2445
      %v2511 = vmul.f32 %v535, %v2445
      %v2512 = vmul.f32 %v540, %v2445
      %v2513 = vmul.f32 %v878, %v2445
      %v2514 = vmul.f32 %v545, %v2445
      %v2515 = vmul.f32 %v550, %v2445
      %v2516 = vmul.f32 %v555, %v2445
      %v2517 = vmul.f32 %v883, %v2445
      %v2518 = vmul.f32 %v560, %v2445
      %v2519 = vmul.f32 %v565, %v2445
      %v2520 = vmul.f32 %v570, %v2445
      %v2521 = vmul.f32 %v888, %v2445
      %v2522 = vmul.f32 %v575, %v2445
      %v2523 = vmul.f32 %v580, %v2445
      %v2524 = vmul.f32 %v585, %v2445
      %v2525 = vmul.f32 %v893, %v2445
      %v2526 = vmul.f32 %v590, %v2445
      %v2527 = vmul.f32 %v595, %v2445
      %v2528 = vmul.f32 %v600, %v2445
      %v2529 = vmul.f32 %v898, %v2445
      %v2530 = vmul.f32 %v605, %v2445
      %v2531 = vmul.f32 %v610, %v2445
      %v2532 = vmul.f32 %v615, %v2445
      %v2533 = vmul.f32 %v903, %v2445
      %v2534 = vmul.f32 %v620, %v2445
      %v2535 = vmul.f32 %v625, %v2445
      %v2536 = vmul.f32 %v630, %v2445
      %v2537 = vmul.f32 %v908, %v2445
      %v2538 = vmul.f32 %v635, %v2445
      %v2539 = vmul.f32 %v640, %v2445
      %v2540 = vmul.f32 %v645, %v2445
      %v2541 = vmul.f32 %v913, %v2445
      %vm2638 = vcmask 1043456
      %v2639 = vrot.slane %v2446, 4
      %v2640 = vrot.slane %v2447, 4
      %v2641 = vsel %vm2638, %v2639, %v2640
      %v2642 = vrot.slane %v2448, 4
      %v2643 = vsel %vm2638, %v2640, %v2642
      %v2644 = vrot.slane %v2449, 4
      %v2645 = vsel %vm2638, %v2642, %v2644
      %v2646 = vrot.slane %v2450, 4
      %v2647 = vrot.slane %v2451, 4
      %v2648 = vsel %vm2638, %v2646, %v2647
      %v2649 = vrot.slane %v2452, 4
      %v2650 = vsel %vm2638, %v2647, %v2649
      %v2651 = vrot.slane %v2453, 4
      %v2652 = vsel %vm2638, %v2649, %v2651
      %v2653 = vrot.slane %v2454, 4
      %v2654 = vrot.slane %v2455, 4
      %v2655 = vsel %vm2638, %v2653, %v2654
      %v2656 = vrot.slane %v2456, 4
      %v2657 = vsel %vm2638, %v2654, %v2656
      %v2658 = vrot.slane %v2457, 4
      %v2659 = vsel %vm2638, %v2656, %v2658
      %v2660 = vrot.slane %v2458, 4
      %v2661 = vrot.slane %v2459, 4
      %v2662 = vsel %vm2638, %v2660, %v2661
      %v2663 = vrot.slane %v2460, 4
      %v2664 = vsel %vm2638, %v2661, %v2663
      %v2665 = vrot.slane %v2461, 4
      %v2666 = vsel %vm2638, %v2663, %v2665
      %v2667 = vrot.slane %v2462, 4
      %v2668 = vrot.slane %v2463, 4
      %v2669 = vsel %vm2638, %v2667, %v2668
      %v2670 = vrot.slane %v2464, 4
      %v2671 = vsel %vm2638, %v2668, %v2670
      %v2672 = vrot.slane %v2465, 4
      %v2673 = vsel %vm2638, %v2670, %v2672
      %v2674 = vrot.slane %v2466, 4
      %v2675 = vrot.slane %v2467, 4
      %v2676 = vsel %vm2638, %v2674, %v2675
      %v2677 = vrot.slane %v2468, 4
      %v2678 = vsel %vm2638, %v2675, %v2677
      %v2679 = vrot.slane %v2469, 4
      %v2680 = vsel %vm2638, %v2677, %v2679
      %v2681 = vrot.slane %v2470, 4
      %v2682 = vrot.slane %v2471, 4
      %v2683 = vsel %vm2638, %v2681, %v2682
      %v2684 = vrot.slane %v2472, 4
      %v2685 = vsel %vm2638, %v2682, %v2684
      %v2686 = vrot.slane %v2473, 4
      %v2687 = vsel %vm2638, %v2684, %v2686
      %v2688 = vrot.slane %v2474, 4
      %v2689 = vrot.slane %v2475, 4
      %v2690 = vsel %vm2638, %v2688, %v2689
      %v2691 = vrot.slane %v2476, 4
      %v2692 = vsel %vm2638, %v2689, %v2691
      %v2693 = vrot.slane %v2477, 4
      %v2694 = vsel %vm2638, %v2691, %v2693
      %v2695 = vrot.slane %v2478, 4
      %v2696 = vrot.slane %v2479, 4
      %v2697 = vsel %vm2638, %v2695, %v2696
      %v2698 = vrot.slane %v2480, 4
      %v2699 = vsel %vm2638, %v2696, %v2698
      %v2700 = vrot.slane %v2481, 4
      %v2701 = vsel %vm2638, %v2698, %v2700
      %v2702 = vrot.slane %v2482, 4
      %v2703 = vrot.slane %v2483, 4
      %v2704 = vsel %vm2638, %v2702, %v2703
      %v2705 = vrot.slane %v2484, 4
      %v2706 = vsel %vm2638, %v2703, %v2705
      %v2707 = vrot.slane %v2485, 4
      %v2708 = vsel %vm2638, %v2705, %v2707
      %v2709 = vrot.slane %v2486, 4
      %v2710 = vrot.slane %v2487, 4
      %v2711 = vsel %vm2638, %v2709, %v2710
      %v2712 = vrot.slane %v2488, 4
      %v2713 = vsel %vm2638, %v2710, %v2712
      %v2714 = vrot.slane %v2489, 4
      %v2715 = vsel %vm2638, %v2712, %v2714
      %v2716 = vrot.slane %v2490, 4
      %v2717 = vrot.slane %v2491, 4
      %v2718 = vsel %vm2638, %v2716, %v2717
      %v2719 = vrot.slane %v2492, 4
      %v2720 = vsel %vm2638, %v2717, %v2719
      %v2721 = vrot.slane %v2493, 4
      %v2722 = vsel %vm2638, %v2719, %v2721
      %v2723 = vrot.slane %v2494, 4
      %v2724 = vrot.slane %v2495, 4
      %v2725 = vsel %vm2638, %v2723, %v2724
      %v2726 = vrot.slane %v2496, 4
      %v2727 = vsel %vm2638, %v2724, %v2726
      %v2728 = vrot.slane %v2497, 4
      %v2729 = vsel %vm2638, %v2726, %v2728
      %v2730 = vrot.slane %v2498, 4
      %v2731 = vrot.slane %v2499, 4
      %v2732 = vsel %vm2638, %v2730, %v2731
      %v2733 = vrot.slane %v2500, 4
      %v2734 = vsel %vm2638, %v2731, %v2733
      %v2735 = vrot.slane %v2501, 4
      %v2736 = vsel %vm2638, %v2733, %v2735
      %v2737 = vrot.slane %v2502, 4
      %v2738 = vrot.slane %v2503, 4
      %v2739 = vsel %vm2638, %v2737, %v2738
      %v2740 = vrot.slane %v2504, 4
      %v2741 = vsel %vm2638, %v2738, %v2740
      %v2742 = vrot.slane %v2505, 4
      %v2743 = vsel %vm2638, %v2740, %v2742
      %v2744 = vrot.slane %v2506, 4
      %v2745 = vrot.slane %v2507, 4
      %v2746 = vsel %vm2638, %v2744, %v2745
      %v2747 = vrot.slane %v2508, 4
      %v2748 = vsel %vm2638, %v2745, %v2747
      %v2749 = vrot.slane %v2509, 4
      %v2750 = vsel %vm2638, %v2747, %v2749
      %v2751 = vrot.slane %v2510, 4
      %v2752 = vrot.slane %v2511, 4
      %v2753 = vsel %vm2638, %v2751, %v2752
      %v2754 = vrot.slane %v2512, 4
      %v2755 = vsel %vm2638, %v2752, %v2754
      %v2756 = vrot.slane %v2513, 4
      %v2757 = vsel %vm2638, %v2754, %v2756
      %v2758 = vrot.slane %v2514, 4
      %v2759 = vrot.slane %v2515, 4
      %v2760 = vsel %vm2638, %v2758, %v2759
      %v2761 = vrot.slane %v2516, 4
      %v2762 = vsel %vm2638, %v2759, %v2761
      %v2763 = vrot.slane %v2517, 4
      %v2764 = vsel %vm2638, %v2761, %v2763
      %v2765 = vrot.slane %v2518, 4
      %v2766 = vrot.slane %v2519, 4
      %v2767 = vsel %vm2638, %v2765, %v2766
      %v2768 = vrot.slane %v2520, 4
      %v2769 = vsel %vm2638, %v2766, %v2768
      %v2770 = vrot.slane %v2521, 4
      %v2771 = vsel %vm2638, %v2768, %v2770
      %v2772 = vrot.slane %v2522, 4
      %v2773 = vrot.slane %v2523, 4
      %v2774 = vsel %vm2638, %v2772, %v2773
      %v2775 = vrot.slane %v2524, 4
      %v2776 = vsel %vm2638, %v2773, %v2775
      %v2777 = vrot.slane %v2525, 4
      %v2778 = vsel %vm2638, %v2775, %v2777
      %v2779 = vrot.slane %v2526, 4
      %v2780 = vrot.slane %v2527, 4
      %v2781 = vsel %vm2638, %v2779, %v2780
      %v2782 = vrot.slane %v2528, 4
      %v2783 = vsel %vm2638, %v2780, %v2782
      %v2784 = vrot.slane %v2529, 4
      %v2785 = vsel %vm2638, %v2782, %v2784
      %v2786 = vrot.slane %v2530, 4
      %v2787 = vrot.slane %v2531, 4
      %v2788 = vsel %vm2638, %v2786, %v2787
      %v2789 = vrot.slane %v2532, 4
      %v2790 = vsel %vm2638, %v2787, %v2789
      %v2791 = vrot.slane %v2533, 4
      %v2792 = vsel %vm2638, %v2789, %v2791
      %v2793 = vrot.slane %v2534, 4
      %v2794 = vrot.slane %v2535, 4
      %v2795 = vsel %vm2638, %v2793, %v2794
      %v2796 = vrot.slane %v2536, 4
      %v2797 = vsel %vm2638, %v2794, %v2796
      %v2798 = vrot.slane %v2537, 4
      %v2799 = vsel %vm2638, %v2796, %v2798
      %v2800 = vrot.slane %v2538, 4
      %v2801 = vrot.slane %v2539, 4
      %v2802 = vsel %vm2638, %v2800, %v2801
      %v2803 = vrot.slane %v2540, 4
      %v2804 = vsel %vm2638, %v2801, %v2803
      %v2805 = vrot.slane %v2541, 4
      %v2806 = vsel %vm2638, %v2803, %v2805
      %v2879 = vadd.f32 %v2370, %v2641
      %v2880 = vadd.f32 %v2371, %v2643
      %v2881 = vadd.f32 %v2372, %v2645
      %v2882 = vadd.f32 %v2373, %v2648
      %v2883 = vadd.f32 %v2374, %v2650
      %v2884 = vadd.f32 %v2375, %v2652
      %v2885 = vadd.f32 %v2376, %v2655
      %v2886 = vadd.f32 %v2377, %v2657
      %v2887 = vadd.f32 %v2378, %v2659
      %v2888 = vadd.f32 %v2379, %v2662
      %v2889 = vadd.f32 %v2380, %v2664
      %v2890 = vadd.f32 %v2381, %v2666
      %v2891 = vadd.f32 %v2382, %v2669
      %v2892 = vadd.f32 %v2383, %v2671
      %v2893 = vadd.f32 %v2384, %v2673
      %v2894 = vadd.f32 %v2385, %v2676
      %v2895 = vadd.f32 %v2386, %v2678
      %v2896 = vadd.f32 %v2387, %v2680
      %v2897 = vadd.f32 %v2388, %v2683
      %v2898 = vadd.f32 %v2389, %v2685
      %v2899 = vadd.f32 %v2390, %v2687
      %v2900 = vadd.f32 %v2391, %v2690
      %v2901 = vadd.f32 %v2392, %v2692
      %v2902 = vadd.f32 %v2393, %v2694
      %v2903 = vadd.f32 %v2394, %v2697
      %v2904 = vadd.f32 %v2395, %v2699
      %v2905 = vadd.f32 %v2396, %v2701
      %v2906 = vadd.f32 %v2397, %v2704
      %v2907 = vadd.f32 %v2398, %v2706
      %v2908 = vadd.f32 %v2399, %v2708
      %v2909 = vadd.f32 %v2400, %v2711
      %v2910 = vadd.f32 %v2401, %v2713
      %v2911 = vadd.f32 %v2402, %v2715
      %v2912 = vadd.f32 %v2403, %v2718
      %v2913 = vadd.f32 %v2404, %v2720
      %v2914 = vadd.f32 %v2405, %v2722
      %v2915 = vadd.f32 %v2406, %v2725
      %v2916 = vadd.f32 %v2407, %v2727
      %v2917 = vadd.f32 %v2408, %v2729
      %v2918 = vadd.f32 %v2409, %v2732
      %v2919 = vadd.f32 %v2410, %v2734
      %v2920 = vadd.f32 %v2411, %v2736
      %v2921 = vadd.f32 %v2412, %v2739
      %v2922 = vadd.f32 %v2413, %v2741
      %v2923 = vadd.f32 %v2414, %v2743
      %v2924 = vadd.f32 %v2415, %v2746
      %v2925 = vadd.f32 %v2416, %v2748
      %v2926 = vadd.f32 %v2417, %v2750
      %v2927 = vadd.f32 %v2418, %v2753
      %v2928 = vadd.f32 %v2419, %v2755
      %v2929 = vadd.f32 %v2420, %v2757
      %v2930 = vadd.f32 %v2421, %v2760
      %v2931 = vadd.f32 %v2422, %v2762
      %v2932 = vadd.f32 %v2423, %v2764
      %v2933 = vadd.f32 %v2424, %v2767
      %v2934 = vadd.f32 %v2425, %v2769
      %v2935 = vadd.f32 %v2426, %v2771
      %v2936 = vadd.f32 %v2427, %v2774
      %v2937 = vadd.f32 %v2428, %v2776
      %v2938 = vadd.f32 %v2429, %v2778
      %v2939 = vadd.f32 %v2430, %v2781
      %v2940 = vadd.f32 %v2431, %v2783
      %v2941 = vadd.f32 %v2432, %v2785
      %v2942 = vadd.f32 %v2433, %v2788
      %v2943 = vadd.f32 %v2434, %v2790
      %v2944 = vadd.f32 %v2435, %v2792
      %v2945 = vadd.f32 %v2436, %v2795
      %v2946 = vadd.f32 %v2437, %v2797
      %v2947 = vadd.f32 %v2438, %v2799
      %v2948 = vadd.f32 %v2439, %v2802
      %v2949 = vadd.f32 %v2440, %v2804
      %v2950 = vadd.f32 %v2441, %v2806
      %2952 = vset.pattern.permute.xlu0 0
      %2953 = vperm.xlu0 %2952, %v267
      %v2954 = vpop.permute.xlu0 %2953
      %2957 = vset.pattern.permute.xlu0 0
      %2958 = vperm.xlu0 %2957, %v268
      %v2959 = vpop.permute.xlu0 %2958
      %2962 = vset.pattern.permute.xlu0 0
      %2963 = vperm.xlu0 %2962, %v269
      %v2964 = vpop.permute.xlu0 %2963
      %v2966 = vlaneseq
      %v2967 = vshrl.u32 %v2966, 7
      %v2968 = vsub.s32 5, %v2967
      %v2969 = vrot.slane %v283, %v2968
      %v2970 = vmul.f32 %v305, %v2969
      %v2971 = vmul.f32 %v310, %v2969
      %v2972 = vmul.f32 %v315, %v2969
      %v2973 = vmul.f32 %v320, %v2969
      %v2974 = vmul.f32 %v325, %v2969
      %v2975 = vmul.f32 %v330, %v2969
      %v2976 = vmul.f32 %v335, %v2969
      %v2977 = vmul.f32 %v340, %v2969
      %v2978 = vmul.f32 %v345, %v2969
      %v2979 = vmul.f32 %v350, %v2969
      %v2980 = vmul.f32 %v355, %v2969
      %v2981 = vmul.f32 %v360, %v2969
      %v2982 = vmul.f32 %v365, %v2969
      %v2983 = vmul.f32 %v370, %v2969
      %v2984 = vmul.f32 %v375, %v2969
      %v2985 = vmul.f32 %v380, %v2969
      %v2986 = vmul.f32 %v385, %v2969
      %v2987 = vmul.f32 %v390, %v2969
      %v2988 = vmul.f32 %v395, %v2969
      %v2989 = vmul.f32 %v400, %v2969
      %v2990 = vmul.f32 %v405, %v2969
      %v2991 = vmul.f32 %v410, %v2969
      %v2992 = vmul.f32 %v415, %v2969
      %v2993 = vmul.f32 %v420, %v2969
      %v2994 = vmul.f32 %v425, %v2969
      %v2995 = vmul.f32 %v430, %v2969
      %v2996 = vmul.f32 %v435, %v2969
      %v2997 = vmul.f32 %v440, %v2969
      %v2998 = vmul.f32 %v445, %v2969
      %v2999 = vmul.f32 %v450, %v2969
      %v3000 = vmul.f32 %v455, %v2969
      %v3001 = vmul.f32 %v460, %v2969
      %v3002 = vmul.f32 %v465, %v2969
      %v3003 = vmul.f32 %v470, %v2969
      %v3004 = vmul.f32 %v475, %v2969
      %v3005 = vmul.f32 %v480, %v2969
      %v3006 = vmul.f32 %v485, %v2969
      %v3007 = vmul.f32 %v490, %v2969
      %v3008 = vmul.f32 %v495, %v2969
      %v3009 = vmul.f32 %v500, %v2969
      %v3010 = vmul.f32 %v505, %v2969
      %v3011 = vmul.f32 %v510, %v2969
      %v3012 = vmul.f32 %v515, %v2969
      %v3013 = vmul.f32 %v520, %v2969
      %v3014 = vmul.f32 %v525, %v2969
      %v3015 = vmul.f32 %v530, %v2969
      %v3016 = vmul.f32 %v535, %v2969
      %v3017 = vmul.f32 %v540, %v2969
      %v3018 = vmul.f32 %v545, %v2969
      %v3019 = vmul.f32 %v550, %v2969
      %v3020 = vmul.f32 %v555, %v2969
      %v3021 = vmul.f32 %v560, %v2969
      %v3022 = vmul.f32 %v565, %v2969
      %v3023 = vmul.f32 %v570, %v2969
      %v3024 = vmul.f32 %v575, %v2969
      %v3025 = vmul.f32 %v580, %v2969
      %v3026 = vmul.f32 %v585, %v2969
      %v3027 = vmul.f32 %v590, %v2969
      %v3028 = vmul.f32 %v595, %v2969
      %v3029 = vmul.f32 %v600, %v2969
      %v3030 = vmul.f32 %v605, %v2969
      %v3031 = vmul.f32 %v610, %v2969
      %v3032 = vmul.f32 %v615, %v2969
      %v3033 = vmul.f32 %v620, %v2969
      %v3034 = vmul.f32 %v625, %v2969
      %v3035 = vmul.f32 %v630, %v2969
      %v3036 = vmul.f32 %v635, %v2969
      %v3037 = vmul.f32 %v640, %v2969
      %v3038 = vmul.f32 %v645, %v2969
      %v3039 = vmul.f32 %v2954, %v2969
      %v3040 = vmul.f32 %v2959, %v2969
      %v3041 = vmul.f32 %v2964, %v2969
      %v3042 = vadd.f32 %v2879, %v2970
      %v3043 = vadd.f32 %v2880, %v2971
      %v3044 = vadd.f32 %v2881, %v2972
      %v3045 = vadd.f32 %v2882, %v2973
      %v3046 = vadd.f32 %v2883, %v2974
      %v3047 = vadd.f32 %v2884, %v2975
      %v3048 = vadd.f32 %v2885, %v2976
      %v3049 = vadd.f32 %v2886, %v2977
      %v3050 = vadd.f32 %v2887, %v2978
      %v3051 = vadd.f32 %v2888, %v2979
      %v3052 = vadd.f32 %v2889, %v2980
      %v3053 = vadd.f32 %v2890, %v2981
      %v3054 = vadd.f32 %v2891, %v2982
      %v3055 = vadd.f32 %v2892, %v2983
      %v3056 = vadd.f32 %v2893, %v2984
      %v3057 = vadd.f32 %v2894, %v2985
      %v3058 = vadd.f32 %v2895, %v2986
      %v3059 = vadd.f32 %v2896, %v2987
      %v3060 = vadd.f32 %v2897, %v2988
      %v3061 = vadd.f32 %v2898, %v2989
      %v3062 = vadd.f32 %v2899, %v2990
      %v3063 = vadd.f32 %v2900, %v2991
      %v3064 = vadd.f32 %v2901, %v2992
      %v3065 = vadd.f32 %v2902, %v2993
      %v3066 = vadd.f32 %v2903, %v2994
      %v3067 = vadd.f32 %v2904, %v2995
      %v3068 = vadd.f32 %v2905, %v2996
      %v3069 = vadd.f32 %v2906, %v2997
      %v3070 = vadd.f32 %v2907, %v2998
      %v3071 = vadd.f32 %v2908, %v2999
      %v3072 = vadd.f32 %v2909, %v3000
      %v3073 = vadd.f32 %v2910, %v3001
      %v3074 = vadd.f32 %v2911, %v3002
      %v3075 = vadd.f32 %v2912, %v3003
      %v3076 = vadd.f32 %v2913, %v3004
      %v3077 = vadd.f32 %v2914, %v3005
      %v3078 = vadd.f32 %v2915, %v3006
      %v3079 = vadd.f32 %v2916, %v3007
      %v3080 = vadd.f32 %v2917, %v3008
      %v3081 = vadd.f32 %v2918, %v3009
      %v3082 = vadd.f32 %v2919, %v3010
      %v3083 = vadd.f32 %v2920, %v3011
      %v3084 = vadd.f32 %v2921, %v3012
      %v3085 = vadd.f32 %v2922, %v3013
      %v3086 = vadd.f32 %v2923, %v3014
      %v3087 = vadd.f32 %v2924, %v3015
      %v3088 = vadd.f32 %v2925, %v3016
      %v3089 = vadd.f32 %v2926, %v3017
      %v3090 = vadd.f32 %v2927, %v3018
      %v3091 = vadd.f32 %v2928, %v3019
      %v3092 = vadd.f32 %v2929, %v3020
      %v3093 = vadd.f32 %v2930, %v3021
      %v3094 = vadd.f32 %v2931, %v3022
      %v3095 = vadd.f32 %v2932, %v3023
      %v3096 = vadd.f32 %v2933, %v3024
      %v3097 = vadd.f32 %v2934, %v3025
      %v3098 = vadd.f32 %v2935, %v3026
      %v3099 = vadd.f32 %v2936, %v3027
      %v3100 = vadd.f32 %v2937, %v3028
      %v3101 = vadd.f32 %v2938, %v3029
      %v3102 = vadd.f32 %v2939, %v3030
      %v3103 = vadd.f32 %v2940, %v3031
      %v3104 = vadd.f32 %v2941, %v3032
      %v3105 = vadd.f32 %v2942, %v3033
      %v3106 = vadd.f32 %v2943, %v3034
      %v3107 = vadd.f32 %v2944, %v3035
      %v3108 = vadd.f32 %v2945, %v3036
      %v3109 = vadd.f32 %v2946, %v3037
      %v3110 = vadd.f32 %v2947, %v3038
      %v3111 = vadd.f32 %v2948, %v3039
      %v3112 = vadd.f32 %v2949, %v3040
      %v3113 = vadd.f32 %v2950, %v3041
      %3115 = vset.pattern.permute.xlu0 0
      %3116 = vperm.xlu0 %3115, %v270
      %v3117 = vpop.permute.xlu0 %3116
      %v3119 = vlaneseq
      %v3120 = vshrl.u32 %v3119, 7
      %v3121 = vsub.s32 6, %v3120
      %v3122 = vrot.slane %v283, %v3121
      %v3123 = vmul.f32 %v305, %v3122
      %v3124 = vmul.f32 %v310, %v3122
      %v3125 = vmul.f32 %v315, %v3122
      %v3126 = vmul.f32 %v803, %v3122
      %v3127 = vmul.f32 %v320, %v3122
      %v3128 = vmul.f32 %v325, %v3122
      %v3129 = vmul.f32 %v330, %v3122
      %v3130 = vmul.f32 %v808, %v3122
      %v3131 = vmul.f32 %v335, %v3122
      %v3132 = vmul.f32 %v340, %v3122
      %v3133 = vmul.f32 %v345, %v3122
      %v3134 = vmul.f32 %v813, %v3122
      %v3135 = vmul.f32 %v350, %v3122
      %v3136 = vmul.f32 %v355, %v3122
      %v3137 = vmul.f32 %v360, %v3122
      %v3138 = vmul.f32 %v818, %v3122
      %v3139 = vmul.f32 %v365, %v3122
      %v3140 = vmul.f32 %v370, %v3122
      %v3141 = vmul.f32 %v375, %v3122
      %v3142 = vmul.f32 %v823, %v3122
      %v3143 = vmul.f32 %v380, %v3122
      %v3144 = vmul.f32 %v385, %v3122
      %v3145 = vmul.f32 %v390, %v3122
      %v3146 = vmul.f32 %v828, %v3122
      %v3147 = vmul.f32 %v395, %v3122
      %v3148 = vmul.f32 %v400, %v3122
      %v3149 = vmul.f32 %v405, %v3122
      %v3150 = vmul.f32 %v833, %v3122
      %v3151 = vmul.f32 %v410, %v3122
      %v3152 = vmul.f32 %v415, %v3122
      %v3153 = vmul.f32 %v420, %v3122
      %v3154 = vmul.f32 %v838, %v3122
      %v3155 = vmul.f32 %v425, %v3122
      %v3156 = vmul.f32 %v430, %v3122
      %v3157 = vmul.f32 %v435, %v3122
      %v3158 = vmul.f32 %v843, %v3122
      %v3159 = vmul.f32 %v440, %v3122
      %v3160 = vmul.f32 %v445, %v3122
      %v3161 = vmul.f32 %v450, %v3122
      %v3162 = vmul.f32 %v848, %v3122
      %v3163 = vmul.f32 %v455, %v3122
      %v3164 = vmul.f32 %v460, %v3122
      %v3165 = vmul.f32 %v465, %v3122
      %v3166 = vmul.f32 %v853, %v3122
      %v3167 = vmul.f32 %v470, %v3122
      %v3168 = vmul.f32 %v475, %v3122
      %v3169 = vmul.f32 %v480, %v3122
      %v3170 = vmul.f32 %v858, %v3122
      %v3171 = vmul.f32 %v485, %v3122
      %v3172 = vmul.f32 %v490, %v3122
      %v3173 = vmul.f32 %v495, %v3122
      %v3174 = vmul.f32 %v863, %v3122
      %v3175 = vmul.f32 %v500, %v3122
      %v3176 = vmul.f32 %v505, %v3122
      %v3177 = vmul.f32 %v510, %v3122
      %v3178 = vmul.f32 %v868, %v3122
      %v3179 = vmul.f32 %v515, %v3122
      %v3180 = vmul.f32 %v520, %v3122
      %v3181 = vmul.f32 %v525, %v3122
      %v3182 = vmul.f32 %v873, %v3122
      %v3183 = vmul.f32 %v530, %v3122
      %v3184 = vmul.f32 %v535, %v3122
      %v3185 = vmul.f32 %v540, %v3122
      %v3186 = vmul.f32 %v878, %v3122
      %v3187 = vmul.f32 %v545, %v3122
      %v3188 = vmul.f32 %v550, %v3122
      %v3189 = vmul.f32 %v555, %v3122
      %v3190 = vmul.f32 %v883, %v3122
      %v3191 = vmul.f32 %v560, %v3122
      %v3192 = vmul.f32 %v565, %v3122
      %v3193 = vmul.f32 %v570, %v3122
      %v3194 = vmul.f32 %v888, %v3122
      %v3195 = vmul.f32 %v575, %v3122
      %v3196 = vmul.f32 %v580, %v3122
      %v3197 = vmul.f32 %v585, %v3122
      %v3198 = vmul.f32 %v893, %v3122
      %v3199 = vmul.f32 %v590, %v3122
      %v3200 = vmul.f32 %v595, %v3122
      %v3201 = vmul.f32 %v600, %v3122
      %v3202 = vmul.f32 %v898, %v3122
      %v3203 = vmul.f32 %v605, %v3122
      %v3204 = vmul.f32 %v610, %v3122
      %v3205 = vmul.f32 %v615, %v3122
      %v3206 = vmul.f32 %v903, %v3122
      %v3207 = vmul.f32 %v620, %v3122
      %v3208 = vmul.f32 %v625, %v3122
      %v3209 = vmul.f32 %v630, %v3122
      %v3210 = vmul.f32 %v908, %v3122
      %v3211 = vmul.f32 %v635, %v3122
      %v3212 = vmul.f32 %v640, %v3122
      %v3213 = vmul.f32 %v645, %v3122
      %v3214 = vmul.f32 %v913, %v3122
      %v3215 = vmul.f32 %v2954, %v3122
      %v3216 = vmul.f32 %v2959, %v3122
      %v3217 = vmul.f32 %v2964, %v3122
      %v3218 = vmul.f32 %v3117, %v3122
      %v3315 = vrot.slane %v3123, 1
      %v3316 = vrot.slane %v3124, 1
      %v3317 = vsel %vm1111, %v3315, %v3316
      %v3318 = vrot.slane %v3125, 1
      %v3319 = vsel %vm1111, %v3316, %v3318
      %v3320 = vrot.slane %v3126, 1
      %v3321 = vsel %vm1111, %v3318, %v3320
      %v3322 = vrot.slane %v3127, 1
      %v3323 = vrot.slane %v3128, 1
      %v3324 = vsel %vm1111, %v3322, %v3323
      %v3325 = vrot.slane %v3129, 1
      %v3326 = vsel %vm1111, %v3323, %v3325
      %v3327 = vrot.slane %v3130, 1
      %v3328 = vsel %vm1111, %v3325, %v3327
      %v3329 = vrot.slane %v3131, 1
      %v3330 = vrot.slane %v3132, 1
      %v3331 = vsel %vm1111, %v3329, %v3330
      %v3332 = vrot.slane %v3133, 1
      %v3333 = vsel %vm1111, %v3330, %v3332
      %v3334 = vrot.slane %v3134, 1
      %v3335 = vsel %vm1111, %v3332, %v3334
      %v3336 = vrot.slane %v3135, 1
      %v3337 = vrot.slane %v3136, 1
      %v3338 = vsel %vm1111, %v3336, %v3337
      %v3339 = vrot.slane %v3137, 1
      %v3340 = vsel %vm1111, %v3337, %v3339
      %v3341 = vrot.slane %v3138, 1
      %v3342 = vsel %vm1111, %v3339, %v3341
      %v3343 = vrot.slane %v3139, 1
      %v3344 = vrot.slane %v3140, 1
      %v3345 = vsel %vm1111, %v3343, %v3344
      %v3346 = vrot.slane %v3141, 1
      %v3347 = vsel %vm1111, %v3344, %v3346
      %v3348 = vrot.slane %v3142, 1
      %v3349 = vsel %vm1111, %v3346, %v3348
      %v3350 = vrot.slane %v3143, 1
      %v3351 = vrot.slane %v3144, 1
      %v3352 = vsel %vm1111, %v3350, %v3351
      %v3353 = vrot.slane %v3145, 1
      %v3354 = vsel %vm1111, %v3351, %v3353
      %v3355 = vrot.slane %v3146, 1
      %v3356 = vsel %vm1111, %v3353, %v3355
      %v3357 = vrot.slane %v3147, 1
      %v3358 = vrot.slane %v3148, 1
      %v3359 = vsel %vm1111, %v3357, %v3358
      %v3360 = vrot.slane %v3149, 1
      %v3361 = vsel %vm1111, %v3358, %v3360
      %v3362 = vrot.slane %v3150, 1
      %v3363 = vsel %vm1111, %v3360, %v3362
      %v3364 = vrot.slane %v3151, 1
      %v3365 = vrot.slane %v3152, 1
      %v3366 = vsel %vm1111, %v3364, %v3365
      %v3367 = vrot.slane %v3153, 1
      %v3368 = vsel %vm1111, %v3365, %v3367
      %v3369 = vrot.slane %v3154, 1
      %v3370 = vsel %vm1111, %v3367, %v3369
      %v3371 = vrot.slane %v3155, 1
      %v3372 = vrot.slane %v3156, 1
      %v3373 = vsel %vm1111, %v3371, %v3372
      %v3374 = vrot.slane %v3157, 1
      %v3375 = vsel %vm1111, %v3372, %v3374
      %v3376 = vrot.slane %v3158, 1
      %v3377 = vsel %vm1111, %v3374, %v3376
      %v3378 = vrot.slane %v3159, 1
      %v3379 = vrot.slane %v3160, 1
      %v3380 = vsel %vm1111, %v3378, %v3379
      %v3381 = vrot.slane %v3161, 1
      %v3382 = vsel %vm1111, %v3379, %v3381
      %v3383 = vrot.slane %v3162, 1
      %v3384 = vsel %vm1111, %v3381, %v3383
      %v3385 = vrot.slane %v3163, 1
      %v3386 = vrot.slane %v3164, 1
      %v3387 = vsel %vm1111, %v3385, %v3386
      %v3388 = vrot.slane %v3165, 1
      %v3389 = vsel %vm1111, %v3386, %v3388
      %v3390 = vrot.slane %v3166, 1
      %v3391 = vsel %vm1111, %v3388, %v3390
      %v3392 = vrot.slane %v3167, 1
      %v3393 = vrot.slane %v3168, 1
      %v3394 = vsel %vm1111, %v3392, %v3393
      %v3395 = vrot.slane %v3169, 1
      %v3396 = vsel %vm1111, %v3393, %v3395
      %v3397 = vrot.slane %v3170, 1
      %v3398 = vsel %vm1111, %v3395, %v3397
      %v3399 = vrot.slane %v3171, 1
      %v3400 = vrot.slane %v3172, 1
      %v3401 = vsel %vm1111, %v3399, %v3400
      %v3402 = vrot.slane %v3173, 1
      %v3403 = vsel %vm1111, %v3400, %v3402
      %v3404 = vrot.slane %v3174, 1
      %v3405 = vsel %vm1111, %v3402, %v3404
      %v3406 = vrot.slane %v3175, 1
      %v3407 = vrot.slane %v3176, 1
      %v3408 = vsel %vm1111, %v3406, %v3407
      %v3409 = vrot.slane %v3177, 1
      %v3410 = vsel %vm1111, %v3407, %v3409
      %v3411 = vrot.slane %v3178, 1
      %v3412 = vsel %vm1111, %v3409, %v3411
      %v3413 = vrot.slane %v3179, 1
      %v3414 = vrot.slane %v3180, 1
      %v3415 = vsel %vm1111, %v3413, %v3414
      %v3416 = vrot.slane %v3181, 1
      %v3417 = vsel %vm1111, %v3414, %v3416
      %v3418 = vrot.slane %v3182, 1
      %v3419 = vsel %vm1111, %v3416, %v3418
      %v3420 = vrot.slane %v3183, 1
      %v3421 = vrot.slane %v3184, 1
      %v3422 = vsel %vm1111, %v3420, %v3421
      %v3423 = vrot.slane %v3185, 1
      %v3424 = vsel %vm1111, %v3421, %v3423
      %v3425 = vrot.slane %v3186, 1
      %v3426 = vsel %vm1111, %v3423, %v3425
      %v3427 = vrot.slane %v3187, 1
      %v3428 = vrot.slane %v3188, 1
      %v3429 = vsel %vm1111, %v3427, %v3428
      %v3430 = vrot.slane %v3189, 1
      %v3431 = vsel %vm1111, %v3428, %v3430
      %v3432 = vrot.slane %v3190, 1
      %v3433 = vsel %vm1111, %v3430, %v3432
      %v3434 = vrot.slane %v3191, 1
      %v3435 = vrot.slane %v3192, 1
      %v3436 = vsel %vm1111, %v3434, %v3435
      %v3437 = vrot.slane %v3193, 1
      %v3438 = vsel %vm1111, %v3435, %v3437
      %v3439 = vrot.slane %v3194, 1
      %v3440 = vsel %vm1111, %v3437, %v3439
      %v3441 = vrot.slane %v3195, 1
      %v3442 = vrot.slane %v3196, 1
      %v3443 = vsel %vm1111, %v3441, %v3442
      %v3444 = vrot.slane %v3197, 1
      %v3445 = vsel %vm1111, %v3442, %v3444
      %v3446 = vrot.slane %v3198, 1
      %v3447 = vsel %vm1111, %v3444, %v3446
      %v3448 = vrot.slane %v3199, 1
      %v3449 = vrot.slane %v3200, 1
      %v3450 = vsel %vm1111, %v3448, %v3449
      %v3451 = vrot.slane %v3201, 1
      %v3452 = vsel %vm1111, %v3449, %v3451
      %v3453 = vrot.slane %v3202, 1
      %v3454 = vsel %vm1111, %v3451, %v3453
      %v3455 = vrot.slane %v3203, 1
      %v3456 = vrot.slane %v3204, 1
      %v3457 = vsel %vm1111, %v3455, %v3456
      %v3458 = vrot.slane %v3205, 1
      %v3459 = vsel %vm1111, %v3456, %v3458
      %v3460 = vrot.slane %v3206, 1
      %v3461 = vsel %vm1111, %v3458, %v3460
      %v3462 = vrot.slane %v3207, 1
      %v3463 = vrot.slane %v3208, 1
      %v3464 = vsel %vm1111, %v3462, %v3463
      %v3465 = vrot.slane %v3209, 1
      %v3466 = vsel %vm1111, %v3463, %v3465
      %v3467 = vrot.slane %v3210, 1
      %v3468 = vsel %vm1111, %v3465, %v3467
      %v3469 = vrot.slane %v3211, 1
      %v3470 = vrot.slane %v3212, 1
      %v3471 = vsel %vm1111, %v3469, %v3470
      %v3472 = vrot.slane %v3213, 1
      %v3473 = vsel %vm1111, %v3470, %v3472
      %v3474 = vrot.slane %v3214, 1
      %v3475 = vsel %vm1111, %v3472, %v3474
      %v3476 = vrot.slane %v3215, 1
      %v3477 = vrot.slane %v3216, 1
      %v3478 = vsel %vm1111, %v3476, %v3477
      %v3479 = vrot.slane %v3217, 1
      %v3480 = vsel %vm1111, %v3477, %v3479
      %v3481 = vrot.slane %v3218, 1
      %v3482 = vsel %vm1111, %v3479, %v3481
      %v3555 = vadd.f32 %v3042, %v3317
      %v3556 = vadd.f32 %v3043, %v3319
      %v3557 = vadd.f32 %v3044, %v3321
      %v3558 = vadd.f32 %v3045, %v3324
      %v3559 = vadd.f32 %v3046, %v3326
      %v3560 = vadd.f32 %v3047, %v3328
      %v3561 = vadd.f32 %v3048, %v3331
      %v3562 = vadd.f32 %v3049, %v3333
      %v3563 = vadd.f32 %v3050, %v3335
      %v3564 = vadd.f32 %v3051, %v3338
      %v3565 = vadd.f32 %v3052, %v3340
      %v3566 = vadd.f32 %v3053, %v3342
      %v3567 = vadd.f32 %v3054, %v3345
      %v3568 = vadd.f32 %v3055, %v3347
      %v3569 = vadd.f32 %v3056, %v3349
      %v3570 = vadd.f32 %v3057, %v3352
      %v3571 = vadd.f32 %v3058, %v3354
      %v3572 = vadd.f32 %v3059, %v3356
      %v3573 = vadd.f32 %v3060, %v3359
      %v3574 = vadd.f32 %v3061, %v3361
      %v3575 = vadd.f32 %v3062, %v3363
      %v3576 = vadd.f32 %v3063, %v3366
      %v3577 = vadd.f32 %v3064, %v3368
      %v3578 = vadd.f32 %v3065, %v3370
      %v3579 = vadd.f32 %v3066, %v3373
      %v3580 = vadd.f32 %v3067, %v3375
      %v3581 = vadd.f32 %v3068, %v3377
      %v3582 = vadd.f32 %v3069, %v3380
      %v3583 = vadd.f32 %v3070, %v3382
      %v3584 = vadd.f32 %v3071, %v3384
      %v3585 = vadd.f32 %v3072, %v3387
      %v3586 = vadd.f32 %v3073, %v3389
      %v3587 = vadd.f32 %v3074, %v3391
      %v3588 = vadd.f32 %v3075, %v3394
      %v3589 = vadd.f32 %v3076, %v3396
      %v3590 = vadd.f32 %v3077, %v3398
      %v3591 = vadd.f32 %v3078, %v3401
      %v3592 = vadd.f32 %v3079, %v3403
      %v3593 = vadd.f32 %v3080, %v3405
      %v3594 = vadd.f32 %v3081, %v3408
      %v3595 = vadd.f32 %v3082, %v3410
      %v3596 = vadd.f32 %v3083, %v3412
      %v3597 = vadd.f32 %v3084, %v3415
      %v3598 = vadd.f32 %v3085, %v3417
      %v3599 = vadd.f32 %v3086, %v3419
      %v3600 = vadd.f32 %v3087, %v3422
      %v3601 = vadd.f32 %v3088, %v3424
      %v3602 = vadd.f32 %v3089, %v3426
      %v3603 = vadd.f32 %v3090, %v3429
      %v3604 = vadd.f32 %v3091, %v3431
      %v3605 = vadd.f32 %v3092, %v3433
      %v3606 = vadd.f32 %v3093, %v3436
      %v3607 = vadd.f32 %v3094, %v3438
      %v3608 = vadd.f32 %v3095, %v3440
      %v3609 = vadd.f32 %v3096, %v3443
      %v3610 = vadd.f32 %v3097, %v3445
      %v3611 = vadd.f32 %v3098, %v3447
      %v3612 = vadd.f32 %v3099, %v3450
      %v3613 = vadd.f32 %v3100, %v3452
      %v3614 = vadd.f32 %v3101, %v3454
      %v3615 = vadd.f32 %v3102, %v3457
      %v3616 = vadd.f32 %v3103, %v3459
      %v3617 = vadd.f32 %v3104, %v3461
      %v3618 = vadd.f32 %v3105, %v3464
      %v3619 = vadd.f32 %v3106, %v3466
      %v3620 = vadd.f32 %v3107, %v3468
      %v3621 = vadd.f32 %v3108, %v3471
      %v3622 = vadd.f32 %v3109, %v3473
      %v3623 = vadd.f32 %v3110, %v3475
      %v3624 = vadd.f32 %v3111, %v3478
      %v3625 = vadd.f32 %v3112, %v3480
      %v3626 = vadd.f32 %v3113, %v3482
      %v3627 = vlaneseq
      %v3628 = vshrl.u32 %v3627, 7
      %v3629 = vsub.s32 7, %v3628
      %v3630 = vrot.slane %v283, %v3629
      %v3631 = vmul.f32 %v305, %v3630
      %v3632 = vmul.f32 %v310, %v3630
      %v3633 = vmul.f32 %v315, %v3630
      %v3634 = vmul.f32 %v803, %v3630
      %v3635 = vmul.f32 %v320, %v3630
      %v3636 = vmul.f32 %v325, %v3630
      %v3637 = vmul.f32 %v330, %v3630
      %v3638 = vmul.f32 %v808, %v3630
      %v3639 = vmul.f32 %v335, %v3630
      %v3640 = vmul.f32 %v340, %v3630
      %v3641 = vmul.f32 %v345, %v3630
      %v3642 = vmul.f32 %v813, %v3630
      %v3643 = vmul.f32 %v350, %v3630
      %v3644 = vmul.f32 %v355, %v3630
      %v3645 = vmul.f32 %v360, %v3630
      %v3646 = vmul.f32 %v818, %v3630
      %v3647 = vmul.f32 %v365, %v3630
      %v3648 = vmul.f32 %v370, %v3630
      %v3649 = vmul.f32 %v375, %v3630
      %v3650 = vmul.f32 %v823, %v3630
      %v3651 = vmul.f32 %v380, %v3630
      %v3652 = vmul.f32 %v385, %v3630
      %v3653 = vmul.f32 %v390, %v3630
      %v3654 = vmul.f32 %v828, %v3630
      %v3655 = vmul.f32 %v395, %v3630
      %v3656 = vmul.f32 %v400, %v3630
      %v3657 = vmul.f32 %v405, %v3630
      %v3658 = vmul.f32 %v833, %v3630
      %v3659 = vmul.f32 %v410, %v3630
      %v3660 = vmul.f32 %v415, %v3630
      %v3661 = vmul.f32 %v420, %v3630
      %v3662 = vmul.f32 %v838, %v3630
      %v3663 = vmul.f32 %v425, %v3630
      %v3664 = vmul.f32 %v430, %v3630
      %v3665 = vmul.f32 %v435, %v3630
      %v3666 = vmul.f32 %v843, %v3630
      %v3667 = vmul.f32 %v440, %v3630
      %v3668 = vmul.f32 %v445, %v3630
      %v3669 = vmul.f32 %v450, %v3630
      %v3670 = vmul.f32 %v848, %v3630
      %v3671 = vmul.f32 %v455, %v3630
      %v3672 = vmul.f32 %v460, %v3630
      %v3673 = vmul.f32 %v465, %v3630
      %v3674 = vmul.f32 %v853, %v3630
      %v3675 = vmul.f32 %v470, %v3630
      %v3676 = vmul.f32 %v475, %v3630
      %v3677 = vmul.f32 %v480, %v3630
      %v3678 = vmul.f32 %v858, %v3630
      %v3679 = vmul.f32 %v485, %v3630
      %v3680 = vmul.f32 %v490, %v3630
      %v3681 = vmul.f32 %v495, %v3630
      %v3682 = vmul.f32 %v863, %v3630
      %v3683 = vmul.f32 %v500, %v3630
      %v3684 = vmul.f32 %v505, %v3630
      %v3685 = vmul.f32 %v510, %v3630
      %v3686 = vmul.f32 %v868, %v3630
      %v3687 = vmul.f32 %v515, %v3630
      %v3688 = vmul.f32 %v520, %v3630
      %v3689 = vmul.f32 %v525, %v3630
      %v3690 = vmul.f32 %v873, %v3630
      %v3691 = vmul.f32 %v530, %v3630
      %v3692 = vmul.f32 %v535, %v3630
      %v3693 = vmul.f32 %v540, %v3630
      %v3694 = vmul.f32 %v878, %v3630
      %v3695 = vmul.f32 %v545, %v3630
      %v3696 = vmul.f32 %v550, %v3630
      %v3697 = vmul.f32 %v555, %v3630
      %v3698 = vmul.f32 %v883, %v3630
      %v3699 = vmul.f32 %v560, %v3630
      %v3700 = vmul.f32 %v565, %v3630
      %v3701 = vmul.f32 %v570, %v3630
      %v3702 = vmul.f32 %v888, %v3630
      %v3703 = vmul.f32 %v575, %v3630
      %v3704 = vmul.f32 %v580, %v3630
      %v3705 = vmul.f32 %v585, %v3630
      %v3706 = vmul.f32 %v893, %v3630
      %v3707 = vmul.f32 %v590, %v3630
      %v3708 = vmul.f32 %v595, %v3630
      %v3709 = vmul.f32 %v600, %v3630
      %v3710 = vmul.f32 %v898, %v3630
      %v3711 = vmul.f32 %v605, %v3630
      %v3712 = vmul.f32 %v610, %v3630
      %v3713 = vmul.f32 %v615, %v3630
      %v3714 = vmul.f32 %v903, %v3630
      %v3715 = vmul.f32 %v620, %v3630
      %v3716 = vmul.f32 %v625, %v3630
      %v3717 = vmul.f32 %v630, %v3630
      %v3718 = vmul.f32 %v908, %v3630
      %v3719 = vmul.f32 %v635, %v3630
      %v3720 = vmul.f32 %v640, %v3630
      %v3721 = vmul.f32 %v645, %v3630
      %v3722 = vmul.f32 %v913, %v3630
      %v3723 = vmul.f32 %v2954, %v3630
      %v3724 = vmul.f32 %v2959, %v3630
      %v3725 = vmul.f32 %v2964, %v3630
      %v3726 = vmul.f32 %v3117, %v3630
      %v3823 = vrot.slane %v3631, 2
      %v3824 = vrot.slane %v3632, 2
      %v3825 = vsel %vm1620, %v3823, %v3824
      %v3826 = vrot.slane %v3633, 2
      %v3827 = vsel %vm1620, %v3824, %v3826
      %v3828 = vrot.slane %v3634, 2
      %v3829 = vsel %vm1620, %v3826, %v3828
      %v3830 = vrot.slane %v3635, 2
      %v3831 = vrot.slane %v3636, 2
      %v3832 = vsel %vm1620, %v3830, %v3831
      %v3833 = vrot.slane %v3637, 2
      %v3834 = vsel %vm1620, %v3831, %v3833
      %v3835 = vrot.slane %v3638, 2
      %v3836 = vsel %vm1620, %v3833, %v3835
      %v3837 = vrot.slane %v3639, 2
      %v3838 = vrot.slane %v3640, 2
      %v3839 = vsel %vm1620, %v3837, %v3838
      %v3840 = vrot.slane %v3641, 2
      %v3841 = vsel %vm1620, %v3838, %v3840
      %v3842 = vrot.slane %v3642, 2
      %v3843 = vsel %vm1620, %v3840, %v3842
      %v3844 = vrot.slane %v3643, 2
      %v3845 = vrot.slane %v3644, 2
      %v3846 = vsel %vm1620, %v3844, %v3845
      %v3847 = vrot.slane %v3645, 2
      %v3848 = vsel %vm1620, %v3845, %v3847
      %v3849 = vrot.slane %v3646, 2
      %v3850 = vsel %vm1620, %v3847, %v3849
      %v3851 = vrot.slane %v3647, 2
      %v3852 = vrot.slane %v3648, 2
      %v3853 = vsel %vm1620, %v3851, %v3852
      %v3854 = vrot.slane %v3649, 2
      %v3855 = vsel %vm1620, %v3852, %v3854
      %v3856 = vrot.slane %v3650, 2
      %v3857 = vsel %vm1620, %v3854, %v3856
      %v3858 = vrot.slane %v3651, 2
      %v3859 = vrot.slane %v3652, 2
      %v3860 = vsel %vm1620, %v3858, %v3859
      %v3861 = vrot.slane %v3653, 2
      %v3862 = vsel %vm1620, %v3859, %v3861
      %v3863 = vrot.slane %v3654, 2
      %v3864 = vsel %vm1620, %v3861, %v3863
      %v3865 = vrot.slane %v3655, 2
      %v3866 = vrot.slane %v3656, 2
      %v3867 = vsel %vm1620, %v3865, %v3866
      %v3868 = vrot.slane %v3657, 2
      %v3869 = vsel %vm1620, %v3866, %v3868
      %v3870 = vrot.slane %v3658, 2
      %v3871 = vsel %vm1620, %v3868, %v3870
      %v3872 = vrot.slane %v3659, 2
      %v3873 = vrot.slane %v3660, 2
      %v3874 = vsel %vm1620, %v3872, %v3873
      %v3875 = vrot.slane %v3661, 2
      %v3876 = vsel %vm1620, %v3873, %v3875
      %v3877 = vrot.slane %v3662, 2
      %v3878 = vsel %vm1620, %v3875, %v3877
      %v3879 = vrot.slane %v3663, 2
      %v3880 = vrot.slane %v3664, 2
      %v3881 = vsel %vm1620, %v3879, %v3880
      %v3882 = vrot.slane %v3665, 2
      %v3883 = vsel %vm1620, %v3880, %v3882
      %v3884 = vrot.slane %v3666, 2
      %v3885 = vsel %vm1620, %v3882, %v3884
      %v3886 = vrot.slane %v3667, 2
      %v3887 = vrot.slane %v3668, 2
      %v3888 = vsel %vm1620, %v3886, %v3887
      %v3889 = vrot.slane %v3669, 2
      %v3890 = vsel %vm1620, %v3887, %v3889
      %v3891 = vrot.slane %v3670, 2
      %v3892 = vsel %vm1620, %v3889, %v3891
      %v3893 = vrot.slane %v3671, 2
      %v3894 = vrot.slane %v3672, 2
      %v3895 = vsel %vm1620, %v3893, %v3894
      %v3896 = vrot.slane %v3673, 2
      %v3897 = vsel %vm1620, %v3894, %v3896
      %v3898 = vrot.slane %v3674, 2
      %v3899 = vsel %vm1620, %v3896, %v3898
      %v3900 = vrot.slane %v3675, 2
      %v3901 = vrot.slane %v3676, 2
      %v3902 = vsel %vm1620, %v3900, %v3901
      %v3903 = vrot.slane %v3677, 2
      %v3904 = vsel %vm1620, %v3901, %v3903
      %v3905 = vrot.slane %v3678, 2
      %v3906 = vsel %vm1620, %v3903, %v3905
      %v3907 = vrot.slane %v3679, 2
      %v3908 = vrot.slane %v3680, 2
      %v3909 = vsel %vm1620, %v3907, %v3908
      %v3910 = vrot.slane %v3681, 2
      %v3911 = vsel %vm1620, %v3908, %v3910
      %v3912 = vrot.slane %v3682, 2
      %v3913 = vsel %vm1620, %v3910, %v3912
      %v3914 = vrot.slane %v3683, 2
      %v3915 = vrot.slane %v3684, 2
      %v3916 = vsel %vm1620, %v3914, %v3915
      %v3917 = vrot.slane %v3685, 2
      %v3918 = vsel %vm1620, %v3915, %v3917
      %v3919 = vrot.slane %v3686, 2
      %v3920 = vsel %vm1620, %v3917, %v3919
      %v3921 = vrot.slane %v3687, 2
      %v3922 = vrot.slane %v3688, 2
      %v3923 = vsel %vm1620, %v3921, %v3922
      %v3924 = vrot.slane %v3689, 2
      %v3925 = vsel %vm1620, %v3922, %v3924
      %v3926 = vrot.slane %v3690, 2
      %v3927 = vsel %vm1620, %v3924, %v3926
      %v3928 = vrot.slane %v3691, 2
      %v3929 = vrot.slane %v3692, 2
      %v3930 = vsel %vm1620, %v3928, %v3929
      %v3931 = vrot.slane %v3693, 2
      %v3932 = vsel %vm1620, %v3929, %v3931
      %v3933 = vrot.slane %v3694, 2
      %v3934 = vsel %vm1620, %v3931, %v3933
      %v3935 = vrot.slane %v3695, 2
      %v3936 = vrot.slane %v3696, 2
      %v3937 = vsel %vm1620, %v3935, %v3936
      %v3938 = vrot.slane %v3697, 2
      %v3939 = vsel %vm1620, %v3936, %v3938
      %v3940 = vrot.slane %v3698, 2
      %v3941 = vsel %vm1620, %v3938, %v3940
      %v3942 = vrot.slane %v3699, 2
      %v3943 = vrot.slane %v3700, 2
      %v3944 = vsel %vm1620, %v3942, %v3943
      %v3945 = vrot.slane %v3701, 2
      %v3946 = vsel %vm1620, %v3943, %v3945
      %v3947 = vrot.slane %v3702, 2
      %v3948 = vsel %vm1620, %v3945, %v3947
      %v3949 = vrot.slane %v3703, 2
      %v3950 = vrot.slane %v3704, 2
      %v3951 = vsel %vm1620, %v3949, %v3950
      %v3952 = vrot.slane %v3705, 2
      %v3953 = vsel %vm1620, %v3950, %v3952
      %v3954 = vrot.slane %v3706, 2
      %v3955 = vsel %vm1620, %v3952, %v3954
      %v3956 = vrot.slane %v3707, 2
      %v3957 = vrot.slane %v3708, 2
      %v3958 = vsel %vm1620, %v3956, %v3957
      %v3959 = vrot.slane %v3709, 2
      %v3960 = vsel %vm1620, %v3957, %v3959
      %v3961 = vrot.slane %v3710, 2
      %v3962 = vsel %vm1620, %v3959, %v3961
      %v3963 = vrot.slane %v3711, 2
      %v3964 = vrot.slane %v3712, 2
      %v3965 = vsel %vm1620, %v3963, %v3964
      %v3966 = vrot.slane %v3713, 2
      %v3967 = vsel %vm1620, %v3964, %v3966
      %v3968 = vrot.slane %v3714, 2
      %v3969 = vsel %vm1620, %v3966, %v3968
      %v3970 = vrot.slane %v3715, 2
      %v3971 = vrot.slane %v3716, 2
      %v3972 = vsel %vm1620, %v3970, %v3971
      %v3973 = vrot.slane %v3717, 2
      %v3974 = vsel %vm1620, %v3971, %v3973
      %v3975 = vrot.slane %v3718, 2
      %v3976 = vsel %vm1620, %v3973, %v3975
      %v3977 = vrot.slane %v3719, 2
      %v3978 = vrot.slane %v3720, 2
      %v3979 = vsel %vm1620, %v3977, %v3978
      %v3980 = vrot.slane %v3721, 2
      %v3981 = vsel %vm1620, %v3978, %v3980
      %v3982 = vrot.slane %v3722, 2
      %v3983 = vsel %vm1620, %v3980, %v3982
      %v3984 = vrot.slane %v3723, 2
      %v3985 = vrot.slane %v3724, 2
      %v3986 = vsel %vm1620, %v3984, %v3985
      %v3987 = vrot.slane %v3725, 2
      %v3988 = vsel %vm1620, %v3985, %v3987
      %v3989 = vrot.slane %v3726, 2
      %v3990 = vsel %vm1620, %v3987, %v3989
      %v4063 = vadd.f32 %v3555, %v3825
      %v4064 = vadd.f32 %v3556, %v3827
      %v4065 = vadd.f32 %v3557, %v3829
      %v4066 = vadd.f32 %v3558, %v3832
      %v4067 = vadd.f32 %v3559, %v3834
      %v4068 = vadd.f32 %v3560, %v3836
      %v4069 = vadd.f32 %v3561, %v3839
      %v4070 = vadd.f32 %v3562, %v3841
      %v4071 = vadd.f32 %v3563, %v3843
      %v4072 = vadd.f32 %v3564, %v3846
      %v4073 = vadd.f32 %v3565, %v3848
      %v4074 = vadd.f32 %v3566, %v3850
      %v4075 = vadd.f32 %v3567, %v3853
      %v4076 = vadd.f32 %v3568, %v3855
      %v4077 = vadd.f32 %v3569, %v3857
      %v4078 = vadd.f32 %v3570, %v3860
      %v4079 = vadd.f32 %v3571, %v3862
      %v4080 = vadd.f32 %v3572, %v3864
      %v4081 = vadd.f32 %v3573, %v3867
      %v4082 = vadd.f32 %v3574, %v3869
      %v4083 = vadd.f32 %v3575, %v3871
      %v4084 = vadd.f32 %v3576, %v3874
      %v4085 = vadd.f32 %v3577, %v3876
      %v4086 = vadd.f32 %v3578, %v3878
      %v4087 = vadd.f32 %v3579, %v3881
      %v4088 = vadd.f32 %v3580, %v3883
      %v4089 = vadd.f32 %v3581, %v3885
      %v4090 = vadd.f32 %v3582, %v3888
      %v4091 = vadd.f32 %v3583, %v3890
      %v4092 = vadd.f32 %v3584, %v3892
      %v4093 = vadd.f32 %v3585, %v3895
      %v4094 = vadd.f32 %v3586, %v3897
      %v4095 = vadd.f32 %v3587, %v3899
      %v4096 = vadd.f32 %v3588, %v3902
      %v4097 = vadd.f32 %v3589, %v3904
      %v4098 = vadd.f32 %v3590, %v3906
      %v4099 = vadd.f32 %v3591, %v3909
      %v4100 = vadd.f32 %v3592, %v3911
      %v4101 = vadd.f32 %v3593, %v3913
      %v4102 = vadd.f32 %v3594, %v3916
      %v4103 = vadd.f32 %v3595, %v3918
      %v4104 = vadd.f32 %v3596, %v3920
      %v4105 = vadd.f32 %v3597, %v3923
      %v4106 = vadd.f32 %v3598, %v3925
      %v4107 = vadd.f32 %v3599, %v3927
      %v4108 = vadd.f32 %v3600, %v3930
      %v4109 = vadd.f32 %v3601, %v3932
      %v4110 = vadd.f32 %v3602, %v3934
      %v4111 = vadd.f32 %v3603, %v3937
      %v4112 = vadd.f32 %v3604, %v3939
      %v4113 = vadd.f32 %v3605, %v3941
      %v4114 = vadd.f32 %v3606, %v3944
      %v4115 = vadd.f32 %v3607, %v3946
      %v4116 = vadd.f32 %v3608, %v3948
      %v4117 = vadd.f32 %v3609, %v3951
      %v4118 = vadd.f32 %v3610, %v3953
      %v4119 = vadd.f32 %v3611, %v3955
      %v4120 = vadd.f32 %v3612, %v3958
      %v4121 = vadd.f32 %v3613, %v3960
      %v4122 = vadd.f32 %v3614, %v3962
      %v4123 = vadd.f32 %v3615, %v3965
      %v4124 = vadd.f32 %v3616, %v3967
      %v4125 = vadd.f32 %v3617, %v3969
      %v4126 = vadd.f32 %v3618, %v3972
      %v4127 = vadd.f32 %v3619, %v3974
      %v4128 = vadd.f32 %v3620, %v3976
      %v4129 = vadd.f32 %v3621, %v3979
      %v4130 = vadd.f32 %v3622, %v3981
      %v4131 = vadd.f32 %v3623, %v3983
      %v4132 = vadd.f32 %v3624, %v3986
      %v4133 = vadd.f32 %v3625, %v3988
      %v4134 = vadd.f32 %v3626, %v3990
      %v4135 = vlaneseq
      %v4136 = vshrl.u32 %v4135, 7
      %v4137 = vsub.s32 0, %v4136
      %v4138 = vrot.slane %v284, %v4137
      %v4139 = vmul.f32 %v305, %v4138
      %v4140 = vmul.f32 %v310, %v4138
      %v4141 = vmul.f32 %v315, %v4138
      %v4142 = vmul.f32 %v803, %v4138
      %v4143 = vmul.f32 %v320, %v4138
      %v4144 = vmul.f32 %v325, %v4138
      %v4145 = vmul.f32 %v330, %v4138
      %v4146 = vmul.f32 %v808, %v4138
      %v4147 = vmul.f32 %v335, %v4138
      %v4148 = vmul.f32 %v340, %v4138
      %v4149 = vmul.f32 %v345, %v4138
      %v4150 = vmul.f32 %v813, %v4138
      %v4151 = vmul.f32 %v350, %v4138
      %v4152 = vmul.f32 %v355, %v4138
      %v4153 = vmul.f32 %v360, %v4138
      %v4154 = vmul.f32 %v818, %v4138
      %v4155 = vmul.f32 %v365, %v4138
      %v4156 = vmul.f32 %v370, %v4138
      %v4157 = vmul.f32 %v375, %v4138
      %v4158 = vmul.f32 %v823, %v4138
      %v4159 = vmul.f32 %v380, %v4138
      %v4160 = vmul.f32 %v385, %v4138
      %v4161 = vmul.f32 %v390, %v4138
      %v4162 = vmul.f32 %v828, %v4138
      %v4163 = vmul.f32 %v395, %v4138
      %v4164 = vmul.f32 %v400, %v4138
      %v4165 = vmul.f32 %v405, %v4138
      %v4166 = vmul.f32 %v833, %v4138
      %v4167 = vmul.f32 %v410, %v4138
      %v4168 = vmul.f32 %v415, %v4138
      %v4169 = vmul.f32 %v420, %v4138
      %v4170 = vmul.f32 %v838, %v4138
      %v4171 = vmul.f32 %v425, %v4138
      %v4172 = vmul.f32 %v430, %v4138
      %v4173 = vmul.f32 %v435, %v4138
      %v4174 = vmul.f32 %v843, %v4138
      %v4175 = vmul.f32 %v440, %v4138
      %v4176 = vmul.f32 %v445, %v4138
      %v4177 = vmul.f32 %v450, %v4138
      %v4178 = vmul.f32 %v848, %v4138
      %v4179 = vmul.f32 %v455, %v4138
      %v4180 = vmul.f32 %v460, %v4138
      %v4181 = vmul.f32 %v465, %v4138
      %v4182 = vmul.f32 %v853, %v4138
      %v4183 = vmul.f32 %v470, %v4138
      %v4184 = vmul.f32 %v475, %v4138
      %v4185 = vmul.f32 %v480, %v4138
      %v4186 = vmul.f32 %v858, %v4138
      %v4187 = vmul.f32 %v485, %v4138
      %v4188 = vmul.f32 %v490, %v4138
      %v4189 = vmul.f32 %v495, %v4138
      %v4190 = vmul.f32 %v863, %v4138
      %v4191 = vmul.f32 %v500, %v4138
      %v4192 = vmul.f32 %v505, %v4138
      %v4193 = vmul.f32 %v510, %v4138
      %v4194 = vmul.f32 %v868, %v4138
      %v4195 = vmul.f32 %v515, %v4138
      %v4196 = vmul.f32 %v520, %v4138
      %v4197 = vmul.f32 %v525, %v4138
      %v4198 = vmul.f32 %v873, %v4138
      %v4199 = vmul.f32 %v530, %v4138
      %v4200 = vmul.f32 %v535, %v4138
      %v4201 = vmul.f32 %v540, %v4138
      %v4202 = vmul.f32 %v878, %v4138
      %v4203 = vmul.f32 %v545, %v4138
      %v4204 = vmul.f32 %v550, %v4138
      %v4205 = vmul.f32 %v555, %v4138
      %v4206 = vmul.f32 %v883, %v4138
      %v4207 = vmul.f32 %v560, %v4138
      %v4208 = vmul.f32 %v565, %v4138
      %v4209 = vmul.f32 %v570, %v4138
      %v4210 = vmul.f32 %v888, %v4138
      %v4211 = vmul.f32 %v575, %v4138
      %v4212 = vmul.f32 %v580, %v4138
      %v4213 = vmul.f32 %v585, %v4138
      %v4214 = vmul.f32 %v893, %v4138
      %v4215 = vmul.f32 %v590, %v4138
      %v4216 = vmul.f32 %v595, %v4138
      %v4217 = vmul.f32 %v600, %v4138
      %v4218 = vmul.f32 %v898, %v4138
      %v4219 = vmul.f32 %v605, %v4138
      %v4220 = vmul.f32 %v610, %v4138
      %v4221 = vmul.f32 %v615, %v4138
      %v4222 = vmul.f32 %v903, %v4138
      %v4223 = vmul.f32 %v620, %v4138
      %v4224 = vmul.f32 %v625, %v4138
      %v4225 = vmul.f32 %v630, %v4138
      %v4226 = vmul.f32 %v908, %v4138
      %v4227 = vmul.f32 %v635, %v4138
      %v4228 = vmul.f32 %v640, %v4138
      %v4229 = vmul.f32 %v645, %v4138
      %v4230 = vmul.f32 %v913, %v4138
      %v4231 = vmul.f32 %v2954, %v4138
      %v4232 = vmul.f32 %v2959, %v4138
      %v4233 = vmul.f32 %v2964, %v4138
      %v4234 = vmul.f32 %v3117, %v4138
      %v4331 = vrot.slane %v4139, 3
      %v4332 = vrot.slane %v4140, 3
      %v4333 = vsel %vm2129, %v4331, %v4332
      %v4334 = vrot.slane %v4141, 3
      %v4335 = vsel %vm2129, %v4332, %v4334
      %v4336 = vrot.slane %v4142, 3
      %v4337 = vsel %vm2129, %v4334, %v4336
      %v4338 = vrot.slane %v4143, 3
      %v4339 = vrot.slane %v4144, 3
      %v4340 = vsel %vm2129, %v4338, %v4339
      %v4341 = vrot.slane %v4145, 3
      %v4342 = vsel %vm2129, %v4339, %v4341
      %v4343 = vrot.slane %v4146, 3
      %v4344 = vsel %vm2129, %v4341, %v4343
      %v4345 = vrot.slane %v4147, 3
      %v4346 = vrot.slane %v4148, 3
      %v4347 = vsel %vm2129, %v4345, %v4346
      %v4348 = vrot.slane %v4149, 3
      %v4349 = vsel %vm2129, %v4346, %v4348
      %v4350 = vrot.slane %v4150, 3
      %v4351 = vsel %vm2129, %v4348, %v4350
      %v4352 = vrot.slane %v4151, 3
      %v4353 = vrot.slane %v4152, 3
      %v4354 = vsel %vm2129, %v4352, %v4353
      %v4355 = vrot.slane %v4153, 3
      %v4356 = vsel %vm2129, %v4353, %v4355
      %v4357 = vrot.slane %v4154, 3
      %v4358 = vsel %vm2129, %v4355, %v4357
      %v4359 = vrot.slane %v4155, 3
      %v4360 = vrot.slane %v4156, 3
      %v4361 = vsel %vm2129, %v4359, %v4360
      %v4362 = vrot.slane %v4157, 3
      %v4363 = vsel %vm2129, %v4360, %v4362
      %v4364 = vrot.slane %v4158, 3
      %v4365 = vsel %vm2129, %v4362, %v4364
      %v4366 = vrot.slane %v4159, 3
      %v4367 = vrot.slane %v4160, 3
      %v4368 = vsel %vm2129, %v4366, %v4367
      %v4369 = vrot.slane %v4161, 3
      %v4370 = vsel %vm2129, %v4367, %v4369
      %v4371 = vrot.slane %v4162, 3
      %v4372 = vsel %vm2129, %v4369, %v4371
      %v4373 = vrot.slane %v4163, 3
      %v4374 = vrot.slane %v4164, 3
      %v4375 = vsel %vm2129, %v4373, %v4374
      %v4376 = vrot.slane %v4165, 3
      %v4377 = vsel %vm2129, %v4374, %v4376
      %v4378 = vrot.slane %v4166, 3
      %v4379 = vsel %vm2129, %v4376, %v4378
      %v4380 = vrot.slane %v4167, 3
      %v4381 = vrot.slane %v4168, 3
      %v4382 = vsel %vm2129, %v4380, %v4381
      %v4383 = vrot.slane %v4169, 3
      %v4384 = vsel %vm2129, %v4381, %v4383
      %v4385 = vrot.slane %v4170, 3
      %v4386 = vsel %vm2129, %v4383, %v4385
      %v4387 = vrot.slane %v4171, 3
      %v4388 = vrot.slane %v4172, 3
      %v4389 = vsel %vm2129, %v4387, %v4388
      %v4390 = vrot.slane %v4173, 3
      %v4391 = vsel %vm2129, %v4388, %v4390
      %v4392 = vrot.slane %v4174, 3
      %v4393 = vsel %vm2129, %v4390, %v4392
      %v4394 = vrot.slane %v4175, 3
      %v4395 = vrot.slane %v4176, 3
      %v4396 = vsel %vm2129, %v4394, %v4395
      %v4397 = vrot.slane %v4177, 3
      %v4398 = vsel %vm2129, %v4395, %v4397
      %v4399 = vrot.slane %v4178, 3
      %v4400 = vsel %vm2129, %v4397, %v4399
      %v4401 = vrot.slane %v4179, 3
      %v4402 = vrot.slane %v4180, 3
      %v4403 = vsel %vm2129, %v4401, %v4402
      %v4404 = vrot.slane %v4181, 3
      %v4405 = vsel %vm2129, %v4402, %v4404
      %v4406 = vrot.slane %v4182, 3
      %v4407 = vsel %vm2129, %v4404, %v4406
      %v4408 = vrot.slane %v4183, 3
      %v4409 = vrot.slane %v4184, 3
      %v4410 = vsel %vm2129, %v4408, %v4409
      %v4411 = vrot.slane %v4185, 3
      %v4412 = vsel %vm2129, %v4409, %v4411
      %v4413 = vrot.slane %v4186, 3
      %v4414 = vsel %vm2129, %v4411, %v4413
      %v4415 = vrot.slane %v4187, 3
      %v4416 = vrot.slane %v4188, 3
      %v4417 = vsel %vm2129, %v4415, %v4416
      %v4418 = vrot.slane %v4189, 3
      %v4419 = vsel %vm2129, %v4416, %v4418
      %v4420 = vrot.slane %v4190, 3
      %v4421 = vsel %vm2129, %v4418, %v4420
      %v4422 = vrot.slane %v4191, 3
      %v4423 = vrot.slane %v4192, 3
      %v4424 = vsel %vm2129, %v4422, %v4423
      %v4425 = vrot.slane %v4193, 3
      %v4426 = vsel %vm2129, %v4423, %v4425
      %v4427 = vrot.slane %v4194, 3
      %v4428 = vsel %vm2129, %v4425, %v4427
      %v4429 = vrot.slane %v4195, 3
      %v4430 = vrot.slane %v4196, 3
      %v4431 = vsel %vm2129, %v4429, %v4430
      %v4432 = vrot.slane %v4197, 3
      %v4433 = vsel %vm2129, %v4430, %v4432
      %v4434 = vrot.slane %v4198, 3
      %v4435 = vsel %vm2129, %v4432, %v4434
      %v4436 = vrot.slane %v4199, 3
      %v4437 = vrot.slane %v4200, 3
      %v4438 = vsel %vm2129, %v4436, %v4437
      %v4439 = vrot.slane %v4201, 3
      %v4440 = vsel %vm2129, %v4437, %v4439
      %v4441 = vrot.slane %v4202, 3
      %v4442 = vsel %vm2129, %v4439, %v4441
      %v4443 = vrot.slane %v4203, 3
      %v4444 = vrot.slane %v4204, 3
      %v4445 = vsel %vm2129, %v4443, %v4444
      %v4446 = vrot.slane %v4205, 3
      %v4447 = vsel %vm2129, %v4444, %v4446
      %v4448 = vrot.slane %v4206, 3
      %v4449 = vsel %vm2129, %v4446, %v4448
      %v4450 = vrot.slane %v4207, 3
      %v4451 = vrot.slane %v4208, 3
      %v4452 = vsel %vm2129, %v4450, %v4451
      %v4453 = vrot.slane %v4209, 3
      %v4454 = vsel %vm2129, %v4451, %v4453
      %v4455 = vrot.slane %v4210, 3
      %v4456 = vsel %vm2129, %v4453, %v4455
      %v4457 = vrot.slane %v4211, 3
      %v4458 = vrot.slane %v4212, 3
      %v4459 = vsel %vm2129, %v4457, %v4458
      %v4460 = vrot.slane %v4213, 3
      %v4461 = vsel %vm2129, %v4458, %v4460
      %v4462 = vrot.slane %v4214, 3
      %v4463 = vsel %vm2129, %v4460, %v4462
      %v4464 = vrot.slane %v4215, 3
      %v4465 = vrot.slane %v4216, 3
      %v4466 = vsel %vm2129, %v4464, %v4465
      %v4467 = vrot.slane %v4217, 3
      %v4468 = vsel %vm2129, %v4465, %v4467
      %v4469 = vrot.slane %v4218, 3
      %v4470 = vsel %vm2129, %v4467, %v4469
      %v4471 = vrot.slane %v4219, 3
      %v4472 = vrot.slane %v4220, 3
      %v4473 = vsel %vm2129, %v4471, %v4472
      %v4474 = vrot.slane %v4221, 3
      %v4475 = vsel %vm2129, %v4472, %v4474
      %v4476 = vrot.slane %v4222, 3
      %v4477 = vsel %vm2129, %v4474, %v4476
      %v4478 = vrot.slane %v4223, 3
      %v4479 = vrot.slane %v4224, 3
      %v4480 = vsel %vm2129, %v4478, %v4479
      %v4481 = vrot.slane %v4225, 3
      %v4482 = vsel %vm2129, %v4479, %v4481
      %v4483 = vrot.slane %v4226, 3
      %v4484 = vsel %vm2129, %v4481, %v4483
      %v4485 = vrot.slane %v4227, 3
      %v4486 = vrot.slane %v4228, 3
      %v4487 = vsel %vm2129, %v4485, %v4486
      %v4488 = vrot.slane %v4229, 3
      %v4489 = vsel %vm2129, %v4486, %v4488
      %v4490 = vrot.slane %v4230, 3
      %v4491 = vsel %vm2129, %v4488, %v4490
      %v4492 = vrot.slane %v4231, 3
      %v4493 = vrot.slane %v4232, 3
      %v4494 = vsel %vm2129, %v4492, %v4493
      %v4495 = vrot.slane %v4233, 3
      %v4496 = vsel %vm2129, %v4493, %v4495
      %v4497 = vrot.slane %v4234, 3
      %v4498 = vsel %vm2129, %v4495, %v4497
      %v4571 = vadd.f32 %v4063, %v4333
      %v4572 = vadd.f32 %v4064, %v4335
      %v4573 = vadd.f32 %v4065, %v4337
      %v4574 = vadd.f32 %v4066, %v4340
      %v4575 = vadd.f32 %v4067, %v4342
      %v4576 = vadd.f32 %v4068, %v4344
      %v4577 = vadd.f32 %v4069, %v4347
      %v4578 = vadd.f32 %v4070, %v4349
      %v4579 = vadd.f32 %v4071, %v4351
      %v4580 = vadd.f32 %v4072, %v4354
      %v4581 = vadd.f32 %v4073, %v4356
      %v4582 = vadd.f32 %v4074, %v4358
      %v4583 = vadd.f32 %v4075, %v4361
      %v4584 = vadd.f32 %v4076, %v4363
      %v4585 = vadd.f32 %v4077, %v4365
      %v4586 = vadd.f32 %v4078, %v4368
      %v4587 = vadd.f32 %v4079, %v4370
      %v4588 = vadd.f32 %v4080, %v4372
      %v4589 = vadd.f32 %v4081, %v4375
      %v4590 = vadd.f32 %v4082, %v4377
      %v4591 = vadd.f32 %v4083, %v4379
      %v4592 = vadd.f32 %v4084, %v4382
      %v4593 = vadd.f32 %v4085, %v4384
      %v4594 = vadd.f32 %v4086, %v4386
      %v4595 = vadd.f32 %v4087, %v4389
      %v4596 = vadd.f32 %v4088, %v4391
      %v4597 = vadd.f32 %v4089, %v4393
      %v4598 = vadd.f32 %v4090, %v4396
      %v4599 = vadd.f32 %v4091, %v4398
      %v4600 = vadd.f32 %v4092, %v4400
      %v4601 = vadd.f32 %v4093, %v4403
      %v4602 = vadd.f32 %v4094, %v4405
      %v4603 = vadd.f32 %v4095, %v4407
      %v4604 = vadd.f32 %v4096, %v4410
      %v4605 = vadd.f32 %v4097, %v4412
      %v4606 = vadd.f32 %v4098, %v4414
      %v4607 = vadd.f32 %v4099, %v4417
      %v4608 = vadd.f32 %v4100, %v4419
      %v4609 = vadd.f32 %v4101, %v4421
      %v4610 = vadd.f32 %v4102, %v4424
      %v4611 = vadd.f32 %v4103, %v4426
      %v4612 = vadd.f32 %v4104, %v4428
      %v4613 = vadd.f32 %v4105, %v4431
      %v4614 = vadd.f32 %v4106, %v4433
      %v4615 = vadd.f32 %v4107, %v4435
      %v4616 = vadd.f32 %v4108, %v4438
      %v4617 = vadd.f32 %v4109, %v4440
      %v4618 = vadd.f32 %v4110, %v4442
      %v4619 = vadd.f32 %v4111, %v4445
      %v4620 = vadd.f32 %v4112, %v4447
      %v4621 = vadd.f32 %v4113, %v4449
      %v4622 = vadd.f32 %v4114, %v4452
      %v4623 = vadd.f32 %v4115, %v4454
      %v4624 = vadd.f32 %v4116, %v4456
      %v4625 = vadd.f32 %v4117, %v4459
      %v4626 = vadd.f32 %v4118, %v4461
      %v4627 = vadd.f32 %v4119, %v4463
      %v4628 = vadd.f32 %v4120, %v4466
      %v4629 = vadd.f32 %v4121, %v4468
      %v4630 = vadd.f32 %v4122, %v4470
      %v4631 = vadd.f32 %v4123, %v4473
      %v4632 = vadd.f32 %v4124, %v4475
      %v4633 = vadd.f32 %v4125, %v4477
      %v4634 = vadd.f32 %v4126, %v4480
      %v4635 = vadd.f32 %v4127, %v4482
      %v4636 = vadd.f32 %v4128, %v4484
      %v4637 = vadd.f32 %v4129, %v4487
      %v4638 = vadd.f32 %v4130, %v4489
      %v4639 = vadd.f32 %v4131, %v4491
      %v4640 = vadd.f32 %v4132, %v4494
      %v4641 = vadd.f32 %v4133, %v4496
      %v4642 = vadd.f32 %v4134, %v4498
      %v4643 = vlaneseq
      %v4644 = vshrl.u32 %v4643, 7
      %v4645 = vsub.s32 1, %v4644
      %v4646 = vrot.slane %v284, %v4645
      %v4647 = vmul.f32 %v305, %v4646
      %v4648 = vmul.f32 %v310, %v4646
      %v4649 = vmul.f32 %v315, %v4646
      %v4650 = vmul.f32 %v803, %v4646
      %v4651 = vmul.f32 %v320, %v4646
      %v4652 = vmul.f32 %v325, %v4646
      %v4653 = vmul.f32 %v330, %v4646
      %v4654 = vmul.f32 %v808, %v4646
      %v4655 = vmul.f32 %v335, %v4646
      %v4656 = vmul.f32 %v340, %v4646
      %v4657 = vmul.f32 %v345, %v4646
      %v4658 = vmul.f32 %v813, %v4646
      %v4659 = vmul.f32 %v350, %v4646
      %v4660 = vmul.f32 %v355, %v4646
      %v4661 = vmul.f32 %v360, %v4646
      %v4662 = vmul.f32 %v818, %v4646
      %v4663 = vmul.f32 %v365, %v4646
      %v4664 = vmul.f32 %v370, %v4646
      %v4665 = vmul.f32 %v375, %v4646
      %v4666 = vmul.f32 %v823, %v4646
      %v4667 = vmul.f32 %v380, %v4646
      %v4668 = vmul.f32 %v385, %v4646
      %v4669 = vmul.f32 %v390, %v4646
      %v4670 = vmul.f32 %v828, %v4646
      %v4671 = vmul.f32 %v395, %v4646
      %v4672 = vmul.f32 %v400, %v4646
      %v4673 = vmul.f32 %v405, %v4646
      %v4674 = vmul.f32 %v833, %v4646
      %v4675 = vmul.f32 %v410, %v4646
      %v4676 = vmul.f32 %v415, %v4646
      %v4677 = vmul.f32 %v420, %v4646
      %v4678 = vmul.f32 %v838, %v4646
      %v4679 = vmul.f32 %v425, %v4646
      %v4680 = vmul.f32 %v430, %v4646
      %v4681 = vmul.f32 %v435, %v4646
      %v4682 = vmul.f32 %v843, %v4646
      %v4683 = vmul.f32 %v440, %v4646
      %v4684 = vmul.f32 %v445, %v4646
      %v4685 = vmul.f32 %v450, %v4646
      %v4686 = vmul.f32 %v848, %v4646
      %v4687 = vmul.f32 %v455, %v4646
      %v4688 = vmul.f32 %v460, %v4646
      %v4689 = vmul.f32 %v465, %v4646
      %v4690 = vmul.f32 %v853, %v4646
      %v4691 = vmul.f32 %v470, %v4646
      %v4692 = vmul.f32 %v475, %v4646
      %v4693 = vmul.f32 %v480, %v4646
      %v4694 = vmul.f32 %v858, %v4646
      %v4695 = vmul.f32 %v485, %v4646
      %v4696 = vmul.f32 %v490, %v4646
      %v4697 = vmul.f32 %v495, %v4646
      %v4698 = vmul.f32 %v863, %v4646
      %v4699 = vmul.f32 %v500, %v4646
      %v4700 = vmul.f32 %v505, %v4646
      %v4701 = vmul.f32 %v510, %v4646
      %v4702 = vmul.f32 %v868, %v4646
      %v4703 = vmul.f32 %v515, %v4646
      %v4704 = vmul.f32 %v520, %v4646
      %v4705 = vmul.f32 %v525, %v4646
      %v4706 = vmul.f32 %v873, %v4646
      %v4707 = vmul.f32 %v530, %v4646
      %v4708 = vmul.f32 %v535, %v4646
      %v4709 = vmul.f32 %v540, %v4646
      %v4710 = vmul.f32 %v878, %v4646
      %v4711 = vmul.f32 %v545, %v4646
      %v4712 = vmul.f32 %v550, %v4646
      %v4713 = vmul.f32 %v555, %v4646
      %v4714 = vmul.f32 %v883, %v4646
      %v4715 = vmul.f32 %v560, %v4646
      %v4716 = vmul.f32 %v565, %v4646
      %v4717 = vmul.f32 %v570, %v4646
      %v4718 = vmul.f32 %v888, %v4646
      %v4719 = vmul.f32 %v575, %v4646
      %v4720 = vmul.f32 %v580, %v4646
      %v4721 = vmul.f32 %v585, %v4646
      %v4722 = vmul.f32 %v893, %v4646
      %v4723 = vmul.f32 %v590, %v4646
      %v4724 = vmul.f32 %v595, %v4646
      %v4725 = vmul.f32 %v600, %v4646
      %v4726 = vmul.f32 %v898, %v4646
      %v4727 = vmul.f32 %v605, %v4646
      %v4728 = vmul.f32 %v610, %v4646
      %v4729 = vmul.f32 %v615, %v4646
      %v4730 = vmul.f32 %v903, %v4646
      %v4731 = vmul.f32 %v620, %v4646
      %v4732 = vmul.f32 %v625, %v4646
      %v4733 = vmul.f32 %v630, %v4646
      %v4734 = vmul.f32 %v908, %v4646
      %v4735 = vmul.f32 %v635, %v4646
      %v4736 = vmul.f32 %v640, %v4646
      %v4737 = vmul.f32 %v645, %v4646
      %v4738 = vmul.f32 %v913, %v4646
      %v4739 = vmul.f32 %v2954, %v4646
      %v4740 = vmul.f32 %v2959, %v4646
      %v4741 = vmul.f32 %v2964, %v4646
      %v4742 = vmul.f32 %v3117, %v4646
      %v4839 = vrot.slane %v4647, 4
      %v4840 = vrot.slane %v4648, 4
      %v4841 = vsel %vm2638, %v4839, %v4840
      %v4842 = vrot.slane %v4649, 4
      %v4843 = vsel %vm2638, %v4840, %v4842
      %v4844 = vrot.slane %v4650, 4
      %v4845 = vsel %vm2638, %v4842, %v4844
      %v4846 = vrot.slane %v4651, 4
      %v4847 = vrot.slane %v4652, 4
      %v4848 = vsel %vm2638, %v4846, %v4847
      %v4849 = vrot.slane %v4653, 4
      %v4850 = vsel %vm2638, %v4847, %v4849
      %v4851 = vrot.slane %v4654, 4
      %v4852 = vsel %vm2638, %v4849, %v4851
      %v4853 = vrot.slane %v4655, 4
      %v4854 = vrot.slane %v4656, 4
      %v4855 = vsel %vm2638, %v4853, %v4854
      %v4856 = vrot.slane %v4657, 4
      %v4857 = vsel %vm2638, %v4854, %v4856
      %v4858 = vrot.slane %v4658, 4
      %v4859 = vsel %vm2638, %v4856, %v4858
      %v4860 = vrot.slane %v4659, 4
      %v4861 = vrot.slane %v4660, 4
      %v4862 = vsel %vm2638, %v4860, %v4861
      %v4863 = vrot.slane %v4661, 4
      %v4864 = vsel %vm2638, %v4861, %v4863
      %v4865 = vrot.slane %v4662, 4
      %v4866 = vsel %vm2638, %v4863, %v4865
      %v4867 = vrot.slane %v4663, 4
      %v4868 = vrot.slane %v4664, 4
      %v4869 = vsel %vm2638, %v4867, %v4868
      %v4870 = vrot.slane %v4665, 4
      %v4871 = vsel %vm2638, %v4868, %v4870
      %v4872 = vrot.slane %v4666, 4
      %v4873 = vsel %vm2638, %v4870, %v4872
      %v4874 = vrot.slane %v4667, 4
      %v4875 = vrot.slane %v4668, 4
      %v4876 = vsel %vm2638, %v4874, %v4875
      %v4877 = vrot.slane %v4669, 4
      %v4878 = vsel %vm2638, %v4875, %v4877
      %v4879 = vrot.slane %v4670, 4
      %v4880 = vsel %vm2638, %v4877, %v4879
      %v4881 = vrot.slane %v4671, 4
      %v4882 = vrot.slane %v4672, 4
      %v4883 = vsel %vm2638, %v4881, %v4882
      %v4884 = vrot.slane %v4673, 4
      %v4885 = vsel %vm2638, %v4882, %v4884
      %v4886 = vrot.slane %v4674, 4
      %v4887 = vsel %vm2638, %v4884, %v4886
      %v4888 = vrot.slane %v4675, 4
      %v4889 = vrot.slane %v4676, 4
      %v4890 = vsel %vm2638, %v4888, %v4889
      %v4891 = vrot.slane %v4677, 4
      %v4892 = vsel %vm2638, %v4889, %v4891
      %v4893 = vrot.slane %v4678, 4
      %v4894 = vsel %vm2638, %v4891, %v4893
      %v4895 = vrot.slane %v4679, 4
      %v4896 = vrot.slane %v4680, 4
      %v4897 = vsel %vm2638, %v4895, %v4896
      %v4898 = vrot.slane %v4681, 4
      %v4899 = vsel %vm2638, %v4896, %v4898
      %v4900 = vrot.slane %v4682, 4
      %v4901 = vsel %vm2638, %v4898, %v4900
      %v4902 = vrot.slane %v4683, 4
      %v4903 = vrot.slane %v4684, 4
      %v4904 = vsel %vm2638, %v4902, %v4903
      %v4905 = vrot.slane %v4685, 4
      %v4906 = vsel %vm2638, %v4903, %v4905
      %v4907 = vrot.slane %v4686, 4
      %v4908 = vsel %vm2638, %v4905, %v4907
      %v4909 = vrot.slane %v4687, 4
      %v4910 = vrot.slane %v4688, 4
      %v4911 = vsel %vm2638, %v4909, %v4910
      %v4912 = vrot.slane %v4689, 4
      %v4913 = vsel %vm2638, %v4910, %v4912
      %v4914 = vrot.slane %v4690, 4
      %v4915 = vsel %vm2638, %v4912, %v4914
      %v4916 = vrot.slane %v4691, 4
      %v4917 = vrot.slane %v4692, 4
      %v4918 = vsel %vm2638, %v4916, %v4917
      %v4919 = vrot.slane %v4693, 4
      %v4920 = vsel %vm2638, %v4917, %v4919
      %v4921 = vrot.slane %v4694, 4
      %v4922 = vsel %vm2638, %v4919, %v4921
      %v4923 = vrot.slane %v4695, 4
      %v4924 = vrot.slane %v4696, 4
      %v4925 = vsel %vm2638, %v4923, %v4924
      %v4926 = vrot.slane %v4697, 4
      %v4927 = vsel %vm2638, %v4924, %v4926
      %v4928 = vrot.slane %v4698, 4
      %v4929 = vsel %vm2638, %v4926, %v4928
      %v4930 = vrot.slane %v4699, 4
      %v4931 = vrot.slane %v4700, 4
      %v4932 = vsel %vm2638, %v4930, %v4931
      %v4933 = vrot.slane %v4701, 4
      %v4934 = vsel %vm2638, %v4931, %v4933
      %v4935 = vrot.slane %v4702, 4
      %v4936 = vsel %vm2638, %v4933, %v4935
      %v4937 = vrot.slane %v4703, 4
      %v4938 = vrot.slane %v4704, 4
      %v4939 = vsel %vm2638, %v4937, %v4938
      %v4940 = vrot.slane %v4705, 4
      %v4941 = vsel %vm2638, %v4938, %v4940
      %v4942 = vrot.slane %v4706, 4
      %v4943 = vsel %vm2638, %v4940, %v4942
      %v4944 = vrot.slane %v4707, 4
      %v4945 = vrot.slane %v4708, 4
      %v4946 = vsel %vm2638, %v4944, %v4945
      %v4947 = vrot.slane %v4709, 4
      %v4948 = vsel %vm2638, %v4945, %v4947
      %v4949 = vrot.slane %v4710, 4
      %v4950 = vsel %vm2638, %v4947, %v4949
      %v4951 = vrot.slane %v4711, 4
      %v4952 = vrot.slane %v4712, 4
      %v4953 = vsel %vm2638, %v4951, %v4952
      %v4954 = vrot.slane %v4713, 4
      %v4955 = vsel %vm2638, %v4952, %v4954
      %v4956 = vrot.slane %v4714, 4
      %v4957 = vsel %vm2638, %v4954, %v4956
      %v4958 = vrot.slane %v4715, 4
      %v4959 = vrot.slane %v4716, 4
      %v4960 = vsel %vm2638, %v4958, %v4959
      %v4961 = vrot.slane %v4717, 4
      %v4962 = vsel %vm2638, %v4959, %v4961
      %v4963 = vrot.slane %v4718, 4
      %v4964 = vsel %vm2638, %v4961, %v4963
      %v4965 = vrot.slane %v4719, 4
      %v4966 = vrot.slane %v4720, 4
      %v4967 = vsel %vm2638, %v4965, %v4966
      %v4968 = vrot.slane %v4721, 4
      %v4969 = vsel %vm2638, %v4966, %v4968
      %v4970 = vrot.slane %v4722, 4
      %v4971 = vsel %vm2638, %v4968, %v4970
      %v4972 = vrot.slane %v4723, 4
      %v4973 = vrot.slane %v4724, 4
      %v4974 = vsel %vm2638, %v4972, %v4973
      %v4975 = vrot.slane %v4725, 4
      %v4976 = vsel %vm2638, %v4973, %v4975
      %v4977 = vrot.slane %v4726, 4
      %v4978 = vsel %vm2638, %v4975, %v4977
      %v4979 = vrot.slane %v4727, 4
      %v4980 = vrot.slane %v4728, 4
      %v4981 = vsel %vm2638, %v4979, %v4980
      %v4982 = vrot.slane %v4729, 4
      %v4983 = vsel %vm2638, %v4980, %v4982
      %v4984 = vrot.slane %v4730, 4
      %v4985 = vsel %vm2638, %v4982, %v4984
      %v4986 = vrot.slane %v4731, 4
      %v4987 = vrot.slane %v4732, 4
      %v4988 = vsel %vm2638, %v4986, %v4987
      %v4989 = vrot.slane %v4733, 4
      %v4990 = vsel %vm2638, %v4987, %v4989
      %v4991 = vrot.slane %v4734, 4
      %v4992 = vsel %vm2638, %v4989, %v4991
      %v4993 = vrot.slane %v4735, 4
      %v4994 = vrot.slane %v4736, 4
      %v4995 = vsel %vm2638, %v4993, %v4994
      %v4996 = vrot.slane %v4737, 4
      %v4997 = vsel %vm2638, %v4994, %v4996
      %v4998 = vrot.slane %v4738, 4
      %v4999 = vsel %vm2638, %v4996, %v4998
      %v5000 = vrot.slane %v4739, 4
      %v5001 = vrot.slane %v4740, 4
      %v5002 = vsel %vm2638, %v5000, %v5001
      %v5003 = vrot.slane %v4741, 4
      %v5004 = vsel %vm2638, %v5001, %v5003
      %v5005 = vrot.slane %v4742, 4
      %v5006 = vsel %vm2638, %v5003, %v5005
      %v5079 = vadd.f32 %v4571, %v4841
      %v5080 = vadd.f32 %v4572, %v4843
      %v5081 = vadd.f32 %v4573, %v4845
      %v5082 = vadd.f32 %v4574, %v4848
      %v5083 = vadd.f32 %v4575, %v4850
      %v5084 = vadd.f32 %v4576, %v4852
      %v5085 = vadd.f32 %v4577, %v4855
      %v5086 = vadd.f32 %v4578, %v4857
      %v5087 = vadd.f32 %v4579, %v4859
      %v5088 = vadd.f32 %v4580, %v4862
      %v5089 = vadd.f32 %v4581, %v4864
      %v5090 = vadd.f32 %v4582, %v4866
      %v5091 = vadd.f32 %v4583, %v4869
      %v5092 = vadd.f32 %v4584, %v4871
      %v5093 = vadd.f32 %v4585, %v4873
      %v5094 = vadd.f32 %v4586, %v4876
      %v5095 = vadd.f32 %v4587, %v4878
      %v5096 = vadd.f32 %v4588, %v4880
      %v5097 = vadd.f32 %v4589, %v4883
      %v5098 = vadd.f32 %v4590, %v4885
      %v5099 = vadd.f32 %v4591, %v4887
      %v5100 = vadd.f32 %v4592, %v4890
      %v5101 = vadd.f32 %v4593, %v4892
      %v5102 = vadd.f32 %v4594, %v4894
      %v5103 = vadd.f32 %v4595, %v4897
      %v5104 = vadd.f32 %v4596, %v4899
      %v5105 = vadd.f32 %v4597, %v4901
      %v5106 = vadd.f32 %v4598, %v4904
      %v5107 = vadd.f32 %v4599, %v4906
      %v5108 = vadd.f32 %v4600, %v4908
      %v5109 = vadd.f32 %v4601, %v4911
      %v5110 = vadd.f32 %v4602, %v4913
      %v5111 = vadd.f32 %v4603, %v4915
      %v5112 = vadd.f32 %v4604, %v4918
      %v5113 = vadd.f32 %v4605, %v4920
      %v5114 = vadd.f32 %v4606, %v4922
      %v5115 = vadd.f32 %v4607, %v4925
      %v5116 = vadd.f32 %v4608, %v4927
      %v5117 = vadd.f32 %v4609, %v4929
      %v5118 = vadd.f32 %v4610, %v4932
      %v5119 = vadd.f32 %v4611, %v4934
      %v5120 = vadd.f32 %v4612, %v4936
      %v5121 = vadd.f32 %v4613, %v4939
      %v5122 = vadd.f32 %v4614, %v4941
      %v5123 = vadd.f32 %v4615, %v4943
      %v5124 = vadd.f32 %v4616, %v4946
      %v5125 = vadd.f32 %v4617, %v4948
      %v5126 = vadd.f32 %v4618, %v4950
      %v5127 = vadd.f32 %v4619, %v4953
      %v5128 = vadd.f32 %v4620, %v4955
      %v5129 = vadd.f32 %v4621, %v4957
      %v5130 = vadd.f32 %v4622, %v4960
      %v5131 = vadd.f32 %v4623, %v4962
      %v5132 = vadd.f32 %v4624, %v4964
      %v5133 = vadd.f32 %v4625, %v4967
      %v5134 = vadd.f32 %v4626, %v4969
      %v5135 = vadd.f32 %v4627, %v4971
      %v5136 = vadd.f32 %v4628, %v4974
      %v5137 = vadd.f32 %v4629, %v4976
      %v5138 = vadd.f32 %v4630, %v4978
      %v5139 = vadd.f32 %v4631, %v4981
      %v5140 = vadd.f32 %v4632, %v4983
      %v5141 = vadd.f32 %v4633, %v4985
      %v5142 = vadd.f32 %v4634, %v4988
      %v5143 = vadd.f32 %v4635, %v4990
      %v5144 = vadd.f32 %v4636, %v4992
      %v5145 = vadd.f32 %v4637, %v4995
      %v5146 = vadd.f32 %v4638, %v4997
      %v5147 = vadd.f32 %v4639, %v4999
      %v5148 = vadd.f32 %v4640, %v5002
      %v5149 = vadd.f32 %v4641, %v5004
      %v5150 = vadd.f32 %v4642, %v5006
      %5152 = vset.pattern.permute.xlu0 0
      %5153 = vperm.xlu0 %5152, %v271
      %v5154 = vpop.permute.xlu0 %5153
      %5157 = vset.pattern.permute.xlu0 0
      %5158 = vperm.xlu0 %5157, %v272
      %v5159 = vpop.permute.xlu0 %5158
      %5162 = vset.pattern.permute.xlu0 0
      %5163 = vperm.xlu0 %5162, %v273
      %v5164 = vpop.permute.xlu0 %5163
      %v5166 = vlaneseq
      %v5167 = vshrl.u32 %v5166, 7
      %v5168 = vsub.s32 2, %v5167
      %v5169 = vrot.slane %v284, %v5168
      %v5170 = vmul.f32 %v320, %v5169
      %v5171 = vmul.f32 %v325, %v5169
      %v5172 = vmul.f32 %v330, %v5169
      %v5173 = vmul.f32 %v335, %v5169
      %v5174 = vmul.f32 %v340, %v5169
      %v5175 = vmul.f32 %v345, %v5169
      %v5176 = vmul.f32 %v350, %v5169
      %v5177 = vmul.f32 %v355, %v5169
      %v5178 = vmul.f32 %v360, %v5169
      %v5179 = vmul.f32 %v365, %v5169
      %v5180 = vmul.f32 %v370, %v5169
      %v5181 = vmul.f32 %v375, %v5169
      %v5182 = vmul.f32 %v380, %v5169
      %v5183 = vmul.f32 %v385, %v5169
      %v5184 = vmul.f32 %v390, %v5169
      %v5185 = vmul.f32 %v395, %v5169
      %v5186 = vmul.f32 %v400, %v5169
      %v5187 = vmul.f32 %v405, %v5169
      %v5188 = vmul.f32 %v410, %v5169
      %v5189 = vmul.f32 %v415, %v5169
      %v5190 = vmul.f32 %v420, %v5169
      %v5191 = vmul.f32 %v425, %v5169
      %v5192 = vmul.f32 %v430, %v5169
      %v5193 = vmul.f32 %v435, %v5169
      %v5194 = vmul.f32 %v440, %v5169
      %v5195 = vmul.f32 %v445, %v5169
      %v5196 = vmul.f32 %v450, %v5169
      %v5197 = vmul.f32 %v455, %v5169
      %v5198 = vmul.f32 %v460, %v5169
      %v5199 = vmul.f32 %v465, %v5169
      %v5200 = vmul.f32 %v470, %v5169
      %v5201 = vmul.f32 %v475, %v5169
      %v5202 = vmul.f32 %v480, %v5169
      %v5203 = vmul.f32 %v485, %v5169
      %v5204 = vmul.f32 %v490, %v5169
      %v5205 = vmul.f32 %v495, %v5169
      %v5206 = vmul.f32 %v500, %v5169
      %v5207 = vmul.f32 %v505, %v5169
      %v5208 = vmul.f32 %v510, %v5169
      %v5209 = vmul.f32 %v515, %v5169
      %v5210 = vmul.f32 %v520, %v5169
      %v5211 = vmul.f32 %v525, %v5169
      %v5212 = vmul.f32 %v530, %v5169
      %v5213 = vmul.f32 %v535, %v5169
      %v5214 = vmul.f32 %v540, %v5169
      %v5215 = vmul.f32 %v545, %v5169
      %v5216 = vmul.f32 %v550, %v5169
      %v5217 = vmul.f32 %v555, %v5169
      %v5218 = vmul.f32 %v560, %v5169
      %v5219 = vmul.f32 %v565, %v5169
      %v5220 = vmul.f32 %v570, %v5169
      %v5221 = vmul.f32 %v575, %v5169
      %v5222 = vmul.f32 %v580, %v5169
      %v5223 = vmul.f32 %v585, %v5169
      %v5224 = vmul.f32 %v590, %v5169
      %v5225 = vmul.f32 %v595, %v5169
      %v5226 = vmul.f32 %v600, %v5169
      %v5227 = vmul.f32 %v605, %v5169
      %v5228 = vmul.f32 %v610, %v5169
      %v5229 = vmul.f32 %v615, %v5169
      %v5230 = vmul.f32 %v620, %v5169
      %v5231 = vmul.f32 %v625, %v5169
      %v5232 = vmul.f32 %v630, %v5169
      %v5233 = vmul.f32 %v635, %v5169
      %v5234 = vmul.f32 %v640, %v5169
      %v5235 = vmul.f32 %v645, %v5169
      %v5236 = vmul.f32 %v2954, %v5169
      %v5237 = vmul.f32 %v2959, %v5169
      %v5238 = vmul.f32 %v2964, %v5169
      %v5239 = vmul.f32 %v5154, %v5169
      %v5240 = vmul.f32 %v5159, %v5169
      %v5241 = vmul.f32 %v5164, %v5169
      %v5242 = vadd.f32 %v5079, %v5170
      %v5243 = vadd.f32 %v5080, %v5171
      %v5244 = vadd.f32 %v5081, %v5172
      %v5245 = vadd.f32 %v5082, %v5173
      %v5246 = vadd.f32 %v5083, %v5174
      %v5247 = vadd.f32 %v5084, %v5175
      %v5248 = vadd.f32 %v5085, %v5176
      %v5249 = vadd.f32 %v5086, %v5177
      %v5250 = vadd.f32 %v5087, %v5178
      %v5251 = vadd.f32 %v5088, %v5179
      %v5252 = vadd.f32 %v5089, %v5180
      %v5253 = vadd.f32 %v5090, %v5181
      %v5254 = vadd.f32 %v5091, %v5182
      %v5255 = vadd.f32 %v5092, %v5183
      %v5256 = vadd.f32 %v5093, %v5184
      %v5257 = vadd.f32 %v5094, %v5185
      %v5258 = vadd.f32 %v5095, %v5186
      %v5259 = vadd.f32 %v5096, %v5187
      %v5260 = vadd.f32 %v5097, %v5188
      %v5261 = vadd.f32 %v5098, %v5189
      %v5262 = vadd.f32 %v5099, %v5190
      %v5263 = vadd.f32 %v5100, %v5191
      %v5264 = vadd.f32 %v5101, %v5192
      %v5265 = vadd.f32 %v5102, %v5193
      %v5266 = vadd.f32 %v5103, %v5194
      %v5267 = vadd.f32 %v5104, %v5195
      %v5268 = vadd.f32 %v5105, %v5196
      %v5269 = vadd.f32 %v5106, %v5197
      %v5270 = vadd.f32 %v5107, %v5198
      %v5271 = vadd.f32 %v5108, %v5199
      %v5272 = vadd.f32 %v5109, %v5200
      %v5273 = vadd.f32 %v5110, %v5201
      %v5274 = vadd.f32 %v5111, %v5202
      %v5275 = vadd.f32 %v5112, %v5203
      %v5276 = vadd.f32 %v5113, %v5204
      %v5277 = vadd.f32 %v5114, %v5205
      %v5278 = vadd.f32 %v5115, %v5206
      %v5279 = vadd.f32 %v5116, %v5207
      %v5280 = vadd.f32 %v5117, %v5208
      %v5281 = vadd.f32 %v5118, %v5209
      %v5282 = vadd.f32 %v5119, %v5210
      %v5283 = vadd.f32 %v5120, %v5211
      %v5284 = vadd.f32 %v5121, %v5212
      %v5285 = vadd.f32 %v5122, %v5213
      %v5286 = vadd.f32 %v5123, %v5214
      %v5287 = vadd.f32 %v5124, %v5215
      %v5288 = vadd.f32 %v5125, %v5216
      %v5289 = vadd.f32 %v5126, %v5217
      %v5290 = vadd.f32 %v5127, %v5218
      %v5291 = vadd.f32 %v5128, %v5219
      %v5292 = vadd.f32 %v5129, %v5220
      %v5293 = vadd.f32 %v5130, %v5221
      %v5294 = vadd.f32 %v5131, %v5222
      %v5295 = vadd.f32 %v5132, %v5223
      %v5296 = vadd.f32 %v5133, %v5224
      %v5297 = vadd.f32 %v5134, %v5225
      %v5298 = vadd.f32 %v5135, %v5226
      %v5299 = vadd.f32 %v5136, %v5227
      %v5300 = vadd.f32 %v5137, %v5228
      %v5301 = vadd.f32 %v5138, %v5229
      %v5302 = vadd.f32 %v5139, %v5230
      %v5303 = vadd.f32 %v5140, %v5231
      %v5304 = vadd.f32 %v5141, %v5232
      %v5305 = vadd.f32 %v5142, %v5233
      %v5306 = vadd.f32 %v5143, %v5234
      %v5307 = vadd.f32 %v5144, %v5235
      %v5308 = vadd.f32 %v5145, %v5236
      %v5309 = vadd.f32 %v5146, %v5237
      %v5310 = vadd.f32 %v5147, %v5238
      %v5311 = vadd.f32 %v5148, %v5239
      %v5312 = vadd.f32 %v5149, %v5240
      %v5313 = vadd.f32 %v5150, %v5241
      %5315 = vset.pattern.permute.xlu0 0
      %5316 = vperm.xlu0 %5315, %v274
      %v5317 = vpop.permute.xlu0 %5316
      %v5319 = vlaneseq
      %v5320 = vshrl.u32 %v5319, 7
      %v5321 = vsub.s32 3, %v5320
      %v5322 = vrot.slane %v284, %v5321
      %v5323 = vmul.f32 %v320, %v5322
      %v5324 = vmul.f32 %v325, %v5322
      %v5325 = vmul.f32 %v330, %v5322
      %v5326 = vmul.f32 %v808, %v5322
      %v5327 = vmul.f32 %v335, %v5322
      %v5328 = vmul.f32 %v340, %v5322
      %v5329 = vmul.f32 %v345, %v5322
      %v5330 = vmul.f32 %v813, %v5322
      %v5331 = vmul.f32 %v350, %v5322
      %v5332 = vmul.f32 %v355, %v5322
      %v5333 = vmul.f32 %v360, %v5322
      %v5334 = vmul.f32 %v818, %v5322
      %v5335 = vmul.f32 %v365, %v5322
      %v5336 = vmul.f32 %v370, %v5322
      %v5337 = vmul.f32 %v375, %v5322
      %v5338 = vmul.f32 %v823, %v5322
      %v5339 = vmul.f32 %v380, %v5322
      %v5340 = vmul.f32 %v385, %v5322
      %v5341 = vmul.f32 %v390, %v5322
      %v5342 = vmul.f32 %v828, %v5322
      %v5343 = vmul.f32 %v395, %v5322
      %v5344 = vmul.f32 %v400, %v5322
      %v5345 = vmul.f32 %v405, %v5322
      %v5346 = vmul.f32 %v833, %v5322
      %v5347 = vmul.f32 %v410, %v5322
      %v5348 = vmul.f32 %v415, %v5322
      %v5349 = vmul.f32 %v420, %v5322
      %v5350 = vmul.f32 %v838, %v5322
      %v5351 = vmul.f32 %v425, %v5322
      %v5352 = vmul.f32 %v430, %v5322
      %v5353 = vmul.f32 %v435, %v5322
      %v5354 = vmul.f32 %v843, %v5322
      %v5355 = vmul.f32 %v440, %v5322
      %v5356 = vmul.f32 %v445, %v5322
      %v5357 = vmul.f32 %v450, %v5322
      %v5358 = vmul.f32 %v848, %v5322
      %v5359 = vmul.f32 %v455, %v5322
      %v5360 = vmul.f32 %v460, %v5322
      %v5361 = vmul.f32 %v465, %v5322
      %v5362 = vmul.f32 %v853, %v5322
      %v5363 = vmul.f32 %v470, %v5322
      %v5364 = vmul.f32 %v475, %v5322
      %v5365 = vmul.f32 %v480, %v5322
      %v5366 = vmul.f32 %v858, %v5322
      %v5367 = vmul.f32 %v485, %v5322
      %v5368 = vmul.f32 %v490, %v5322
      %v5369 = vmul.f32 %v495, %v5322
      %v5370 = vmul.f32 %v863, %v5322
      %v5371 = vmul.f32 %v500, %v5322
      %v5372 = vmul.f32 %v505, %v5322
      %v5373 = vmul.f32 %v510, %v5322
      %v5374 = vmul.f32 %v868, %v5322
      %v5375 = vmul.f32 %v515, %v5322
      %v5376 = vmul.f32 %v520, %v5322
      %v5377 = vmul.f32 %v525, %v5322
      %v5378 = vmul.f32 %v873, %v5322
      %v5379 = vmul.f32 %v530, %v5322
      %v5380 = vmul.f32 %v535, %v5322
      %v5381 = vmul.f32 %v540, %v5322
      %v5382 = vmul.f32 %v878, %v5322
      %v5383 = vmul.f32 %v545, %v5322
      %v5384 = vmul.f32 %v550, %v5322
      %v5385 = vmul.f32 %v555, %v5322
      %v5386 = vmul.f32 %v883, %v5322
      %v5387 = vmul.f32 %v560, %v5322
      %v5388 = vmul.f32 %v565, %v5322
      %v5389 = vmul.f32 %v570, %v5322
      %v5390 = vmul.f32 %v888, %v5322
      %v5391 = vmul.f32 %v575, %v5322
      %v5392 = vmul.f32 %v580, %v5322
      %v5393 = vmul.f32 %v585, %v5322
      %v5394 = vmul.f32 %v893, %v5322
      %v5395 = vmul.f32 %v590, %v5322
      %v5396 = vmul.f32 %v595, %v5322
      %v5397 = vmul.f32 %v600, %v5322
      %v5398 = vmul.f32 %v898, %v5322
      %v5399 = vmul.f32 %v605, %v5322
      %v5400 = vmul.f32 %v610, %v5322
      %v5401 = vmul.f32 %v615, %v5322
      %v5402 = vmul.f32 %v903, %v5322
      %v5403 = vmul.f32 %v620, %v5322
      %v5404 = vmul.f32 %v625, %v5322
      %v5405 = vmul.f32 %v630, %v5322
      %v5406 = vmul.f32 %v908, %v5322
      %v5407 = vmul.f32 %v635, %v5322
      %v5408 = vmul.f32 %v640, %v5322
      %v5409 = vmul.f32 %v645, %v5322
      %v5410 = vmul.f32 %v913, %v5322
      %v5411 = vmul.f32 %v2954, %v5322
      %v5412 = vmul.f32 %v2959, %v5322
      %v5413 = vmul.f32 %v2964, %v5322
      %v5414 = vmul.f32 %v3117, %v5322
      %v5415 = vmul.f32 %v5154, %v5322
      %v5416 = vmul.f32 %v5159, %v5322
      %v5417 = vmul.f32 %v5164, %v5322
      %v5418 = vmul.f32 %v5317, %v5322
      %v5515 = vrot.slane %v5323, 1
      %v5516 = vrot.slane %v5324, 1
      %v5517 = vsel %vm1111, %v5515, %v5516
      %v5518 = vrot.slane %v5325, 1
      %v5519 = vsel %vm1111, %v5516, %v5518
      %v5520 = vrot.slane %v5326, 1
      %v5521 = vsel %vm1111, %v5518, %v5520
      %v5522 = vrot.slane %v5327, 1
      %v5523 = vrot.slane %v5328, 1
      %v5524 = vsel %vm1111, %v5522, %v5523
      %v5525 = vrot.slane %v5329, 1
      %v5526 = vsel %vm1111, %v5523, %v5525
      %v5527 = vrot.slane %v5330, 1
      %v5528 = vsel %vm1111, %v5525, %v5527
      %v5529 = vrot.slane %v5331, 1
      %v5530 = vrot.slane %v5332, 1
      %v5531 = vsel %vm1111, %v5529, %v5530
      %v5532 = vrot.slane %v5333, 1
      %v5533 = vsel %vm1111, %v5530, %v5532
      %v5534 = vrot.slane %v5334, 1
      %v5535 = vsel %vm1111, %v5532, %v5534
      %v5536 = vrot.slane %v5335, 1
      %v5537 = vrot.slane %v5336, 1
      %v5538 = vsel %vm1111, %v5536, %v5537
      %v5539 = vrot.slane %v5337, 1
      %v5540 = vsel %vm1111, %v5537, %v5539
      %v5541 = vrot.slane %v5338, 1
      %v5542 = vsel %vm1111, %v5539, %v5541
      %v5543 = vrot.slane %v5339, 1
      %v5544 = vrot.slane %v5340, 1
      %v5545 = vsel %vm1111, %v5543, %v5544
      %v5546 = vrot.slane %v5341, 1
      %v5547 = vsel %vm1111, %v5544, %v5546
      %v5548 = vrot.slane %v5342, 1
      %v5549 = vsel %vm1111, %v5546, %v5548
      %v5550 = vrot.slane %v5343, 1
      %v5551 = vrot.slane %v5344, 1
      %v5552 = vsel %vm1111, %v5550, %v5551
      %v5553 = vrot.slane %v5345, 1
      %v5554 = vsel %vm1111, %v5551, %v5553
      %v5555 = vrot.slane %v5346, 1
      %v5556 = vsel %vm1111, %v5553, %v5555
      %v5557 = vrot.slane %v5347, 1
      %v5558 = vrot.slane %v5348, 1
      %v5559 = vsel %vm1111, %v5557, %v5558
      %v5560 = vrot.slane %v5349, 1
      %v5561 = vsel %vm1111, %v5558, %v5560
      %v5562 = vrot.slane %v5350, 1
      %v5563 = vsel %vm1111, %v5560, %v5562
      %v5564 = vrot.slane %v5351, 1
      %v5565 = vrot.slane %v5352, 1
      %v5566 = vsel %vm1111, %v5564, %v5565
      %v5567 = vrot.slane %v5353, 1
      %v5568 = vsel %vm1111, %v5565, %v5567
      %v5569 = vrot.slane %v5354, 1
      %v5570 = vsel %vm1111, %v5567, %v5569
      %v5571 = vrot.slane %v5355, 1
      %v5572 = vrot.slane %v5356, 1
      %v5573 = vsel %vm1111, %v5571, %v5572
      %v5574 = vrot.slane %v5357, 1
      %v5575 = vsel %vm1111, %v5572, %v5574
      %v5576 = vrot.slane %v5358, 1
      %v5577 = vsel %vm1111, %v5574, %v5576
      %v5578 = vrot.slane %v5359, 1
      %v5579 = vrot.slane %v5360, 1
      %v5580 = vsel %vm1111, %v5578, %v5579
      %v5581 = vrot.slane %v5361, 1
      %v5582 = vsel %vm1111, %v5579, %v5581
      %v5583 = vrot.slane %v5362, 1
      %v5584 = vsel %vm1111, %v5581, %v5583
      %v5585 = vrot.slane %v5363, 1
      %v5586 = vrot.slane %v5364, 1
      %v5587 = vsel %vm1111, %v5585, %v5586
      %v5588 = vrot.slane %v5365, 1
      %v5589 = vsel %vm1111, %v5586, %v5588
      %v5590 = vrot.slane %v5366, 1
      %v5591 = vsel %vm1111, %v5588, %v5590
      %v5592 = vrot.slane %v5367, 1
      %v5593 = vrot.slane %v5368, 1
      %v5594 = vsel %vm1111, %v5592, %v5593
      %v5595 = vrot.slane %v5369, 1
      %v5596 = vsel %vm1111, %v5593, %v5595
      %v5597 = vrot.slane %v5370, 1
      %v5598 = vsel %vm1111, %v5595, %v5597
      %v5599 = vrot.slane %v5371, 1
      %v5600 = vrot.slane %v5372, 1
      %v5601 = vsel %vm1111, %v5599, %v5600
      %v5602 = vrot.slane %v5373, 1
      %v5603 = vsel %vm1111, %v5600, %v5602
      %v5604 = vrot.slane %v5374, 1
      %v5605 = vsel %vm1111, %v5602, %v5604
      %v5606 = vrot.slane %v5375, 1
      %v5607 = vrot.slane %v5376, 1
      %v5608 = vsel %vm1111, %v5606, %v5607
      %v5609 = vrot.slane %v5377, 1
      %v5610 = vsel %vm1111, %v5607, %v5609
      %v5611 = vrot.slane %v5378, 1
      %v5612 = vsel %vm1111, %v5609, %v5611
      %v5613 = vrot.slane %v5379, 1
      %v5614 = vrot.slane %v5380, 1
      %v5615 = vsel %vm1111, %v5613, %v5614
      %v5616 = vrot.slane %v5381, 1
      %v5617 = vsel %vm1111, %v5614, %v5616
      %v5618 = vrot.slane %v5382, 1
      %v5619 = vsel %vm1111, %v5616, %v5618
      %v5620 = vrot.slane %v5383, 1
      %v5621 = vrot.slane %v5384, 1
      %v5622 = vsel %vm1111, %v5620, %v5621
      %v5623 = vrot.slane %v5385, 1
      %v5624 = vsel %vm1111, %v5621, %v5623
      %v5625 = vrot.slane %v5386, 1
      %v5626 = vsel %vm1111, %v5623, %v5625
      %v5627 = vrot.slane %v5387, 1
      %v5628 = vrot.slane %v5388, 1
      %v5629 = vsel %vm1111, %v5627, %v5628
      %v5630 = vrot.slane %v5389, 1
      %v5631 = vsel %vm1111, %v5628, %v5630
      %v5632 = vrot.slane %v5390, 1
      %v5633 = vsel %vm1111, %v5630, %v5632
      %v5634 = vrot.slane %v5391, 1
      %v5635 = vrot.slane %v5392, 1
      %v5636 = vsel %vm1111, %v5634, %v5635
      %v5637 = vrot.slane %v5393, 1
      %v5638 = vsel %vm1111, %v5635, %v5637
      %v5639 = vrot.slane %v5394, 1
      %v5640 = vsel %vm1111, %v5637, %v5639
      %v5641 = vrot.slane %v5395, 1
      %v5642 = vrot.slane %v5396, 1
      %v5643 = vsel %vm1111, %v5641, %v5642
      %v5644 = vrot.slane %v5397, 1
      %v5645 = vsel %vm1111, %v5642, %v5644
      %v5646 = vrot.slane %v5398, 1
      %v5647 = vsel %vm1111, %v5644, %v5646
      %v5648 = vrot.slane %v5399, 1
      %v5649 = vrot.slane %v5400, 1
      %v5650 = vsel %vm1111, %v5648, %v5649
      %v5651 = vrot.slane %v5401, 1
      %v5652 = vsel %vm1111, %v5649, %v5651
      %v5653 = vrot.slane %v5402, 1
      %v5654 = vsel %vm1111, %v5651, %v5653
      %v5655 = vrot.slane %v5403, 1
      %v5656 = vrot.slane %v5404, 1
      %v5657 = vsel %vm1111, %v5655, %v5656
      %v5658 = vrot.slane %v5405, 1
      %v5659 = vsel %vm1111, %v5656, %v5658
      %v5660 = vrot.slane %v5406, 1
      %v5661 = vsel %vm1111, %v5658, %v5660
      %v5662 = vrot.slane %v5407, 1
      %v5663 = vrot.slane %v5408, 1
      %v5664 = vsel %vm1111, %v5662, %v5663
      %v5665 = vrot.slane %v5409, 1
      %v5666 = vsel %vm1111, %v5663, %v5665
      %v5667 = vrot.slane %v5410, 1
      %v5668 = vsel %vm1111, %v5665, %v5667
      %v5669 = vrot.slane %v5411, 1
      %v5670 = vrot.slane %v5412, 1
      %v5671 = vsel %vm1111, %v5669, %v5670
      %v5672 = vrot.slane %v5413, 1
      %v5673 = vsel %vm1111, %v5670, %v5672
      %v5674 = vrot.slane %v5414, 1
      %v5675 = vsel %vm1111, %v5672, %v5674
      %v5676 = vrot.slane %v5415, 1
      %v5677 = vrot.slane %v5416, 1
      %v5678 = vsel %vm1111, %v5676, %v5677
      %v5679 = vrot.slane %v5417, 1
      %v5680 = vsel %vm1111, %v5677, %v5679
      %v5681 = vrot.slane %v5418, 1
      %v5682 = vsel %vm1111, %v5679, %v5681
      %v5755 = vadd.f32 %v5242, %v5517
      %v5756 = vadd.f32 %v5243, %v5519
      %v5757 = vadd.f32 %v5244, %v5521
      %v5758 = vadd.f32 %v5245, %v5524
      %v5759 = vadd.f32 %v5246, %v5526
      %v5760 = vadd.f32 %v5247, %v5528
      %v5761 = vadd.f32 %v5248, %v5531
      %v5762 = vadd.f32 %v5249, %v5533
      %v5763 = vadd.f32 %v5250, %v5535
      %v5764 = vadd.f32 %v5251, %v5538
      %v5765 = vadd.f32 %v5252, %v5540
      %v5766 = vadd.f32 %v5253, %v5542
      %v5767 = vadd.f32 %v5254, %v5545
      %v5768 = vadd.f32 %v5255, %v5547
      %v5769 = vadd.f32 %v5256, %v5549
      %v5770 = vadd.f32 %v5257, %v5552
      %v5771 = vadd.f32 %v5258, %v5554
      %v5772 = vadd.f32 %v5259, %v5556
      %v5773 = vadd.f32 %v5260, %v5559
      %v5774 = vadd.f32 %v5261, %v5561
      %v5775 = vadd.f32 %v5262, %v5563
      %v5776 = vadd.f32 %v5263, %v5566
      %v5777 = vadd.f32 %v5264, %v5568
      %v5778 = vadd.f32 %v5265, %v5570
      %v5779 = vadd.f32 %v5266, %v5573
      %v5780 = vadd.f32 %v5267, %v5575
      %v5781 = vadd.f32 %v5268, %v5577
      %v5782 = vadd.f32 %v5269, %v5580
      %v5783 = vadd.f32 %v5270, %v5582
      %v5784 = vadd.f32 %v5271, %v5584
      %v5785 = vadd.f32 %v5272, %v5587
      %v5786 = vadd.f32 %v5273, %v5589
      %v5787 = vadd.f32 %v5274, %v5591
      %v5788 = vadd.f32 %v5275, %v5594
      %v5789 = vadd.f32 %v5276, %v5596
      %v5790 = vadd.f32 %v5277, %v5598
      %v5791 = vadd.f32 %v5278, %v5601
      %v5792 = vadd.f32 %v5279, %v5603
      %v5793 = vadd.f32 %v5280, %v5605
      %v5794 = vadd.f32 %v5281, %v5608
      %v5795 = vadd.f32 %v5282, %v5610
      %v5796 = vadd.f32 %v5283, %v5612
      %v5797 = vadd.f32 %v5284, %v5615
      %v5798 = vadd.f32 %v5285, %v5617
      %v5799 = vadd.f32 %v5286, %v5619
      %v5800 = vadd.f32 %v5287, %v5622
      %v5801 = vadd.f32 %v5288, %v5624
      %v5802 = vadd.f32 %v5289, %v5626
      %v5803 = vadd.f32 %v5290, %v5629
      %v5804 = vadd.f32 %v5291, %v5631
      %v5805 = vadd.f32 %v5292, %v5633
      %v5806 = vadd.f32 %v5293, %v5636
      %v5807 = vadd.f32 %v5294, %v5638
      %v5808 = vadd.f32 %v5295, %v5640
      %v5809 = vadd.f32 %v5296, %v5643
      %v5810 = vadd.f32 %v5297, %v5645
      %v5811 = vadd.f32 %v5298, %v5647
      %v5812 = vadd.f32 %v5299, %v5650
      %v5813 = vadd.f32 %v5300, %v5652
      %v5814 = vadd.f32 %v5301, %v5654
      %v5815 = vadd.f32 %v5302, %v5657
      %v5816 = vadd.f32 %v5303, %v5659
      %v5817 = vadd.f32 %v5304, %v5661
      %v5818 = vadd.f32 %v5305, %v5664
      %v5819 = vadd.f32 %v5306, %v5666
      %v5820 = vadd.f32 %v5307, %v5668
      %v5821 = vadd.f32 %v5308, %v5671
      %v5822 = vadd.f32 %v5309, %v5673
      %v5823 = vadd.f32 %v5310, %v5675
      %v5824 = vadd.f32 %v5311, %v5678
      %v5825 = vadd.f32 %v5312, %v5680
      %v5826 = vadd.f32 %v5313, %v5682
      %v5827 = vlaneseq
      %v5828 = vshrl.u32 %v5827, 7
      %v5829 = vsub.s32 4, %v5828
      %v5830 = vrot.slane %v284, %v5829
      %v5831 = vmul.f32 %v320, %v5830
      %v5832 = vmul.f32 %v325, %v5830
      %v5833 = vmul.f32 %v330, %v5830
      %v5834 = vmul.f32 %v808, %v5830
      %v5835 = vmul.f32 %v335, %v5830
      %v5836 = vmul.f32 %v340, %v5830
      %v5837 = vmul.f32 %v345, %v5830
      %v5838 = vmul.f32 %v813, %v5830
      %v5839 = vmul.f32 %v350, %v5830
      %v5840 = vmul.f32 %v355, %v5830
      %v5841 = vmul.f32 %v360, %v5830
      %v5842 = vmul.f32 %v818, %v5830
      %v5843 = vmul.f32 %v365, %v5830
      %v5844 = vmul.f32 %v370, %v5830
      %v5845 = vmul.f32 %v375, %v5830
      %v5846 = vmul.f32 %v823, %v5830
      %v5847 = vmul.f32 %v380, %v5830
      %v5848 = vmul.f32 %v385, %v5830
      %v5849 = vmul.f32 %v390, %v5830
      %v5850 = vmul.f32 %v828, %v5830
      %v5851 = vmul.f32 %v395, %v5830
      %v5852 = vmul.f32 %v400, %v5830
      %v5853 = vmul.f32 %v405, %v5830
      %v5854 = vmul.f32 %v833, %v5830
      %v5855 = vmul.f32 %v410, %v5830
      %v5856 = vmul.f32 %v415, %v5830
      %v5857 = vmul.f32 %v420, %v5830
      %v5858 = vmul.f32 %v838, %v5830
      %v5859 = vmul.f32 %v425, %v5830
      %v5860 = vmul.f32 %v430, %v5830
      %v5861 = vmul.f32 %v435, %v5830
      %v5862 = vmul.f32 %v843, %v5830
      %v5863 = vmul.f32 %v440, %v5830
      %v5864 = vmul.f32 %v445, %v5830
      %v5865 = vmul.f32 %v450, %v5830
      %v5866 = vmul.f32 %v848, %v5830
      %v5867 = vmul.f32 %v455, %v5830
      %v5868 = vmul.f32 %v460, %v5830
      %v5869 = vmul.f32 %v465, %v5830
      %v5870 = vmul.f32 %v853, %v5830
      %v5871 = vmul.f32 %v470, %v5830
      %v5872 = vmul.f32 %v475, %v5830
      %v5873 = vmul.f32 %v480, %v5830
      %v5874 = vmul.f32 %v858, %v5830
      %v5875 = vmul.f32 %v485, %v5830
      %v5876 = vmul.f32 %v490, %v5830
      %v5877 = vmul.f32 %v495, %v5830
      %v5878 = vmul.f32 %v863, %v5830
      %v5879 = vmul.f32 %v500, %v5830
      %v5880 = vmul.f32 %v505, %v5830
      %v5881 = vmul.f32 %v510, %v5830
      %v5882 = vmul.f32 %v868, %v5830
      %v5883 = vmul.f32 %v515, %v5830
      %v5884 = vmul.f32 %v520, %v5830
      %v5885 = vmul.f32 %v525, %v5830
      %v5886 = vmul.f32 %v873, %v5830
      %v5887 = vmul.f32 %v530, %v5830
      %v5888 = vmul.f32 %v535, %v5830
      %v5889 = vmul.f32 %v540, %v5830
      %v5890 = vmul.f32 %v878, %v5830
      %v5891 = vmul.f32 %v545, %v5830
      %v5892 = vmul.f32 %v550, %v5830
      %v5893 = vmul.f32 %v555, %v5830
      %v5894 = vmul.f32 %v883, %v5830
      %v5895 = vmul.f32 %v560, %v5830
      %v5896 = vmul.f32 %v565, %v5830
      %v5897 = vmul.f32 %v570, %v5830
      %v5898 = vmul.f32 %v888, %v5830
      %v5899 = vmul.f32 %v575, %v5830
      %v5900 = vmul.f32 %v580, %v5830
      %v5901 = vmul.f32 %v585, %v5830
      %v5902 = vmul.f32 %v893, %v5830
      %v5903 = vmul.f32 %v590, %v5830
      %v5904 = vmul.f32 %v595, %v5830
      %v5905 = vmul.f32 %v600, %v5830
      %v5906 = vmul.f32 %v898, %v5830
      %v5907 = vmul.f32 %v605, %v5830
      %v5908 = vmul.f32 %v610, %v5830
      %v5909 = vmul.f32 %v615, %v5830
      %v5910 = vmul.f32 %v903, %v5830
      %v5911 = vmul.f32 %v620, %v5830
      %v5912 = vmul.f32 %v625, %v5830
      %v5913 = vmul.f32 %v630, %v5830
      %v5914 = vmul.f32 %v908, %v5830
      %v5915 = vmul.f32 %v635, %v5830
      %v5916 = vmul.f32 %v640, %v5830
      %v5917 = vmul.f32 %v645, %v5830
      %v5918 = vmul.f32 %v913, %v5830
      %v5919 = vmul.f32 %v2954, %v5830
      %v5920 = vmul.f32 %v2959, %v5830
      %v5921 = vmul.f32 %v2964, %v5830
      %v5922 = vmul.f32 %v3117, %v5830
      %v5923 = vmul.f32 %v5154, %v5830
      %v5924 = vmul.f32 %v5159, %v5830
      %v5925 = vmul.f32 %v5164, %v5830
      %v5926 = vmul.f32 %v5317, %v5830
      %v6023 = vrot.slane %v5831, 2
      %v6024 = vrot.slane %v5832, 2
      %v6025 = vsel %vm1620, %v6023, %v6024
      %v6026 = vrot.slane %v5833, 2
      %v6027 = vsel %vm1620, %v6024, %v6026
      %v6028 = vrot.slane %v5834, 2
      %v6029 = vsel %vm1620, %v6026, %v6028
      %v6030 = vrot.slane %v5835, 2
      %v6031 = vrot.slane %v5836, 2
      %v6032 = vsel %vm1620, %v6030, %v6031
      %v6033 = vrot.slane %v5837, 2
      %v6034 = vsel %vm1620, %v6031, %v6033
      %v6035 = vrot.slane %v5838, 2
      %v6036 = vsel %vm1620, %v6033, %v6035
      %v6037 = vrot.slane %v5839, 2
      %v6038 = vrot.slane %v5840, 2
      %v6039 = vsel %vm1620, %v6037, %v6038
      %v6040 = vrot.slane %v5841, 2
      %v6041 = vsel %vm1620, %v6038, %v6040
      %v6042 = vrot.slane %v5842, 2
      %v6043 = vsel %vm1620, %v6040, %v6042
      %v6044 = vrot.slane %v5843, 2
      %v6045 = vrot.slane %v5844, 2
      %v6046 = vsel %vm1620, %v6044, %v6045
      %v6047 = vrot.slane %v5845, 2
      %v6048 = vsel %vm1620, %v6045, %v6047
      %v6049 = vrot.slane %v5846, 2
      %v6050 = vsel %vm1620, %v6047, %v6049
      %v6051 = vrot.slane %v5847, 2
      %v6052 = vrot.slane %v5848, 2
      %v6053 = vsel %vm1620, %v6051, %v6052
      %v6054 = vrot.slane %v5849, 2
      %v6055 = vsel %vm1620, %v6052, %v6054
      %v6056 = vrot.slane %v5850, 2
      %v6057 = vsel %vm1620, %v6054, %v6056
      %v6058 = vrot.slane %v5851, 2
      %v6059 = vrot.slane %v5852, 2
      %v6060 = vsel %vm1620, %v6058, %v6059
      %v6061 = vrot.slane %v5853, 2
      %v6062 = vsel %vm1620, %v6059, %v6061
      %v6063 = vrot.slane %v5854, 2
      %v6064 = vsel %vm1620, %v6061, %v6063
      %v6065 = vrot.slane %v5855, 2
      %v6066 = vrot.slane %v5856, 2
      %v6067 = vsel %vm1620, %v6065, %v6066
      %v6068 = vrot.slane %v5857, 2
      %v6069 = vsel %vm1620, %v6066, %v6068
      %v6070 = vrot.slane %v5858, 2
      %v6071 = vsel %vm1620, %v6068, %v6070
      %v6072 = vrot.slane %v5859, 2
      %v6073 = vrot.slane %v5860, 2
      %v6074 = vsel %vm1620, %v6072, %v6073
      %v6075 = vrot.slane %v5861, 2
      %v6076 = vsel %vm1620, %v6073, %v6075
      %v6077 = vrot.slane %v5862, 2
      %v6078 = vsel %vm1620, %v6075, %v6077
      %v6079 = vrot.slane %v5863, 2
      %v6080 = vrot.slane %v5864, 2
      %v6081 = vsel %vm1620, %v6079, %v6080
      %v6082 = vrot.slane %v5865, 2
      %v6083 = vsel %vm1620, %v6080, %v6082
      %v6084 = vrot.slane %v5866, 2
      %v6085 = vsel %vm1620, %v6082, %v6084
      %v6086 = vrot.slane %v5867, 2
      %v6087 = vrot.slane %v5868, 2
      %v6088 = vsel %vm1620, %v6086, %v6087
      %v6089 = vrot.slane %v5869, 2
      %v6090 = vsel %vm1620, %v6087, %v6089
      %v6091 = vrot.slane %v5870, 2
      %v6092 = vsel %vm1620, %v6089, %v6091
      %v6093 = vrot.slane %v5871, 2
      %v6094 = vrot.slane %v5872, 2
      %v6095 = vsel %vm1620, %v6093, %v6094
      %v6096 = vrot.slane %v5873, 2
      %v6097 = vsel %vm1620, %v6094, %v6096
      %v6098 = vrot.slane %v5874, 2
      %v6099 = vsel %vm1620, %v6096, %v6098
      %v6100 = vrot.slane %v5875, 2
      %v6101 = vrot.slane %v5876, 2
      %v6102 = vsel %vm1620, %v6100, %v6101
      %v6103 = vrot.slane %v5877, 2
      %v6104 = vsel %vm1620, %v6101, %v6103
      %v6105 = vrot.slane %v5878, 2
      %v6106 = vsel %vm1620, %v6103, %v6105
      %v6107 = vrot.slane %v5879, 2
      %v6108 = vrot.slane %v5880, 2
      %v6109 = vsel %vm1620, %v6107, %v6108
      %v6110 = vrot.slane %v5881, 2
      %v6111 = vsel %vm1620, %v6108, %v6110
      %v6112 = vrot.slane %v5882, 2
      %v6113 = vsel %vm1620, %v6110, %v6112
      %v6114 = vrot.slane %v5883, 2
      %v6115 = vrot.slane %v5884, 2
      %v6116 = vsel %vm1620, %v6114, %v6115
      %v6117 = vrot.slane %v5885, 2
      %v6118 = vsel %vm1620, %v6115, %v6117
      %v6119 = vrot.slane %v5886, 2
      %v6120 = vsel %vm1620, %v6117, %v6119
      %v6121 = vrot.slane %v5887, 2
      %v6122 = vrot.slane %v5888, 2
      %v6123 = vsel %vm1620, %v6121, %v6122
      %v6124 = vrot.slane %v5889, 2
      %v6125 = vsel %vm1620, %v6122, %v6124
      %v6126 = vrot.slane %v5890, 2
      %v6127 = vsel %vm1620, %v6124, %v6126
      %v6128 = vrot.slane %v5891, 2
      %v6129 = vrot.slane %v5892, 2
      %v6130 = vsel %vm1620, %v6128, %v6129
      %v6131 = vrot.slane %v5893, 2
      %v6132 = vsel %vm1620, %v6129, %v6131
      %v6133 = vrot.slane %v5894, 2
      %v6134 = vsel %vm1620, %v6131, %v6133
      %v6135 = vrot.slane %v5895, 2
      %v6136 = vrot.slane %v5896, 2
      %v6137 = vsel %vm1620, %v6135, %v6136
      %v6138 = vrot.slane %v5897, 2
      %v6139 = vsel %vm1620, %v6136, %v6138
      %v6140 = vrot.slane %v5898, 2
      %v6141 = vsel %vm1620, %v6138, %v6140
      %v6142 = vrot.slane %v5899, 2
      %v6143 = vrot.slane %v5900, 2
      %v6144 = vsel %vm1620, %v6142, %v6143
      %v6145 = vrot.slane %v5901, 2
      %v6146 = vsel %vm1620, %v6143, %v6145
      %v6147 = vrot.slane %v5902, 2
      %v6148 = vsel %vm1620, %v6145, %v6147
      %v6149 = vrot.slane %v5903, 2
      %v6150 = vrot.slane %v5904, 2
      %v6151 = vsel %vm1620, %v6149, %v6150
      %v6152 = vrot.slane %v5905, 2
      %v6153 = vsel %vm1620, %v6150, %v6152
      %v6154 = vrot.slane %v5906, 2
      %v6155 = vsel %vm1620, %v6152, %v6154
      %v6156 = vrot.slane %v5907, 2
      %v6157 = vrot.slane %v5908, 2
      %v6158 = vsel %vm1620, %v6156, %v6157
      %v6159 = vrot.slane %v5909, 2
      %v6160 = vsel %vm1620, %v6157, %v6159
      %v6161 = vrot.slane %v5910, 2
      %v6162 = vsel %vm1620, %v6159, %v6161
      %v6163 = vrot.slane %v5911, 2
      %v6164 = vrot.slane %v5912, 2
      %v6165 = vsel %vm1620, %v6163, %v6164
      %v6166 = vrot.slane %v5913, 2
      %v6167 = vsel %vm1620, %v6164, %v6166
      %v6168 = vrot.slane %v5914, 2
      %v6169 = vsel %vm1620, %v6166, %v6168
      %v6170 = vrot.slane %v5915, 2
      %v6171 = vrot.slane %v5916, 2
      %v6172 = vsel %vm1620, %v6170, %v6171
      %v6173 = vrot.slane %v5917, 2
      %v6174 = vsel %vm1620, %v6171, %v6173
      %v6175 = vrot.slane %v5918, 2
      %v6176 = vsel %vm1620, %v6173, %v6175
      %v6177 = vrot.slane %v5919, 2
      %v6178 = vrot.slane %v5920, 2
      %v6179 = vsel %vm1620, %v6177, %v6178
      %v6180 = vrot.slane %v5921, 2
      %v6181 = vsel %vm1620, %v6178, %v6180
      %v6182 = vrot.slane %v5922, 2
      %v6183 = vsel %vm1620, %v6180, %v6182
      %v6184 = vrot.slane %v5923, 2
      %v6185 = vrot.slane %v5924, 2
      %v6186 = vsel %vm1620, %v6184, %v6185
      %v6187 = vrot.slane %v5925, 2
      %v6188 = vsel %vm1620, %v6185, %v6187
      %v6189 = vrot.slane %v5926, 2
      %v6190 = vsel %vm1620, %v6187, %v6189
      %v6263 = vadd.f32 %v5755, %v6025
      %v6264 = vadd.f32 %v5756, %v6027
      %v6265 = vadd.f32 %v5757, %v6029
      %v6266 = vadd.f32 %v5758, %v6032
      %v6267 = vadd.f32 %v5759, %v6034
      %v6268 = vadd.f32 %v5760, %v6036
      %v6269 = vadd.f32 %v5761, %v6039
      %v6270 = vadd.f32 %v5762, %v6041
      %v6271 = vadd.f32 %v5763, %v6043
      %v6272 = vadd.f32 %v5764, %v6046
      %v6273 = vadd.f32 %v5765, %v6048
      %v6274 = vadd.f32 %v5766, %v6050
      %v6275 = vadd.f32 %v5767, %v6053
      %v6276 = vadd.f32 %v5768, %v6055
      %v6277 = vadd.f32 %v5769, %v6057
      %v6278 = vadd.f32 %v5770, %v6060
      %v6279 = vadd.f32 %v5771, %v6062
      %v6280 = vadd.f32 %v5772, %v6064
      %v6281 = vadd.f32 %v5773, %v6067
      %v6282 = vadd.f32 %v5774, %v6069
      %v6283 = vadd.f32 %v5775, %v6071
      %v6284 = vadd.f32 %v5776, %v6074
      %v6285 = vadd.f32 %v5777, %v6076
      %v6286 = vadd.f32 %v5778, %v6078
      %v6287 = vadd.f32 %v5779, %v6081
      %v6288 = vadd.f32 %v5780, %v6083
      %v6289 = vadd.f32 %v5781, %v6085
      %v6290 = vadd.f32 %v5782, %v6088
      %v6291 = vadd.f32 %v5783, %v6090
      %v6292 = vadd.f32 %v5784, %v6092
      %v6293 = vadd.f32 %v5785, %v6095
      %v6294 = vadd.f32 %v5786, %v6097
      %v6295 = vadd.f32 %v5787, %v6099
      %v6296 = vadd.f32 %v5788, %v6102
      %v6297 = vadd.f32 %v5789, %v6104
      %v6298 = vadd.f32 %v5790, %v6106
      %v6299 = vadd.f32 %v5791, %v6109
      %v6300 = vadd.f32 %v5792, %v6111
      %v6301 = vadd.f32 %v5793, %v6113
      %v6302 = vadd.f32 %v5794, %v6116
      %v6303 = vadd.f32 %v5795, %v6118
      %v6304 = vadd.f32 %v5796, %v6120
      %v6305 = vadd.f32 %v5797, %v6123
      %v6306 = vadd.f32 %v5798, %v6125
      %v6307 = vadd.f32 %v5799, %v6127
      %v6308 = vadd.f32 %v5800, %v6130
      %v6309 = vadd.f32 %v5801, %v6132
      %v6310 = vadd.f32 %v5802, %v6134
      %v6311 = vadd.f32 %v5803, %v6137
      %v6312 = vadd.f32 %v5804, %v6139
      %v6313 = vadd.f32 %v5805, %v6141
      %v6314 = vadd.f32 %v5806, %v6144
      %v6315 = vadd.f32 %v5807, %v6146
      %v6316 = vadd.f32 %v5808, %v6148
      %v6317 = vadd.f32 %v5809, %v6151
      %v6318 = vadd.f32 %v5810, %v6153
      %v6319 = vadd.f32 %v5811, %v6155
      %v6320 = vadd.f32 %v5812, %v6158
      %v6321 = vadd.f32 %v5813, %v6160
      %v6322 = vadd.f32 %v5814, %v6162
      %v6323 = vadd.f32 %v5815, %v6165
      %v6324 = vadd.f32 %v5816, %v6167
      %v6325 = vadd.f32 %v5817, %v6169
      %v6326 = vadd.f32 %v5818, %v6172
      %v6327 = vadd.f32 %v5819, %v6174
      %v6328 = vadd.f32 %v5820, %v6176
      %v6329 = vadd.f32 %v5821, %v6179
      %v6330 = vadd.f32 %v5822, %v6181
      %v6331 = vadd.f32 %v5823, %v6183
      %v6332 = vadd.f32 %v5824, %v6186
      %v6333 = vadd.f32 %v5825, %v6188
      %v6334 = vadd.f32 %v5826, %v6190
      %v6335 = vlaneseq
      %v6336 = vshrl.u32 %v6335, 7
      %v6337 = vsub.s32 5, %v6336
      %v6338 = vrot.slane %v284, %v6337
      %v6339 = vmul.f32 %v320, %v6338
      %v6340 = vmul.f32 %v325, %v6338
      %v6341 = vmul.f32 %v330, %v6338
      %v6342 = vmul.f32 %v808, %v6338
      %v6343 = vmul.f32 %v335, %v6338
      %v6344 = vmul.f32 %v340, %v6338
      %v6345 = vmul.f32 %v345, %v6338
      %v6346 = vmul.f32 %v813, %v6338
      %v6347 = vmul.f32 %v350, %v6338
      %v6348 = vmul.f32 %v355, %v6338
      %v6349 = vmul.f32 %v360, %v6338
      %v6350 = vmul.f32 %v818, %v6338
      %v6351 = vmul.f32 %v365, %v6338
      %v6352 = vmul.f32 %v370, %v6338
      %v6353 = vmul.f32 %v375, %v6338
      %v6354 = vmul.f32 %v823, %v6338
      %v6355 = vmul.f32 %v380, %v6338
      %v6356 = vmul.f32 %v385, %v6338
      %v6357 = vmul.f32 %v390, %v6338
      %v6358 = vmul.f32 %v828, %v6338
      %v6359 = vmul.f32 %v395, %v6338
      %v6360 = vmul.f32 %v400, %v6338
      %v6361 = vmul.f32 %v405, %v6338
      %v6362 = vmul.f32 %v833, %v6338
      %v6363 = vmul.f32 %v410, %v6338
      %v6364 = vmul.f32 %v415, %v6338
      %v6365 = vmul.f32 %v420, %v6338
      %v6366 = vmul.f32 %v838, %v6338
      %v6367 = vmul.f32 %v425, %v6338
      %v6368 = vmul.f32 %v430, %v6338
      %v6369 = vmul.f32 %v435, %v6338
      %v6370 = vmul.f32 %v843, %v6338
      %v6371 = vmul.f32 %v440, %v6338
      %v6372 = vmul.f32 %v445, %v6338
      %v6373 = vmul.f32 %v450, %v6338
      %v6374 = vmul.f32 %v848, %v6338
      %v6375 = vmul.f32 %v455, %v6338
      %v6376 = vmul.f32 %v460, %v6338
      %v6377 = vmul.f32 %v465, %v6338
      %v6378 = vmul.f32 %v853, %v6338
      %v6379 = vmul.f32 %v470, %v6338
      %v6380 = vmul.f32 %v475, %v6338
      %v6381 = vmul.f32 %v480, %v6338
      %v6382 = vmul.f32 %v858, %v6338
      %v6383 = vmul.f32 %v485, %v6338
      %v6384 = vmul.f32 %v490, %v6338
      %v6385 = vmul.f32 %v495, %v6338
      %v6386 = vmul.f32 %v863, %v6338
      %v6387 = vmul.f32 %v500, %v6338
      %v6388 = vmul.f32 %v505, %v6338
      %v6389 = vmul.f32 %v510, %v6338
      %v6390 = vmul.f32 %v868, %v6338
      %v6391 = vmul.f32 %v515, %v6338
      %v6392 = vmul.f32 %v520, %v6338
      %v6393 = vmul.f32 %v525, %v6338
      %v6394 = vmul.f32 %v873, %v6338
      %v6395 = vmul.f32 %v530, %v6338
      %v6396 = vmul.f32 %v535, %v6338
      %v6397 = vmul.f32 %v540, %v6338
      %v6398 = vmul.f32 %v878, %v6338
      %v6399 = vmul.f32 %v545, %v6338
      %v6400 = vmul.f32 %v550, %v6338
      %v6401 = vmul.f32 %v555, %v6338
      %v6402 = vmul.f32 %v883, %v6338
      %v6403 = vmul.f32 %v560, %v6338
      %v6404 = vmul.f32 %v565, %v6338
      %v6405 = vmul.f32 %v570, %v6338
      %v6406 = vmul.f32 %v888, %v6338
      %v6407 = vmul.f32 %v575, %v6338
      %v6408 = vmul.f32 %v580, %v6338
      %v6409 = vmul.f32 %v585, %v6338
      %v6410 = vmul.f32 %v893, %v6338
      %v6411 = vmul.f32 %v590, %v6338
      %v6412 = vmul.f32 %v595, %v6338
      %v6413 = vmul.f32 %v600, %v6338
      %v6414 = vmul.f32 %v898, %v6338
      %v6415 = vmul.f32 %v605, %v6338
      %v6416 = vmul.f32 %v610, %v6338
      %v6417 = vmul.f32 %v615, %v6338
      %v6418 = vmul.f32 %v903, %v6338
      %v6419 = vmul.f32 %v620, %v6338
      %v6420 = vmul.f32 %v625, %v6338
      %v6421 = vmul.f32 %v630, %v6338
      %v6422 = vmul.f32 %v908, %v6338
      %v6423 = vmul.f32 %v635, %v6338
      %v6424 = vmul.f32 %v640, %v6338
      %v6425 = vmul.f32 %v645, %v6338
      %v6426 = vmul.f32 %v913, %v6338
      %v6427 = vmul.f32 %v2954, %v6338
      %v6428 = vmul.f32 %v2959, %v6338
      %v6429 = vmul.f32 %v2964, %v6338
      %v6430 = vmul.f32 %v3117, %v6338
      %v6431 = vmul.f32 %v5154, %v6338
      %v6432 = vmul.f32 %v5159, %v6338
      %v6433 = vmul.f32 %v5164, %v6338
      %v6434 = vmul.f32 %v5317, %v6338
      %v6531 = vrot.slane %v6339, 3
      %v6532 = vrot.slane %v6340, 3
      %v6533 = vsel %vm2129, %v6531, %v6532
      %v6534 = vrot.slane %v6341, 3
      %v6535 = vsel %vm2129, %v6532, %v6534
      %v6536 = vrot.slane %v6342, 3
      %v6537 = vsel %vm2129, %v6534, %v6536
      %v6538 = vrot.slane %v6343, 3
      %v6539 = vrot.slane %v6344, 3
      %v6540 = vsel %vm2129, %v6538, %v6539
      %v6541 = vrot.slane %v6345, 3
      %v6542 = vsel %vm2129, %v6539, %v6541
      %v6543 = vrot.slane %v6346, 3
      %v6544 = vsel %vm2129, %v6541, %v6543
      %v6545 = vrot.slane %v6347, 3
      %v6546 = vrot.slane %v6348, 3
      %v6547 = vsel %vm2129, %v6545, %v6546
      %v6548 = vrot.slane %v6349, 3
      %v6549 = vsel %vm2129, %v6546, %v6548
      %v6550 = vrot.slane %v6350, 3
      %v6551 = vsel %vm2129, %v6548, %v6550
      %v6552 = vrot.slane %v6351, 3
      %v6553 = vrot.slane %v6352, 3
      %v6554 = vsel %vm2129, %v6552, %v6553
      %v6555 = vrot.slane %v6353, 3
      %v6556 = vsel %vm2129, %v6553, %v6555
      %v6557 = vrot.slane %v6354, 3
      %v6558 = vsel %vm2129, %v6555, %v6557
      %v6559 = vrot.slane %v6355, 3
      %v6560 = vrot.slane %v6356, 3
      %v6561 = vsel %vm2129, %v6559, %v6560
      %v6562 = vrot.slane %v6357, 3
      %v6563 = vsel %vm2129, %v6560, %v6562
      %v6564 = vrot.slane %v6358, 3
      %v6565 = vsel %vm2129, %v6562, %v6564
      %v6566 = vrot.slane %v6359, 3
      %v6567 = vrot.slane %v6360, 3
      %v6568 = vsel %vm2129, %v6566, %v6567
      %v6569 = vrot.slane %v6361, 3
      %v6570 = vsel %vm2129, %v6567, %v6569
      %v6571 = vrot.slane %v6362, 3
      %v6572 = vsel %vm2129, %v6569, %v6571
      %v6573 = vrot.slane %v6363, 3
      %v6574 = vrot.slane %v6364, 3
      %v6575 = vsel %vm2129, %v6573, %v6574
      %v6576 = vrot.slane %v6365, 3
      %v6577 = vsel %vm2129, %v6574, %v6576
      %v6578 = vrot.slane %v6366, 3
      %v6579 = vsel %vm2129, %v6576, %v6578
      %v6580 = vrot.slane %v6367, 3
      %v6581 = vrot.slane %v6368, 3
      %v6582 = vsel %vm2129, %v6580, %v6581
      %v6583 = vrot.slane %v6369, 3
      %v6584 = vsel %vm2129, %v6581, %v6583
      %v6585 = vrot.slane %v6370, 3
      %v6586 = vsel %vm2129, %v6583, %v6585
      %v6587 = vrot.slane %v6371, 3
      %v6588 = vrot.slane %v6372, 3
      %v6589 = vsel %vm2129, %v6587, %v6588
      %v6590 = vrot.slane %v6373, 3
      %v6591 = vsel %vm2129, %v6588, %v6590
      %v6592 = vrot.slane %v6374, 3
      %v6593 = vsel %vm2129, %v6590, %v6592
      %v6594 = vrot.slane %v6375, 3
      %v6595 = vrot.slane %v6376, 3
      %v6596 = vsel %vm2129, %v6594, %v6595
      %v6597 = vrot.slane %v6377, 3
      %v6598 = vsel %vm2129, %v6595, %v6597
      %v6599 = vrot.slane %v6378, 3
      %v6600 = vsel %vm2129, %v6597, %v6599
      %v6601 = vrot.slane %v6379, 3
      %v6602 = vrot.slane %v6380, 3
      %v6603 = vsel %vm2129, %v6601, %v6602
      %v6604 = vrot.slane %v6381, 3
      %v6605 = vsel %vm2129, %v6602, %v6604
      %v6606 = vrot.slane %v6382, 3
      %v6607 = vsel %vm2129, %v6604, %v6606
      %v6608 = vrot.slane %v6383, 3
      %v6609 = vrot.slane %v6384, 3
      %v6610 = vsel %vm2129, %v6608, %v6609
      %v6611 = vrot.slane %v6385, 3
      %v6612 = vsel %vm2129, %v6609, %v6611
      %v6613 = vrot.slane %v6386, 3
      %v6614 = vsel %vm2129, %v6611, %v6613
      %v6615 = vrot.slane %v6387, 3
      %v6616 = vrot.slane %v6388, 3
      %v6617 = vsel %vm2129, %v6615, %v6616
      %v6618 = vrot.slane %v6389, 3
      %v6619 = vsel %vm2129, %v6616, %v6618
      %v6620 = vrot.slane %v6390, 3
      %v6621 = vsel %vm2129, %v6618, %v6620
      %v6622 = vrot.slane %v6391, 3
      %v6623 = vrot.slane %v6392, 3
      %v6624 = vsel %vm2129, %v6622, %v6623
      %v6625 = vrot.slane %v6393, 3
      %v6626 = vsel %vm2129, %v6623, %v6625
      %v6627 = vrot.slane %v6394, 3
      %v6628 = vsel %vm2129, %v6625, %v6627
      %v6629 = vrot.slane %v6395, 3
      %v6630 = vrot.slane %v6396, 3
      %v6631 = vsel %vm2129, %v6629, %v6630
      %v6632 = vrot.slane %v6397, 3
      %v6633 = vsel %vm2129, %v6630, %v6632
      %v6634 = vrot.slane %v6398, 3
      %v6635 = vsel %vm2129, %v6632, %v6634
      %v6636 = vrot.slane %v6399, 3
      %v6637 = vrot.slane %v6400, 3
      %v6638 = vsel %vm2129, %v6636, %v6637
      %v6639 = vrot.slane %v6401, 3
      %v6640 = vsel %vm2129, %v6637, %v6639
      %v6641 = vrot.slane %v6402, 3
      %v6642 = vsel %vm2129, %v6639, %v6641
      %v6643 = vrot.slane %v6403, 3
      %v6644 = vrot.slane %v6404, 3
      %v6645 = vsel %vm2129, %v6643, %v6644
      %v6646 = vrot.slane %v6405, 3
      %v6647 = vsel %vm2129, %v6644, %v6646
      %v6648 = vrot.slane %v6406, 3
      %v6649 = vsel %vm2129, %v6646, %v6648
      %v6650 = vrot.slane %v6407, 3
      %v6651 = vrot.slane %v6408, 3
      %v6652 = vsel %vm2129, %v6650, %v6651
      %v6653 = vrot.slane %v6409, 3
      %v6654 = vsel %vm2129, %v6651, %v6653
      %v6655 = vrot.slane %v6410, 3
      %v6656 = vsel %vm2129, %v6653, %v6655
      %v6657 = vrot.slane %v6411, 3
      %v6658 = vrot.slane %v6412, 3
      %v6659 = vsel %vm2129, %v6657, %v6658
      %v6660 = vrot.slane %v6413, 3
      %v6661 = vsel %vm2129, %v6658, %v6660
      %v6662 = vrot.slane %v6414, 3
      %v6663 = vsel %vm2129, %v6660, %v6662
      %v6664 = vrot.slane %v6415, 3
      %v6665 = vrot.slane %v6416, 3
      %v6666 = vsel %vm2129, %v6664, %v6665
      %v6667 = vrot.slane %v6417, 3
      %v6668 = vsel %vm2129, %v6665, %v6667
      %v6669 = vrot.slane %v6418, 3
      %v6670 = vsel %vm2129, %v6667, %v6669
      %v6671 = vrot.slane %v6419, 3
      %v6672 = vrot.slane %v6420, 3
      %v6673 = vsel %vm2129, %v6671, %v6672
      %v6674 = vrot.slane %v6421, 3
      %v6675 = vsel %vm2129, %v6672, %v6674
      %v6676 = vrot.slane %v6422, 3
      %v6677 = vsel %vm2129, %v6674, %v6676
      %v6678 = vrot.slane %v6423, 3
      %v6679 = vrot.slane %v6424, 3
      %v6680 = vsel %vm2129, %v6678, %v6679
      %v6681 = vrot.slane %v6425, 3
      %v6682 = vsel %vm2129, %v6679, %v6681
      %v6683 = vrot.slane %v6426, 3
      %v6684 = vsel %vm2129, %v6681, %v6683
      %v6685 = vrot.slane %v6427, 3
      %v6686 = vrot.slane %v6428, 3
      %v6687 = vsel %vm2129, %v6685, %v6686
      %v6688 = vrot.slane %v6429, 3
      %v6689 = vsel %vm2129, %v6686, %v6688
      %v6690 = vrot.slane %v6430, 3
      %v6691 = vsel %vm2129, %v6688, %v6690
      %v6692 = vrot.slane %v6431, 3
      %v6693 = vrot.slane %v6432, 3
      %v6694 = vsel %vm2129, %v6692, %v6693
      %v6695 = vrot.slane %v6433, 3
      %v6696 = vsel %vm2129, %v6693, %v6695
      %v6697 = vrot.slane %v6434, 3
      %v6698 = vsel %vm2129, %v6695, %v6697
      %v6771 = vadd.f32 %v6263, %v6533
      %v6772 = vadd.f32 %v6264, %v6535
      %v6773 = vadd.f32 %v6265, %v6537
      %v6774 = vadd.f32 %v6266, %v6540
      %v6775 = vadd.f32 %v6267, %v6542
      %v6776 = vadd.f32 %v6268, %v6544
      %v6777 = vadd.f32 %v6269, %v6547
      %v6778 = vadd.f32 %v6270, %v6549
      %v6779 = vadd.f32 %v6271, %v6551
      %v6780 = vadd.f32 %v6272, %v6554
      %v6781 = vadd.f32 %v6273, %v6556
      %v6782 = vadd.f32 %v6274, %v6558
      %v6783 = vadd.f32 %v6275, %v6561
      %v6784 = vadd.f32 %v6276, %v6563
      %v6785 = vadd.f32 %v6277, %v6565
      %v6786 = vadd.f32 %v6278, %v6568
      %v6787 = vadd.f32 %v6279, %v6570
      %v6788 = vadd.f32 %v6280, %v6572
      %v6789 = vadd.f32 %v6281, %v6575
      %v6790 = vadd.f32 %v6282, %v6577
      %v6791 = vadd.f32 %v6283, %v6579
      %v6792 = vadd.f32 %v6284, %v6582
      %v6793 = vadd.f32 %v6285, %v6584
      %v6794 = vadd.f32 %v6286, %v6586
      %v6795 = vadd.f32 %v6287, %v6589
      %v6796 = vadd.f32 %v6288, %v6591
      %v6797 = vadd.f32 %v6289, %v6593
      %v6798 = vadd.f32 %v6290, %v6596
      %v6799 = vadd.f32 %v6291, %v6598
      %v6800 = vadd.f32 %v6292, %v6600
      %v6801 = vadd.f32 %v6293, %v6603
      %v6802 = vadd.f32 %v6294, %v6605
      %v6803 = vadd.f32 %v6295, %v6607
      %v6804 = vadd.f32 %v6296, %v6610
      %v6805 = vadd.f32 %v6297, %v6612
      %v6806 = vadd.f32 %v6298, %v6614
      %v6807 = vadd.f32 %v6299, %v6617
      %v6808 = vadd.f32 %v6300, %v6619
      %v6809 = vadd.f32 %v6301, %v6621
      %v6810 = vadd.f32 %v6302, %v6624
      %v6811 = vadd.f32 %v6303, %v6626
      %v6812 = vadd.f32 %v6304, %v6628
      %v6813 = vadd.f32 %v6305, %v6631
      %v6814 = vadd.f32 %v6306, %v6633
      %v6815 = vadd.f32 %v6307, %v6635
      %v6816 = vadd.f32 %v6308, %v6638
      %v6817 = vadd.f32 %v6309, %v6640
      %v6818 = vadd.f32 %v6310, %v6642
      %v6819 = vadd.f32 %v6311, %v6645
      %v6820 = vadd.f32 %v6312, %v6647
      %v6821 = vadd.f32 %v6313, %v6649
      %v6822 = vadd.f32 %v6314, %v6652
      %v6823 = vadd.f32 %v6315, %v6654
      %v6824 = vadd.f32 %v6316, %v6656
      %v6825 = vadd.f32 %v6317, %v6659
      %v6826 = vadd.f32 %v6318, %v6661
      %v6827 = vadd.f32 %v6319, %v6663
      %v6828 = vadd.f32 %v6320, %v6666
      %v6829 = vadd.f32 %v6321, %v6668
      %v6830 = vadd.f32 %v6322, %v6670
      %v6831 = vadd.f32 %v6323, %v6673
      %v6832 = vadd.f32 %v6324, %v6675
      %v6833 = vadd.f32 %v6325, %v6677
      %v6834 = vadd.f32 %v6326, %v6680
      %v6835 = vadd.f32 %v6327, %v6682
      %v6836 = vadd.f32 %v6328, %v6684
      %v6837 = vadd.f32 %v6329, %v6687
      %v6838 = vadd.f32 %v6330, %v6689
      %v6839 = vadd.f32 %v6331, %v6691
      %v6840 = vadd.f32 %v6332, %v6694
      %v6841 = vadd.f32 %v6333, %v6696
      %v6842 = vadd.f32 %v6334, %v6698
      %v6843 = vlaneseq
      %v6844 = vshrl.u32 %v6843, 7
      %v6845 = vsub.s32 6, %v6844
      %v6846 = vrot.slane %v284, %v6845
      %v6847 = vmul.f32 %v320, %v6846
      %v6848 = vmul.f32 %v325, %v6846
      %v6849 = vmul.f32 %v330, %v6846
      %v6850 = vmul.f32 %v808, %v6846
      %v6851 = vmul.f32 %v335, %v6846
      %v6852 = vmul.f32 %v340, %v6846
      %v6853 = vmul.f32 %v345, %v6846
      %v6854 = vmul.f32 %v813, %v6846
      %v6855 = vmul.f32 %v350, %v6846
      %v6856 = vmul.f32 %v355, %v6846
      %v6857 = vmul.f32 %v360, %v6846
      %v6858 = vmul.f32 %v818, %v6846
      %v6859 = vmul.f32 %v365, %v6846
      %v6860 = vmul.f32 %v370, %v6846
      %v6861 = vmul.f32 %v375, %v6846
      %v6862 = vmul.f32 %v823, %v6846
      %v6863 = vmul.f32 %v380, %v6846
      %v6864 = vmul.f32 %v385, %v6846
      %v6865 = vmul.f32 %v390, %v6846
      %v6866 = vmul.f32 %v828, %v6846
      %v6867 = vmul.f32 %v395, %v6846
      %v6868 = vmul.f32 %v400, %v6846
      %v6869 = vmul.f32 %v405, %v6846
      %v6870 = vmul.f32 %v833, %v6846
      %v6871 = vmul.f32 %v410, %v6846
      %v6872 = vmul.f32 %v415, %v6846
      %v6873 = vmul.f32 %v420, %v6846
      %v6874 = vmul.f32 %v838, %v6846
      %v6875 = vmul.f32 %v425, %v6846
      %v6876 = vmul.f32 %v430, %v6846
      %v6877 = vmul.f32 %v435, %v6846
      %v6878 = vmul.f32 %v843, %v6846
      %v6879 = vmul.f32 %v440, %v6846
      %v6880 = vmul.f32 %v445, %v6846
      %v6881 = vmul.f32 %v450, %v6846
      %v6882 = vmul.f32 %v848, %v6846
      %v6883 = vmul.f32 %v455, %v6846
      %v6884 = vmul.f32 %v460, %v6846
      %v6885 = vmul.f32 %v465, %v6846
      %v6886 = vmul.f32 %v853, %v6846
      %v6887 = vmul.f32 %v470, %v6846
      %v6888 = vmul.f32 %v475, %v6846
      %v6889 = vmul.f32 %v480, %v6846
      %v6890 = vmul.f32 %v858, %v6846
      %v6891 = vmul.f32 %v485, %v6846
      %v6892 = vmul.f32 %v490, %v6846
      %v6893 = vmul.f32 %v495, %v6846
      %v6894 = vmul.f32 %v863, %v6846
      %v6895 = vmul.f32 %v500, %v6846
      %v6896 = vmul.f32 %v505, %v6846
      %v6897 = vmul.f32 %v510, %v6846
      %v6898 = vmul.f32 %v868, %v6846
      %v6899 = vmul.f32 %v515, %v6846
      %v6900 = vmul.f32 %v520, %v6846
      %v6901 = vmul.f32 %v525, %v6846
      %v6902 = vmul.f32 %v873, %v6846
      %v6903 = vmul.f32 %v530, %v6846
      %v6904 = vmul.f32 %v535, %v6846
      %v6905 = vmul.f32 %v540, %v6846
      %v6906 = vmul.f32 %v878, %v6846
      %v6907 = vmul.f32 %v545, %v6846
      %v6908 = vmul.f32 %v550, %v6846
      %v6909 = vmul.f32 %v555, %v6846
      %v6910 = vmul.f32 %v883, %v6846
      %v6911 = vmul.f32 %v560, %v6846
      %v6912 = vmul.f32 %v565, %v6846
      %v6913 = vmul.f32 %v570, %v6846
      %v6914 = vmul.f32 %v888, %v6846
      %v6915 = vmul.f32 %v575, %v6846
      %v6916 = vmul.f32 %v580, %v6846
      %v6917 = vmul.f32 %v585, %v6846
      %v6918 = vmul.f32 %v893, %v6846
      %v6919 = vmul.f32 %v590, %v6846
      %v6920 = vmul.f32 %v595, %v6846
      %v6921 = vmul.f32 %v600, %v6846
      %v6922 = vmul.f32 %v898, %v6846
      %v6923 = vmul.f32 %v605, %v6846
      %v6924 = vmul.f32 %v610, %v6846
      %v6925 = vmul.f32 %v615, %v6846
      %v6926 = vmul.f32 %v903, %v6846
      %v6927 = vmul.f32 %v620, %v6846
      %v6928 = vmul.f32 %v625, %v6846
      %v6929 = vmul.f32 %v630, %v6846
      %v6930 = vmul.f32 %v908, %v6846
      %v6931 = vmul.f32 %v635, %v6846
      %v6932 = vmul.f32 %v640, %v6846
      %v6933 = vmul.f32 %v645, %v6846
      %v6934 = vmul.f32 %v913, %v6846
      %v6935 = vmul.f32 %v2954, %v6846
      %v6936 = vmul.f32 %v2959, %v6846
      %v6937 = vmul.f32 %v2964, %v6846
      %v6938 = vmul.f32 %v3117, %v6846
      %v6939 = vmul.f32 %v5154, %v6846
      %v6940 = vmul.f32 %v5159, %v6846
      %v6941 = vmul.f32 %v5164, %v6846
      %v6942 = vmul.f32 %v5317, %v6846
      %v7039 = vrot.slane %v6847, 4
      %v7040 = vrot.slane %v6848, 4
      %v7041 = vsel %vm2638, %v7039, %v7040
      %v7042 = vrot.slane %v6849, 4
      %v7043 = vsel %vm2638, %v7040, %v7042
      %v7044 = vrot.slane %v6850, 4
      %v7045 = vsel %vm2638, %v7042, %v7044
      %v7046 = vrot.slane %v6851, 4
      %v7047 = vrot.slane %v6852, 4
      %v7048 = vsel %vm2638, %v7046, %v7047
      %v7049 = vrot.slane %v6853, 4
      %v7050 = vsel %vm2638, %v7047, %v7049
      %v7051 = vrot.slane %v6854, 4
      %v7052 = vsel %vm2638, %v7049, %v7051
      %v7053 = vrot.slane %v6855, 4
      %v7054 = vrot.slane %v6856, 4
      %v7055 = vsel %vm2638, %v7053, %v7054
      %v7056 = vrot.slane %v6857, 4
      %v7057 = vsel %vm2638, %v7054, %v7056
      %v7058 = vrot.slane %v6858, 4
      %v7059 = vsel %vm2638, %v7056, %v7058
      %v7060 = vrot.slane %v6859, 4
      %v7061 = vrot.slane %v6860, 4
      %v7062 = vsel %vm2638, %v7060, %v7061
      %v7063 = vrot.slane %v6861, 4
      %v7064 = vsel %vm2638, %v7061, %v7063
      %v7065 = vrot.slane %v6862, 4
      %v7066 = vsel %vm2638, %v7063, %v7065
      %v7067 = vrot.slane %v6863, 4
      %v7068 = vrot.slane %v6864, 4
      %v7069 = vsel %vm2638, %v7067, %v7068
      %v7070 = vrot.slane %v6865, 4
      %v7071 = vsel %vm2638, %v7068, %v7070
      %v7072 = vrot.slane %v6866, 4
      %v7073 = vsel %vm2638, %v7070, %v7072
      %v7074 = vrot.slane %v6867, 4
      %v7075 = vrot.slane %v6868, 4
      %v7076 = vsel %vm2638, %v7074, %v7075
      %v7077 = vrot.slane %v6869, 4
      %v7078 = vsel %vm2638, %v7075, %v7077
      %v7079 = vrot.slane %v6870, 4
      %v7080 = vsel %vm2638, %v7077, %v7079
      %v7081 = vrot.slane %v6871, 4
      %v7082 = vrot.slane %v6872, 4
      %v7083 = vsel %vm2638, %v7081, %v7082
      %v7084 = vrot.slane %v6873, 4
      %v7085 = vsel %vm2638, %v7082, %v7084
      %v7086 = vrot.slane %v6874, 4
      %v7087 = vsel %vm2638, %v7084, %v7086
      %v7088 = vrot.slane %v6875, 4
      %v7089 = vrot.slane %v6876, 4
      %v7090 = vsel %vm2638, %v7088, %v7089
      %v7091 = vrot.slane %v6877, 4
      %v7092 = vsel %vm2638, %v7089, %v7091
      %v7093 = vrot.slane %v6878, 4
      %v7094 = vsel %vm2638, %v7091, %v7093
      %v7095 = vrot.slane %v6879, 4
      %v7096 = vrot.slane %v6880, 4
      %v7097 = vsel %vm2638, %v7095, %v7096
      %v7098 = vrot.slane %v6881, 4
      %v7099 = vsel %vm2638, %v7096, %v7098
      %v7100 = vrot.slane %v6882, 4
      %v7101 = vsel %vm2638, %v7098, %v7100
      %v7102 = vrot.slane %v6883, 4
      %v7103 = vrot.slane %v6884, 4
      %v7104 = vsel %vm2638, %v7102, %v7103
      %v7105 = vrot.slane %v6885, 4
      %v7106 = vsel %vm2638, %v7103, %v7105
      %v7107 = vrot.slane %v6886, 4
      %v7108 = vsel %vm2638, %v7105, %v7107
      %v7109 = vrot.slane %v6887, 4
      %v7110 = vrot.slane %v6888, 4
      %v7111 = vsel %vm2638, %v7109, %v7110
      %v7112 = vrot.slane %v6889, 4
      %v7113 = vsel %vm2638, %v7110, %v7112
      %v7114 = vrot.slane %v6890, 4
      %v7115 = vsel %vm2638, %v7112, %v7114
      %v7116 = vrot.slane %v6891, 4
      %v7117 = vrot.slane %v6892, 4
      %v7118 = vsel %vm2638, %v7116, %v7117
      %v7119 = vrot.slane %v6893, 4
      %v7120 = vsel %vm2638, %v7117, %v7119
      %v7121 = vrot.slane %v6894, 4
      %v7122 = vsel %vm2638, %v7119, %v7121
      %v7123 = vrot.slane %v6895, 4
      %v7124 = vrot.slane %v6896, 4
      %v7125 = vsel %vm2638, %v7123, %v7124
      %v7126 = vrot.slane %v6897, 4
      %v7127 = vsel %vm2638, %v7124, %v7126
      %v7128 = vrot.slane %v6898, 4
      %v7129 = vsel %vm2638, %v7126, %v7128
      %v7130 = vrot.slane %v6899, 4
      %v7131 = vrot.slane %v6900, 4
      %v7132 = vsel %vm2638, %v7130, %v7131
      %v7133 = vrot.slane %v6901, 4
      %v7134 = vsel %vm2638, %v7131, %v7133
      %v7135 = vrot.slane %v6902, 4
      %v7136 = vsel %vm2638, %v7133, %v7135
      %v7137 = vrot.slane %v6903, 4
      %v7138 = vrot.slane %v6904, 4
      %v7139 = vsel %vm2638, %v7137, %v7138
      %v7140 = vrot.slane %v6905, 4
      %v7141 = vsel %vm2638, %v7138, %v7140
      %v7142 = vrot.slane %v6906, 4
      %v7143 = vsel %vm2638, %v7140, %v7142
      %v7144 = vrot.slane %v6907, 4
      %v7145 = vrot.slane %v6908, 4
      %v7146 = vsel %vm2638, %v7144, %v7145
      %v7147 = vrot.slane %v6909, 4
      %v7148 = vsel %vm2638, %v7145, %v7147
      %v7149 = vrot.slane %v6910, 4
      %v7150 = vsel %vm2638, %v7147, %v7149
      %v7151 = vrot.slane %v6911, 4
      %v7152 = vrot.slane %v6912, 4
      %v7153 = vsel %vm2638, %v7151, %v7152
      %v7154 = vrot.slane %v6913, 4
      %v7155 = vsel %vm2638, %v7152, %v7154
      %v7156 = vrot.slane %v6914, 4
      %v7157 = vsel %vm2638, %v7154, %v7156
      %v7158 = vrot.slane %v6915, 4
      %v7159 = vrot.slane %v6916, 4
      %v7160 = vsel %vm2638, %v7158, %v7159
      %v7161 = vrot.slane %v6917, 4
      %v7162 = vsel %vm2638, %v7159, %v7161
      %v7163 = vrot.slane %v6918, 4
      %v7164 = vsel %vm2638, %v7161, %v7163
      %v7165 = vrot.slane %v6919, 4
      %v7166 = vrot.slane %v6920, 4
      %v7167 = vsel %vm2638, %v7165, %v7166
      %v7168 = vrot.slane %v6921, 4
      %v7169 = vsel %vm2638, %v7166, %v7168
      %v7170 = vrot.slane %v6922, 4
      %v7171 = vsel %vm2638, %v7168, %v7170
      %v7172 = vrot.slane %v6923, 4
      %v7173 = vrot.slane %v6924, 4
      %v7174 = vsel %vm2638, %v7172, %v7173
      %v7175 = vrot.slane %v6925, 4
      %v7176 = vsel %vm2638, %v7173, %v7175
      %v7177 = vrot.slane %v6926, 4
      %v7178 = vsel %vm2638, %v7175, %v7177
      %v7179 = vrot.slane %v6927, 4
      %v7180 = vrot.slane %v6928, 4
      %v7181 = vsel %vm2638, %v7179, %v7180
      %v7182 = vrot.slane %v6929, 4
      %v7183 = vsel %vm2638, %v7180, %v7182
      %v7184 = vrot.slane %v6930, 4
      %v7185 = vsel %vm2638, %v7182, %v7184
      %v7186 = vrot.slane %v6931, 4
      %v7187 = vrot.slane %v6932, 4
      %v7188 = vsel %vm2638, %v7186, %v7187
      %v7189 = vrot.slane %v6933, 4
      %v7190 = vsel %vm2638, %v7187, %v7189
      %v7191 = vrot.slane %v6934, 4
      %v7192 = vsel %vm2638, %v7189, %v7191
      %v7193 = vrot.slane %v6935, 4
      %v7194 = vrot.slane %v6936, 4
      %v7195 = vsel %vm2638, %v7193, %v7194
      %v7196 = vrot.slane %v6937, 4
      %v7197 = vsel %vm2638, %v7194, %v7196
      %v7198 = vrot.slane %v6938, 4
      %v7199 = vsel %vm2638, %v7196, %v7198
      %v7200 = vrot.slane %v6939, 4
      %v7201 = vrot.slane %v6940, 4
      %v7202 = vsel %vm2638, %v7200, %v7201
      %v7203 = vrot.slane %v6941, 4
      %v7204 = vsel %vm2638, %v7201, %v7203
      %v7205 = vrot.slane %v6942, 4
      %v7206 = vsel %vm2638, %v7203, %v7205
      %v7279 = vadd.f32 %v6771, %v7041
      %v7280 = vadd.f32 %v6772, %v7043
      %v7281 = vadd.f32 %v6773, %v7045
      %v7282 = vadd.f32 %v6774, %v7048
      %v7283 = vadd.f32 %v6775, %v7050
      %v7284 = vadd.f32 %v6776, %v7052
      %v7285 = vadd.f32 %v6777, %v7055
      %v7286 = vadd.f32 %v6778, %v7057
      %v7287 = vadd.f32 %v6779, %v7059
      %v7288 = vadd.f32 %v6780, %v7062
      %v7289 = vadd.f32 %v6781, %v7064
      %v7290 = vadd.f32 %v6782, %v7066
      %v7291 = vadd.f32 %v6783, %v7069
      %v7292 = vadd.f32 %v6784, %v7071
      %v7293 = vadd.f32 %v6785, %v7073
      %v7294 = vadd.f32 %v6786, %v7076
      %v7295 = vadd.f32 %v6787, %v7078
      %v7296 = vadd.f32 %v6788, %v7080
      %v7297 = vadd.f32 %v6789, %v7083
      %v7298 = vadd.f32 %v6790, %v7085
      %v7299 = vadd.f32 %v6791, %v7087
      %v7300 = vadd.f32 %v6792, %v7090
      %v7301 = vadd.f32 %v6793, %v7092
      %v7302 = vadd.f32 %v6794, %v7094
      %v7303 = vadd.f32 %v6795, %v7097
      %v7304 = vadd.f32 %v6796, %v7099
      %v7305 = vadd.f32 %v6797, %v7101
      %v7306 = vadd.f32 %v6798, %v7104
      %v7307 = vadd.f32 %v6799, %v7106
      %v7308 = vadd.f32 %v6800, %v7108
      %v7309 = vadd.f32 %v6801, %v7111
      %v7310 = vadd.f32 %v6802, %v7113
      %v7311 = vadd.f32 %v6803, %v7115
      %v7312 = vadd.f32 %v6804, %v7118
      %v7313 = vadd.f32 %v6805, %v7120
      %v7314 = vadd.f32 %v6806, %v7122
      %v7315 = vadd.f32 %v6807, %v7125
      %v7316 = vadd.f32 %v6808, %v7127
      %v7317 = vadd.f32 %v6809, %v7129
      %v7318 = vadd.f32 %v6810, %v7132
      %v7319 = vadd.f32 %v6811, %v7134
      %v7320 = vadd.f32 %v6812, %v7136
      %v7321 = vadd.f32 %v6813, %v7139
      %v7322 = vadd.f32 %v6814, %v7141
      %v7323 = vadd.f32 %v6815, %v7143
      %v7324 = vadd.f32 %v6816, %v7146
      %v7325 = vadd.f32 %v6817, %v7148
      %v7326 = vadd.f32 %v6818, %v7150
      %v7327 = vadd.f32 %v6819, %v7153
      %v7328 = vadd.f32 %v6820, %v7155
      %v7329 = vadd.f32 %v6821, %v7157
      %v7330 = vadd.f32 %v6822, %v7160
      %v7331 = vadd.f32 %v6823, %v7162
      %v7332 = vadd.f32 %v6824, %v7164
      %v7333 = vadd.f32 %v6825, %v7167
      %v7334 = vadd.f32 %v6826, %v7169
      %v7335 = vadd.f32 %v6827, %v7171
      %v7336 = vadd.f32 %v6828, %v7174
      %v7337 = vadd.f32 %v6829, %v7176
      %v7338 = vadd.f32 %v6830, %v7178
      %v7339 = vadd.f32 %v6831, %v7181
      %v7340 = vadd.f32 %v6832, %v7183
      %v7341 = vadd.f32 %v6833, %v7185
      %v7342 = vadd.f32 %v6834, %v7188
      %v7343 = vadd.f32 %v6835, %v7190
      %v7344 = vadd.f32 %v6836, %v7192
      %v7345 = vadd.f32 %v6837, %v7195
      %v7346 = vadd.f32 %v6838, %v7197
      %v7347 = vadd.f32 %v6839, %v7199
      %v7348 = vadd.f32 %v6840, %v7202
      %v7349 = vadd.f32 %v6841, %v7204
      %v7350 = vadd.f32 %v6842, %v7206
      %7352 = vset.pattern.permute.xlu0 0
      %7353 = vperm.xlu0 %7352, %v275
      %v7354 = vpop.permute.xlu0 %7353
      %7357 = vset.pattern.permute.xlu0 0
      %7358 = vperm.xlu0 %7357, %v276
      %v7359 = vpop.permute.xlu0 %7358
      %7362 = vset.pattern.permute.xlu0 0
      %7363 = vperm.xlu0 %7362, %v277
      %v7364 = vpop.permute.xlu0 %7363
      %v7366 = vlaneseq
      %v7367 = vshrl.u32 %v7366, 7
      %v7368 = vsub.s32 7, %v7367
      %v7369 = vrot.slane %v284, %v7368
      %v7370 = vmul.f32 %v335, %v7369
      %v7371 = vmul.f32 %v340, %v7369
      %v7372 = vmul.f32 %v345, %v7369
      %v7373 = vmul.f32 %v350, %v7369
      %v7374 = vmul.f32 %v355, %v7369
      %v7375 = vmul.f32 %v360, %v7369
      %v7376 = vmul.f32 %v365, %v7369
      %v7377 = vmul.f32 %v370, %v7369
      %v7378 = vmul.f32 %v375, %v7369
      %v7379 = vmul.f32 %v380, %v7369
      %v7380 = vmul.f32 %v385, %v7369
      %v7381 = vmul.f32 %v390, %v7369
      %v7382 = vmul.f32 %v395, %v7369
      %v7383 = vmul.f32 %v400, %v7369
      %v7384 = vmul.f32 %v405, %v7369
      %v7385 = vmul.f32 %v410, %v7369
      %v7386 = vmul.f32 %v415, %v7369
      %v7387 = vmul.f32 %v420, %v7369
      %v7388 = vmul.f32 %v425, %v7369
      %v7389 = vmul.f32 %v430, %v7369
      %v7390 = vmul.f32 %v435, %v7369
      %v7391 = vmul.f32 %v440, %v7369
      %v7392 = vmul.f32 %v445, %v7369
      %v7393 = vmul.f32 %v450, %v7369
      %v7394 = vmul.f32 %v455, %v7369
      %v7395 = vmul.f32 %v460, %v7369
      %v7396 = vmul.f32 %v465, %v7369
      %v7397 = vmul.f32 %v470, %v7369
      %v7398 = vmul.f32 %v475, %v7369
      %v7399 = vmul.f32 %v480, %v7369
      %v7400 = vmul.f32 %v485, %v7369
      %v7401 = vmul.f32 %v490, %v7369
      %v7402 = vmul.f32 %v495, %v7369
      %v7403 = vmul.f32 %v500, %v7369
      %v7404 = vmul.f32 %v505, %v7369
      %v7405 = vmul.f32 %v510, %v7369
      %v7406 = vmul.f32 %v515, %v7369
      %v7407 = vmul.f32 %v520, %v7369
      %v7408 = vmul.f32 %v525, %v7369
      %v7409 = vmul.f32 %v530, %v7369
      %v7410 = vmul.f32 %v535, %v7369
      %v7411 = vmul.f32 %v540, %v7369
      %v7412 = vmul.f32 %v545, %v7369
      %v7413 = vmul.f32 %v550, %v7369
      %v7414 = vmul.f32 %v555, %v7369
      %v7415 = vmul.f32 %v560, %v7369
      %v7416 = vmul.f32 %v565, %v7369
      %v7417 = vmul.f32 %v570, %v7369
      %v7418 = vmul.f32 %v575, %v7369
      %v7419 = vmul.f32 %v580, %v7369
      %v7420 = vmul.f32 %v585, %v7369
      %v7421 = vmul.f32 %v590, %v7369
      %v7422 = vmul.f32 %v595, %v7369
      %v7423 = vmul.f32 %v600, %v7369
      %v7424 = vmul.f32 %v605, %v7369
      %v7425 = vmul.f32 %v610, %v7369
      %v7426 = vmul.f32 %v615, %v7369
      %v7427 = vmul.f32 %v620, %v7369
      %v7428 = vmul.f32 %v625, %v7369
      %v7429 = vmul.f32 %v630, %v7369
      %v7430 = vmul.f32 %v635, %v7369
      %v7431 = vmul.f32 %v640, %v7369
      %v7432 = vmul.f32 %v645, %v7369
      %v7433 = vmul.f32 %v2954, %v7369
      %v7434 = vmul.f32 %v2959, %v7369
      %v7435 = vmul.f32 %v2964, %v7369
      %v7436 = vmul.f32 %v5154, %v7369
      %v7437 = vmul.f32 %v5159, %v7369
      %v7438 = vmul.f32 %v5164, %v7369
      %v7439 = vmul.f32 %v7354, %v7369
      %v7440 = vmul.f32 %v7359, %v7369
      %v7441 = vmul.f32 %v7364, %v7369
      %v7442 = vadd.f32 %v7279, %v7370
      %v7443 = vadd.f32 %v7280, %v7371
      %v7444 = vadd.f32 %v7281, %v7372
      %v7445 = vadd.f32 %v7282, %v7373
      %v7446 = vadd.f32 %v7283, %v7374
      %v7447 = vadd.f32 %v7284, %v7375
      %v7448 = vadd.f32 %v7285, %v7376
      %v7449 = vadd.f32 %v7286, %v7377
      %v7450 = vadd.f32 %v7287, %v7378
      %v7451 = vadd.f32 %v7288, %v7379
      %v7452 = vadd.f32 %v7289, %v7380
      %v7453 = vadd.f32 %v7290, %v7381
      %v7454 = vadd.f32 %v7291, %v7382
      %v7455 = vadd.f32 %v7292, %v7383
      %v7456 = vadd.f32 %v7293, %v7384
      %v7457 = vadd.f32 %v7294, %v7385
      %v7458 = vadd.f32 %v7295, %v7386
      %v7459 = vadd.f32 %v7296, %v7387
      %v7460 = vadd.f32 %v7297, %v7388
      %v7461 = vadd.f32 %v7298, %v7389
      %v7462 = vadd.f32 %v7299, %v7390
      %v7463 = vadd.f32 %v7300, %v7391
      %v7464 = vadd.f32 %v7301, %v7392
      %v7465 = vadd.f32 %v7302, %v7393
      %v7466 = vadd.f32 %v7303, %v7394
      %v7467 = vadd.f32 %v7304, %v7395
      %v7468 = vadd.f32 %v7305, %v7396
      %v7469 = vadd.f32 %v7306, %v7397
      %v7470 = vadd.f32 %v7307, %v7398
      %v7471 = vadd.f32 %v7308, %v7399
      %v7472 = vadd.f32 %v7309, %v7400
      %v7473 = vadd.f32 %v7310, %v7401
      %v7474 = vadd.f32 %v7311, %v7402
      %v7475 = vadd.f32 %v7312, %v7403
      %v7476 = vadd.f32 %v7313, %v7404
      %v7477 = vadd.f32 %v7314, %v7405
      %v7478 = vadd.f32 %v7315, %v7406
      %v7479 = vadd.f32 %v7316, %v7407
      %v7480 = vadd.f32 %v7317, %v7408
      %v7481 = vadd.f32 %v7318, %v7409
      %v7482 = vadd.f32 %v7319, %v7410
      %v7483 = vadd.f32 %v7320, %v7411
      %v7484 = vadd.f32 %v7321, %v7412
      %v7485 = vadd.f32 %v7322, %v7413
      %v7486 = vadd.f32 %v7323, %v7414
      %v7487 = vadd.f32 %v7324, %v7415
      %v7488 = vadd.f32 %v7325, %v7416
      %v7489 = vadd.f32 %v7326, %v7417
      %v7490 = vadd.f32 %v7327, %v7418
      %v7491 = vadd.f32 %v7328, %v7419
      %v7492 = vadd.f32 %v7329, %v7420
      %v7493 = vadd.f32 %v7330, %v7421
      %v7494 = vadd.f32 %v7331, %v7422
      %v7495 = vadd.f32 %v7332, %v7423
      %v7496 = vadd.f32 %v7333, %v7424
      %v7497 = vadd.f32 %v7334, %v7425
      %v7498 = vadd.f32 %v7335, %v7426
      %v7499 = vadd.f32 %v7336, %v7427
      %v7500 = vadd.f32 %v7337, %v7428
      %v7501 = vadd.f32 %v7338, %v7429
      %v7502 = vadd.f32 %v7339, %v7430
      %v7503 = vadd.f32 %v7340, %v7431
      %v7504 = vadd.f32 %v7341, %v7432
      %v7505 = vadd.f32 %v7342, %v7433
      %v7506 = vadd.f32 %v7343, %v7434
      %v7507 = vadd.f32 %v7344, %v7435
      %v7508 = vadd.f32 %v7345, %v7436
      %v7509 = vadd.f32 %v7346, %v7437
      %v7510 = vadd.f32 %v7347, %v7438
      %v7511 = vadd.f32 %v7348, %v7439
      %v7512 = vadd.f32 %v7349, %v7440
      %v7513 = vadd.f32 %v7350, %v7441
      %7515 = vset.pattern.permute.xlu0 0
      %7516 = vperm.xlu0 %7515, %v278
      %v7517 = vpop.permute.xlu0 %7516
      %v7519 = vlaneseq
      %v7520 = vshrl.u32 %v7519, 7
      %v7521 = vsub.s32 0, %v7520
      %v7522 = vrot.slane %v285, %v7521
      %v7523 = vmul.f32 %v335, %v7522
      %v7524 = vmul.f32 %v340, %v7522
      %v7525 = vmul.f32 %v345, %v7522
      %v7526 = vmul.f32 %v813, %v7522
      %v7527 = vmul.f32 %v350, %v7522
      %v7528 = vmul.f32 %v355, %v7522
      %v7529 = vmul.f32 %v360, %v7522
      %v7530 = vmul.f32 %v818, %v7522
      %v7531 = vmul.f32 %v365, %v7522
      %v7532 = vmul.f32 %v370, %v7522
      %v7533 = vmul.f32 %v375, %v7522
      %v7534 = vmul.f32 %v823, %v7522
      %v7535 = vmul.f32 %v380, %v7522
      %v7536 = vmul.f32 %v385, %v7522
      %v7537 = vmul.f32 %v390, %v7522
      %v7538 = vmul.f32 %v828, %v7522
      %v7539 = vmul.f32 %v395, %v7522
      %v7540 = vmul.f32 %v400, %v7522
      %v7541 = vmul.f32 %v405, %v7522
      %v7542 = vmul.f32 %v833, %v7522
      %v7543 = vmul.f32 %v410, %v7522
      %v7544 = vmul.f32 %v415, %v7522
      %v7545 = vmul.f32 %v420, %v7522
      %v7546 = vmul.f32 %v838, %v7522
      %v7547 = vmul.f32 %v425, %v7522
      %v7548 = vmul.f32 %v430, %v7522
      %v7549 = vmul.f32 %v435, %v7522
      %v7550 = vmul.f32 %v843, %v7522
      %v7551 = vmul.f32 %v440, %v7522
      %v7552 = vmul.f32 %v445, %v7522
      %v7553 = vmul.f32 %v450, %v7522
      %v7554 = vmul.f32 %v848, %v7522
      %v7555 = vmul.f32 %v455, %v7522
      %v7556 = vmul.f32 %v460, %v7522
      %v7557 = vmul.f32 %v465, %v7522
      %v7558 = vmul.f32 %v853, %v7522
      %v7559 = vmul.f32 %v470, %v7522
      %v7560 = vmul.f32 %v475, %v7522
      %v7561 = vmul.f32 %v480, %v7522
      %v7562 = vmul.f32 %v858, %v7522
      %v7563 = vmul.f32 %v485, %v7522
      %v7564 = vmul.f32 %v490, %v7522
      %v7565 = vmul.f32 %v495, %v7522
      %v7566 = vmul.f32 %v863, %v7522
      %v7567 = vmul.f32 %v500, %v7522
      %v7568 = vmul.f32 %v505, %v7522
      %v7569 = vmul.f32 %v510, %v7522
      %v7570 = vmul.f32 %v868, %v7522
      %v7571 = vmul.f32 %v515, %v7522
      %v7572 = vmul.f32 %v520, %v7522
      %v7573 = vmul.f32 %v525, %v7522
      %v7574 = vmul.f32 %v873, %v7522
      %v7575 = vmul.f32 %v530, %v7522
      %v7576 = vmul.f32 %v535, %v7522
      %v7577 = vmul.f32 %v540, %v7522
      %v7578 = vmul.f32 %v878, %v7522
      %v7579 = vmul.f32 %v545, %v7522
      %v7580 = vmul.f32 %v550, %v7522
      %v7581 = vmul.f32 %v555, %v7522
      %v7582 = vmul.f32 %v883, %v7522
      %v7583 = vmul.f32 %v560, %v7522
      %v7584 = vmul.f32 %v565, %v7522
      %v7585 = vmul.f32 %v570, %v7522
      %v7586 = vmul.f32 %v888, %v7522
      %v7587 = vmul.f32 %v575, %v7522
      %v7588 = vmul.f32 %v580, %v7522
      %v7589 = vmul.f32 %v585, %v7522
      %v7590 = vmul.f32 %v893, %v7522
      %v7591 = vmul.f32 %v590, %v7522
      %v7592 = vmul.f32 %v595, %v7522
      %v7593 = vmul.f32 %v600, %v7522
      %v7594 = vmul.f32 %v898, %v7522
      %v7595 = vmul.f32 %v605, %v7522
      %v7596 = vmul.f32 %v610, %v7522
      %v7597 = vmul.f32 %v615, %v7522
      %v7598 = vmul.f32 %v903, %v7522
      %v7599 = vmul.f32 %v620, %v7522
      %v7600 = vmul.f32 %v625, %v7522
      %v7601 = vmul.f32 %v630, %v7522
      %v7602 = vmul.f32 %v908, %v7522
      %v7603 = vmul.f32 %v635, %v7522
      %v7604 = vmul.f32 %v640, %v7522
      %v7605 = vmul.f32 %v645, %v7522
      %v7606 = vmul.f32 %v913, %v7522
      %v7607 = vmul.f32 %v2954, %v7522
      %v7608 = vmul.f32 %v2959, %v7522
      %v7609 = vmul.f32 %v2964, %v7522
      %v7610 = vmul.f32 %v3117, %v7522
      %v7611 = vmul.f32 %v5154, %v7522
      %v7612 = vmul.f32 %v5159, %v7522
      %v7613 = vmul.f32 %v5164, %v7522
      %v7614 = vmul.f32 %v5317, %v7522
      %v7615 = vmul.f32 %v7354, %v7522
      %v7616 = vmul.f32 %v7359, %v7522
      %v7617 = vmul.f32 %v7364, %v7522
      %v7618 = vmul.f32 %v7517, %v7522
      %v7715 = vrot.slane %v7523, 1
      %v7716 = vrot.slane %v7524, 1
      %v7717 = vsel %vm1111, %v7715, %v7716
      %v7718 = vrot.slane %v7525, 1
      %v7719 = vsel %vm1111, %v7716, %v7718
      %v7720 = vrot.slane %v7526, 1
      %v7721 = vsel %vm1111, %v7718, %v7720
      %v7722 = vrot.slane %v7527, 1
      %v7723 = vrot.slane %v7528, 1
      %v7724 = vsel %vm1111, %v7722, %v7723
      %v7725 = vrot.slane %v7529, 1
      %v7726 = vsel %vm1111, %v7723, %v7725
      %v7727 = vrot.slane %v7530, 1
      %v7728 = vsel %vm1111, %v7725, %v7727
      %v7729 = vrot.slane %v7531, 1
      %v7730 = vrot.slane %v7532, 1
      %v7731 = vsel %vm1111, %v7729, %v7730
      %v7732 = vrot.slane %v7533, 1
      %v7733 = vsel %vm1111, %v7730, %v7732
      %v7734 = vrot.slane %v7534, 1
      %v7735 = vsel %vm1111, %v7732, %v7734
      %v7736 = vrot.slane %v7535, 1
      %v7737 = vrot.slane %v7536, 1
      %v7738 = vsel %vm1111, %v7736, %v7737
      %v7739 = vrot.slane %v7537, 1
      %v7740 = vsel %vm1111, %v7737, %v7739
      %v7741 = vrot.slane %v7538, 1
      %v7742 = vsel %vm1111, %v7739, %v7741
      %v7743 = vrot.slane %v7539, 1
      %v7744 = vrot.slane %v7540, 1
      %v7745 = vsel %vm1111, %v7743, %v7744
      %v7746 = vrot.slane %v7541, 1
      %v7747 = vsel %vm1111, %v7744, %v7746
      %v7748 = vrot.slane %v7542, 1
      %v7749 = vsel %vm1111, %v7746, %v7748
      %v7750 = vrot.slane %v7543, 1
      %v7751 = vrot.slane %v7544, 1
      %v7752 = vsel %vm1111, %v7750, %v7751
      %v7753 = vrot.slane %v7545, 1
      %v7754 = vsel %vm1111, %v7751, %v7753
      %v7755 = vrot.slane %v7546, 1
      %v7756 = vsel %vm1111, %v7753, %v7755
      %v7757 = vrot.slane %v7547, 1
      %v7758 = vrot.slane %v7548, 1
      %v7759 = vsel %vm1111, %v7757, %v7758
      %v7760 = vrot.slane %v7549, 1
      %v7761 = vsel %vm1111, %v7758, %v7760
      %v7762 = vrot.slane %v7550, 1
      %v7763 = vsel %vm1111, %v7760, %v7762
      %v7764 = vrot.slane %v7551, 1
      %v7765 = vrot.slane %v7552, 1
      %v7766 = vsel %vm1111, %v7764, %v7765
      %v7767 = vrot.slane %v7553, 1
      %v7768 = vsel %vm1111, %v7765, %v7767
      %v7769 = vrot.slane %v7554, 1
      %v7770 = vsel %vm1111, %v7767, %v7769
      %v7771 = vrot.slane %v7555, 1
      %v7772 = vrot.slane %v7556, 1
      %v7773 = vsel %vm1111, %v7771, %v7772
      %v7774 = vrot.slane %v7557, 1
      %v7775 = vsel %vm1111, %v7772, %v7774
      %v7776 = vrot.slane %v7558, 1
      %v7777 = vsel %vm1111, %v7774, %v7776
      %v7778 = vrot.slane %v7559, 1
      %v7779 = vrot.slane %v7560, 1
      %v7780 = vsel %vm1111, %v7778, %v7779
      %v7781 = vrot.slane %v7561, 1
      %v7782 = vsel %vm1111, %v7779, %v7781
      %v7783 = vrot.slane %v7562, 1
      %v7784 = vsel %vm1111, %v7781, %v7783
      %v7785 = vrot.slane %v7563, 1
      %v7786 = vrot.slane %v7564, 1
      %v7787 = vsel %vm1111, %v7785, %v7786
      %v7788 = vrot.slane %v7565, 1
      %v7789 = vsel %vm1111, %v7786, %v7788
      %v7790 = vrot.slane %v7566, 1
      %v7791 = vsel %vm1111, %v7788, %v7790
      %v7792 = vrot.slane %v7567, 1
      %v7793 = vrot.slane %v7568, 1
      %v7794 = vsel %vm1111, %v7792, %v7793
      %v7795 = vrot.slane %v7569, 1
      %v7796 = vsel %vm1111, %v7793, %v7795
      %v7797 = vrot.slane %v7570, 1
      %v7798 = vsel %vm1111, %v7795, %v7797
      %v7799 = vrot.slane %v7571, 1
      %v7800 = vrot.slane %v7572, 1
      %v7801 = vsel %vm1111, %v7799, %v7800
      %v7802 = vrot.slane %v7573, 1
      %v7803 = vsel %vm1111, %v7800, %v7802
      %v7804 = vrot.slane %v7574, 1
      %v7805 = vsel %vm1111, %v7802, %v7804
      %v7806 = vrot.slane %v7575, 1
      %v7807 = vrot.slane %v7576, 1
      %v7808 = vsel %vm1111, %v7806, %v7807
      %v7809 = vrot.slane %v7577, 1
      %v7810 = vsel %vm1111, %v7807, %v7809
      %v7811 = vrot.slane %v7578, 1
      %v7812 = vsel %vm1111, %v7809, %v7811
      %v7813 = vrot.slane %v7579, 1
      %v7814 = vrot.slane %v7580, 1
      %v7815 = vsel %vm1111, %v7813, %v7814
      %v7816 = vrot.slane %v7581, 1
      %v7817 = vsel %vm1111, %v7814, %v7816
      %v7818 = vrot.slane %v7582, 1
      %v7819 = vsel %vm1111, %v7816, %v7818
      %v7820 = vrot.slane %v7583, 1
      %v7821 = vrot.slane %v7584, 1
      %v7822 = vsel %vm1111, %v7820, %v7821
      %v7823 = vrot.slane %v7585, 1
      %v7824 = vsel %vm1111, %v7821, %v7823
      %v7825 = vrot.slane %v7586, 1
      %v7826 = vsel %vm1111, %v7823, %v7825
      %v7827 = vrot.slane %v7587, 1
      %v7828 = vrot.slane %v7588, 1
      %v7829 = vsel %vm1111, %v7827, %v7828
      %v7830 = vrot.slane %v7589, 1
      %v7831 = vsel %vm1111, %v7828, %v7830
      %v7832 = vrot.slane %v7590, 1
      %v7833 = vsel %vm1111, %v7830, %v7832
      %v7834 = vrot.slane %v7591, 1
      %v7835 = vrot.slane %v7592, 1
      %v7836 = vsel %vm1111, %v7834, %v7835
      %v7837 = vrot.slane %v7593, 1
      %v7838 = vsel %vm1111, %v7835, %v7837
      %v7839 = vrot.slane %v7594, 1
      %v7840 = vsel %vm1111, %v7837, %v7839
      %v7841 = vrot.slane %v7595, 1
      %v7842 = vrot.slane %v7596, 1
      %v7843 = vsel %vm1111, %v7841, %v7842
      %v7844 = vrot.slane %v7597, 1
      %v7845 = vsel %vm1111, %v7842, %v7844
      %v7846 = vrot.slane %v7598, 1
      %v7847 = vsel %vm1111, %v7844, %v7846
      %v7848 = vrot.slane %v7599, 1
      %v7849 = vrot.slane %v7600, 1
      %v7850 = vsel %vm1111, %v7848, %v7849
      %v7851 = vrot.slane %v7601, 1
      %v7852 = vsel %vm1111, %v7849, %v7851
      %v7853 = vrot.slane %v7602, 1
      %v7854 = vsel %vm1111, %v7851, %v7853
      %v7855 = vrot.slane %v7603, 1
      %v7856 = vrot.slane %v7604, 1
      %v7857 = vsel %vm1111, %v7855, %v7856
      %v7858 = vrot.slane %v7605, 1
      %v7859 = vsel %vm1111, %v7856, %v7858
      %v7860 = vrot.slane %v7606, 1
      %v7861 = vsel %vm1111, %v7858, %v7860
      %v7862 = vrot.slane %v7607, 1
      %v7863 = vrot.slane %v7608, 1
      %v7864 = vsel %vm1111, %v7862, %v7863
      %v7865 = vrot.slane %v7609, 1
      %v7866 = vsel %vm1111, %v7863, %v7865
      %v7867 = vrot.slane %v7610, 1
      %v7868 = vsel %vm1111, %v7865, %v7867
      %v7869 = vrot.slane %v7611, 1
      %v7870 = vrot.slane %v7612, 1
      %v7871 = vsel %vm1111, %v7869, %v7870
      %v7872 = vrot.slane %v7613, 1
      %v7873 = vsel %vm1111, %v7870, %v7872
      %v7874 = vrot.slane %v7614, 1
      %v7875 = vsel %vm1111, %v7872, %v7874
      %v7876 = vrot.slane %v7615, 1
      %v7877 = vrot.slane %v7616, 1
      %v7878 = vsel %vm1111, %v7876, %v7877
      %v7879 = vrot.slane %v7617, 1
      %v7880 = vsel %vm1111, %v7877, %v7879
      %v7881 = vrot.slane %v7618, 1
      %v7882 = vsel %vm1111, %v7879, %v7881
      %v7955 = vadd.f32 %v7442, %v7717
      %v7956 = vadd.f32 %v7443, %v7719
      %v7957 = vadd.f32 %v7444, %v7721
      %v7958 = vadd.f32 %v7445, %v7724
      %v7959 = vadd.f32 %v7446, %v7726
      %v7960 = vadd.f32 %v7447, %v7728
      %v7961 = vadd.f32 %v7448, %v7731
      %v7962 = vadd.f32 %v7449, %v7733
      %v7963 = vadd.f32 %v7450, %v7735
      %v7964 = vadd.f32 %v7451, %v7738
      %v7965 = vadd.f32 %v7452, %v7740
      %v7966 = vadd.f32 %v7453, %v7742
      %v7967 = vadd.f32 %v7454, %v7745
      %v7968 = vadd.f32 %v7455, %v7747
      %v7969 = vadd.f32 %v7456, %v7749
      %v7970 = vadd.f32 %v7457, %v7752
      %v7971 = vadd.f32 %v7458, %v7754
      %v7972 = vadd.f32 %v7459, %v7756
      %v7973 = vadd.f32 %v7460, %v7759
      %v7974 = vadd.f32 %v7461, %v7761
      %v7975 = vadd.f32 %v7462, %v7763
      %v7976 = vadd.f32 %v7463, %v7766
      %v7977 = vadd.f32 %v7464, %v7768
      %v7978 = vadd.f32 %v7465, %v7770
      %v7979 = vadd.f32 %v7466, %v7773
      %v7980 = vadd.f32 %v7467, %v7775
      %v7981 = vadd.f32 %v7468, %v7777
      %v7982 = vadd.f32 %v7469, %v7780
      %v7983 = vadd.f32 %v7470, %v7782
      %v7984 = vadd.f32 %v7471, %v7784
      %v7985 = vadd.f32 %v7472, %v7787
      %v7986 = vadd.f32 %v7473, %v7789
      %v7987 = vadd.f32 %v7474, %v7791
      %v7988 = vadd.f32 %v7475, %v7794
      %v7989 = vadd.f32 %v7476, %v7796
      %v7990 = vadd.f32 %v7477, %v7798
      %v7991 = vadd.f32 %v7478, %v7801
      %v7992 = vadd.f32 %v7479, %v7803
      %v7993 = vadd.f32 %v7480, %v7805
      %v7994 = vadd.f32 %v7481, %v7808
      %v7995 = vadd.f32 %v7482, %v7810
      %v7996 = vadd.f32 %v7483, %v7812
      %v7997 = vadd.f32 %v7484, %v7815
      %v7998 = vadd.f32 %v7485, %v7817
      %v7999 = vadd.f32 %v7486, %v7819
      %v8000 = vadd.f32 %v7487, %v7822
      %v8001 = vadd.f32 %v7488, %v7824
      %v8002 = vadd.f32 %v7489, %v7826
      %v8003 = vadd.f32 %v7490, %v7829
      %v8004 = vadd.f32 %v7491, %v7831
      %v8005 = vadd.f32 %v7492, %v7833
      %v8006 = vadd.f32 %v7493, %v7836
      %v8007 = vadd.f32 %v7494, %v7838
      %v8008 = vadd.f32 %v7495, %v7840
      %v8009 = vadd.f32 %v7496, %v7843
      %v8010 = vadd.f32 %v7497, %v7845
      %v8011 = vadd.f32 %v7498, %v7847
      %v8012 = vadd.f32 %v7499, %v7850
      %v8013 = vadd.f32 %v7500, %v7852
      %v8014 = vadd.f32 %v7501, %v7854
      %v8015 = vadd.f32 %v7502, %v7857
      %v8016 = vadd.f32 %v7503, %v7859
      %v8017 = vadd.f32 %v7504, %v7861
      %v8018 = vadd.f32 %v7505, %v7864
      %v8019 = vadd.f32 %v7506, %v7866
      %v8020 = vadd.f32 %v7507, %v7868
      %v8021 = vadd.f32 %v7508, %v7871
      %v8022 = vadd.f32 %v7509, %v7873
      %v8023 = vadd.f32 %v7510, %v7875
      %v8024 = vadd.f32 %v7511, %v7878
      %v8025 = vadd.f32 %v7512, %v7880
      %v8026 = vadd.f32 %v7513, %v7882
      %v8027 = vlaneseq
      %v8028 = vshrl.u32 %v8027, 7
      %v8029 = vsub.s32 1, %v8028
      %v8030 = vrot.slane %v285, %v8029
      %v8031 = vmul.f32 %v335, %v8030
      %v8032 = vmul.f32 %v340, %v8030
      %v8033 = vmul.f32 %v345, %v8030
      %v8034 = vmul.f32 %v813, %v8030
      %v8035 = vmul.f32 %v350, %v8030
      %v8036 = vmul.f32 %v355, %v8030
      %v8037 = vmul.f32 %v360, %v8030
      %v8038 = vmul.f32 %v818, %v8030
      %v8039 = vmul.f32 %v365, %v8030
      %v8040 = vmul.f32 %v370, %v8030
      %v8041 = vmul.f32 %v375, %v8030
      %v8042 = vmul.f32 %v823, %v8030
      %v8043 = vmul.f32 %v380, %v8030
      %v8044 = vmul.f32 %v385, %v8030
      %v8045 = vmul.f32 %v390, %v8030
      %v8046 = vmul.f32 %v828, %v8030
      %v8047 = vmul.f32 %v395, %v8030
      %v8048 = vmul.f32 %v400, %v8030
      %v8049 = vmul.f32 %v405, %v8030
      %v8050 = vmul.f32 %v833, %v8030
      %v8051 = vmul.f32 %v410, %v8030
      %v8052 = vmul.f32 %v415, %v8030
      %v8053 = vmul.f32 %v420, %v8030
      %v8054 = vmul.f32 %v838, %v8030
      %v8055 = vmul.f32 %v425, %v8030
      %v8056 = vmul.f32 %v430, %v8030
      %v8057 = vmul.f32 %v435, %v8030
      %v8058 = vmul.f32 %v843, %v8030
      %v8059 = vmul.f32 %v440, %v8030
      %v8060 = vmul.f32 %v445, %v8030
      %v8061 = vmul.f32 %v450, %v8030
      %v8062 = vmul.f32 %v848, %v8030
      %v8063 = vmul.f32 %v455, %v8030
      %v8064 = vmul.f32 %v460, %v8030
      %v8065 = vmul.f32 %v465, %v8030
      %v8066 = vmul.f32 %v853, %v8030
      %v8067 = vmul.f32 %v470, %v8030
      %v8068 = vmul.f32 %v475, %v8030
      %v8069 = vmul.f32 %v480, %v8030
      %v8070 = vmul.f32 %v858, %v8030
      %v8071 = vmul.f32 %v485, %v8030
      %v8072 = vmul.f32 %v490, %v8030
      %v8073 = vmul.f32 %v495, %v8030
      %v8074 = vmul.f32 %v863, %v8030
      %v8075 = vmul.f32 %v500, %v8030
      %v8076 = vmul.f32 %v505, %v8030
      %v8077 = vmul.f32 %v510, %v8030
      %v8078 = vmul.f32 %v868, %v8030
      %v8079 = vmul.f32 %v515, %v8030
      %v8080 = vmul.f32 %v520, %v8030
      %v8081 = vmul.f32 %v525, %v8030
      %v8082 = vmul.f32 %v873, %v8030
      %v8083 = vmul.f32 %v530, %v8030
      %v8084 = vmul.f32 %v535, %v8030
      %v8085 = vmul.f32 %v540, %v8030
      %v8086 = vmul.f32 %v878, %v8030
      %v8087 = vmul.f32 %v545, %v8030
      %v8088 = vmul.f32 %v550, %v8030
      %v8089 = vmul.f32 %v555, %v8030
      %v8090 = vmul.f32 %v883, %v8030
      %v8091 = vmul.f32 %v560, %v8030
      %v8092 = vmul.f32 %v565, %v8030
      %v8093 = vmul.f32 %v570, %v8030
      %v8094 = vmul.f32 %v888, %v8030
      %v8095 = vmul.f32 %v575, %v8030
      %v8096 = vmul.f32 %v580, %v8030
      %v8097 = vmul.f32 %v585, %v8030
      %v8098 = vmul.f32 %v893, %v8030
      %v8099 = vmul.f32 %v590, %v8030
      %v8100 = vmul.f32 %v595, %v8030
      %v8101 = vmul.f32 %v600, %v8030
      %v8102 = vmul.f32 %v898, %v8030
      %v8103 = vmul.f32 %v605, %v8030
      %v8104 = vmul.f32 %v610, %v8030
      %v8105 = vmul.f32 %v615, %v8030
      %v8106 = vmul.f32 %v903, %v8030
      %v8107 = vmul.f32 %v620, %v8030
      %v8108 = vmul.f32 %v625, %v8030
      %v8109 = vmul.f32 %v630, %v8030
      %v8110 = vmul.f32 %v908, %v8030
      %v8111 = vmul.f32 %v635, %v8030
      %v8112 = vmul.f32 %v640, %v8030
      %v8113 = vmul.f32 %v645, %v8030
      %v8114 = vmul.f32 %v913, %v8030
      %v8115 = vmul.f32 %v2954, %v8030
      %v8116 = vmul.f32 %v2959, %v8030
      %v8117 = vmul.f32 %v2964, %v8030
      %v8118 = vmul.f32 %v3117, %v8030
      %v8119 = vmul.f32 %v5154, %v8030
      %v8120 = vmul.f32 %v5159, %v8030
      %v8121 = vmul.f32 %v5164, %v8030
      %v8122 = vmul.f32 %v5317, %v8030
      %v8123 = vmul.f32 %v7354, %v8030
      %v8124 = vmul.f32 %v7359, %v8030
      %v8125 = vmul.f32 %v7364, %v8030
      %v8126 = vmul.f32 %v7517, %v8030
      %v8223 = vrot.slane %v8031, 2
      %v8224 = vrot.slane %v8032, 2
      %v8225 = vsel %vm1620, %v8223, %v8224
      %v8226 = vrot.slane %v8033, 2
      %v8227 = vsel %vm1620, %v8224, %v8226
      %v8228 = vrot.slane %v8034, 2
      %v8229 = vsel %vm1620, %v8226, %v8228
      %v8230 = vrot.slane %v8035, 2
      %v8231 = vrot.slane %v8036, 2
      %v8232 = vsel %vm1620, %v8230, %v8231
      %v8233 = vrot.slane %v8037, 2
      %v8234 = vsel %vm1620, %v8231, %v8233
      %v8235 = vrot.slane %v8038, 2
      %v8236 = vsel %vm1620, %v8233, %v8235
      %v8237 = vrot.slane %v8039, 2
      %v8238 = vrot.slane %v8040, 2
      %v8239 = vsel %vm1620, %v8237, %v8238
      %v8240 = vrot.slane %v8041, 2
      %v8241 = vsel %vm1620, %v8238, %v8240
      %v8242 = vrot.slane %v8042, 2
      %v8243 = vsel %vm1620, %v8240, %v8242
      %v8244 = vrot.slane %v8043, 2
      %v8245 = vrot.slane %v8044, 2
      %v8246 = vsel %vm1620, %v8244, %v8245
      %v8247 = vrot.slane %v8045, 2
      %v8248 = vsel %vm1620, %v8245, %v8247
      %v8249 = vrot.slane %v8046, 2
      %v8250 = vsel %vm1620, %v8247, %v8249
      %v8251 = vrot.slane %v8047, 2
      %v8252 = vrot.slane %v8048, 2
      %v8253 = vsel %vm1620, %v8251, %v8252
      %v8254 = vrot.slane %v8049, 2
      %v8255 = vsel %vm1620, %v8252, %v8254
      %v8256 = vrot.slane %v8050, 2
      %v8257 = vsel %vm1620, %v8254, %v8256
      %v8258 = vrot.slane %v8051, 2
      %v8259 = vrot.slane %v8052, 2
      %v8260 = vsel %vm1620, %v8258, %v8259
      %v8261 = vrot.slane %v8053, 2
      %v8262 = vsel %vm1620, %v8259, %v8261
      %v8263 = vrot.slane %v8054, 2
      %v8264 = vsel %vm1620, %v8261, %v8263
      %v8265 = vrot.slane %v8055, 2
      %v8266 = vrot.slane %v8056, 2
      %v8267 = vsel %vm1620, %v8265, %v8266
      %v8268 = vrot.slane %v8057, 2
      %v8269 = vsel %vm1620, %v8266, %v8268
      %v8270 = vrot.slane %v8058, 2
      %v8271 = vsel %vm1620, %v8268, %v8270
      %v8272 = vrot.slane %v8059, 2
      %v8273 = vrot.slane %v8060, 2
      %v8274 = vsel %vm1620, %v8272, %v8273
      %v8275 = vrot.slane %v8061, 2
      %v8276 = vsel %vm1620, %v8273, %v8275
      %v8277 = vrot.slane %v8062, 2
      %v8278 = vsel %vm1620, %v8275, %v8277
      %v8279 = vrot.slane %v8063, 2
      %v8280 = vrot.slane %v8064, 2
      %v8281 = vsel %vm1620, %v8279, %v8280
      %v8282 = vrot.slane %v8065, 2
      %v8283 = vsel %vm1620, %v8280, %v8282
      %v8284 = vrot.slane %v8066, 2
      %v8285 = vsel %vm1620, %v8282, %v8284
      %v8286 = vrot.slane %v8067, 2
      %v8287 = vrot.slane %v8068, 2
      %v8288 = vsel %vm1620, %v8286, %v8287
      %v8289 = vrot.slane %v8069, 2
      %v8290 = vsel %vm1620, %v8287, %v8289
      %v8291 = vrot.slane %v8070, 2
      %v8292 = vsel %vm1620, %v8289, %v8291
      %v8293 = vrot.slane %v8071, 2
      %v8294 = vrot.slane %v8072, 2
      %v8295 = vsel %vm1620, %v8293, %v8294
      %v8296 = vrot.slane %v8073, 2
      %v8297 = vsel %vm1620, %v8294, %v8296
      %v8298 = vrot.slane %v8074, 2
      %v8299 = vsel %vm1620, %v8296, %v8298
      %v8300 = vrot.slane %v8075, 2
      %v8301 = vrot.slane %v8076, 2
      %v8302 = vsel %vm1620, %v8300, %v8301
      %v8303 = vrot.slane %v8077, 2
      %v8304 = vsel %vm1620, %v8301, %v8303
      %v8305 = vrot.slane %v8078, 2
      %v8306 = vsel %vm1620, %v8303, %v8305
      %v8307 = vrot.slane %v8079, 2
      %v8308 = vrot.slane %v8080, 2
      %v8309 = vsel %vm1620, %v8307, %v8308
      %v8310 = vrot.slane %v8081, 2
      %v8311 = vsel %vm1620, %v8308, %v8310
      %v8312 = vrot.slane %v8082, 2
      %v8313 = vsel %vm1620, %v8310, %v8312
      %v8314 = vrot.slane %v8083, 2
      %v8315 = vrot.slane %v8084, 2
      %v8316 = vsel %vm1620, %v8314, %v8315
      %v8317 = vrot.slane %v8085, 2
      %v8318 = vsel %vm1620, %v8315, %v8317
      %v8319 = vrot.slane %v8086, 2
      %v8320 = vsel %vm1620, %v8317, %v8319
      %v8321 = vrot.slane %v8087, 2
      %v8322 = vrot.slane %v8088, 2
      %v8323 = vsel %vm1620, %v8321, %v8322
      %v8324 = vrot.slane %v8089, 2
      %v8325 = vsel %vm1620, %v8322, %v8324
      %v8326 = vrot.slane %v8090, 2
      %v8327 = vsel %vm1620, %v8324, %v8326
      %v8328 = vrot.slane %v8091, 2
      %v8329 = vrot.slane %v8092, 2
      %v8330 = vsel %vm1620, %v8328, %v8329
      %v8331 = vrot.slane %v8093, 2
      %v8332 = vsel %vm1620, %v8329, %v8331
      %v8333 = vrot.slane %v8094, 2
      %v8334 = vsel %vm1620, %v8331, %v8333
      %v8335 = vrot.slane %v8095, 2
      %v8336 = vrot.slane %v8096, 2
      %v8337 = vsel %vm1620, %v8335, %v8336
      %v8338 = vrot.slane %v8097, 2
      %v8339 = vsel %vm1620, %v8336, %v8338
      %v8340 = vrot.slane %v8098, 2
      %v8341 = vsel %vm1620, %v8338, %v8340
      %v8342 = vrot.slane %v8099, 2
      %v8343 = vrot.slane %v8100, 2
      %v8344 = vsel %vm1620, %v8342, %v8343
      %v8345 = vrot.slane %v8101, 2
      %v8346 = vsel %vm1620, %v8343, %v8345
      %v8347 = vrot.slane %v8102, 2
      %v8348 = vsel %vm1620, %v8345, %v8347
      %v8349 = vrot.slane %v8103, 2
      %v8350 = vrot.slane %v8104, 2
      %v8351 = vsel %vm1620, %v8349, %v8350
      %v8352 = vrot.slane %v8105, 2
      %v8353 = vsel %vm1620, %v8350, %v8352
      %v8354 = vrot.slane %v8106, 2
      %v8355 = vsel %vm1620, %v8352, %v8354
      %v8356 = vrot.slane %v8107, 2
      %v8357 = vrot.slane %v8108, 2
      %v8358 = vsel %vm1620, %v8356, %v8357
      %v8359 = vrot.slane %v8109, 2
      %v8360 = vsel %vm1620, %v8357, %v8359
      %v8361 = vrot.slane %v8110, 2
      %v8362 = vsel %vm1620, %v8359, %v8361
      %v8363 = vrot.slane %v8111, 2
      %v8364 = vrot.slane %v8112, 2
      %v8365 = vsel %vm1620, %v8363, %v8364
      %v8366 = vrot.slane %v8113, 2
      %v8367 = vsel %vm1620, %v8364, %v8366
      %v8368 = vrot.slane %v8114, 2
      %v8369 = vsel %vm1620, %v8366, %v8368
      %v8370 = vrot.slane %v8115, 2
      %v8371 = vrot.slane %v8116, 2
      %v8372 = vsel %vm1620, %v8370, %v8371
      %v8373 = vrot.slane %v8117, 2
      %v8374 = vsel %vm1620, %v8371, %v8373
      %v8375 = vrot.slane %v8118, 2
      %v8376 = vsel %vm1620, %v8373, %v8375
      %v8377 = vrot.slane %v8119, 2
      %v8378 = vrot.slane %v8120, 2
      %v8379 = vsel %vm1620, %v8377, %v8378
      %v8380 = vrot.slane %v8121, 2
      %v8381 = vsel %vm1620, %v8378, %v8380
      %v8382 = vrot.slane %v8122, 2
      %v8383 = vsel %vm1620, %v8380, %v8382
      %v8384 = vrot.slane %v8123, 2
      %v8385 = vrot.slane %v8124, 2
      %v8386 = vsel %vm1620, %v8384, %v8385
      %v8387 = vrot.slane %v8125, 2
      %v8388 = vsel %vm1620, %v8385, %v8387
      %v8389 = vrot.slane %v8126, 2
      %v8390 = vsel %vm1620, %v8387, %v8389
      %v8463 = vadd.f32 %v7955, %v8225
      %v8464 = vadd.f32 %v7956, %v8227
      %v8465 = vadd.f32 %v7957, %v8229
      %v8466 = vadd.f32 %v7958, %v8232
      %v8467 = vadd.f32 %v7959, %v8234
      %v8468 = vadd.f32 %v7960, %v8236
      %v8469 = vadd.f32 %v7961, %v8239
      %v8470 = vadd.f32 %v7962, %v8241
      %v8471 = vadd.f32 %v7963, %v8243
      %v8472 = vadd.f32 %v7964, %v8246
      %v8473 = vadd.f32 %v7965, %v8248
      %v8474 = vadd.f32 %v7966, %v8250
      %v8475 = vadd.f32 %v7967, %v8253
      %v8476 = vadd.f32 %v7968, %v8255
      %v8477 = vadd.f32 %v7969, %v8257
      %v8478 = vadd.f32 %v7970, %v8260
      %v8479 = vadd.f32 %v7971, %v8262
      %v8480 = vadd.f32 %v7972, %v8264
      %v8481 = vadd.f32 %v7973, %v8267
      %v8482 = vadd.f32 %v7974, %v8269
      %v8483 = vadd.f32 %v7975, %v8271
      %v8484 = vadd.f32 %v7976, %v8274
      %v8485 = vadd.f32 %v7977, %v8276
      %v8486 = vadd.f32 %v7978, %v8278
      %v8487 = vadd.f32 %v7979, %v8281
      %v8488 = vadd.f32 %v7980, %v8283
      %v8489 = vadd.f32 %v7981, %v8285
      %v8490 = vadd.f32 %v7982, %v8288
      %v8491 = vadd.f32 %v7983, %v8290
      %v8492 = vadd.f32 %v7984, %v8292
      %v8493 = vadd.f32 %v7985, %v8295
      %v8494 = vadd.f32 %v7986, %v8297
      %v8495 = vadd.f32 %v7987, %v8299
      %v8496 = vadd.f32 %v7988, %v8302
      %v8497 = vadd.f32 %v7989, %v8304
      %v8498 = vadd.f32 %v7990, %v8306
      %v8499 = vadd.f32 %v7991, %v8309
      %v8500 = vadd.f32 %v7992, %v8311
      %v8501 = vadd.f32 %v7993, %v8313
      %v8502 = vadd.f32 %v7994, %v8316
      %v8503 = vadd.f32 %v7995, %v8318
      %v8504 = vadd.f32 %v7996, %v8320
      %v8505 = vadd.f32 %v7997, %v8323
      %v8506 = vadd.f32 %v7998, %v8325
      %v8507 = vadd.f32 %v7999, %v8327
      %v8508 = vadd.f32 %v8000, %v8330
      %v8509 = vadd.f32 %v8001, %v8332
      %v8510 = vadd.f32 %v8002, %v8334
      %v8511 = vadd.f32 %v8003, %v8337
      %v8512 = vadd.f32 %v8004, %v8339
      %v8513 = vadd.f32 %v8005, %v8341
      %v8514 = vadd.f32 %v8006, %v8344
      %v8515 = vadd.f32 %v8007, %v8346
      %v8516 = vadd.f32 %v8008, %v8348
      %v8517 = vadd.f32 %v8009, %v8351
      %v8518 = vadd.f32 %v8010, %v8353
      %v8519 = vadd.f32 %v8011, %v8355
      %v8520 = vadd.f32 %v8012, %v8358
      %v8521 = vadd.f32 %v8013, %v8360
      %v8522 = vadd.f32 %v8014, %v8362
      %v8523 = vadd.f32 %v8015, %v8365
      %v8524 = vadd.f32 %v8016, %v8367
      %v8525 = vadd.f32 %v8017, %v8369
      %v8526 = vadd.f32 %v8018, %v8372
      %v8527 = vadd.f32 %v8019, %v8374
      %v8528 = vadd.f32 %v8020, %v8376
      %v8529 = vadd.f32 %v8021, %v8379
      %v8530 = vadd.f32 %v8022, %v8381
      %v8531 = vadd.f32 %v8023, %v8383
      %v8532 = vadd.f32 %v8024, %v8386
      %v8533 = vadd.f32 %v8025, %v8388
      %v8534 = vadd.f32 %v8026, %v8390
      %v8535 = vlaneseq
      %v8536 = vshrl.u32 %v8535, 7
      %v8537 = vsub.s32 2, %v8536
      %v8538 = vrot.slane %v285, %v8537
      %v8539 = vmul.f32 %v335, %v8538
      %v8540 = vmul.f32 %v340, %v8538
      %v8541 = vmul.f32 %v345, %v8538
      %v8542 = vmul.f32 %v813, %v8538
      %v8543 = vmul.f32 %v350, %v8538
      %v8544 = vmul.f32 %v355, %v8538
      %v8545 = vmul.f32 %v360, %v8538
      %v8546 = vmul.f32 %v818, %v8538
      %v8547 = vmul.f32 %v365, %v8538
      %v8548 = vmul.f32 %v370, %v8538
      %v8549 = vmul.f32 %v375, %v8538
      %v8550 = vmul.f32 %v823, %v8538
      %v8551 = vmul.f32 %v380, %v8538
      %v8552 = vmul.f32 %v385, %v8538
      %v8553 = vmul.f32 %v390, %v8538
      %v8554 = vmul.f32 %v828, %v8538
      %v8555 = vmul.f32 %v395, %v8538
      %v8556 = vmul.f32 %v400, %v8538
      %v8557 = vmul.f32 %v405, %v8538
      %v8558 = vmul.f32 %v833, %v8538
      %v8559 = vmul.f32 %v410, %v8538
      %v8560 = vmul.f32 %v415, %v8538
      %v8561 = vmul.f32 %v420, %v8538
      %v8562 = vmul.f32 %v838, %v8538
      %v8563 = vmul.f32 %v425, %v8538
      %v8564 = vmul.f32 %v430, %v8538
      %v8565 = vmul.f32 %v435, %v8538
      %v8566 = vmul.f32 %v843, %v8538
      %v8567 = vmul.f32 %v440, %v8538
      %v8568 = vmul.f32 %v445, %v8538
      %v8569 = vmul.f32 %v450, %v8538
      %v8570 = vmul.f32 %v848, %v8538
      %v8571 = vmul.f32 %v455, %v8538
      %v8572 = vmul.f32 %v460, %v8538
      %v8573 = vmul.f32 %v465, %v8538
      %v8574 = vmul.f32 %v853, %v8538
      %v8575 = vmul.f32 %v470, %v8538
      %v8576 = vmul.f32 %v475, %v8538
      %v8577 = vmul.f32 %v480, %v8538
      %v8578 = vmul.f32 %v858, %v8538
      %v8579 = vmul.f32 %v485, %v8538
      %v8580 = vmul.f32 %v490, %v8538
      %v8581 = vmul.f32 %v495, %v8538
      %v8582 = vmul.f32 %v863, %v8538
      %v8583 = vmul.f32 %v500, %v8538
      %v8584 = vmul.f32 %v505, %v8538
      %v8585 = vmul.f32 %v510, %v8538
      %v8586 = vmul.f32 %v868, %v8538
      %v8587 = vmul.f32 %v515, %v8538
      %v8588 = vmul.f32 %v520, %v8538
      %v8589 = vmul.f32 %v525, %v8538
      %v8590 = vmul.f32 %v873, %v8538
      %v8591 = vmul.f32 %v530, %v8538
      %v8592 = vmul.f32 %v535, %v8538
      %v8593 = vmul.f32 %v540, %v8538
      %v8594 = vmul.f32 %v878, %v8538
      %v8595 = vmul.f32 %v545, %v8538
      %v8596 = vmul.f32 %v550, %v8538
      %v8597 = vmul.f32 %v555, %v8538
      %v8598 = vmul.f32 %v883, %v8538
      %v8599 = vmul.f32 %v560, %v8538
      %v8600 = vmul.f32 %v565, %v8538
      %v8601 = vmul.f32 %v570, %v8538
      %v8602 = vmul.f32 %v888, %v8538
      %v8603 = vmul.f32 %v575, %v8538
      %v8604 = vmul.f32 %v580, %v8538
      %v8605 = vmul.f32 %v585, %v8538
      %v8606 = vmul.f32 %v893, %v8538
      %v8607 = vmul.f32 %v590, %v8538
      %v8608 = vmul.f32 %v595, %v8538
      %v8609 = vmul.f32 %v600, %v8538
      %v8610 = vmul.f32 %v898, %v8538
      %v8611 = vmul.f32 %v605, %v8538
      %v8612 = vmul.f32 %v610, %v8538
      %v8613 = vmul.f32 %v615, %v8538
      %v8614 = vmul.f32 %v903, %v8538
      %v8615 = vmul.f32 %v620, %v8538
      %v8616 = vmul.f32 %v625, %v8538
      %v8617 = vmul.f32 %v630, %v8538
      %v8618 = vmul.f32 %v908, %v8538
      %v8619 = vmul.f32 %v635, %v8538
      %v8620 = vmul.f32 %v640, %v8538
      %v8621 = vmul.f32 %v645, %v8538
      %v8622 = vmul.f32 %v913, %v8538
      %v8623 = vmul.f32 %v2954, %v8538
      %v8624 = vmul.f32 %v2959, %v8538
      %v8625 = vmul.f32 %v2964, %v8538
      %v8626 = vmul.f32 %v3117, %v8538
      %v8627 = vmul.f32 %v5154, %v8538
      %v8628 = vmul.f32 %v5159, %v8538
      %v8629 = vmul.f32 %v5164, %v8538
      %v8630 = vmul.f32 %v5317, %v8538
      %v8631 = vmul.f32 %v7354, %v8538
      %v8632 = vmul.f32 %v7359, %v8538
      %v8633 = vmul.f32 %v7364, %v8538
      %v8634 = vmul.f32 %v7517, %v8538
      %v8731 = vrot.slane %v8539, 3
      %v8732 = vrot.slane %v8540, 3
      %v8733 = vsel %vm2129, %v8731, %v8732
      %v8734 = vrot.slane %v8541, 3
      %v8735 = vsel %vm2129, %v8732, %v8734
      %v8736 = vrot.slane %v8542, 3
      %v8737 = vsel %vm2129, %v8734, %v8736
      %v8738 = vrot.slane %v8543, 3
      %v8739 = vrot.slane %v8544, 3
      %v8740 = vsel %vm2129, %v8738, %v8739
      %v8741 = vrot.slane %v8545, 3
      %v8742 = vsel %vm2129, %v8739, %v8741
      %v8743 = vrot.slane %v8546, 3
      %v8744 = vsel %vm2129, %v8741, %v8743
      %v8745 = vrot.slane %v8547, 3
      %v8746 = vrot.slane %v8548, 3
      %v8747 = vsel %vm2129, %v8745, %v8746
      %v8748 = vrot.slane %v8549, 3
      %v8749 = vsel %vm2129, %v8746, %v8748
      %v8750 = vrot.slane %v8550, 3
      %v8751 = vsel %vm2129, %v8748, %v8750
      %v8752 = vrot.slane %v8551, 3
      %v8753 = vrot.slane %v8552, 3
      %v8754 = vsel %vm2129, %v8752, %v8753
      %v8755 = vrot.slane %v8553, 3
      %v8756 = vsel %vm2129, %v8753, %v8755
      %v8757 = vrot.slane %v8554, 3
      %v8758 = vsel %vm2129, %v8755, %v8757
      %v8759 = vrot.slane %v8555, 3
      %v8760 = vrot.slane %v8556, 3
      %v8761 = vsel %vm2129, %v8759, %v8760
      %v8762 = vrot.slane %v8557, 3
      %v8763 = vsel %vm2129, %v8760, %v8762
      %v8764 = vrot.slane %v8558, 3
      %v8765 = vsel %vm2129, %v8762, %v8764
      %v8766 = vrot.slane %v8559, 3
      %v8767 = vrot.slane %v8560, 3
      %v8768 = vsel %vm2129, %v8766, %v8767
      %v8769 = vrot.slane %v8561, 3
      %v8770 = vsel %vm2129, %v8767, %v8769
      %v8771 = vrot.slane %v8562, 3
      %v8772 = vsel %vm2129, %v8769, %v8771
      %v8773 = vrot.slane %v8563, 3
      %v8774 = vrot.slane %v8564, 3
      %v8775 = vsel %vm2129, %v8773, %v8774
      %v8776 = vrot.slane %v8565, 3
      %v8777 = vsel %vm2129, %v8774, %v8776
      %v8778 = vrot.slane %v8566, 3
      %v8779 = vsel %vm2129, %v8776, %v8778
      %v8780 = vrot.slane %v8567, 3
      %v8781 = vrot.slane %v8568, 3
      %v8782 = vsel %vm2129, %v8780, %v8781
      %v8783 = vrot.slane %v8569, 3
      %v8784 = vsel %vm2129, %v8781, %v8783
      %v8785 = vrot.slane %v8570, 3
      %v8786 = vsel %vm2129, %v8783, %v8785
      %v8787 = vrot.slane %v8571, 3
      %v8788 = vrot.slane %v8572, 3
      %v8789 = vsel %vm2129, %v8787, %v8788
      %v8790 = vrot.slane %v8573, 3
      %v8791 = vsel %vm2129, %v8788, %v8790
      %v8792 = vrot.slane %v8574, 3
      %v8793 = vsel %vm2129, %v8790, %v8792
      %v8794 = vrot.slane %v8575, 3
      %v8795 = vrot.slane %v8576, 3
      %v8796 = vsel %vm2129, %v8794, %v8795
      %v8797 = vrot.slane %v8577, 3
      %v8798 = vsel %vm2129, %v8795, %v8797
      %v8799 = vrot.slane %v8578, 3
      %v8800 = vsel %vm2129, %v8797, %v8799
      %v8801 = vrot.slane %v8579, 3
      %v8802 = vrot.slane %v8580, 3
      %v8803 = vsel %vm2129, %v8801, %v8802
      %v8804 = vrot.slane %v8581, 3
      %v8805 = vsel %vm2129, %v8802, %v8804
      %v8806 = vrot.slane %v8582, 3
      %v8807 = vsel %vm2129, %v8804, %v8806
      %v8808 = vrot.slane %v8583, 3
      %v8809 = vrot.slane %v8584, 3
      %v8810 = vsel %vm2129, %v8808, %v8809
      %v8811 = vrot.slane %v8585, 3
      %v8812 = vsel %vm2129, %v8809, %v8811
      %v8813 = vrot.slane %v8586, 3
      %v8814 = vsel %vm2129, %v8811, %v8813
      %v8815 = vrot.slane %v8587, 3
      %v8816 = vrot.slane %v8588, 3
      %v8817 = vsel %vm2129, %v8815, %v8816
      %v8818 = vrot.slane %v8589, 3
      %v8819 = vsel %vm2129, %v8816, %v8818
      %v8820 = vrot.slane %v8590, 3
      %v8821 = vsel %vm2129, %v8818, %v8820
      %v8822 = vrot.slane %v8591, 3
      %v8823 = vrot.slane %v8592, 3
      %v8824 = vsel %vm2129, %v8822, %v8823
      %v8825 = vrot.slane %v8593, 3
      %v8826 = vsel %vm2129, %v8823, %v8825
      %v8827 = vrot.slane %v8594, 3
      %v8828 = vsel %vm2129, %v8825, %v8827
      %v8829 = vrot.slane %v8595, 3
      %v8830 = vrot.slane %v8596, 3
      %v8831 = vsel %vm2129, %v8829, %v8830
      %v8832 = vrot.slane %v8597, 3
      %v8833 = vsel %vm2129, %v8830, %v8832
      %v8834 = vrot.slane %v8598, 3
      %v8835 = vsel %vm2129, %v8832, %v8834
      %v8836 = vrot.slane %v8599, 3
      %v8837 = vrot.slane %v8600, 3
      %v8838 = vsel %vm2129, %v8836, %v8837
      %v8839 = vrot.slane %v8601, 3
      %v8840 = vsel %vm2129, %v8837, %v8839
      %v8841 = vrot.slane %v8602, 3
      %v8842 = vsel %vm2129, %v8839, %v8841
      %v8843 = vrot.slane %v8603, 3
      %v8844 = vrot.slane %v8604, 3
      %v8845 = vsel %vm2129, %v8843, %v8844
      %v8846 = vrot.slane %v8605, 3
      %v8847 = vsel %vm2129, %v8844, %v8846
      %v8848 = vrot.slane %v8606, 3
      %v8849 = vsel %vm2129, %v8846, %v8848
      %v8850 = vrot.slane %v8607, 3
      %v8851 = vrot.slane %v8608, 3
      %v8852 = vsel %vm2129, %v8850, %v8851
      %v8853 = vrot.slane %v8609, 3
      %v8854 = vsel %vm2129, %v8851, %v8853
      %v8855 = vrot.slane %v8610, 3
      %v8856 = vsel %vm2129, %v8853, %v8855
      %v8857 = vrot.slane %v8611, 3
      %v8858 = vrot.slane %v8612, 3
      %v8859 = vsel %vm2129, %v8857, %v8858
      %v8860 = vrot.slane %v8613, 3
      %v8861 = vsel %vm2129, %v8858, %v8860
      %v8862 = vrot.slane %v8614, 3
      %v8863 = vsel %vm2129, %v8860, %v8862
      %v8864 = vrot.slane %v8615, 3
      %v8865 = vrot.slane %v8616, 3
      %v8866 = vsel %vm2129, %v8864, %v8865
      %v8867 = vrot.slane %v8617, 3
      %v8868 = vsel %vm2129, %v8865, %v8867
      %v8869 = vrot.slane %v8618, 3
      %v8870 = vsel %vm2129, %v8867, %v8869
      %v8871 = vrot.slane %v8619, 3
      %v8872 = vrot.slane %v8620, 3
      %v8873 = vsel %vm2129, %v8871, %v8872
      %v8874 = vrot.slane %v8621, 3
      %v8875 = vsel %vm2129, %v8872, %v8874
      %v8876 = vrot.slane %v8622, 3
      %v8877 = vsel %vm2129, %v8874, %v8876
      %v8878 = vrot.slane %v8623, 3
      %v8879 = vrot.slane %v8624, 3
      %v8880 = vsel %vm2129, %v8878, %v8879
      %v8881 = vrot.slane %v8625, 3
      %v8882 = vsel %vm2129, %v8879, %v8881
      %v8883 = vrot.slane %v8626, 3
      %v8884 = vsel %vm2129, %v8881, %v8883
      %v8885 = vrot.slane %v8627, 3
      %v8886 = vrot.slane %v8628, 3
      %v8887 = vsel %vm2129, %v8885, %v8886
      %v8888 = vrot.slane %v8629, 3
      %v8889 = vsel %vm2129, %v8886, %v8888
      %v8890 = vrot.slane %v8630, 3
      %v8891 = vsel %vm2129, %v8888, %v8890
      %v8892 = vrot.slane %v8631, 3
      %v8893 = vrot.slane %v8632, 3
      %v8894 = vsel %vm2129, %v8892, %v8893
      %v8895 = vrot.slane %v8633, 3
      %v8896 = vsel %vm2129, %v8893, %v8895
      %v8897 = vrot.slane %v8634, 3
      %v8898 = vsel %vm2129, %v8895, %v8897
      %v8971 = vadd.f32 %v8463, %v8733
      %v8972 = vadd.f32 %v8464, %v8735
      %v8973 = vadd.f32 %v8465, %v8737
      %v8974 = vadd.f32 %v8466, %v8740
      %v8975 = vadd.f32 %v8467, %v8742
      %v8976 = vadd.f32 %v8468, %v8744
      %v8977 = vadd.f32 %v8469, %v8747
      %v8978 = vadd.f32 %v8470, %v8749
      %v8979 = vadd.f32 %v8471, %v8751
      %v8980 = vadd.f32 %v8472, %v8754
      %v8981 = vadd.f32 %v8473, %v8756
      %v8982 = vadd.f32 %v8474, %v8758
      %v8983 = vadd.f32 %v8475, %v8761
      %v8984 = vadd.f32 %v8476, %v8763
      %v8985 = vadd.f32 %v8477, %v8765
      %v8986 = vadd.f32 %v8478, %v8768
      %v8987 = vadd.f32 %v8479, %v8770
      %v8988 = vadd.f32 %v8480, %v8772
      %v8989 = vadd.f32 %v8481, %v8775
      %v8990 = vadd.f32 %v8482, %v8777
      %v8991 = vadd.f32 %v8483, %v8779
      %v8992 = vadd.f32 %v8484, %v8782
      %v8993 = vadd.f32 %v8485, %v8784
      %v8994 = vadd.f32 %v8486, %v8786
      %v8995 = vadd.f32 %v8487, %v8789
      %v8996 = vadd.f32 %v8488, %v8791
      %v8997 = vadd.f32 %v8489, %v8793
      %v8998 = vadd.f32 %v8490, %v8796
      %v8999 = vadd.f32 %v8491, %v8798
      %v9000 = vadd.f32 %v8492, %v8800
      %v9001 = vadd.f32 %v8493, %v8803
      %v9002 = vadd.f32 %v8494, %v8805
      %v9003 = vadd.f32 %v8495, %v8807
      %v9004 = vadd.f32 %v8496, %v8810
      %v9005 = vadd.f32 %v8497, %v8812
      %v9006 = vadd.f32 %v8498, %v8814
      %v9007 = vadd.f32 %v8499, %v8817
      %v9008 = vadd.f32 %v8500, %v8819
      %v9009 = vadd.f32 %v8501, %v8821
      %v9010 = vadd.f32 %v8502, %v8824
      %v9011 = vadd.f32 %v8503, %v8826
      %v9012 = vadd.f32 %v8504, %v8828
      %v9013 = vadd.f32 %v8505, %v8831
      %v9014 = vadd.f32 %v8506, %v8833
      %v9015 = vadd.f32 %v8507, %v8835
      %v9016 = vadd.f32 %v8508, %v8838
      %v9017 = vadd.f32 %v8509, %v8840
      %v9018 = vadd.f32 %v8510, %v8842
      %v9019 = vadd.f32 %v8511, %v8845
      %v9020 = vadd.f32 %v8512, %v8847
      %v9021 = vadd.f32 %v8513, %v8849
      %v9022 = vadd.f32 %v8514, %v8852
      %v9023 = vadd.f32 %v8515, %v8854
      %v9024 = vadd.f32 %v8516, %v8856
      %v9025 = vadd.f32 %v8517, %v8859
      %v9026 = vadd.f32 %v8518, %v8861
      %v9027 = vadd.f32 %v8519, %v8863
      %v9028 = vadd.f32 %v8520, %v8866
      %v9029 = vadd.f32 %v8521, %v8868
      %v9030 = vadd.f32 %v8522, %v8870
      %v9031 = vadd.f32 %v8523, %v8873
      %v9032 = vadd.f32 %v8524, %v8875
      %v9033 = vadd.f32 %v8525, %v8877
      %v9034 = vadd.f32 %v8526, %v8880
      %v9035 = vadd.f32 %v8527, %v8882
      %v9036 = vadd.f32 %v8528, %v8884
      %v9037 = vadd.f32 %v8529, %v8887
      %v9038 = vadd.f32 %v8530, %v8889
      %v9039 = vadd.f32 %v8531, %v8891
      %v9040 = vadd.f32 %v8532, %v8894
      %v9041 = vadd.f32 %v8533, %v8896
      %v9042 = vadd.f32 %v8534, %v8898
      %v9043 = vlaneseq
      %v9044 = vshrl.u32 %v9043, 7
      %v9045 = vsub.s32 3, %v9044
      %v9046 = vrot.slane %v285, %v9045
      %v9047 = vmul.f32 %v335, %v9046
      %v9048 = vmul.f32 %v340, %v9046
      %v9049 = vmul.f32 %v345, %v9046
      %v9050 = vmul.f32 %v813, %v9046
      %v9051 = vmul.f32 %v350, %v9046
      %v9052 = vmul.f32 %v355, %v9046
      %v9053 = vmul.f32 %v360, %v9046
      %v9054 = vmul.f32 %v818, %v9046
      %v9055 = vmul.f32 %v365, %v9046
      %v9056 = vmul.f32 %v370, %v9046
      %v9057 = vmul.f32 %v375, %v9046
      %v9058 = vmul.f32 %v823, %v9046
      %v9059 = vmul.f32 %v380, %v9046
      %v9060 = vmul.f32 %v385, %v9046
      %v9061 = vmul.f32 %v390, %v9046
      %v9062 = vmul.f32 %v828, %v9046
      %v9063 = vmul.f32 %v395, %v9046
      %v9064 = vmul.f32 %v400, %v9046
      %v9065 = vmul.f32 %v405, %v9046
      %v9066 = vmul.f32 %v833, %v9046
      %v9067 = vmul.f32 %v410, %v9046
      %v9068 = vmul.f32 %v415, %v9046
      %v9069 = vmul.f32 %v420, %v9046
      %v9070 = vmul.f32 %v838, %v9046
      %v9071 = vmul.f32 %v425, %v9046
      %v9072 = vmul.f32 %v430, %v9046
      %v9073 = vmul.f32 %v435, %v9046
      %v9074 = vmul.f32 %v843, %v9046
      %v9075 = vmul.f32 %v440, %v9046
      %v9076 = vmul.f32 %v445, %v9046
      %v9077 = vmul.f32 %v450, %v9046
      %v9078 = vmul.f32 %v848, %v9046
      %v9079 = vmul.f32 %v455, %v9046
      %v9080 = vmul.f32 %v460, %v9046
      %v9081 = vmul.f32 %v465, %v9046
      %v9082 = vmul.f32 %v853, %v9046
      %v9083 = vmul.f32 %v470, %v9046
      %v9084 = vmul.f32 %v475, %v9046
      %v9085 = vmul.f32 %v480, %v9046
      %v9086 = vmul.f32 %v858, %v9046
      %v9087 = vmul.f32 %v485, %v9046
      %v9088 = vmul.f32 %v490, %v9046
      %v9089 = vmul.f32 %v495, %v9046
      %v9090 = vmul.f32 %v863, %v9046
      %v9091 = vmul.f32 %v500, %v9046
      %v9092 = vmul.f32 %v505, %v9046
      %v9093 = vmul.f32 %v510, %v9046
      %v9094 = vmul.f32 %v868, %v9046
      %v9095 = vmul.f32 %v515, %v9046
      %v9096 = vmul.f32 %v520, %v9046
      %v9097 = vmul.f32 %v525, %v9046
      %v9098 = vmul.f32 %v873, %v9046
      %v9099 = vmul.f32 %v530, %v9046
      %v9100 = vmul.f32 %v535, %v9046
      %v9101 = vmul.f32 %v540, %v9046
      %v9102 = vmul.f32 %v878, %v9046
      %v9103 = vmul.f32 %v545, %v9046
      %v9104 = vmul.f32 %v550, %v9046
      %v9105 = vmul.f32 %v555, %v9046
      %v9106 = vmul.f32 %v883, %v9046
      %v9107 = vmul.f32 %v560, %v9046
      %v9108 = vmul.f32 %v565, %v9046
      %v9109 = vmul.f32 %v570, %v9046
      %v9110 = vmul.f32 %v888, %v9046
      %v9111 = vmul.f32 %v575, %v9046
      %v9112 = vmul.f32 %v580, %v9046
      %v9113 = vmul.f32 %v585, %v9046
      %v9114 = vmul.f32 %v893, %v9046
      %v9115 = vmul.f32 %v590, %v9046
      %v9116 = vmul.f32 %v595, %v9046
      %v9117 = vmul.f32 %v600, %v9046
      %v9118 = vmul.f32 %v898, %v9046
      %v9119 = vmul.f32 %v605, %v9046
      %v9120 = vmul.f32 %v610, %v9046
      %v9121 = vmul.f32 %v615, %v9046
      %v9122 = vmul.f32 %v903, %v9046
      %v9123 = vmul.f32 %v620, %v9046
      %v9124 = vmul.f32 %v625, %v9046
      %v9125 = vmul.f32 %v630, %v9046
      %v9126 = vmul.f32 %v908, %v9046
      %v9127 = vmul.f32 %v635, %v9046
      %v9128 = vmul.f32 %v640, %v9046
      %v9129 = vmul.f32 %v645, %v9046
      %v9130 = vmul.f32 %v913, %v9046
      %v9131 = vmul.f32 %v2954, %v9046
      %v9132 = vmul.f32 %v2959, %v9046
      %v9133 = vmul.f32 %v2964, %v9046
      %v9134 = vmul.f32 %v3117, %v9046
      %v9135 = vmul.f32 %v5154, %v9046
      %v9136 = vmul.f32 %v5159, %v9046
      %v9137 = vmul.f32 %v5164, %v9046
      %v9138 = vmul.f32 %v5317, %v9046
      %v9139 = vmul.f32 %v7354, %v9046
      %v9140 = vmul.f32 %v7359, %v9046
      %v9141 = vmul.f32 %v7364, %v9046
      %v9142 = vmul.f32 %v7517, %v9046
      %v9239 = vrot.slane %v9047, 4
      %v9240 = vrot.slane %v9048, 4
      %v9241 = vsel %vm2638, %v9239, %v9240
      %v9242 = vrot.slane %v9049, 4
      %v9243 = vsel %vm2638, %v9240, %v9242
      %v9244 = vrot.slane %v9050, 4
      %v9245 = vsel %vm2638, %v9242, %v9244
      %v9246 = vrot.slane %v9051, 4
      %v9247 = vrot.slane %v9052, 4
      %v9248 = vsel %vm2638, %v9246, %v9247
      %v9249 = vrot.slane %v9053, 4
      %v9250 = vsel %vm2638, %v9247, %v9249
      %v9251 = vrot.slane %v9054, 4
      %v9252 = vsel %vm2638, %v9249, %v9251
      %v9253 = vrot.slane %v9055, 4
      %v9254 = vrot.slane %v9056, 4
      %v9255 = vsel %vm2638, %v9253, %v9254
      %v9256 = vrot.slane %v9057, 4
      %v9257 = vsel %vm2638, %v9254, %v9256
      %v9258 = vrot.slane %v9058, 4
      %v9259 = vsel %vm2638, %v9256, %v9258
      %v9260 = vrot.slane %v9059, 4
      %v9261 = vrot.slane %v9060, 4
      %v9262 = vsel %vm2638, %v9260, %v9261
      %v9263 = vrot.slane %v9061, 4
      %v9264 = vsel %vm2638, %v9261, %v9263
      %v9265 = vrot.slane %v9062, 4
      %v9266 = vsel %vm2638, %v9263, %v9265
      %v9267 = vrot.slane %v9063, 4
      %v9268 = vrot.slane %v9064, 4
      %v9269 = vsel %vm2638, %v9267, %v9268
      %v9270 = vrot.slane %v9065, 4
      %v9271 = vsel %vm2638, %v9268, %v9270
      %v9272 = vrot.slane %v9066, 4
      %v9273 = vsel %vm2638, %v9270, %v9272
      %v9274 = vrot.slane %v9067, 4
      %v9275 = vrot.slane %v9068, 4
      %v9276 = vsel %vm2638, %v9274, %v9275
      %v9277 = vrot.slane %v9069, 4
      %v9278 = vsel %vm2638, %v9275, %v9277
      %v9279 = vrot.slane %v9070, 4
      %v9280 = vsel %vm2638, %v9277, %v9279
      %v9281 = vrot.slane %v9071, 4
      %v9282 = vrot.slane %v9072, 4
      %v9283 = vsel %vm2638, %v9281, %v9282
      %v9284 = vrot.slane %v9073, 4
      %v9285 = vsel %vm2638, %v9282, %v9284
      %v9286 = vrot.slane %v9074, 4
      %v9287 = vsel %vm2638, %v9284, %v9286
      %v9288 = vrot.slane %v9075, 4
      %v9289 = vrot.slane %v9076, 4
      %v9290 = vsel %vm2638, %v9288, %v9289
      %v9291 = vrot.slane %v9077, 4
      %v9292 = vsel %vm2638, %v9289, %v9291
      %v9293 = vrot.slane %v9078, 4
      %v9294 = vsel %vm2638, %v9291, %v9293
      %v9295 = vrot.slane %v9079, 4
      %v9296 = vrot.slane %v9080, 4
      %v9297 = vsel %vm2638, %v9295, %v9296
      %v9298 = vrot.slane %v9081, 4
      %v9299 = vsel %vm2638, %v9296, %v9298
      %v9300 = vrot.slane %v9082, 4
      %v9301 = vsel %vm2638, %v9298, %v9300
      %v9302 = vrot.slane %v9083, 4
      %v9303 = vrot.slane %v9084, 4
      %v9304 = vsel %vm2638, %v9302, %v9303
      %v9305 = vrot.slane %v9085, 4
      %v9306 = vsel %vm2638, %v9303, %v9305
      %v9307 = vrot.slane %v9086, 4
      %v9308 = vsel %vm2638, %v9305, %v9307
      %v9309 = vrot.slane %v9087, 4
      %v9310 = vrot.slane %v9088, 4
      %v9311 = vsel %vm2638, %v9309, %v9310
      %v9312 = vrot.slane %v9089, 4
      %v9313 = vsel %vm2638, %v9310, %v9312
      %v9314 = vrot.slane %v9090, 4
      %v9315 = vsel %vm2638, %v9312, %v9314
      %v9316 = vrot.slane %v9091, 4
      %v9317 = vrot.slane %v9092, 4
      %v9318 = vsel %vm2638, %v9316, %v9317
      %v9319 = vrot.slane %v9093, 4
      %v9320 = vsel %vm2638, %v9317, %v9319
      %v9321 = vrot.slane %v9094, 4
      %v9322 = vsel %vm2638, %v9319, %v9321
      %v9323 = vrot.slane %v9095, 4
      %v9324 = vrot.slane %v9096, 4
      %v9325 = vsel %vm2638, %v9323, %v9324
      %v9326 = vrot.slane %v9097, 4
      %v9327 = vsel %vm2638, %v9324, %v9326
      %v9328 = vrot.slane %v9098, 4
      %v9329 = vsel %vm2638, %v9326, %v9328
      %v9330 = vrot.slane %v9099, 4
      %v9331 = vrot.slane %v9100, 4
      %v9332 = vsel %vm2638, %v9330, %v9331
      %v9333 = vrot.slane %v9101, 4
      %v9334 = vsel %vm2638, %v9331, %v9333
      %v9335 = vrot.slane %v9102, 4
      %v9336 = vsel %vm2638, %v9333, %v9335
      %v9337 = vrot.slane %v9103, 4
      %v9338 = vrot.slane %v9104, 4
      %v9339 = vsel %vm2638, %v9337, %v9338
      %v9340 = vrot.slane %v9105, 4
      %v9341 = vsel %vm2638, %v9338, %v9340
      %v9342 = vrot.slane %v9106, 4
      %v9343 = vsel %vm2638, %v9340, %v9342
      %v9344 = vrot.slane %v9107, 4
      %v9345 = vrot.slane %v9108, 4
      %v9346 = vsel %vm2638, %v9344, %v9345
      %v9347 = vrot.slane %v9109, 4
      %v9348 = vsel %vm2638, %v9345, %v9347
      %v9349 = vrot.slane %v9110, 4
      %v9350 = vsel %vm2638, %v9347, %v9349
      %v9351 = vrot.slane %v9111, 4
      %v9352 = vrot.slane %v9112, 4
      %v9353 = vsel %vm2638, %v9351, %v9352
      %v9354 = vrot.slane %v9113, 4
      %v9355 = vsel %vm2638, %v9352, %v9354
      %v9356 = vrot.slane %v9114, 4
      %v9357 = vsel %vm2638, %v9354, %v9356
      %v9358 = vrot.slane %v9115, 4
      %v9359 = vrot.slane %v9116, 4
      %v9360 = vsel %vm2638, %v9358, %v9359
      %v9361 = vrot.slane %v9117, 4
      %v9362 = vsel %vm2638, %v9359, %v9361
      %v9363 = vrot.slane %v9118, 4
      %v9364 = vsel %vm2638, %v9361, %v9363
      %v9365 = vrot.slane %v9119, 4
      %v9366 = vrot.slane %v9120, 4
      %v9367 = vsel %vm2638, %v9365, %v9366
      %v9368 = vrot.slane %v9121, 4
      %v9369 = vsel %vm2638, %v9366, %v9368
      %v9370 = vrot.slane %v9122, 4
      %v9371 = vsel %vm2638, %v9368, %v9370
      %v9372 = vrot.slane %v9123, 4
      %v9373 = vrot.slane %v9124, 4
      %v9374 = vsel %vm2638, %v9372, %v9373
      %v9375 = vrot.slane %v9125, 4
      %v9376 = vsel %vm2638, %v9373, %v9375
      %v9377 = vrot.slane %v9126, 4
      %v9378 = vsel %vm2638, %v9375, %v9377
      %v9379 = vrot.slane %v9127, 4
      %v9380 = vrot.slane %v9128, 4
      %v9381 = vsel %vm2638, %v9379, %v9380
      %v9382 = vrot.slane %v9129, 4
      %v9383 = vsel %vm2638, %v9380, %v9382
      %v9384 = vrot.slane %v9130, 4
      %v9385 = vsel %vm2638, %v9382, %v9384
      %v9386 = vrot.slane %v9131, 4
      %v9387 = vrot.slane %v9132, 4
      %v9388 = vsel %vm2638, %v9386, %v9387
      %v9389 = vrot.slane %v9133, 4
      %v9390 = vsel %vm2638, %v9387, %v9389
      %v9391 = vrot.slane %v9134, 4
      %v9392 = vsel %vm2638, %v9389, %v9391
      %v9393 = vrot.slane %v9135, 4
      %v9394 = vrot.slane %v9136, 4
      %v9395 = vsel %vm2638, %v9393, %v9394
      %v9396 = vrot.slane %v9137, 4
      %v9397 = vsel %vm2638, %v9394, %v9396
      %v9398 = vrot.slane %v9138, 4
      %v9399 = vsel %vm2638, %v9396, %v9398
      %v9400 = vrot.slane %v9139, 4
      %v9401 = vrot.slane %v9140, 4
      %v9402 = vsel %vm2638, %v9400, %v9401
      %v9403 = vrot.slane %v9141, 4
      %v9404 = vsel %vm2638, %v9401, %v9403
      %v9405 = vrot.slane %v9142, 4
      %v9406 = vsel %vm2638, %v9403, %v9405
      %v9479 = vadd.f32 %v8971, %v9241
      %v9480 = vadd.f32 %v8972, %v9243
      %v9481 = vadd.f32 %v8973, %v9245
      %v9482 = vadd.f32 %v8974, %v9248
      %v9483 = vadd.f32 %v8975, %v9250
      %v9484 = vadd.f32 %v8976, %v9252
      %v9485 = vadd.f32 %v8977, %v9255
      %v9486 = vadd.f32 %v8978, %v9257
      %v9487 = vadd.f32 %v8979, %v9259
      %v9488 = vadd.f32 %v8980, %v9262
      %v9489 = vadd.f32 %v8981, %v9264
      %v9490 = vadd.f32 %v8982, %v9266
      %v9491 = vadd.f32 %v8983, %v9269
      %v9492 = vadd.f32 %v8984, %v9271
      %v9493 = vadd.f32 %v8985, %v9273
      %v9494 = vadd.f32 %v8986, %v9276
      %v9495 = vadd.f32 %v8987, %v9278
      %v9496 = vadd.f32 %v8988, %v9280
      %v9497 = vadd.f32 %v8989, %v9283
      %v9498 = vadd.f32 %v8990, %v9285
      %v9499 = vadd.f32 %v8991, %v9287
      %v9500 = vadd.f32 %v8992, %v9290
      %v9501 = vadd.f32 %v8993, %v9292
      %v9502 = vadd.f32 %v8994, %v9294
      %v9503 = vadd.f32 %v8995, %v9297
      %v9504 = vadd.f32 %v8996, %v9299
      %v9505 = vadd.f32 %v8997, %v9301
      %v9506 = vadd.f32 %v8998, %v9304
      %v9507 = vadd.f32 %v8999, %v9306
      %v9508 = vadd.f32 %v9000, %v9308
      %v9509 = vadd.f32 %v9001, %v9311
      %v9510 = vadd.f32 %v9002, %v9313
      %v9511 = vadd.f32 %v9003, %v9315
      %v9512 = vadd.f32 %v9004, %v9318
      %v9513 = vadd.f32 %v9005, %v9320
      %v9514 = vadd.f32 %v9006, %v9322
      %v9515 = vadd.f32 %v9007, %v9325
      %v9516 = vadd.f32 %v9008, %v9327
      %v9517 = vadd.f32 %v9009, %v9329
      %v9518 = vadd.f32 %v9010, %v9332
      %v9519 = vadd.f32 %v9011, %v9334
      %v9520 = vadd.f32 %v9012, %v9336
      %v9521 = vadd.f32 %v9013, %v9339
      %v9522 = vadd.f32 %v9014, %v9341
      %v9523 = vadd.f32 %v9015, %v9343
      %v9524 = vadd.f32 %v9016, %v9346
      %v9525 = vadd.f32 %v9017, %v9348
      %v9526 = vadd.f32 %v9018, %v9350
      %v9527 = vadd.f32 %v9019, %v9353
      %v9528 = vadd.f32 %v9020, %v9355
      %v9529 = vadd.f32 %v9021, %v9357
      %v9530 = vadd.f32 %v9022, %v9360
      %v9531 = vadd.f32 %v9023, %v9362
      %v9532 = vadd.f32 %v9024, %v9364
      %v9533 = vadd.f32 %v9025, %v9367
      %v9534 = vadd.f32 %v9026, %v9369
      %v9535 = vadd.f32 %v9027, %v9371
      %v9536 = vadd.f32 %v9028, %v9374
      %v9537 = vadd.f32 %v9029, %v9376
      %v9538 = vadd.f32 %v9030, %v9378
      %v9539 = vadd.f32 %v9031, %v9381
      %v9540 = vadd.f32 %v9032, %v9383
      %v9541 = vadd.f32 %v9033, %v9385
      %v9542 = vadd.f32 %v9034, %v9388
      %v9543 = vadd.f32 %v9035, %v9390
      %v9544 = vadd.f32 %v9036, %v9392
      %v9545 = vadd.f32 %v9037, %v9395
      %v9546 = vadd.f32 %v9038, %v9397
      %v9547 = vadd.f32 %v9039, %v9399
      %v9548 = vadd.f32 %v9040, %v9402
      %v9549 = vadd.f32 %v9041, %v9404
      %v9550 = vadd.f32 %v9042, %v9406
      %9552 = vset.pattern.permute.xlu0 0
      %9553 = vperm.xlu0 %9552, %v279
      %v9554 = vpop.permute.xlu0 %9553
      %9557 = vset.pattern.permute.xlu0 0
      %9558 = vperm.xlu0 %9557, %v280
      %v9559 = vpop.permute.xlu0 %9558
      %9562 = vset.pattern.permute.xlu0 0
      %9563 = vperm.xlu0 %9562, %v281
      %v9564 = vpop.permute.xlu0 %9563
      %v9566 = vlaneseq
      %v9567 = vshrl.u32 %v9566, 7
      %v9568 = vsub.s32 4, %v9567
      %v9569 = vrot.slane %v285, %v9568
      %v9570 = vmul.f32 %v350, %v9569
      %v9571 = vmul.f32 %v355, %v9569
      %v9572 = vmul.f32 %v360, %v9569
      %v9573 = vmul.f32 %v365, %v9569
      %v9574 = vmul.f32 %v370, %v9569
      %v9575 = vmul.f32 %v375, %v9569
      %v9576 = vmul.f32 %v380, %v9569
      %v9577 = vmul.f32 %v385, %v9569
      %v9578 = vmul.f32 %v390, %v9569
      %v9579 = vmul.f32 %v395, %v9569
      %v9580 = vmul.f32 %v400, %v9569
      %v9581 = vmul.f32 %v405, %v9569
      %v9582 = vmul.f32 %v410, %v9569
      %v9583 = vmul.f32 %v415, %v9569
      %v9584 = vmul.f32 %v420, %v9569
      %v9585 = vmul.f32 %v425, %v9569
      %v9586 = vmul.f32 %v430, %v9569
      %v9587 = vmul.f32 %v435, %v9569
      %v9588 = vmul.f32 %v440, %v9569
      %v9589 = vmul.f32 %v445, %v9569
      %v9590 = vmul.f32 %v450, %v9569
      %v9591 = vmul.f32 %v455, %v9569
      %v9592 = vmul.f32 %v460, %v9569
      %v9593 = vmul.f32 %v465, %v9569
      %v9594 = vmul.f32 %v470, %v9569
      %v9595 = vmul.f32 %v475, %v9569
      %v9596 = vmul.f32 %v480, %v9569
      %v9597 = vmul.f32 %v485, %v9569
      %v9598 = vmul.f32 %v490, %v9569
      %v9599 = vmul.f32 %v495, %v9569
      %v9600 = vmul.f32 %v500, %v9569
      %v9601 = vmul.f32 %v505, %v9569
      %v9602 = vmul.f32 %v510, %v9569
      %v9603 = vmul.f32 %v515, %v9569
      %v9604 = vmul.f32 %v520, %v9569
      %v9605 = vmul.f32 %v525, %v9569
      %v9606 = vmul.f32 %v530, %v9569
      %v9607 = vmul.f32 %v535, %v9569
      %v9608 = vmul.f32 %v540, %v9569
      %v9609 = vmul.f32 %v545, %v9569
      %v9610 = vmul.f32 %v550, %v9569
      %v9611 = vmul.f32 %v555, %v9569
      %v9612 = vmul.f32 %v560, %v9569
      %v9613 = vmul.f32 %v565, %v9569
      %v9614 = vmul.f32 %v570, %v9569
      %v9615 = vmul.f32 %v575, %v9569
      %v9616 = vmul.f32 %v580, %v9569
      %v9617 = vmul.f32 %v585, %v9569
      %v9618 = vmul.f32 %v590, %v9569
      %v9619 = vmul.f32 %v595, %v9569
      %v9620 = vmul.f32 %v600, %v9569
      %v9621 = vmul.f32 %v605, %v9569
      %v9622 = vmul.f32 %v610, %v9569
      %v9623 = vmul.f32 %v615, %v9569
      %v9624 = vmul.f32 %v620, %v9569
      %v9625 = vmul.f32 %v625, %v9569
      %v9626 = vmul.f32 %v630, %v9569
      %v9627 = vmul.f32 %v635, %v9569
      %v9628 = vmul.f32 %v640, %v9569
      %v9629 = vmul.f32 %v645, %v9569
      %v9630 = vmul.f32 %v2954, %v9569
      %v9631 = vmul.f32 %v2959, %v9569
      %v9632 = vmul.f32 %v2964, %v9569
      %v9633 = vmul.f32 %v5154, %v9569
      %v9634 = vmul.f32 %v5159, %v9569
      %v9635 = vmul.f32 %v5164, %v9569
      %v9636 = vmul.f32 %v7354, %v9569
      %v9637 = vmul.f32 %v7359, %v9569
      %v9638 = vmul.f32 %v7364, %v9569
      %v9639 = vmul.f32 %v9554, %v9569
      %v9640 = vmul.f32 %v9559, %v9569
      %v9641 = vmul.f32 %v9564, %v9569
      %v9642 = vadd.f32 %v9479, %v9570
      %v9643 = vadd.f32 %v9480, %v9571
      %v9644 = vadd.f32 %v9481, %v9572
      %v9645 = vadd.f32 %v9482, %v9573
      %v9646 = vadd.f32 %v9483, %v9574
      %v9647 = vadd.f32 %v9484, %v9575
      %v9648 = vadd.f32 %v9485, %v9576
      %v9649 = vadd.f32 %v9486, %v9577
      %v9650 = vadd.f32 %v9487, %v9578
      %v9651 = vadd.f32 %v9488, %v9579
      %v9652 = vadd.f32 %v9489, %v9580
      %v9653 = vadd.f32 %v9490, %v9581
      %v9654 = vadd.f32 %v9491, %v9582
      %v9655 = vadd.f32 %v9492, %v9583
      %v9656 = vadd.f32 %v9493, %v9584
      %v9657 = vadd.f32 %v9494, %v9585
      %v9658 = vadd.f32 %v9495, %v9586
      %v9659 = vadd.f32 %v9496, %v9587
      %v9660 = vadd.f32 %v9497, %v9588
      %v9661 = vadd.f32 %v9498, %v9589
      %v9662 = vadd.f32 %v9499, %v9590
      %v9663 = vadd.f32 %v9500, %v9591
      %v9664 = vadd.f32 %v9501, %v9592
      %v9665 = vadd.f32 %v9502, %v9593
      %v9666 = vadd.f32 %v9503, %v9594
      %v9667 = vadd.f32 %v9504, %v9595
      %v9668 = vadd.f32 %v9505, %v9596
      %v9669 = vadd.f32 %v9506, %v9597
      %v9670 = vadd.f32 %v9507, %v9598
      %v9671 = vadd.f32 %v9508, %v9599
      %v9672 = vadd.f32 %v9509, %v9600
      %v9673 = vadd.f32 %v9510, %v9601
      %v9674 = vadd.f32 %v9511, %v9602
      %v9675 = vadd.f32 %v9512, %v9603
      %v9676 = vadd.f32 %v9513, %v9604
      %v9677 = vadd.f32 %v9514, %v9605
      %v9678 = vadd.f32 %v9515, %v9606
      %v9679 = vadd.f32 %v9516, %v9607
      %v9680 = vadd.f32 %v9517, %v9608
      %v9681 = vadd.f32 %v9518, %v9609
      %v9682 = vadd.f32 %v9519, %v9610
      %v9683 = vadd.f32 %v9520, %v9611
      %v9684 = vadd.f32 %v9521, %v9612
      %v9685 = vadd.f32 %v9522, %v9613
      %v9686 = vadd.f32 %v9523, %v9614
      %v9687 = vadd.f32 %v9524, %v9615
      %v9688 = vadd.f32 %v9525, %v9616
      %v9689 = vadd.f32 %v9526, %v9617
      %v9690 = vadd.f32 %v9527, %v9618
      %v9691 = vadd.f32 %v9528, %v9619
      %v9692 = vadd.f32 %v9529, %v9620
      %v9693 = vadd.f32 %v9530, %v9621
      %v9694 = vadd.f32 %v9531, %v9622
      %v9695 = vadd.f32 %v9532, %v9623
      %v9696 = vadd.f32 %v9533, %v9624
      %v9697 = vadd.f32 %v9534, %v9625
      %v9698 = vadd.f32 %v9535, %v9626
      %v9699 = vadd.f32 %v9536, %v9627
      %v9700 = vadd.f32 %v9537, %v9628
      %v9701 = vadd.f32 %v9538, %v9629
      %v9702 = vadd.f32 %v9539, %v9630
      %v9703 = vadd.f32 %v9540, %v9631
      %v9704 = vadd.f32 %v9541, %v9632
      %v9705 = vadd.f32 %v9542, %v9633
      %v9706 = vadd.f32 %v9543, %v9634
      %v9707 = vadd.f32 %v9544, %v9635
      %v9708 = vadd.f32 %v9545, %v9636
      %v9709 = vadd.f32 %v9546, %v9637
      %v9710 = vadd.f32 %v9547, %v9638
      %v9711 = vadd.f32 %v9548, %v9639
      %v9712 = vadd.f32 %v9549, %v9640
      %v9713 = vadd.f32 %v9550, %v9641
      %9715 = vset.pattern.permute.xlu0 0
      %9716 = vperm.xlu0 %9715, %v282
      %v9717 = vpop.permute.xlu0 %9716
      %v9719 = vlaneseq
      %v9720 = vshrl.u32 %v9719, 7
      %v9721 = vsub.s32 5, %v9720
      %v9722 = vrot.slane %v285, %v9721
      %v9723 = vmul.f32 %v350, %v9722
      %v9724 = vmul.f32 %v355, %v9722
      %v9725 = vmul.f32 %v360, %v9722
      %v9726 = vmul.f32 %v818, %v9722
      %v9727 = vmul.f32 %v365, %v9722
      %v9728 = vmul.f32 %v370, %v9722
      %v9729 = vmul.f32 %v375, %v9722
      %v9730 = vmul.f32 %v823, %v9722
      %v9731 = vmul.f32 %v380, %v9722
      %v9732 = vmul.f32 %v385, %v9722
      %v9733 = vmul.f32 %v390, %v9722
      %v9734 = vmul.f32 %v828, %v9722
      %v9735 = vmul.f32 %v395, %v9722
      %v9736 = vmul.f32 %v400, %v9722
      %v9737 = vmul.f32 %v405, %v9722
      %v9738 = vmul.f32 %v833, %v9722
      %v9739 = vmul.f32 %v410, %v9722
      %v9740 = vmul.f32 %v415, %v9722
      %v9741 = vmul.f32 %v420, %v9722
      %v9742 = vmul.f32 %v838, %v9722
      %v9743 = vmul.f32 %v425, %v9722
      %v9744 = vmul.f32 %v430, %v9722
      %v9745 = vmul.f32 %v435, %v9722
      %v9746 = vmul.f32 %v843, %v9722
      %v9747 = vmul.f32 %v440, %v9722
      %v9748 = vmul.f32 %v445, %v9722
      %v9749 = vmul.f32 %v450, %v9722
      %v9750 = vmul.f32 %v848, %v9722
      %v9751 = vmul.f32 %v455, %v9722
      %v9752 = vmul.f32 %v460, %v9722
      %v9753 = vmul.f32 %v465, %v9722
      %v9754 = vmul.f32 %v853, %v9722
      %v9755 = vmul.f32 %v470, %v9722
      %v9756 = vmul.f32 %v475, %v9722
      %v9757 = vmul.f32 %v480, %v9722
      %v9758 = vmul.f32 %v858, %v9722
      %v9759 = vmul.f32 %v485, %v9722
      %v9760 = vmul.f32 %v490, %v9722
      %v9761 = vmul.f32 %v495, %v9722
      %v9762 = vmul.f32 %v863, %v9722
      %v9763 = vmul.f32 %v500, %v9722
      %v9764 = vmul.f32 %v505, %v9722
      %v9765 = vmul.f32 %v510, %v9722
      %v9766 = vmul.f32 %v868, %v9722
      %v9767 = vmul.f32 %v515, %v9722
      %v9768 = vmul.f32 %v520, %v9722
      %v9769 = vmul.f32 %v525, %v9722
      %v9770 = vmul.f32 %v873, %v9722
      %v9771 = vmul.f32 %v530, %v9722
      %v9772 = vmul.f32 %v535, %v9722
      %v9773 = vmul.f32 %v540, %v9722
      %v9774 = vmul.f32 %v878, %v9722
      %v9775 = vmul.f32 %v545, %v9722
      %v9776 = vmul.f32 %v550, %v9722
      %v9777 = vmul.f32 %v555, %v9722
      %v9778 = vmul.f32 %v883, %v9722
      %v9779 = vmul.f32 %v560, %v9722
      %v9780 = vmul.f32 %v565, %v9722
      %v9781 = vmul.f32 %v570, %v9722
      %v9782 = vmul.f32 %v888, %v9722
      %v9783 = vmul.f32 %v575, %v9722
      %v9784 = vmul.f32 %v580, %v9722
      %v9785 = vmul.f32 %v585, %v9722
      %v9786 = vmul.f32 %v893, %v9722
      %v9787 = vmul.f32 %v590, %v9722
      %v9788 = vmul.f32 %v595, %v9722
      %v9789 = vmul.f32 %v600, %v9722
      %v9790 = vmul.f32 %v898, %v9722
      %v9791 = vmul.f32 %v605, %v9722
      %v9792 = vmul.f32 %v610, %v9722
      %v9793 = vmul.f32 %v615, %v9722
      %v9794 = vmul.f32 %v903, %v9722
      %v9795 = vmul.f32 %v620, %v9722
      %v9796 = vmul.f32 %v625, %v9722
      %v9797 = vmul.f32 %v630, %v9722
      %v9798 = vmul.f32 %v908, %v9722
      %v9799 = vmul.f32 %v635, %v9722
      %v9800 = vmul.f32 %v640, %v9722
      %v9801 = vmul.f32 %v645, %v9722
      %v9802 = vmul.f32 %v913, %v9722
      %v9803 = vmul.f32 %v2954, %v9722
      %v9804 = vmul.f32 %v2959, %v9722
      %v9805 = vmul.f32 %v2964, %v9722
      %v9806 = vmul.f32 %v3117, %v9722
      %v9807 = vmul.f32 %v5154, %v9722
      %v9808 = vmul.f32 %v5159, %v9722
      %v9809 = vmul.f32 %v5164, %v9722
      %v9810 = vmul.f32 %v5317, %v9722
      %v9811 = vmul.f32 %v7354, %v9722
      %v9812 = vmul.f32 %v7359, %v9722
      %v9813 = vmul.f32 %v7364, %v9722
      %v9814 = vmul.f32 %v7517, %v9722
      %v9815 = vmul.f32 %v9554, %v9722
      %v9816 = vmul.f32 %v9559, %v9722
      %v9817 = vmul.f32 %v9564, %v9722
      %v9818 = vmul.f32 %v9717, %v9722
      %v9915 = vrot.slane %v9723, 1
      %v9916 = vrot.slane %v9724, 1
      %v9917 = vsel %vm1111, %v9915, %v9916
      %v9918 = vrot.slane %v9725, 1
      %v9919 = vsel %vm1111, %v9916, %v9918
      %v9920 = vrot.slane %v9726, 1
      %v9921 = vsel %vm1111, %v9918, %v9920
      %v9922 = vrot.slane %v9727, 1
      %v9923 = vrot.slane %v9728, 1
      %v9924 = vsel %vm1111, %v9922, %v9923
      %v9925 = vrot.slane %v9729, 1
      %v9926 = vsel %vm1111, %v9923, %v9925
      %v9927 = vrot.slane %v9730, 1
      %v9928 = vsel %vm1111, %v9925, %v9927
      %v9929 = vrot.slane %v9731, 1
      %v9930 = vrot.slane %v9732, 1
      %v9931 = vsel %vm1111, %v9929, %v9930
      %v9932 = vrot.slane %v9733, 1
      %v9933 = vsel %vm1111, %v9930, %v9932
      %v9934 = vrot.slane %v9734, 1
      %v9935 = vsel %vm1111, %v9932, %v9934
      %v9936 = vrot.slane %v9735, 1
      %v9937 = vrot.slane %v9736, 1
      %v9938 = vsel %vm1111, %v9936, %v9937
      %v9939 = vrot.slane %v9737, 1
      %v9940 = vsel %vm1111, %v9937, %v9939
      %v9941 = vrot.slane %v9738, 1
      %v9942 = vsel %vm1111, %v9939, %v9941
      %v9943 = vrot.slane %v9739, 1
      %v9944 = vrot.slane %v9740, 1
      %v9945 = vsel %vm1111, %v9943, %v9944
      %v9946 = vrot.slane %v9741, 1
      %v9947 = vsel %vm1111, %v9944, %v9946
      %v9948 = vrot.slane %v9742, 1
      %v9949 = vsel %vm1111, %v9946, %v9948
      %v9950 = vrot.slane %v9743, 1
      %v9951 = vrot.slane %v9744, 1
      %v9952 = vsel %vm1111, %v9950, %v9951
      %v9953 = vrot.slane %v9745, 1
      %v9954 = vsel %vm1111, %v9951, %v9953
      %v9955 = vrot.slane %v9746, 1
      %v9956 = vsel %vm1111, %v9953, %v9955
      %v9957 = vrot.slane %v9747, 1
      %v9958 = vrot.slane %v9748, 1
      %v9959 = vsel %vm1111, %v9957, %v9958
      %v9960 = vrot.slane %v9749, 1
      %v9961 = vsel %vm1111, %v9958, %v9960
      %v9962 = vrot.slane %v9750, 1
      %v9963 = vsel %vm1111, %v9960, %v9962
      %v9964 = vrot.slane %v9751, 1
      %v9965 = vrot.slane %v9752, 1
      %v9966 = vsel %vm1111, %v9964, %v9965
      %v9967 = vrot.slane %v9753, 1
      %v9968 = vsel %vm1111, %v9965, %v9967
      %v9969 = vrot.slane %v9754, 1
      %v9970 = vsel %vm1111, %v9967, %v9969
      %v9971 = vrot.slane %v9755, 1
      %v9972 = vrot.slane %v9756, 1
      %v9973 = vsel %vm1111, %v9971, %v9972
      %v9974 = vrot.slane %v9757, 1
      %v9975 = vsel %vm1111, %v9972, %v9974
      %v9976 = vrot.slane %v9758, 1
      %v9977 = vsel %vm1111, %v9974, %v9976
      %v9978 = vrot.slane %v9759, 1
      %v9979 = vrot.slane %v9760, 1
      %v9980 = vsel %vm1111, %v9978, %v9979
      %v9981 = vrot.slane %v9761, 1
      %v9982 = vsel %vm1111, %v9979, %v9981
      %v9983 = vrot.slane %v9762, 1
      %v9984 = vsel %vm1111, %v9981, %v9983
      %v9985 = vrot.slane %v9763, 1
      %v9986 = vrot.slane %v9764, 1
      %v9987 = vsel %vm1111, %v9985, %v9986
      %v9988 = vrot.slane %v9765, 1
      %v9989 = vsel %vm1111, %v9986, %v9988
      %v9990 = vrot.slane %v9766, 1
      %v9991 = vsel %vm1111, %v9988, %v9990
      %v9992 = vrot.slane %v9767, 1
      %v9993 = vrot.slane %v9768, 1
      %v9994 = vsel %vm1111, %v9992, %v9993
      %v9995 = vrot.slane %v9769, 1
      %v9996 = vsel %vm1111, %v9993, %v9995
      %v9997 = vrot.slane %v9770, 1
      %v9998 = vsel %vm1111, %v9995, %v9997
      %v9999 = vrot.slane %v9771, 1
      %v10000 = vrot.slane %v9772, 1
      %v10001 = vsel %vm1111, %v9999, %v10000
      %v10002 = vrot.slane %v9773, 1
      %v10003 = vsel %vm1111, %v10000, %v10002
      %v10004 = vrot.slane %v9774, 1
      %v10005 = vsel %vm1111, %v10002, %v10004
      %v10006 = vrot.slane %v9775, 1
      %v10007 = vrot.slane %v9776, 1
      %v10008 = vsel %vm1111, %v10006, %v10007
      %v10009 = vrot.slane %v9777, 1
      %v10010 = vsel %vm1111, %v10007, %v10009
      %v10011 = vrot.slane %v9778, 1
      %v10012 = vsel %vm1111, %v10009, %v10011
      %v10013 = vrot.slane %v9779, 1
      %v10014 = vrot.slane %v9780, 1
      %v10015 = vsel %vm1111, %v10013, %v10014
      %v10016 = vrot.slane %v9781, 1
      %v10017 = vsel %vm1111, %v10014, %v10016
      %v10018 = vrot.slane %v9782, 1
      %v10019 = vsel %vm1111, %v10016, %v10018
      %v10020 = vrot.slane %v9783, 1
      %v10021 = vrot.slane %v9784, 1
      %v10022 = vsel %vm1111, %v10020, %v10021
      %v10023 = vrot.slane %v9785, 1
      %v10024 = vsel %vm1111, %v10021, %v10023
      %v10025 = vrot.slane %v9786, 1
      %v10026 = vsel %vm1111, %v10023, %v10025
      %v10027 = vrot.slane %v9787, 1
      %v10028 = vrot.slane %v9788, 1
      %v10029 = vsel %vm1111, %v10027, %v10028
      %v10030 = vrot.slane %v9789, 1
      %v10031 = vsel %vm1111, %v10028, %v10030
      %v10032 = vrot.slane %v9790, 1
      %v10033 = vsel %vm1111, %v10030, %v10032
      %v10034 = vrot.slane %v9791, 1
      %v10035 = vrot.slane %v9792, 1
      %v10036 = vsel %vm1111, %v10034, %v10035
      %v10037 = vrot.slane %v9793, 1
      %v10038 = vsel %vm1111, %v10035, %v10037
      %v10039 = vrot.slane %v9794, 1
      %v10040 = vsel %vm1111, %v10037, %v10039
      %v10041 = vrot.slane %v9795, 1
      %v10042 = vrot.slane %v9796, 1
      %v10043 = vsel %vm1111, %v10041, %v10042
      %v10044 = vrot.slane %v9797, 1
      %v10045 = vsel %vm1111, %v10042, %v10044
      %v10046 = vrot.slane %v9798, 1
      %v10047 = vsel %vm1111, %v10044, %v10046
      %v10048 = vrot.slane %v9799, 1
      %v10049 = vrot.slane %v9800, 1
      %v10050 = vsel %vm1111, %v10048, %v10049
      %v10051 = vrot.slane %v9801, 1
      %v10052 = vsel %vm1111, %v10049, %v10051
      %v10053 = vrot.slane %v9802, 1
      %v10054 = vsel %vm1111, %v10051, %v10053
      %v10055 = vrot.slane %v9803, 1
      %v10056 = vrot.slane %v9804, 1
      %v10057 = vsel %vm1111, %v10055, %v10056
      %v10058 = vrot.slane %v9805, 1
      %v10059 = vsel %vm1111, %v10056, %v10058
      %v10060 = vrot.slane %v9806, 1
      %v10061 = vsel %vm1111, %v10058, %v10060
      %v10062 = vrot.slane %v9807, 1
      %v10063 = vrot.slane %v9808, 1
      %v10064 = vsel %vm1111, %v10062, %v10063
      %v10065 = vrot.slane %v9809, 1
      %v10066 = vsel %vm1111, %v10063, %v10065
      %v10067 = vrot.slane %v9810, 1
      %v10068 = vsel %vm1111, %v10065, %v10067
      %v10069 = vrot.slane %v9811, 1
      %v10070 = vrot.slane %v9812, 1
      %v10071 = vsel %vm1111, %v10069, %v10070
      %v10072 = vrot.slane %v9813, 1
      %v10073 = vsel %vm1111, %v10070, %v10072
      %v10074 = vrot.slane %v9814, 1
      %v10075 = vsel %vm1111, %v10072, %v10074
      %v10076 = vrot.slane %v9815, 1
      %v10077 = vrot.slane %v9816, 1
      %v10078 = vsel %vm1111, %v10076, %v10077
      %v10079 = vrot.slane %v9817, 1
      %v10080 = vsel %vm1111, %v10077, %v10079
      %v10081 = vrot.slane %v9818, 1
      %v10082 = vsel %vm1111, %v10079, %v10081
      %v10155 = vadd.f32 %v9642, %v9917
      %v10156 = vadd.f32 %v9643, %v9919
      %v10157 = vadd.f32 %v9644, %v9921
      %v10158 = vadd.f32 %v9645, %v9924
      %v10159 = vadd.f32 %v9646, %v9926
      %v10160 = vadd.f32 %v9647, %v9928
      %v10161 = vadd.f32 %v9648, %v9931
      %v10162 = vadd.f32 %v9649, %v9933
      %v10163 = vadd.f32 %v9650, %v9935
      %v10164 = vadd.f32 %v9651, %v9938
      %v10165 = vadd.f32 %v9652, %v9940
      %v10166 = vadd.f32 %v9653, %v9942
      %v10167 = vadd.f32 %v9654, %v9945
      %v10168 = vadd.f32 %v9655, %v9947
      %v10169 = vadd.f32 %v9656, %v9949
      %v10170 = vadd.f32 %v9657, %v9952
      %v10171 = vadd.f32 %v9658, %v9954
      %v10172 = vadd.f32 %v9659, %v9956
      %v10173 = vadd.f32 %v9660, %v9959
      %v10174 = vadd.f32 %v9661, %v9961
      %v10175 = vadd.f32 %v9662, %v9963
      %v10176 = vadd.f32 %v9663, %v9966
      %v10177 = vadd.f32 %v9664, %v9968
      %v10178 = vadd.f32 %v9665, %v9970
      %v10179 = vadd.f32 %v9666, %v9973
      %v10180 = vadd.f32 %v9667, %v9975
      %v10181 = vadd.f32 %v9668, %v9977
      %v10182 = vadd.f32 %v9669, %v9980
      %v10183 = vadd.f32 %v9670, %v9982
      %v10184 = vadd.f32 %v9671, %v9984
      %v10185 = vadd.f32 %v9672, %v9987
      %v10186 = vadd.f32 %v9673, %v9989
      %v10187 = vadd.f32 %v9674, %v9991
      %v10188 = vadd.f32 %v9675, %v9994
      %v10189 = vadd.f32 %v9676, %v9996
      %v10190 = vadd.f32 %v9677, %v9998
      %v10191 = vadd.f32 %v9678, %v10001
      %v10192 = vadd.f32 %v9679, %v10003
      %v10193 = vadd.f32 %v9680, %v10005
      %v10194 = vadd.f32 %v9681, %v10008
      %v10195 = vadd.f32 %v9682, %v10010
      %v10196 = vadd.f32 %v9683, %v10012
      %v10197 = vadd.f32 %v9684, %v10015
      %v10198 = vadd.f32 %v9685, %v10017
      %v10199 = vadd.f32 %v9686, %v10019
      %v10200 = vadd.f32 %v9687, %v10022
      %v10201 = vadd.f32 %v9688, %v10024
      %v10202 = vadd.f32 %v9689, %v10026
      %v10203 = vadd.f32 %v9690, %v10029
      %v10204 = vadd.f32 %v9691, %v10031
      %v10205 = vadd.f32 %v9692, %v10033
      %v10206 = vadd.f32 %v9693, %v10036
      %v10207 = vadd.f32 %v9694, %v10038
      %v10208 = vadd.f32 %v9695, %v10040
      %v10209 = vadd.f32 %v9696, %v10043
      %v10210 = vadd.f32 %v9697, %v10045
      %v10211 = vadd.f32 %v9698, %v10047
      %v10212 = vadd.f32 %v9699, %v10050
      %v10213 = vadd.f32 %v9700, %v10052
      %v10214 = vadd.f32 %v9701, %v10054
      %v10215 = vadd.f32 %v9702, %v10057
      %v10216 = vadd.f32 %v9703, %v10059
      %v10217 = vadd.f32 %v9704, %v10061
      %v10218 = vadd.f32 %v9705, %v10064
      %v10219 = vadd.f32 %v9706, %v10066
      %v10220 = vadd.f32 %v9707, %v10068
      %v10221 = vadd.f32 %v9708, %v10071
      %v10222 = vadd.f32 %v9709, %v10073
      %v10223 = vadd.f32 %v9710, %v10075
      %v10224 = vadd.f32 %v9711, %v10078
      %v10225 = vadd.f32 %v9712, %v10080
      %v10226 = vadd.f32 %v9713, %v10082
      %v10227 = vlaneseq
      %v10228 = vshrl.u32 %v10227, 7
      %v10229 = vsub.s32 6, %v10228
      %v10230 = vrot.slane %v285, %v10229
      %v10231 = vmul.f32 %v350, %v10230
      %v10232 = vmul.f32 %v355, %v10230
      %v10233 = vmul.f32 %v360, %v10230
      %v10234 = vmul.f32 %v818, %v10230
      %v10235 = vmul.f32 %v365, %v10230
      %v10236 = vmul.f32 %v370, %v10230
      %v10237 = vmul.f32 %v375, %v10230
      %v10238 = vmul.f32 %v823, %v10230
      %v10239 = vmul.f32 %v380, %v10230
      %v10240 = vmul.f32 %v385, %v10230
      %v10241 = vmul.f32 %v390, %v10230
      %v10242 = vmul.f32 %v828, %v10230
      %v10243 = vmul.f32 %v395, %v10230
      %v10244 = vmul.f32 %v400, %v10230
      %v10245 = vmul.f32 %v405, %v10230
      %v10246 = vmul.f32 %v833, %v10230
      %v10247 = vmul.f32 %v410, %v10230
      %v10248 = vmul.f32 %v415, %v10230
      %v10249 = vmul.f32 %v420, %v10230
      %v10250 = vmul.f32 %v838, %v10230
      %v10251 = vmul.f32 %v425, %v10230
      %v10252 = vmul.f32 %v430, %v10230
      %v10253 = vmul.f32 %v435, %v10230
      %v10254 = vmul.f32 %v843, %v10230
      %v10255 = vmul.f32 %v440, %v10230
      %v10256 = vmul.f32 %v445, %v10230
      %v10257 = vmul.f32 %v450, %v10230
      %v10258 = vmul.f32 %v848, %v10230
      %v10259 = vmul.f32 %v455, %v10230
      %v10260 = vmul.f32 %v460, %v10230
      %v10261 = vmul.f32 %v465, %v10230
      %v10262 = vmul.f32 %v853, %v10230
      %v10263 = vmul.f32 %v470, %v10230
      %v10264 = vmul.f32 %v475, %v10230
      %v10265 = vmul.f32 %v480, %v10230
      %v10266 = vmul.f32 %v858, %v10230
      %v10267 = vmul.f32 %v485, %v10230
      %v10268 = vmul.f32 %v490, %v10230
      %v10269 = vmul.f32 %v495, %v10230
      %v10270 = vmul.f32 %v863, %v10230
      %v10271 = vmul.f32 %v500, %v10230
      %v10272 = vmul.f32 %v505, %v10230
      %v10273 = vmul.f32 %v510, %v10230
      %v10274 = vmul.f32 %v868, %v10230
      %v10275 = vmul.f32 %v515, %v10230
      %v10276 = vmul.f32 %v520, %v10230
      %v10277 = vmul.f32 %v525, %v10230
      %v10278 = vmul.f32 %v873, %v10230
      %v10279 = vmul.f32 %v530, %v10230
      %v10280 = vmul.f32 %v535, %v10230
      %v10281 = vmul.f32 %v540, %v10230
      %v10282 = vmul.f32 %v878, %v10230
      %v10283 = vmul.f32 %v545, %v10230
      %v10284 = vmul.f32 %v550, %v10230
      %v10285 = vmul.f32 %v555, %v10230
      %v10286 = vmul.f32 %v883, %v10230
      %v10287 = vmul.f32 %v560, %v10230
      %v10288 = vmul.f32 %v565, %v10230
      %v10289 = vmul.f32 %v570, %v10230
      %v10290 = vmul.f32 %v888, %v10230
      %v10291 = vmul.f32 %v575, %v10230
      %v10292 = vmul.f32 %v580, %v10230
      %v10293 = vmul.f32 %v585, %v10230
      %v10294 = vmul.f32 %v893, %v10230
      %v10295 = vmul.f32 %v590, %v10230
      %v10296 = vmul.f32 %v595, %v10230
      %v10297 = vmul.f32 %v600, %v10230
      %v10298 = vmul.f32 %v898, %v10230
      %v10299 = vmul.f32 %v605, %v10230
      %v10300 = vmul.f32 %v610, %v10230
      %v10301 = vmul.f32 %v615, %v10230
      %v10302 = vmul.f32 %v903, %v10230
      %v10303 = vmul.f32 %v620, %v10230
      %v10304 = vmul.f32 %v625, %v10230
      %v10305 = vmul.f32 %v630, %v10230
      %v10306 = vmul.f32 %v908, %v10230
      %v10307 = vmul.f32 %v635, %v10230
      %v10308 = vmul.f32 %v640, %v10230
      %v10309 = vmul.f32 %v645, %v10230
      %v10310 = vmul.f32 %v913, %v10230
      %v10311 = vmul.f32 %v2954, %v10230
      %v10312 = vmul.f32 %v2959, %v10230
      %v10313 = vmul.f32 %v2964, %v10230
      %v10314 = vmul.f32 %v3117, %v10230
      %v10315 = vmul.f32 %v5154, %v10230
      %v10316 = vmul.f32 %v5159, %v10230
      %v10317 = vmul.f32 %v5164, %v10230
      %v10318 = vmul.f32 %v5317, %v10230
      %v10319 = vmul.f32 %v7354, %v10230
      %v10320 = vmul.f32 %v7359, %v10230
      %v10321 = vmul.f32 %v7364, %v10230
      %v10322 = vmul.f32 %v7517, %v10230
      %v10323 = vmul.f32 %v9554, %v10230
      %v10324 = vmul.f32 %v9559, %v10230
      %v10325 = vmul.f32 %v9564, %v10230
      %v10326 = vmul.f32 %v9717, %v10230
      %v10423 = vrot.slane %v10231, 2
      %v10424 = vrot.slane %v10232, 2
      %v10425 = vsel %vm1620, %v10423, %v10424
      %v10426 = vrot.slane %v10233, 2
      %v10427 = vsel %vm1620, %v10424, %v10426
      %v10428 = vrot.slane %v10234, 2
      %v10429 = vsel %vm1620, %v10426, %v10428
      %v10430 = vrot.slane %v10235, 2
      %v10431 = vrot.slane %v10236, 2
      %v10432 = vsel %vm1620, %v10430, %v10431
      %v10433 = vrot.slane %v10237, 2
      %v10434 = vsel %vm1620, %v10431, %v10433
      %v10435 = vrot.slane %v10238, 2
      %v10436 = vsel %vm1620, %v10433, %v10435
      %v10437 = vrot.slane %v10239, 2
      %v10438 = vrot.slane %v10240, 2
      %v10439 = vsel %vm1620, %v10437, %v10438
      %v10440 = vrot.slane %v10241, 2
      %v10441 = vsel %vm1620, %v10438, %v10440
      %v10442 = vrot.slane %v10242, 2
      %v10443 = vsel %vm1620, %v10440, %v10442
      %v10444 = vrot.slane %v10243, 2
      %v10445 = vrot.slane %v10244, 2
      %v10446 = vsel %vm1620, %v10444, %v10445
      %v10447 = vrot.slane %v10245, 2
      %v10448 = vsel %vm1620, %v10445, %v10447
      %v10449 = vrot.slane %v10246, 2
      %v10450 = vsel %vm1620, %v10447, %v10449
      %v10451 = vrot.slane %v10247, 2
      %v10452 = vrot.slane %v10248, 2
      %v10453 = vsel %vm1620, %v10451, %v10452
      %v10454 = vrot.slane %v10249, 2
      %v10455 = vsel %vm1620, %v10452, %v10454
      %v10456 = vrot.slane %v10250, 2
      %v10457 = vsel %vm1620, %v10454, %v10456
      %v10458 = vrot.slane %v10251, 2
      %v10459 = vrot.slane %v10252, 2
      %v10460 = vsel %vm1620, %v10458, %v10459
      %v10461 = vrot.slane %v10253, 2
      %v10462 = vsel %vm1620, %v10459, %v10461
      %v10463 = vrot.slane %v10254, 2
      %v10464 = vsel %vm1620, %v10461, %v10463
      %v10465 = vrot.slane %v10255, 2
      %v10466 = vrot.slane %v10256, 2
      %v10467 = vsel %vm1620, %v10465, %v10466
      %v10468 = vrot.slane %v10257, 2
      %v10469 = vsel %vm1620, %v10466, %v10468
      %v10470 = vrot.slane %v10258, 2
      %v10471 = vsel %vm1620, %v10468, %v10470
      %v10472 = vrot.slane %v10259, 2
      %v10473 = vrot.slane %v10260, 2
      %v10474 = vsel %vm1620, %v10472, %v10473
      %v10475 = vrot.slane %v10261, 2
      %v10476 = vsel %vm1620, %v10473, %v10475
      %v10477 = vrot.slane %v10262, 2
      %v10478 = vsel %vm1620, %v10475, %v10477
      %v10479 = vrot.slane %v10263, 2
      %v10480 = vrot.slane %v10264, 2
      %v10481 = vsel %vm1620, %v10479, %v10480
      %v10482 = vrot.slane %v10265, 2
      %v10483 = vsel %vm1620, %v10480, %v10482
      %v10484 = vrot.slane %v10266, 2
      %v10485 = vsel %vm1620, %v10482, %v10484
      %v10486 = vrot.slane %v10267, 2
      %v10487 = vrot.slane %v10268, 2
      %v10488 = vsel %vm1620, %v10486, %v10487
      %v10489 = vrot.slane %v10269, 2
      %v10490 = vsel %vm1620, %v10487, %v10489
      %v10491 = vrot.slane %v10270, 2
      %v10492 = vsel %vm1620, %v10489, %v10491
      %v10493 = vrot.slane %v10271, 2
      %v10494 = vrot.slane %v10272, 2
      %v10495 = vsel %vm1620, %v10493, %v10494
      %v10496 = vrot.slane %v10273, 2
      %v10497 = vsel %vm1620, %v10494, %v10496
      %v10498 = vrot.slane %v10274, 2
      %v10499 = vsel %vm1620, %v10496, %v10498
      %v10500 = vrot.slane %v10275, 2
      %v10501 = vrot.slane %v10276, 2
      %v10502 = vsel %vm1620, %v10500, %v10501
      %v10503 = vrot.slane %v10277, 2
      %v10504 = vsel %vm1620, %v10501, %v10503
      %v10505 = vrot.slane %v10278, 2
      %v10506 = vsel %vm1620, %v10503, %v10505
      %v10507 = vrot.slane %v10279, 2
      %v10508 = vrot.slane %v10280, 2
      %v10509 = vsel %vm1620, %v10507, %v10508
      %v10510 = vrot.slane %v10281, 2
      %v10511 = vsel %vm1620, %v10508, %v10510
      %v10512 = vrot.slane %v10282, 2
      %v10513 = vsel %vm1620, %v10510, %v10512
      %v10514 = vrot.slane %v10283, 2
      %v10515 = vrot.slane %v10284, 2
      %v10516 = vsel %vm1620, %v10514, %v10515
      %v10517 = vrot.slane %v10285, 2
      %v10518 = vsel %vm1620, %v10515, %v10517
      %v10519 = vrot.slane %v10286, 2
      %v10520 = vsel %vm1620, %v10517, %v10519
      %v10521 = vrot.slane %v10287, 2
      %v10522 = vrot.slane %v10288, 2
      %v10523 = vsel %vm1620, %v10521, %v10522
      %v10524 = vrot.slane %v10289, 2
      %v10525 = vsel %vm1620, %v10522, %v10524
      %v10526 = vrot.slane %v10290, 2
      %v10527 = vsel %vm1620, %v10524, %v10526
      %v10528 = vrot.slane %v10291, 2
      %v10529 = vrot.slane %v10292, 2
      %v10530 = vsel %vm1620, %v10528, %v10529
      %v10531 = vrot.slane %v10293, 2
      %v10532 = vsel %vm1620, %v10529, %v10531
      %v10533 = vrot.slane %v10294, 2
      %v10534 = vsel %vm1620, %v10531, %v10533
      %v10535 = vrot.slane %v10295, 2
      %v10536 = vrot.slane %v10296, 2
      %v10537 = vsel %vm1620, %v10535, %v10536
      %v10538 = vrot.slane %v10297, 2
      %v10539 = vsel %vm1620, %v10536, %v10538
      %v10540 = vrot.slane %v10298, 2
      %v10541 = vsel %vm1620, %v10538, %v10540
      %v10542 = vrot.slane %v10299, 2
      %v10543 = vrot.slane %v10300, 2
      %v10544 = vsel %vm1620, %v10542, %v10543
      %v10545 = vrot.slane %v10301, 2
      %v10546 = vsel %vm1620, %v10543, %v10545
      %v10547 = vrot.slane %v10302, 2
      %v10548 = vsel %vm1620, %v10545, %v10547
      %v10549 = vrot.slane %v10303, 2
      %v10550 = vrot.slane %v10304, 2
      %v10551 = vsel %vm1620, %v10549, %v10550
      %v10552 = vrot.slane %v10305, 2
      %v10553 = vsel %vm1620, %v10550, %v10552
      %v10554 = vrot.slane %v10306, 2
      %v10555 = vsel %vm1620, %v10552, %v10554
      %v10556 = vrot.slane %v10307, 2
      %v10557 = vrot.slane %v10308, 2
      %v10558 = vsel %vm1620, %v10556, %v10557
      %v10559 = vrot.slane %v10309, 2
      %v10560 = vsel %vm1620, %v10557, %v10559
      %v10561 = vrot.slane %v10310, 2
      %v10562 = vsel %vm1620, %v10559, %v10561
      %v10563 = vrot.slane %v10311, 2
      %v10564 = vrot.slane %v10312, 2
      %v10565 = vsel %vm1620, %v10563, %v10564
      %v10566 = vrot.slane %v10313, 2
      %v10567 = vsel %vm1620, %v10564, %v10566
      %v10568 = vrot.slane %v10314, 2
      %v10569 = vsel %vm1620, %v10566, %v10568
      %v10570 = vrot.slane %v10315, 2
      %v10571 = vrot.slane %v10316, 2
      %v10572 = vsel %vm1620, %v10570, %v10571
      %v10573 = vrot.slane %v10317, 2
      %v10574 = vsel %vm1620, %v10571, %v10573
      %v10575 = vrot.slane %v10318, 2
      %v10576 = vsel %vm1620, %v10573, %v10575
      %v10577 = vrot.slane %v10319, 2
      %v10578 = vrot.slane %v10320, 2
      %v10579 = vsel %vm1620, %v10577, %v10578
      %v10580 = vrot.slane %v10321, 2
      %v10581 = vsel %vm1620, %v10578, %v10580
      %v10582 = vrot.slane %v10322, 2
      %v10583 = vsel %vm1620, %v10580, %v10582
      %v10584 = vrot.slane %v10323, 2
      %v10585 = vrot.slane %v10324, 2
      %v10586 = vsel %vm1620, %v10584, %v10585
      %v10587 = vrot.slane %v10325, 2
      %v10588 = vsel %vm1620, %v10585, %v10587
      %v10589 = vrot.slane %v10326, 2
      %v10590 = vsel %vm1620, %v10587, %v10589
      %v10663 = vadd.f32 %v10155, %v10425
      %v10664 = vadd.f32 %v10156, %v10427
      %v10665 = vadd.f32 %v10157, %v10429
      %v10666 = vadd.f32 %v10158, %v10432
      %v10667 = vadd.f32 %v10159, %v10434
      %v10668 = vadd.f32 %v10160, %v10436
      %v10669 = vadd.f32 %v10161, %v10439
      %v10670 = vadd.f32 %v10162, %v10441
      %v10671 = vadd.f32 %v10163, %v10443
      %v10672 = vadd.f32 %v10164, %v10446
      %v10673 = vadd.f32 %v10165, %v10448
      %v10674 = vadd.f32 %v10166, %v10450
      %v10675 = vadd.f32 %v10167, %v10453
      %v10676 = vadd.f32 %v10168, %v10455
      %v10677 = vadd.f32 %v10169, %v10457
      %v10678 = vadd.f32 %v10170, %v10460
      %v10679 = vadd.f32 %v10171, %v10462
      %v10680 = vadd.f32 %v10172, %v10464
      %v10681 = vadd.f32 %v10173, %v10467
      %v10682 = vadd.f32 %v10174, %v10469
      %v10683 = vadd.f32 %v10175, %v10471
      %v10684 = vadd.f32 %v10176, %v10474
      %v10685 = vadd.f32 %v10177, %v10476
      %v10686 = vadd.f32 %v10178, %v10478
      %v10687 = vadd.f32 %v10179, %v10481
      %v10688 = vadd.f32 %v10180, %v10483
      %v10689 = vadd.f32 %v10181, %v10485
      %v10690 = vadd.f32 %v10182, %v10488
      %v10691 = vadd.f32 %v10183, %v10490
      %v10692 = vadd.f32 %v10184, %v10492
      %v10693 = vadd.f32 %v10185, %v10495
      %v10694 = vadd.f32 %v10186, %v10497
      %v10695 = vadd.f32 %v10187, %v10499
      %v10696 = vadd.f32 %v10188, %v10502
      %v10697 = vadd.f32 %v10189, %v10504
      %v10698 = vadd.f32 %v10190, %v10506
      %v10699 = vadd.f32 %v10191, %v10509
      %v10700 = vadd.f32 %v10192, %v10511
      %v10701 = vadd.f32 %v10193, %v10513
      %v10702 = vadd.f32 %v10194, %v10516
      %v10703 = vadd.f32 %v10195, %v10518
      %v10704 = vadd.f32 %v10196, %v10520
      %v10705 = vadd.f32 %v10197, %v10523
      %v10706 = vadd.f32 %v10198, %v10525
      %v10707 = vadd.f32 %v10199, %v10527
      %v10708 = vadd.f32 %v10200, %v10530
      %v10709 = vadd.f32 %v10201, %v10532
      %v10710 = vadd.f32 %v10202, %v10534
      %v10711 = vadd.f32 %v10203, %v10537
      %v10712 = vadd.f32 %v10204, %v10539
      %v10713 = vadd.f32 %v10205, %v10541
      %v10714 = vadd.f32 %v10206, %v10544
      %v10715 = vadd.f32 %v10207, %v10546
      %v10716 = vadd.f32 %v10208, %v10548
      %v10717 = vadd.f32 %v10209, %v10551
      %v10718 = vadd.f32 %v10210, %v10553
      %v10719 = vadd.f32 %v10211, %v10555
      %v10720 = vadd.f32 %v10212, %v10558
      %v10721 = vadd.f32 %v10213, %v10560
      %v10722 = vadd.f32 %v10214, %v10562
      %v10723 = vadd.f32 %v10215, %v10565
      %v10724 = vadd.f32 %v10216, %v10567
      %v10725 = vadd.f32 %v10217, %v10569
      %v10726 = vadd.f32 %v10218, %v10572
      %v10727 = vadd.f32 %v10219, %v10574
      %v10728 = vadd.f32 %v10220, %v10576
      %v10729 = vadd.f32 %v10221, %v10579
      %v10730 = vadd.f32 %v10222, %v10581
      %v10731 = vadd.f32 %v10223, %v10583
      %v10732 = vadd.f32 %v10224, %v10586
      %v10733 = vadd.f32 %v10225, %v10588
      %v10734 = vadd.f32 %v10226, %v10590
      %v10735 = vlaneseq
      %v10736 = vshrl.u32 %v10735, 7
      %v10737 = vsub.s32 7, %v10736
      %v10738 = vrot.slane %v285, %v10737
      %v10739 = vmul.f32 %v350, %v10738
      %v10740 = vmul.f32 %v355, %v10738
      %v10741 = vmul.f32 %v360, %v10738
      %v10742 = vmul.f32 %v818, %v10738
      %v10743 = vmul.f32 %v365, %v10738
      %v10744 = vmul.f32 %v370, %v10738
      %v10745 = vmul.f32 %v375, %v10738
      %v10746 = vmul.f32 %v823, %v10738
      %v10747 = vmul.f32 %v380, %v10738
      %v10748 = vmul.f32 %v385, %v10738
      %v10749 = vmul.f32 %v390, %v10738
      %v10750 = vmul.f32 %v828, %v10738
      %v10751 = vmul.f32 %v395, %v10738
      %v10752 = vmul.f32 %v400, %v10738
      %v10753 = vmul.f32 %v405, %v10738
      %v10754 = vmul.f32 %v833, %v10738
      %v10755 = vmul.f32 %v410, %v10738
      %v10756 = vmul.f32 %v415, %v10738
      %v10757 = vmul.f32 %v420, %v10738
      %v10758 = vmul.f32 %v838, %v10738
      %v10759 = vmul.f32 %v425, %v10738
      %v10760 = vmul.f32 %v430, %v10738
      %v10761 = vmul.f32 %v435, %v10738
      %v10762 = vmul.f32 %v843, %v10738
      %v10763 = vmul.f32 %v440, %v10738
      %v10764 = vmul.f32 %v445, %v10738
      %v10765 = vmul.f32 %v450, %v10738
      %v10766 = vmul.f32 %v848, %v10738
      %v10767 = vmul.f32 %v455, %v10738
      %v10768 = vmul.f32 %v460, %v10738
      %v10769 = vmul.f32 %v465, %v10738
      %v10770 = vmul.f32 %v853, %v10738
      %v10771 = vmul.f32 %v470, %v10738
      %v10772 = vmul.f32 %v475, %v10738
      %v10773 = vmul.f32 %v480, %v10738
      %v10774 = vmul.f32 %v858, %v10738
      %v10775 = vmul.f32 %v485, %v10738
      %v10776 = vmul.f32 %v490, %v10738
      %v10777 = vmul.f32 %v495, %v10738
      %v10778 = vmul.f32 %v863, %v10738
      %v10779 = vmul.f32 %v500, %v10738
      %v10780 = vmul.f32 %v505, %v10738
      %v10781 = vmul.f32 %v510, %v10738
      %v10782 = vmul.f32 %v868, %v10738
      %v10783 = vmul.f32 %v515, %v10738
      %v10784 = vmul.f32 %v520, %v10738
      %v10785 = vmul.f32 %v525, %v10738
      %v10786 = vmul.f32 %v873, %v10738
      %v10787 = vmul.f32 %v530, %v10738
      %v10788 = vmul.f32 %v535, %v10738
      %v10789 = vmul.f32 %v540, %v10738
      %v10790 = vmul.f32 %v878, %v10738
      %v10791 = vmul.f32 %v545, %v10738
      %v10792 = vmul.f32 %v550, %v10738
      %v10793 = vmul.f32 %v555, %v10738
      %v10794 = vmul.f32 %v883, %v10738
      %v10795 = vmul.f32 %v560, %v10738
      %v10796 = vmul.f32 %v565, %v10738
      %v10797 = vmul.f32 %v570, %v10738
      %v10798 = vmul.f32 %v888, %v10738
      %v10799 = vmul.f32 %v575, %v10738
      %v10800 = vmul.f32 %v580, %v10738
      %v10801 = vmul.f32 %v585, %v10738
      %v10802 = vmul.f32 %v893, %v10738
      %v10803 = vmul.f32 %v590, %v10738
      %v10804 = vmul.f32 %v595, %v10738
      %v10805 = vmul.f32 %v600, %v10738
      %v10806 = vmul.f32 %v898, %v10738
      %v10807 = vmul.f32 %v605, %v10738
      %v10808 = vmul.f32 %v610, %v10738
      %v10809 = vmul.f32 %v615, %v10738
      %v10810 = vmul.f32 %v903, %v10738
      %v10811 = vmul.f32 %v620, %v10738
      %v10812 = vmul.f32 %v625, %v10738
      %v10813 = vmul.f32 %v630, %v10738
      %v10814 = vmul.f32 %v908, %v10738
      %v10815 = vmul.f32 %v635, %v10738
      %v10816 = vmul.f32 %v640, %v10738
      %v10817 = vmul.f32 %v645, %v10738
      %v10818 = vmul.f32 %v913, %v10738
      %v10819 = vmul.f32 %v2954, %v10738
      %v10820 = vmul.f32 %v2959, %v10738
      %v10821 = vmul.f32 %v2964, %v10738
      %v10822 = vmul.f32 %v3117, %v10738
      %v10823 = vmul.f32 %v5154, %v10738
      %v10824 = vmul.f32 %v5159, %v10738
      %v10825 = vmul.f32 %v5164, %v10738
      %v10826 = vmul.f32 %v5317, %v10738
      %v10827 = vmul.f32 %v7354, %v10738
      %v10828 = vmul.f32 %v7359, %v10738
      %v10829 = vmul.f32 %v7364, %v10738
      %v10830 = vmul.f32 %v7517, %v10738
      %v10831 = vmul.f32 %v9554, %v10738
      %v10832 = vmul.f32 %v9559, %v10738
      %v10833 = vmul.f32 %v9564, %v10738
      %v10834 = vmul.f32 %v9717, %v10738
      %v10931 = vrot.slane %v10739, 3
      %v10932 = vrot.slane %v10740, 3
      %v10933 = vsel %vm2129, %v10931, %v10932
      %v10934 = vrot.slane %v10741, 3
      %v10935 = vsel %vm2129, %v10932, %v10934
      %v10936 = vrot.slane %v10742, 3
      %v10937 = vsel %vm2129, %v10934, %v10936
      %v10938 = vrot.slane %v10743, 3
      %v10939 = vrot.slane %v10744, 3
      %v10940 = vsel %vm2129, %v10938, %v10939
      %v10941 = vrot.slane %v10745, 3
      %v10942 = vsel %vm2129, %v10939, %v10941
      %v10943 = vrot.slane %v10746, 3
      %v10944 = vsel %vm2129, %v10941, %v10943
      %v10945 = vrot.slane %v10747, 3
      %v10946 = vrot.slane %v10748, 3
      %v10947 = vsel %vm2129, %v10945, %v10946
      %v10948 = vrot.slane %v10749, 3
      %v10949 = vsel %vm2129, %v10946, %v10948
      %v10950 = vrot.slane %v10750, 3
      %v10951 = vsel %vm2129, %v10948, %v10950
      %v10952 = vrot.slane %v10751, 3
      %v10953 = vrot.slane %v10752, 3
      %v10954 = vsel %vm2129, %v10952, %v10953
      %v10955 = vrot.slane %v10753, 3
      %v10956 = vsel %vm2129, %v10953, %v10955
      %v10957 = vrot.slane %v10754, 3
      %v10958 = vsel %vm2129, %v10955, %v10957
      %v10959 = vrot.slane %v10755, 3
      %v10960 = vrot.slane %v10756, 3
      %v10961 = vsel %vm2129, %v10959, %v10960
      %v10962 = vrot.slane %v10757, 3
      %v10963 = vsel %vm2129, %v10960, %v10962
      %v10964 = vrot.slane %v10758, 3
      %v10965 = vsel %vm2129, %v10962, %v10964
      %v10966 = vrot.slane %v10759, 3
      %v10967 = vrot.slane %v10760, 3
      %v10968 = vsel %vm2129, %v10966, %v10967
      %v10969 = vrot.slane %v10761, 3
      %v10970 = vsel %vm2129, %v10967, %v10969
      %v10971 = vrot.slane %v10762, 3
      %v10972 = vsel %vm2129, %v10969, %v10971
      %v10973 = vrot.slane %v10763, 3
      %v10974 = vrot.slane %v10764, 3
      %v10975 = vsel %vm2129, %v10973, %v10974
      %v10976 = vrot.slane %v10765, 3
      %v10977 = vsel %vm2129, %v10974, %v10976
      %v10978 = vrot.slane %v10766, 3
      %v10979 = vsel %vm2129, %v10976, %v10978
      %v10980 = vrot.slane %v10767, 3
      %v10981 = vrot.slane %v10768, 3
      %v10982 = vsel %vm2129, %v10980, %v10981
      %v10983 = vrot.slane %v10769, 3
      %v10984 = vsel %vm2129, %v10981, %v10983
      %v10985 = vrot.slane %v10770, 3
      %v10986 = vsel %vm2129, %v10983, %v10985
      %v10987 = vrot.slane %v10771, 3
      %v10988 = vrot.slane %v10772, 3
      %v10989 = vsel %vm2129, %v10987, %v10988
      %v10990 = vrot.slane %v10773, 3
      %v10991 = vsel %vm2129, %v10988, %v10990
      %v10992 = vrot.slane %v10774, 3
      %v10993 = vsel %vm2129, %v10990, %v10992
      %v10994 = vrot.slane %v10775, 3
      %v10995 = vrot.slane %v10776, 3
      %v10996 = vsel %vm2129, %v10994, %v10995
      %v10997 = vrot.slane %v10777, 3
      %v10998 = vsel %vm2129, %v10995, %v10997
      %v10999 = vrot.slane %v10778, 3
      %v11000 = vsel %vm2129, %v10997, %v10999
      %v11001 = vrot.slane %v10779, 3
      %v11002 = vrot.slane %v10780, 3
      %v11003 = vsel %vm2129, %v11001, %v11002
      %v11004 = vrot.slane %v10781, 3
      %v11005 = vsel %vm2129, %v11002, %v11004
      %v11006 = vrot.slane %v10782, 3
      %v11007 = vsel %vm2129, %v11004, %v11006
      %v11008 = vrot.slane %v10783, 3
      %v11009 = vrot.slane %v10784, 3
      %v11010 = vsel %vm2129, %v11008, %v11009
      %v11011 = vrot.slane %v10785, 3
      %v11012 = vsel %vm2129, %v11009, %v11011
      %v11013 = vrot.slane %v10786, 3
      %v11014 = vsel %vm2129, %v11011, %v11013
      %v11015 = vrot.slane %v10787, 3
      %v11016 = vrot.slane %v10788, 3
      %v11017 = vsel %vm2129, %v11015, %v11016
      %v11018 = vrot.slane %v10789, 3
      %v11019 = vsel %vm2129, %v11016, %v11018
      %v11020 = vrot.slane %v10790, 3
      %v11021 = vsel %vm2129, %v11018, %v11020
      %v11022 = vrot.slane %v10791, 3
      %v11023 = vrot.slane %v10792, 3
      %v11024 = vsel %vm2129, %v11022, %v11023
      %v11025 = vrot.slane %v10793, 3
      %v11026 = vsel %vm2129, %v11023, %v11025
      %v11027 = vrot.slane %v10794, 3
      %v11028 = vsel %vm2129, %v11025, %v11027
      %v11029 = vrot.slane %v10795, 3
      %v11030 = vrot.slane %v10796, 3
      %v11031 = vsel %vm2129, %v11029, %v11030
      %v11032 = vrot.slane %v10797, 3
      %v11033 = vsel %vm2129, %v11030, %v11032
      %v11034 = vrot.slane %v10798, 3
      %v11035 = vsel %vm2129, %v11032, %v11034
      %v11036 = vrot.slane %v10799, 3
      %v11037 = vrot.slane %v10800, 3
      %v11038 = vsel %vm2129, %v11036, %v11037
      %v11039 = vrot.slane %v10801, 3
      %v11040 = vsel %vm2129, %v11037, %v11039
      %v11041 = vrot.slane %v10802, 3
      %v11042 = vsel %vm2129, %v11039, %v11041
      %v11043 = vrot.slane %v10803, 3
      %v11044 = vrot.slane %v10804, 3
      %v11045 = vsel %vm2129, %v11043, %v11044
      %v11046 = vrot.slane %v10805, 3
      %v11047 = vsel %vm2129, %v11044, %v11046
      %v11048 = vrot.slane %v10806, 3
      %v11049 = vsel %vm2129, %v11046, %v11048
      %v11050 = vrot.slane %v10807, 3
      %v11051 = vrot.slane %v10808, 3
      %v11052 = vsel %vm2129, %v11050, %v11051
      %v11053 = vrot.slane %v10809, 3
      %v11054 = vsel %vm2129, %v11051, %v11053
      %v11055 = vrot.slane %v10810, 3
      %v11056 = vsel %vm2129, %v11053, %v11055
      %v11057 = vrot.slane %v10811, 3
      %v11058 = vrot.slane %v10812, 3
      %v11059 = vsel %vm2129, %v11057, %v11058
      %v11060 = vrot.slane %v10813, 3
      %v11061 = vsel %vm2129, %v11058, %v11060
      %v11062 = vrot.slane %v10814, 3
      %v11063 = vsel %vm2129, %v11060, %v11062
      %v11064 = vrot.slane %v10815, 3
      %v11065 = vrot.slane %v10816, 3
      %v11066 = vsel %vm2129, %v11064, %v11065
      %v11067 = vrot.slane %v10817, 3
      %v11068 = vsel %vm2129, %v11065, %v11067
      %v11069 = vrot.slane %v10818, 3
      %v11070 = vsel %vm2129, %v11067, %v11069
      %v11071 = vrot.slane %v10819, 3
      %v11072 = vrot.slane %v10820, 3
      %v11073 = vsel %vm2129, %v11071, %v11072
      %v11074 = vrot.slane %v10821, 3
      %v11075 = vsel %vm2129, %v11072, %v11074
      %v11076 = vrot.slane %v10822, 3
      %v11077 = vsel %vm2129, %v11074, %v11076
      %v11078 = vrot.slane %v10823, 3
      %v11079 = vrot.slane %v10824, 3
      %v11080 = vsel %vm2129, %v11078, %v11079
      %v11081 = vrot.slane %v10825, 3
      %v11082 = vsel %vm2129, %v11079, %v11081
      %v11083 = vrot.slane %v10826, 3
      %v11084 = vsel %vm2129, %v11081, %v11083
      %v11085 = vrot.slane %v10827, 3
      %v11086 = vrot.slane %v10828, 3
      %v11087 = vsel %vm2129, %v11085, %v11086
      %v11088 = vrot.slane %v10829, 3
      %v11089 = vsel %vm2129, %v11086, %v11088
      %v11090 = vrot.slane %v10830, 3
      %v11091 = vsel %vm2129, %v11088, %v11090
      %v11092 = vrot.slane %v10831, 3
      %v11093 = vrot.slane %v10832, 3
      %v11094 = vsel %vm2129, %v11092, %v11093
      %v11095 = vrot.slane %v10833, 3
      %v11096 = vsel %vm2129, %v11093, %v11095
      %v11097 = vrot.slane %v10834, 3
      %v11098 = vsel %vm2129, %v11095, %v11097
      %v11171 = vadd.f32 %v10663, %v10933
      %v11172 = vadd.f32 %v10664, %v10935
      %v11173 = vadd.f32 %v10665, %v10937
      %v11174 = vadd.f32 %v10666, %v10940
      %v11175 = vadd.f32 %v10667, %v10942
      %v11176 = vadd.f32 %v10668, %v10944
      %v11177 = vadd.f32 %v10669, %v10947
      %v11178 = vadd.f32 %v10670, %v10949
      %v11179 = vadd.f32 %v10671, %v10951
      %v11180 = vadd.f32 %v10672, %v10954
      %v11181 = vadd.f32 %v10673, %v10956
      %v11182 = vadd.f32 %v10674, %v10958
      %v11183 = vadd.f32 %v10675, %v10961
      %v11184 = vadd.f32 %v10676, %v10963
      %v11185 = vadd.f32 %v10677, %v10965
      %v11186 = vadd.f32 %v10678, %v10968
      %v11187 = vadd.f32 %v10679, %v10970
      %v11188 = vadd.f32 %v10680, %v10972
      %v11189 = vadd.f32 %v10681, %v10975
      %v11190 = vadd.f32 %v10682, %v10977
      %v11191 = vadd.f32 %v10683, %v10979
      %v11192 = vadd.f32 %v10684, %v10982
      %v11193 = vadd.f32 %v10685, %v10984
      %v11194 = vadd.f32 %v10686, %v10986
      %v11195 = vadd.f32 %v10687, %v10989
      %v11196 = vadd.f32 %v10688, %v10991
      %v11197 = vadd.f32 %v10689, %v10993
      %v11198 = vadd.f32 %v10690, %v10996
      %v11199 = vadd.f32 %v10691, %v10998
      %v11200 = vadd.f32 %v10692, %v11000
      %v11201 = vadd.f32 %v10693, %v11003
      %v11202 = vadd.f32 %v10694, %v11005
      %v11203 = vadd.f32 %v10695, %v11007
      %v11204 = vadd.f32 %v10696, %v11010
      %v11205 = vadd.f32 %v10697, %v11012
      %v11206 = vadd.f32 %v10698, %v11014
      %v11207 = vadd.f32 %v10699, %v11017
      %v11208 = vadd.f32 %v10700, %v11019
      %v11209 = vadd.f32 %v10701, %v11021
      %v11210 = vadd.f32 %v10702, %v11024
      %v11211 = vadd.f32 %v10703, %v11026
      %v11212 = vadd.f32 %v10704, %v11028
      %v11213 = vadd.f32 %v10705, %v11031
      %v11214 = vadd.f32 %v10706, %v11033
      %v11215 = vadd.f32 %v10707, %v11035
      %v11216 = vadd.f32 %v10708, %v11038
      %v11217 = vadd.f32 %v10709, %v11040
      %v11218 = vadd.f32 %v10710, %v11042
      %v11219 = vadd.f32 %v10711, %v11045
      %v11220 = vadd.f32 %v10712, %v11047
      %v11221 = vadd.f32 %v10713, %v11049
      %v11222 = vadd.f32 %v10714, %v11052
      %v11223 = vadd.f32 %v10715, %v11054
      %v11224 = vadd.f32 %v10716, %v11056
      %v11225 = vadd.f32 %v10717, %v11059
      %v11226 = vadd.f32 %v10718, %v11061
      %v11227 = vadd.f32 %v10719, %v11063
      %v11228 = vadd.f32 %v10720, %v11066
      %v11229 = vadd.f32 %v10721, %v11068
      %v11230 = vadd.f32 %v10722, %v11070
      %v11231 = vadd.f32 %v10723, %v11073
      %v11232 = vadd.f32 %v10724, %v11075
      %v11233 = vadd.f32 %v10725, %v11077
      %v11234 = vadd.f32 %v10726, %v11080
      %v11235 = vadd.f32 %v10727, %v11082
      %v11236 = vadd.f32 %v10728, %v11084
      %v11237 = vadd.f32 %v10729, %v11087
      %v11238 = vadd.f32 %v10730, %v11089
      %v11239 = vadd.f32 %v10731, %v11091
      %v11240 = vadd.f32 %v10732, %v11094
      %v11241 = vadd.f32 %v10733, %v11096
      %v11242 = vadd.f32 %v10734, %v11098
      %v11243 = vlaneseq
      %v11244 = vshrl.u32 %v11243, 7
      %v11245 = vsub.s32 0, %v11244
      %v11246 = vrot.slane %v286, %v11245
      %v11247 = vmul.f32 %v350, %v11246
      %v11248 = vmul.f32 %v355, %v11246
      %v11249 = vmul.f32 %v360, %v11246
      %v11250 = vmul.f32 %v818, %v11246
      %v11251 = vmul.f32 %v365, %v11246
      %v11252 = vmul.f32 %v370, %v11246
      %v11253 = vmul.f32 %v375, %v11246
      %v11254 = vmul.f32 %v823, %v11246
      %v11255 = vmul.f32 %v380, %v11246
      %v11256 = vmul.f32 %v385, %v11246
      %v11257 = vmul.f32 %v390, %v11246
      %v11258 = vmul.f32 %v828, %v11246
      %v11259 = vmul.f32 %v395, %v11246
      %v11260 = vmul.f32 %v400, %v11246
      %v11261 = vmul.f32 %v405, %v11246
      %v11262 = vmul.f32 %v833, %v11246
      %v11263 = vmul.f32 %v410, %v11246
      %v11264 = vmul.f32 %v415, %v11246
      %v11265 = vmul.f32 %v420, %v11246
      %v11266 = vmul.f32 %v838, %v11246
      %v11267 = vmul.f32 %v425, %v11246
      %v11268 = vmul.f32 %v430, %v11246
      %v11269 = vmul.f32 %v435, %v11246
      %v11270 = vmul.f32 %v843, %v11246
      %v11271 = vmul.f32 %v440, %v11246
      %v11272 = vmul.f32 %v445, %v11246
      %v11273 = vmul.f32 %v450, %v11246
      %v11274 = vmul.f32 %v848, %v11246
      %v11275 = vmul.f32 %v455, %v11246
      %v11276 = vmul.f32 %v460, %v11246
      %v11277 = vmul.f32 %v465, %v11246
      %v11278 = vmul.f32 %v853, %v11246
      %v11279 = vmul.f32 %v470, %v11246
      %v11280 = vmul.f32 %v475, %v11246
      %v11281 = vmul.f32 %v480, %v11246
      %v11282 = vmul.f32 %v858, %v11246
      %v11283 = vmul.f32 %v485, %v11246
      %v11284 = vmul.f32 %v490, %v11246
      %v11285 = vmul.f32 %v495, %v11246
      %v11286 = vmul.f32 %v863, %v11246
      %v11287 = vmul.f32 %v500, %v11246
      %v11288 = vmul.f32 %v505, %v11246
      %v11289 = vmul.f32 %v510, %v11246
      %v11290 = vmul.f32 %v868, %v11246
      %v11291 = vmul.f32 %v515, %v11246
      %v11292 = vmul.f32 %v520, %v11246
      %v11293 = vmul.f32 %v525, %v11246
      %v11294 = vmul.f32 %v873, %v11246
      %v11295 = vmul.f32 %v530, %v11246
      %v11296 = vmul.f32 %v535, %v11246
      %v11297 = vmul.f32 %v540, %v11246
      %v11298 = vmul.f32 %v878, %v11246
      %v11299 = vmul.f32 %v545, %v11246
      %v11300 = vmul.f32 %v550, %v11246
      %v11301 = vmul.f32 %v555, %v11246
      %v11302 = vmul.f32 %v883, %v11246
      %v11303 = vmul.f32 %v560, %v11246
      %v11304 = vmul.f32 %v565, %v11246
      %v11305 = vmul.f32 %v570, %v11246
      %v11306 = vmul.f32 %v888, %v11246
      %v11307 = vmul.f32 %v575, %v11246
      %v11308 = vmul.f32 %v580, %v11246
      %v11309 = vmul.f32 %v585, %v11246
      %v11310 = vmul.f32 %v893, %v11246
      %v11311 = vmul.f32 %v590, %v11246
      %v11312 = vmul.f32 %v595, %v11246
      %v11313 = vmul.f32 %v600, %v11246
      %v11314 = vmul.f32 %v898, %v11246
      %v11315 = vmul.f32 %v605, %v11246
      %v11316 = vmul.f32 %v610, %v11246
      %v11317 = vmul.f32 %v615, %v11246
      %v11318 = vmul.f32 %v903, %v11246
      %v11319 = vmul.f32 %v620, %v11246
      %v11320 = vmul.f32 %v625, %v11246
      %v11321 = vmul.f32 %v630, %v11246
      %v11322 = vmul.f32 %v908, %v11246
      %v11323 = vmul.f32 %v635, %v11246
      %v11324 = vmul.f32 %v640, %v11246
      %v11325 = vmul.f32 %v645, %v11246
      %v11326 = vmul.f32 %v913, %v11246
      %v11327 = vmul.f32 %v2954, %v11246
      %v11328 = vmul.f32 %v2959, %v11246
      %v11329 = vmul.f32 %v2964, %v11246
      %v11330 = vmul.f32 %v3117, %v11246
      %v11331 = vmul.f32 %v5154, %v11246
      %v11332 = vmul.f32 %v5159, %v11246
      %v11333 = vmul.f32 %v5164, %v11246
      %v11334 = vmul.f32 %v5317, %v11246
      %v11335 = vmul.f32 %v7354, %v11246
      %v11336 = vmul.f32 %v7359, %v11246
      %v11337 = vmul.f32 %v7364, %v11246
      %v11338 = vmul.f32 %v7517, %v11246
      %v11339 = vmul.f32 %v9554, %v11246
      %v11340 = vmul.f32 %v9559, %v11246
      %v11341 = vmul.f32 %v9564, %v11246
      %v11342 = vmul.f32 %v9717, %v11246
      %v11439 = vrot.slane %v11247, 4
      %v11440 = vrot.slane %v11248, 4
      %v11441 = vsel %vm2638, %v11439, %v11440
      %v11442 = vrot.slane %v11249, 4
      %v11443 = vsel %vm2638, %v11440, %v11442
      %v11444 = vrot.slane %v11250, 4
      %v11445 = vsel %vm2638, %v11442, %v11444
      %v11446 = vrot.slane %v11251, 4
      %v11447 = vrot.slane %v11252, 4
      %v11448 = vsel %vm2638, %v11446, %v11447
      %v11449 = vrot.slane %v11253, 4
      %v11450 = vsel %vm2638, %v11447, %v11449
      %v11451 = vrot.slane %v11254, 4
      %v11452 = vsel %vm2638, %v11449, %v11451
      %v11453 = vrot.slane %v11255, 4
      %v11454 = vrot.slane %v11256, 4
      %v11455 = vsel %vm2638, %v11453, %v11454
      %v11456 = vrot.slane %v11257, 4
      %v11457 = vsel %vm2638, %v11454, %v11456
      %v11458 = vrot.slane %v11258, 4
      %v11459 = vsel %vm2638, %v11456, %v11458
      %v11460 = vrot.slane %v11259, 4
      %v11461 = vrot.slane %v11260, 4
      %v11462 = vsel %vm2638, %v11460, %v11461
      %v11463 = vrot.slane %v11261, 4
      %v11464 = vsel %vm2638, %v11461, %v11463
      %v11465 = vrot.slane %v11262, 4
      %v11466 = vsel %vm2638, %v11463, %v11465
      %v11467 = vrot.slane %v11263, 4
      %v11468 = vrot.slane %v11264, 4
      %v11469 = vsel %vm2638, %v11467, %v11468
      %v11470 = vrot.slane %v11265, 4
      %v11471 = vsel %vm2638, %v11468, %v11470
      %v11472 = vrot.slane %v11266, 4
      %v11473 = vsel %vm2638, %v11470, %v11472
      %v11474 = vrot.slane %v11267, 4
      %v11475 = vrot.slane %v11268, 4
      %v11476 = vsel %vm2638, %v11474, %v11475
      %v11477 = vrot.slane %v11269, 4
      %v11478 = vsel %vm2638, %v11475, %v11477
      %v11479 = vrot.slane %v11270, 4
      %v11480 = vsel %vm2638, %v11477, %v11479
      %v11481 = vrot.slane %v11271, 4
      %v11482 = vrot.slane %v11272, 4
      %v11483 = vsel %vm2638, %v11481, %v11482
      %v11484 = vrot.slane %v11273, 4
      %v11485 = vsel %vm2638, %v11482, %v11484
      %v11486 = vrot.slane %v11274, 4
      %v11487 = vsel %vm2638, %v11484, %v11486
      %v11488 = vrot.slane %v11275, 4
      %v11489 = vrot.slane %v11276, 4
      %v11490 = vsel %vm2638, %v11488, %v11489
      %v11491 = vrot.slane %v11277, 4
      %v11492 = vsel %vm2638, %v11489, %v11491
      %v11493 = vrot.slane %v11278, 4
      %v11494 = vsel %vm2638, %v11491, %v11493
      %v11495 = vrot.slane %v11279, 4
      %v11496 = vrot.slane %v11280, 4
      %v11497 = vsel %vm2638, %v11495, %v11496
      %v11498 = vrot.slane %v11281, 4
      %v11499 = vsel %vm2638, %v11496, %v11498
      %v11500 = vrot.slane %v11282, 4
      %v11501 = vsel %vm2638, %v11498, %v11500
      %v11502 = vrot.slane %v11283, 4
      %v11503 = vrot.slane %v11284, 4
      %v11504 = vsel %vm2638, %v11502, %v11503
      %v11505 = vrot.slane %v11285, 4
      %v11506 = vsel %vm2638, %v11503, %v11505
      %v11507 = vrot.slane %v11286, 4
      %v11508 = vsel %vm2638, %v11505, %v11507
      %v11509 = vrot.slane %v11287, 4
      %v11510 = vrot.slane %v11288, 4
      %v11511 = vsel %vm2638, %v11509, %v11510
      %v11512 = vrot.slane %v11289, 4
      %v11513 = vsel %vm2638, %v11510, %v11512
      %v11514 = vrot.slane %v11290, 4
      %v11515 = vsel %vm2638, %v11512, %v11514
      %v11516 = vrot.slane %v11291, 4
      %v11517 = vrot.slane %v11292, 4
      %v11518 = vsel %vm2638, %v11516, %v11517
      %v11519 = vrot.slane %v11293, 4
      %v11520 = vsel %vm2638, %v11517, %v11519
      %v11521 = vrot.slane %v11294, 4
      %v11522 = vsel %vm2638, %v11519, %v11521
      %v11523 = vrot.slane %v11295, 4
      %v11524 = vrot.slane %v11296, 4
      %v11525 = vsel %vm2638, %v11523, %v11524
      %v11526 = vrot.slane %v11297, 4
      %v11527 = vsel %vm2638, %v11524, %v11526
      %v11528 = vrot.slane %v11298, 4
      %v11529 = vsel %vm2638, %v11526, %v11528
      %v11530 = vrot.slane %v11299, 4
      %v11531 = vrot.slane %v11300, 4
      %v11532 = vsel %vm2638, %v11530, %v11531
      %v11533 = vrot.slane %v11301, 4
      %v11534 = vsel %vm2638, %v11531, %v11533
      %v11535 = vrot.slane %v11302, 4
      %v11536 = vsel %vm2638, %v11533, %v11535
      %v11537 = vrot.slane %v11303, 4
      %v11538 = vrot.slane %v11304, 4
      %v11539 = vsel %vm2638, %v11537, %v11538
      %v11540 = vrot.slane %v11305, 4
      %v11541 = vsel %vm2638, %v11538, %v11540
      %v11542 = vrot.slane %v11306, 4
      %v11543 = vsel %vm2638, %v11540, %v11542
      %v11544 = vrot.slane %v11307, 4
      %v11545 = vrot.slane %v11308, 4
      %v11546 = vsel %vm2638, %v11544, %v11545
      %v11547 = vrot.slane %v11309, 4
      %v11548 = vsel %vm2638, %v11545, %v11547
      %v11549 = vrot.slane %v11310, 4
      %v11550 = vsel %vm2638, %v11547, %v11549
      %v11551 = vrot.slane %v11311, 4
      %v11552 = vrot.slane %v11312, 4
      %v11553 = vsel %vm2638, %v11551, %v11552
      %v11554 = vrot.slane %v11313, 4
      %v11555 = vsel %vm2638, %v11552, %v11554
      %v11556 = vrot.slane %v11314, 4
      %v11557 = vsel %vm2638, %v11554, %v11556
      %v11558 = vrot.slane %v11315, 4
      %v11559 = vrot.slane %v11316, 4
      %v11560 = vsel %vm2638, %v11558, %v11559
      %v11561 = vrot.slane %v11317, 4
      %v11562 = vsel %vm2638, %v11559, %v11561
      %v11563 = vrot.slane %v11318, 4
      %v11564 = vsel %vm2638, %v11561, %v11563
      %v11565 = vrot.slane %v11319, 4
      %v11566 = vrot.slane %v11320, 4
      %v11567 = vsel %vm2638, %v11565, %v11566
      %v11568 = vrot.slane %v11321, 4
      %v11569 = vsel %vm2638, %v11566, %v11568
      %v11570 = vrot.slane %v11322, 4
      %v11571 = vsel %vm2638, %v11568, %v11570
      %v11572 = vrot.slane %v11323, 4
      %v11573 = vrot.slane %v11324, 4
      %v11574 = vsel %vm2638, %v11572, %v11573
      %v11575 = vrot.slane %v11325, 4
      %v11576 = vsel %vm2638, %v11573, %v11575
      %v11577 = vrot.slane %v11326, 4
      %v11578 = vsel %vm2638, %v11575, %v11577
      %v11579 = vrot.slane %v11327, 4
      %v11580 = vrot.slane %v11328, 4
      %v11581 = vsel %vm2638, %v11579, %v11580
      %v11582 = vrot.slane %v11329, 4
      %v11583 = vsel %vm2638, %v11580, %v11582
      %v11584 = vrot.slane %v11330, 4
      %v11585 = vsel %vm2638, %v11582, %v11584
      %v11586 = vrot.slane %v11331, 4
      %v11587 = vrot.slane %v11332, 4
      %v11588 = vsel %vm2638, %v11586, %v11587
      %v11589 = vrot.slane %v11333, 4
      %v11590 = vsel %vm2638, %v11587, %v11589
      %v11591 = vrot.slane %v11334, 4
      %v11592 = vsel %vm2638, %v11589, %v11591
      %v11593 = vrot.slane %v11335, 4
      %v11594 = vrot.slane %v11336, 4
      %v11595 = vsel %vm2638, %v11593, %v11594
      %v11596 = vrot.slane %v11337, 4
      %v11597 = vsel %vm2638, %v11594, %v11596
      %v11598 = vrot.slane %v11338, 4
      %v11599 = vsel %vm2638, %v11596, %v11598
      %v11600 = vrot.slane %v11339, 4
      %v11601 = vrot.slane %v11340, 4
      %v11602 = vsel %vm2638, %v11600, %v11601
      %v11603 = vrot.slane %v11341, 4
      %v11604 = vsel %vm2638, %v11601, %v11603
      %v11605 = vrot.slane %v11342, 4
      %v11606 = vsel %vm2638, %v11603, %v11605
      %v11679 = vadd.f32 %v11171, %v11441
      %v11680 = vadd.f32 %v11172, %v11443
      %v11681 = vadd.f32 %v11173, %v11445
      %v11682 = vadd.f32 %v11174, %v11448
      %v11683 = vadd.f32 %v11175, %v11450
      %v11684 = vadd.f32 %v11176, %v11452
      %v11685 = vadd.f32 %v11177, %v11455
      %v11686 = vadd.f32 %v11178, %v11457
      %v11687 = vadd.f32 %v11179, %v11459
      %v11688 = vadd.f32 %v11180, %v11462
      %v11689 = vadd.f32 %v11181, %v11464
      %v11690 = vadd.f32 %v11182, %v11466
      %v11691 = vadd.f32 %v11183, %v11469
      %v11692 = vadd.f32 %v11184, %v11471
      %v11693 = vadd.f32 %v11185, %v11473
      %v11694 = vadd.f32 %v11186, %v11476
      %v11695 = vadd.f32 %v11187, %v11478
      %v11696 = vadd.f32 %v11188, %v11480
      %v11697 = vadd.f32 %v11189, %v11483
      %v11698 = vadd.f32 %v11190, %v11485
      %v11699 = vadd.f32 %v11191, %v11487
      %v11700 = vadd.f32 %v11192, %v11490
      %v11701 = vadd.f32 %v11193, %v11492
      %v11702 = vadd.f32 %v11194, %v11494
      %v11703 = vadd.f32 %v11195, %v11497
      %v11704 = vadd.f32 %v11196, %v11499
      %v11705 = vadd.f32 %v11197, %v11501
      %v11706 = vadd.f32 %v11198, %v11504
      %v11707 = vadd.f32 %v11199, %v11506
      %v11708 = vadd.f32 %v11200, %v11508
      %v11709 = vadd.f32 %v11201, %v11511
      %v11710 = vadd.f32 %v11202, %v11513
      %v11711 = vadd.f32 %v11203, %v11515
      %v11712 = vadd.f32 %v11204, %v11518
      %v11713 = vadd.f32 %v11205, %v11520
      %v11714 = vadd.f32 %v11206, %v11522
      %v11715 = vadd.f32 %v11207, %v11525
      %v11716 = vadd.f32 %v11208, %v11527
      %v11717 = vadd.f32 %v11209, %v11529
      %v11718 = vadd.f32 %v11210, %v11532
      %v11719 = vadd.f32 %v11211, %v11534
      %v11720 = vadd.f32 %v11212, %v11536
      %v11721 = vadd.f32 %v11213, %v11539
      %v11722 = vadd.f32 %v11214, %v11541
      %v11723 = vadd.f32 %v11215, %v11543
      %v11724 = vadd.f32 %v11216, %v11546
      %v11725 = vadd.f32 %v11217, %v11548
      %v11726 = vadd.f32 %v11218, %v11550
      %v11727 = vadd.f32 %v11219, %v11553
      %v11728 = vadd.f32 %v11220, %v11555
      %v11729 = vadd.f32 %v11221, %v11557
      %v11730 = vadd.f32 %v11222, %v11560
      %v11731 = vadd.f32 %v11223, %v11562
      %v11732 = vadd.f32 %v11224, %v11564
      %v11733 = vadd.f32 %v11225, %v11567
      %v11734 = vadd.f32 %v11226, %v11569
      %v11735 = vadd.f32 %v11227, %v11571
      %v11736 = vadd.f32 %v11228, %v11574
      %v11737 = vadd.f32 %v11229, %v11576
      %v11738 = vadd.f32 %v11230, %v11578
      %v11739 = vadd.f32 %v11231, %v11581
      %v11740 = vadd.f32 %v11232, %v11583
      %v11741 = vadd.f32 %v11233, %v11585
      %v11742 = vadd.f32 %v11234, %v11588
      %v11743 = vadd.f32 %v11235, %v11590
      %v11744 = vadd.f32 %v11236, %v11592
      %v11745 = vadd.f32 %v11237, %v11595
      %v11746 = vadd.f32 %v11238, %v11597
      %v11747 = vadd.f32 %v11239, %v11599
      %v11748 = vadd.f32 %v11240, %v11602
      %v11749 = vadd.f32 %v11241, %v11604
      %v11750 = vadd.f32 %v11242, %v11606
      %v11751 = vld [vmem:[%s2] sm:$0x1]
      %v11753 = vlaneseq
      %v11754 = vshrl.u32 %v11753, 7
      %v11755 = vsub.s32 0, %v11754
      %v11756 = vrot.slane %v11751, %v11755
      %v11758 = vadd.f32 %v11679, %v11756
      %v11759 = vadd.f32 %v11680, %v11756
      %v11760 = vadd.f32 %v11681, %v11756
      %v11761 = vadd.f32 %v11682, %v11756
      %v11762 = vadd.f32 %v11683, %v11756
      %v11763 = vadd.f32 %v11684, %v11756
      %v11764 = vadd.f32 %v11685, %v11756
      %v11765 = vadd.f32 %v11686, %v11756
      %v11766 = vadd.f32 %v11687, %v11756
      %v11767 = vadd.f32 %v11688, %v11756
      %v11768 = vadd.f32 %v11689, %v11756
      %v11769 = vadd.f32 %v11690, %v11756
      %v11770 = vadd.f32 %v11691, %v11756
      %v11771 = vadd.f32 %v11692, %v11756
      %v11772 = vadd.f32 %v11693, %v11756
      %v11773 = vadd.f32 %v11694, %v11756
      %v11774 = vadd.f32 %v11695, %v11756
      %v11775 = vadd.f32 %v11696, %v11756
      %v11776 = vadd.f32 %v11697, %v11756
      %v11777 = vadd.f32 %v11698, %v11756
      %v11778 = vadd.f32 %v11699, %v11756
      %v11779 = vadd.f32 %v11700, %v11756
      %v11780 = vadd.f32 %v11701, %v11756
      %v11781 = vadd.f32 %v11702, %v11756
      %v11782 = vadd.f32 %v11703, %v11756
      %v11783 = vadd.f32 %v11704, %v11756
      %v11784 = vadd.f32 %v11705, %v11756
      %v11785 = vadd.f32 %v11706, %v11756
      %v11786 = vadd.f32 %v11707, %v11756
      %v11787 = vadd.f32 %v11708, %v11756
      %v11788 = vadd.f32 %v11709, %v11756
      %v11789 = vadd.f32 %v11710, %v11756
      %v11790 = vadd.f32 %v11711, %v11756
      %v11791 = vadd.f32 %v11712, %v11756
      %v11792 = vadd.f32 %v11713, %v11756
      %v11793 = vadd.f32 %v11714, %v11756
      %v11794 = vadd.f32 %v11715, %v11756
      %v11795 = vadd.f32 %v11716, %v11756
      %v11796 = vadd.f32 %v11717, %v11756
      %v11797 = vadd.f32 %v11718, %v11756
      %v11798 = vadd.f32 %v11719, %v11756
      %v11799 = vadd.f32 %v11720, %v11756
      %v11800 = vadd.f32 %v11721, %v11756
      %v11801 = vadd.f32 %v11722, %v11756
      %v11802 = vadd.f32 %v11723, %v11756
      %v11803 = vadd.f32 %v11724, %v11756
      %v11804 = vadd.f32 %v11725, %v11756
      %v11805 = vadd.f32 %v11726, %v11756
      %v11806 = vadd.f32 %v11727, %v11756
      %v11807 = vadd.f32 %v11728, %v11756
      %v11808 = vadd.f32 %v11729, %v11756
      %v11809 = vadd.f32 %v11730, %v11756
      %v11810 = vadd.f32 %v11731, %v11756
      %v11811 = vadd.f32 %v11732, %v11756
      %v11812 = vadd.f32 %v11733, %v11756
      %v11813 = vadd.f32 %v11734, %v11756
      %v11814 = vadd.f32 %v11735, %v11756
      %v11815 = vadd.f32 %v11736, %v11756
      %v11816 = vadd.f32 %v11737, %v11756
      %v11817 = vadd.f32 %v11738, %v11756
      %v11818 = vadd.f32 %v11739, %v11756
      %v11819 = vadd.f32 %v11740, %v11756
      %v11820 = vadd.f32 %v11741, %v11756
      %v11821 = vadd.f32 %v11742, %v11756
      %v11822 = vadd.f32 %v11743, %v11756
      %v11823 = vadd.f32 %v11744, %v11756
      %v11824 = vadd.f32 %v11745, %v11756
      %v11825 = vadd.f32 %v11746, %v11756
      %v11826 = vadd.f32 %v11747, %v11756
      %v11827 = vadd.f32 %v11748, %v11756
      %v11828 = vadd.f32 %v11749, %v11756
      %v11829 = vadd.f32 %v11750, %v11756
      %v11830 = vpack.c.bf16 %v11759, %v11758
      %v11831 = vpack.c.bf16 %v11760, %v11760
      %v11832 = vpack.c.bf16 %v11762, %v11761
      %v11833 = vpack.c.bf16 %v11763, %v11763
      %v11834 = vpack.c.bf16 %v11765, %v11764
      %v11835 = vpack.c.bf16 %v11766, %v11766
      %v11836 = vpack.c.bf16 %v11768, %v11767
      %v11837 = vpack.c.bf16 %v11769, %v11769
      %v11838 = vpack.c.bf16 %v11771, %v11770
      %v11839 = vpack.c.bf16 %v11772, %v11772
      %v11840 = vpack.c.bf16 %v11774, %v11773
      %v11841 = vpack.c.bf16 %v11775, %v11775
      %v11842 = vpack.c.bf16 %v11777, %v11776
      %v11843 = vpack.c.bf16 %v11778, %v11778
      %v11844 = vpack.c.bf16 %v11780, %v11779
      %v11845 = vpack.c.bf16 %v11781, %v11781
      %v11846 = vpack.c.bf16 %v11783, %v11782
      %v11847 = vpack.c.bf16 %v11784, %v11784
      %v11848 = vpack.c.bf16 %v11786, %v11785
      %v11849 = vpack.c.bf16 %v11787, %v11787
      %v11850 = vpack.c.bf16 %v11789, %v11788
      %v11851 = vpack.c.bf16 %v11790, %v11790
      %v11852 = vpack.c.bf16 %v11792, %v11791
      %v11853 = vpack.c.bf16 %v11793, %v11793
      %v11854 = vpack.c.bf16 %v11795, %v11794
      %v11855 = vpack.c.bf16 %v11796, %v11796
      %v11856 = vpack.c.bf16 %v11798, %v11797
      %v11857 = vpack.c.bf16 %v11799, %v11799
      %v11858 = vpack.c.bf16 %v11801, %v11800
      %v11859 = vpack.c.bf16 %v11802, %v11802
      %v11860 = vpack.c.bf16 %v11804, %v11803
      %v11861 = vpack.c.bf16 %v11805, %v11805
      %v11862 = vpack.c.bf16 %v11807, %v11806
      %v11863 = vpack.c.bf16 %v11808, %v11808
      %v11864 = vpack.c.bf16 %v11810, %v11809
      %v11865 = vpack.c.bf16 %v11811, %v11811
      %v11866 = vpack.c.bf16 %v11813, %v11812
      %v11867 = vpack.c.bf16 %v11814, %v11814
      %v11868 = vpack.c.bf16 %v11816, %v11815
      %v11869 = vpack.c.bf16 %v11817, %v11817
      %v11870 = vpack.c.bf16 %v11819, %v11818
      %v11871 = vpack.c.bf16 %v11820, %v11820
      %v11872 = vpack.c.bf16 %v11822, %v11821
      %v11873 = vpack.c.bf16 %v11823, %v11823
      %v11874 = vpack.c.bf16 %v11825, %v11824
      %v11875 = vpack.c.bf16 %v11826, %v11826
      %v11876 = vpack.c.bf16 %v11828, %v11827
      %v11877 = vpack.c.bf16 %v11829, %v11829
      %v11926 = vunpack.c.l.b16 %v11830
      %v11927 = vunpack.c.h.b16 %v11830
      %v11928 = vunpack.c.l.b16 %v11831
      %v11929 = vunpack.c.l.b16 %v11832
      %v11930 = vunpack.c.h.b16 %v11832
      %v11931 = vunpack.c.l.b16 %v11833
      %v11932 = vunpack.c.l.b16 %v11834
      %v11933 = vunpack.c.h.b16 %v11834
      %v11934 = vunpack.c.l.b16 %v11835
      %v11935 = vunpack.c.l.b16 %v11836
      %v11936 = vunpack.c.h.b16 %v11836
      %v11937 = vunpack.c.l.b16 %v11837
      %v11938 = vunpack.c.l.b16 %v11838
      %v11939 = vunpack.c.h.b16 %v11838
      %v11940 = vunpack.c.l.b16 %v11839
      %v11941 = vunpack.c.l.b16 %v11840
      %v11942 = vunpack.c.h.b16 %v11840
      %v11943 = vunpack.c.l.b16 %v11841
      %v11944 = vunpack.c.l.b16 %v11842
      %v11945 = vunpack.c.h.b16 %v11842
      %v11946 = vunpack.c.l.b16 %v11843
      %v11947 = vunpack.c.l.b16 %v11844
      %v11948 = vunpack.c.h.b16 %v11844
      %v11949 = vunpack.c.l.b16 %v11845
      %v11950 = vunpack.c.l.b16 %v11846
      %v11951 = vunpack.c.h.b16 %v11846
      %v11952 = vunpack.c.l.b16 %v11847
      %v11953 = vunpack.c.l.b16 %v11848
      %v11954 = vunpack.c.h.b16 %v11848
      %v11955 = vunpack.c.l.b16 %v11849
      %v11956 = vunpack.c.l.b16 %v11850
      %v11957 = vunpack.c.h.b16 %v11850
      %v11958 = vunpack.c.l.b16 %v11851
      %v11959 = vunpack.c.l.b16 %v11852
      %v11960 = vunpack.c.h.b16 %v11852
      %v11961 = vunpack.c.l.b16 %v11853
      %v11962 = vunpack.c.l.b16 %v11854
      %v11963 = vunpack.c.h.b16 %v11854
      %v11964 = vunpack.c.l.b16 %v11855
      %v11965 = vunpack.c.l.b16 %v11856
      %v11966 = vunpack.c.h.b16 %v11856
      %v11967 = vunpack.c.l.b16 %v11857
      %v11968 = vunpack.c.l.b16 %v11858
      %v11969 = vunpack.c.h.b16 %v11858
      %v11970 = vunpack.c.l.b16 %v11859
      %v11971 = vunpack.c.l.b16 %v11860
      %v11972 = vunpack.c.h.b16 %v11860
      %v11973 = vunpack.c.l.b16 %v11861
      %v11974 = vunpack.c.l.b16 %v11862
      %v11975 = vunpack.c.h.b16 %v11862
      %v11976 = vunpack.c.l.b16 %v11863
      %v11977 = vunpack.c.l.b16 %v11864
      %v11978 = vunpack.c.h.b16 %v11864
      %v11979 = vunpack.c.l.b16 %v11865
      %v11980 = vunpack.c.l.b16 %v11866
      %v11981 = vunpack.c.h.b16 %v11866
      %v11982 = vunpack.c.l.b16 %v11867
      %v11983 = vunpack.c.l.b16 %v11868
      %v11984 = vunpack.c.h.b16 %v11868
      %v11985 = vunpack.c.l.b16 %v11869
      %v11986 = vunpack.c.l.b16 %v11870
      %v11987 = vunpack.c.h.b16 %v11870
      %v11988 = vunpack.c.l.b16 %v11871
      %v11989 = vunpack.c.l.b16 %v11872
      %v11990 = vunpack.c.h.b16 %v11872
      %v11991 = vunpack.c.l.b16 %v11873
      %v11992 = vunpack.c.l.b16 %v11874
      %v11993 = vunpack.c.h.b16 %v11874
      %v11994 = vunpack.c.l.b16 %v11875
      %v11995 = vunpack.c.l.b16 %v11876
      %v11996 = vunpack.c.h.b16 %v11876
      %v11997 = vunpack.c.l.b16 %v11877
      %v11998 = vpack.c.b16 %v11926, %v11926
      %v11999 = vpack.c.b16 %v11927, %v11927
      %v12000 = vpack.c.b16 %v11928, %v11928
      %v12001 = vpack.c.b16 %v11929, %v11929
      %v12002 = vpack.c.b16 %v11930, %v11930
      %v12003 = vpack.c.b16 %v11931, %v11931
      %v12004 = vpack.c.b16 %v11932, %v11932
      %v12005 = vpack.c.b16 %v11933, %v11933
      %v12006 = vpack.c.b16 %v11934, %v11934
      %v12007 = vpack.c.b16 %v11935, %v11935
      %v12008 = vpack.c.b16 %v11936, %v11936
      %v12009 = vpack.c.b16 %v11937, %v11937
      %v12010 = vpack.c.b16 %v11938, %v11938
      %v12011 = vpack.c.b16 %v11939, %v11939
      %v12012 = vpack.c.b16 %v11940, %v11940
      %v12013 = vpack.c.b16 %v11941, %v11941
      %v12014 = vpack.c.b16 %v11942, %v11942
      %v12015 = vpack.c.b16 %v11943, %v11943
      %v12016 = vpack.c.b16 %v11944, %v11944
      %v12017 = vpack.c.b16 %v11945, %v11945
      %v12018 = vpack.c.b16 %v11946, %v11946
      %v12019 = vpack.c.b16 %v11947, %v11947
      %v12020 = vpack.c.b16 %v11948, %v11948
      %v12021 = vpack.c.b16 %v11949, %v11949
      %v12022 = vpack.c.b16 %v11950, %v11950
      %v12023 = vpack.c.b16 %v11951, %v11951
      %v12024 = vpack.c.b16 %v11952, %v11952
      %v12025 = vpack.c.b16 %v11953, %v11953
      %v12026 = vpack.c.b16 %v11954, %v11954
      %v12027 = vpack.c.b16 %v11955, %v11955
      %v12028 = vpack.c.b16 %v11956, %v11956
      %v12029 = vpack.c.b16 %v11957, %v11957
      %v12030 = vpack.c.b16 %v11958, %v11958
      %v12031 = vpack.c.b16 %v11959, %v11959
      %v12032 = vpack.c.b16 %v11960, %v11960
      %v12033 = vpack.c.b16 %v11961, %v11961
      %v12034 = vpack.c.b16 %v11962, %v11962
      %v12035 = vpack.c.b16 %v11963, %v11963
      %v12036 = vpack.c.b16 %v11964, %v11964
      %v12037 = vpack.c.b16 %v11965, %v11965
      %v12038 = vpack.c.b16 %v11966, %v11966
      %v12039 = vpack.c.b16 %v11967, %v11967
      %v12040 = vpack.c.b16 %v11968, %v11968
      %v12041 = vpack.c.b16 %v11969, %v11969
      %v12042 = vpack.c.b16 %v11970, %v11970
      %v12043 = vpack.c.b16 %v11971, %v11971
      %v12044 = vpack.c.b16 %v11972, %v11972
      %v12045 = vpack.c.b16 %v11973, %v11973
      %v12046 = vpack.c.b16 %v11974, %v11974
      %v12047 = vpack.c.b16 %v11975, %v11975
      %v12048 = vpack.c.b16 %v11976, %v11976
      %v12049 = vpack.c.b16 %v11977, %v11977
      %v12050 = vpack.c.b16 %v11978, %v11978
      %v12051 = vpack.c.b16 %v11979, %v11979
      %v12052 = vpack.c.b16 %v11980, %v11980
      %v12053 = vpack.c.b16 %v11981, %v11981
      %v12054 = vpack.c.b16 %v11982, %v11982
      %v12055 = vpack.c.b16 %v11983, %v11983
      %v12056 = vpack.c.b16 %v11984, %v11984
      %v12057 = vpack.c.b16 %v11985, %v11985
      %v12058 = vpack.c.b16 %v11986, %v11986
      %v12059 = vpack.c.b16 %v11987, %v11987
      %v12060 = vpack.c.b16 %v11988, %v11988
      %v12061 = vpack.c.b16 %v11989, %v11989
      %v12062 = vpack.c.b16 %v11990, %v11990
      %v12063 = vpack.c.b16 %v11991, %v11991
      %v12064 = vpack.c.b16 %v11992, %v11992
      %v12065 = vpack.c.b16 %v11993, %v11993
      %v12066 = vpack.c.b16 %v11994, %v11994
      %v12067 = vpack.c.b16 %v11995, %v11995
      %v12068 = vpack.c.b16 %v11996, %v11996
      %v12069 = vpack.c.b16 %v11997, %v11997
      %vm12142 = vcmask 76800
      %12143 = vst.msk [vmem:[%s170] sm:$0xf] %vm12142, %v11998
      %12144 = vst.msk [vmem:[%s170 + $0x4] sm:$0xf] %vm12142, %v11999
      %12145 = vst.msk [vmem:[%s170 + $0x8] sm:$0xf] %vm12142, %v12000
      %12146 = vst.msk [vmem:[%s170 + $0xc] sm:$0xf] %vm12142, %v12001
      %12147 = vst.msk [vmem:[%s170 + $0x10] sm:$0xf] %vm12142, %v12002
      %12148 = vst.msk [vmem:[%s170 + $0x14] sm:$0xf] %vm12142, %v12003
      %12149 = vst.msk [vmem:[%s170 + $0x18] sm:$0xf] %vm12142, %v12004
      %12150 = vst.msk [vmem:[%s170 + $0x1c] sm:$0xf] %vm12142, %v12005
      %12151 = vst.msk [vmem:[%s170 + $0x20] sm:$0xf] %vm12142, %v12006
      %12152 = vst.msk [vmem:[%s170 + $0x24] sm:$0xf] %vm12142, %v12007
      %12153 = vst.msk [vmem:[%s170 + $0x28] sm:$0xf] %vm12142, %v12008
      %12154 = vst.msk [vmem:[%s170 + $0x2c] sm:$0xf] %vm12142, %v12009
      %12155 = vst.msk [vmem:[%s170 + $0x30] sm:$0xf] %vm12142, %v12010
      %12156 = vst.msk [vmem:[%s170 + $0x34] sm:$0xf] %vm12142, %v12011
      %12157 = vst.msk [vmem:[%s170 + $0x38] sm:$0xf] %vm12142, %v12012
      %12158 = vst.msk [vmem:[%s170 + $0x3c] sm:$0xf] %vm12142, %v12013
      %12159 = vst.msk [vmem:[%s170 + $0x40] sm:$0xf] %vm12142, %v12014
      %12160 = vst.msk [vmem:[%s170 + $0x44] sm:$0xf] %vm12142, %v12015
      %12161 = vst.msk [vmem:[%s170 + $0x48] sm:$0xf] %vm12142, %v12016
      %12162 = vst.msk [vmem:[%s170 + $0x4c] sm:$0xf] %vm12142, %v12017
      %12163 = vst.msk [vmem:[%s170 + $0x50] sm:$0xf] %vm12142, %v12018
      %12164 = vst.msk [vmem:[%s170 + $0x54] sm:$0xf] %vm12142, %v12019
      %12165 = vst.msk [vmem:[%s170 + $0x58] sm:$0xf] %vm12142, %v12020
      %12166 = vst.msk [vmem:[%s170 + $0x5c] sm:$0xf] %vm12142, %v12021
      %12167 = vst.msk [vmem:[%s170 + $0x60] sm:$0xf] %vm12142, %v12022
      %12168 = vst.msk [vmem:[%s170 + $0x64] sm:$0xf] %vm12142, %v12023
      %12169 = vst.msk [vmem:[%s170 + $0x68] sm:$0xf] %vm12142, %v12024
      %12170 = vst.msk [vmem:[%s170 + $0x6c] sm:$0xf] %vm12142, %v12025
      %12171 = vst.msk [vmem:[%s170 + $0x70] sm:$0xf] %vm12142, %v12026
      %12172 = vst.msk [vmem:[%s170 + $0x74] sm:$0xf] %vm12142, %v12027
      %12173 = vst.msk [vmem:[%s170 + $0x78] sm:$0xf] %vm12142, %v12028
      %12174 = vst.msk [vmem:[%s170 + $0x7c] sm:$0xf] %vm12142, %v12029
      %12175 = vst.msk [vmem:[%s170 + $0x80] sm:$0xf] %vm12142, %v12030
      %12176 = vst.msk [vmem:[%s170 + $0x84] sm:$0xf] %vm12142, %v12031
      %12177 = vst.msk [vmem:[%s170 + $0x88] sm:$0xf] %vm12142, %v12032
      %12178 = vst.msk [vmem:[%s170 + $0x8c] sm:$0xf] %vm12142, %v12033
      %12179 = vst.msk [vmem:[%s170 + $0x90] sm:$0xf] %vm12142, %v12034
      %12180 = vst.msk [vmem:[%s170 + $0x94] sm:$0xf] %vm12142, %v12035
      %12181 = vst.msk [vmem:[%s170 + $0x98] sm:$0xf] %vm12142, %v12036
      %12182 = vst.msk [vmem:[%s170 + $0x9c] sm:$0xf] %vm12142, %v12037
      %12183 = vst.msk [vmem:[%s170 + $0xa0] sm:$0xf] %vm12142, %v12038
      %12184 = vst.msk [vmem:[%s170 + $0xa4] sm:$0xf] %vm12142, %v12039
      %12185 = vst.msk [vmem:[%s170 + $0xa8] sm:$0xf] %vm12142, %v12040
      %12186 = vst.msk [vmem:[%s170 + $0xac] sm:$0xf] %vm12142, %v12041
      %12187 = vst.msk [vmem:[%s170 + $0xb0] sm:$0xf] %vm12142, %v12042
      %12188 = vst.msk [vmem:[%s170 + $0xb4] sm:$0xf] %vm12142, %v12043
      %12189 = vst.msk [vmem:[%s170 + $0xb8] sm:$0xf] %vm12142, %v12044
      %12190 = vst.msk [vmem:[%s170 + $0xbc] sm:$0xf] %vm12142, %v12045
      %12191 = vst.msk [vmem:[%s170 + $0xc0] sm:$0xf] %vm12142, %v12046
      %12192 = vst.msk [vmem:[%s170 + $0xc4] sm:$0xf] %vm12142, %v12047
      %12193 = vst.msk [vmem:[%s170 + $0xc8] sm:$0xf] %vm12142, %v12048
      %12194 = vst.msk [vmem:[%s170 + $0xcc] sm:$0xf] %vm12142, %v12049
      %12195 = vst.msk [vmem:[%s170 + $0xd0] sm:$0xf] %vm12142, %v12050
      %12196 = vst.msk [vmem:[%s170 + $0xd4] sm:$0xf] %vm12142, %v12051
      %12197 = vst.msk [vmem:[%s170 + $0xd8] sm:$0xf] %vm12142, %v12052
      %12198 = vst.msk [vmem:[%s170 + $0xdc] sm:$0xf] %vm12142, %v12053
      %12199 = vst.msk [vmem:[%s170 + $0xe0] sm:$0xf] %vm12142, %v12054
      %12200 = vst.msk [vmem:[%s170 + $0xe4] sm:$0xf] %vm12142, %v12055
      %12201 = vst.msk [vmem:[%s170 + $0xe8] sm:$0xf] %vm12142, %v12056
      %12202 = vst.msk [vmem:[%s170 + $0xec] sm:$0xf] %vm12142, %v12057
      %12203 = vst.msk [vmem:[%s170 + $0xf0] sm:$0xf] %vm12142, %v12058
      %12204 = vst.msk [vmem:[%s170 + $0xf4] sm:$0xf] %vm12142, %v12059
      %12205 = vst.msk [vmem:[%s170 + $0xf8] sm:$0xf] %vm12142, %v12060
      %12206 = vst.msk [vmem:[%s170 + $0xfc] sm:$0xf] %vm12142, %v12061
      %12207 = vst.msk [vmem:[%s170 + $0x100] sm:$0xf] %vm12142, %v12062
      %12208 = vst.msk [vmem:[%s170 + $0x104] sm:$0xf] %vm12142, %v12063
      %12209 = vst.msk [vmem:[%s170 + $0x108] sm:$0xf] %vm12142, %v12064
      %12210 = vst.msk [vmem:[%s170 + $0x10c] sm:$0xf] %vm12142, %v12065
      %12211 = vst.msk [vmem:[%s170 + $0x110] sm:$0xf] %vm12142, %v12066
      %12212 = vst.msk [vmem:[%s170 + $0x114] sm:$0xf] %vm12142, %v12067
      %12213 = vst.msk [vmem:[%s170 + $0x118] sm:$0xf] %vm12142, %v12068
      %12214 = vst.msk [vmem:[%s170 + $0x11c] sm:$0xf] %vm12142, %v12069
      %p12215 = scmp.lt.s32.totalorder %s14, 1
      %s12216 = scalar_select %p12215, %s14, 1
      %s12217 = smul.addr %s12216, 72
      %s12218 = smul.addr %s12217, 4
      %s12219 = scalar_lea.vmem %s3, %s12218
      // Predicated region
      $region33: #{neural_network_explainer_forward.5} parent=31 // pred_check
        %p12220 = pneg %p100
      $region34: #{neural_network_explainer_forward.5} parent=31 // pred_check_branch
        %12222 = sbr.rel (%p12220) target = $region36
      $region35: #{neural_network_explainer_forward.5} parent=31 // pred_region
        _
      $region36: #{neural_network_explainer_forward.5} parent=31 // pred_fallthru
        _
    $region32: #{neural_network_explainer_forward.5} parent=5 // pred_fallthru
      _
    %p12223 = scmp.le.s32.totalorder 2, %s9
    // Predicated region
    $region37: #{neural_network_explainer_forward.5} parent=5 // pred_check
      %p12224 = pneg %p12223
    $region38: #{neural_network_explainer_forward.5} parent=5 // pred_check_branch
      %12226 = sbr.rel (%p12224) target = $region40
    $region39: #{neural_network_explainer_forward.5} parent=5 // pred_region
      %s12227 = ssub.s32 %s9, 2
      // Predicated region
      $region41: #{neural_network_explainer_forward.5} parent=39 // pred_check
        %p12228 = pneg %p106
      $region42: #{neural_network_explainer_forward.5} parent=39 // pred_check_branch
        %12230 = sbr.rel (%p12228) target = $region44
      $region43: #{neural_network_explainer_forward.5} parent=39 // pred_region
        %p12231 = scmp.lt.s32.totalorder %s15, 1
        %s12232 = scalar_select %p12231, %s15, 1
        %s12233 = smul.addr %s12232, 72
        %s12234 = smul.addr %s12233, 4
        %s12235 = scalar_lea.vmem %s3, %s12234
      $region44: #{neural_network_explainer_forward.5} parent=39 // pred_fallthru
        _
    $region40: #{neural_network_explainer_forward.5} parent=5 // pred_fallthru
      _
  $region6: #{neural_network_explainer_forward.5} parent=0 // loop_footer
    %s13 = sadd.s32 1, %s9
  $region7: #{neural_network_explainer_forward.5} parent=0 // loop_footer_branch
    %8 = sbr.rel target = $region3
  $region8: #{neural_network_explainer_forward.5} parent=0 // loop_exit
    _

</llo_original>
